<compile_context>
chip_gen: v6e
topology: v6e:2x2x1
jax: 0.10.0
libtpu: 0.0.40
codegen_flags: <defaults>
</compile_context>

<pallas_src>
import jax
import jax.numpy as jnp
from jax.experimental import pallas as pl
from jax.experimental.pallas import tpu as pltpu


# Order of the batch-independent (constant) kernel inputs.
_PARAM_ORDER = (
    "m2", "m3", "u16t", "u32t", "u64t",
    "w_up14", "s_up14", "w_up2", "s_up2", "w_up3", "s_up3",
    "w_cat2", "s_cat2", "w_up5", "s_up5",
    "w_cat3", "s_cat3", "w_c4", "s_c4", "w_c5", "b_c5",
)


# ------------------------------ fused kernel --------------------------------

def _make_kernel(c, h1, w1):
    h2, w2 = 2 * h1, 2 * w1
    h3, w3 = 4 * h1, 4 * w1
    hw2, hw3 = h2 * w2, h3 * w3
    f32 = jnp.float32
    bf16 = jnp.bfloat16

    def tap_stack(inputs, masks, width, hw):
        """K-stack of masked, lane-rolled copies of the inputs.

        inputs: list of (ci_k, hw) f32 arrays (channel-concat pieces).
        masks:  (9, hw) f32 border masks, one per 3x3 tap.
        Returns (9 * sum(ci_k), hw) bf16; rows are tap-major then the inputs'
        channels in order, matching the host-side (Cout, 9*Cin) weight layout.
        Masking the rolled input is exactly equivalent to masking the conv
        output (linearity), so one big matmul replaces the 9-tap loop.
        """
        pieces = []
        for t in range(9):
            dh, dw = t // 3 - 1, t % 3 - 1
            off = dh * width + dw
            m = masks[t:t + 1, :]
            for x in inputs:
                if off == 0:                       # centre tap: mask == 1
                    pieces.append(x)
                else:
                    xs = pltpu.roll(x, shift=(-off) % hw, axis=1)
                    pieces.append(m * xs)
        return jnp.concatenate(pieces, axis=0).astype(bf16)

    def conv(w_ref, stack, s_ref):
        # (Cout, 9*Cin)bf16 @ (9*Cin, HW)bf16 -> f32, plus folded-BN shift.
        return (jnp.dot(w_ref[...], stack, preferred_element_type=f32)
                + s_ref[...])

    def kernel(x1_ref, x2_ref, x3_ref,
               m2_ref, m3_ref, u16_ref, u32_ref, u64_ref,
               w_up14, s_up14, w_up2, s_up2, w_up3, s_up3,
               w_cat2, s_cat2, w_up5, s_up5,
               w_cat3, s_cat3, w_c4, s_c4, w_c5, b_c5,
               out_ref):
        x1 = x1_ref[...]          # (c,  hw1)
        x2 = x2_ref[...]          # (c,  hw2)
        x3 = x3_ref[...]          # (c,  hw3)
        m2 = m2_ref[...]          # (9,  hw2)
        m3 = m3_ref[...]          # (9,  hw3)

        # bilinear (align_corners=True) 2x upsample == right matmul with the
        # precomputed interpolation matrix; U64 = U16 @ U32 is precomposed so
        # up(up(x1)) is one matmul and independent of up(x1).
        up_x1 = jnp.dot(x1, u16_ref[...], preferred_element_type=f32)    # (c, hw2)
        up_up_x1 = jnp.dot(x1, u64_ref[...], preferred_element_type=f32)  # (c, hw3)
        up_x2 = jnp.dot(x2, u32_ref[...], preferred_element_type=f32)    # (c, hw3)

        # conv_upsample1 / conv_upsample4 share up(x1): build its masked/
        # rolled stack once, run one fused matmul, split the output rows.
        y14 = conv(w_up14, tap_stack([up_x1], m2, w2, hw2), s_up14)      # (2c, hw2)
        cu1, cu4 = y14[:c, :], y14[c:, :]
        x2_1 = cu1 * x2

        cu2 = conv(w_up2, tap_stack([up_up_x1], m3, w3, hw3), s_up2)     # (c, hw3)
        cu3 = conv(w_up3, tap_stack([up_x2], m3, w3, hw3), s_up3)        # (c, hw3)
        x3_1 = cu2 * cu3 * x3

        # conv_concat2(cat([x2_1, cu4], channel)): the concat just extends
        # the contraction axis of a single matmul.
        x2_2 = conv(w_cat2, tap_stack([x2_1, cu4], m2, w2, hw2), s_cat2)  # (2c, hw2)

        up_x2_2 = jnp.dot(x2_2, u32_ref[...], preferred_element_type=f32)  # (2c, hw3)
        cu5 = conv(w_up5, tap_stack([up_x2_2], m3, w3, hw3), s_up5)      # (2c, hw3)

        # conv_concat3(cat([x3_1, cu5], channel))
        x3_2 = conv(w_cat3, tap_stack([x3_1, cu5], m3, w3, hw3), s_cat3)  # (3c, hw3)

        # conv4 (3x3 conv + BN), then conv5 (1x1 conv with bias) epilogue.
        y4 = conv(w_c4, tap_stack([x3_2], m3, w3, hw3), s_c4)            # (3c, hw3)
        out_ref[...] = (jnp.dot(w_c5[...], y4, preferred_element_type=f32)
                        + b_c5[...])

    return kernel


# --------------------------------- wrapper ----------------------------------

def pdc_im_forward(params, x1, x2, x3):
    """x1: (N,C,S,S), x2: (N,C,2S,2S), x3: (N,C,4S,4S) (NCHW, like PyTorch)."""
    n, c, h1, w1 = x1.shape
    assert x2.shape == (n, c, 2 * h1, 2 * w1)
    assert x3.shape == (n, c, 4 * h1, 4 * w1)
    hw1, hw2, hw3 = h1 * w1, 4 * h1 * w1, 16 * h1 * w1

    # lane-dense layout: per batch element, rows = channels, lanes = H*W.
    batched = [x1.reshape(n, c, hw1), x2.reshape(n, c, hw2),
               x3.reshape(n, c, hw3)]
    consts = [params[k] for k in _PARAM_ORDER]

    in_specs = [pl.BlockSpec((None,) + a.shape[1:], lambda b: (b, 0, 0))
                for a in batched]
    in_specs += [pl.BlockSpec(p.shape, lambda b, nd=p.ndim: (0,) * nd)
                 for p in consts]

    out = pl.pallas_call(
        _make_kernel(c, h1, w1),
        grid=(n,),
        out_shape=jax.ShapeDtypeStruct((n, 1, hw3), jnp.float32),
        in_specs=in_specs,
        out_specs=pl.BlockSpec((None, 1, hw3), lambda b: (b, 0, 0)),
        compiler_params=pltpu.CompilerParams(
            dimension_semantics=("parallel",)),
    )(*batched, *consts)
    return out.reshape(n, 1, 4 * h1, 4 * w1)    # NCHW, single output channel


# --------------------------- parameter construction -------------------------

def _interp_matrix_1d(size):
    """(2*size, size) bilinear weights, scale_factor=2, align_corners=True."""
    out = 2 * size
    i = jnp.arange(out, dtype=jnp.float32)[:, None]
    j = jnp.arange(size, dtype=jnp.float32)[None, :]
    src = i * (size - 1) / (out - 1)
    return jnp.maximum(0.0, 1.0 - jnp.abs(src - j))


def _upsample_matrix_t(h, w):
    """(h*w, 4*h*w): right-multiplying a (rows, h*w) activation upsamples 2x."""
    uh = _interp_matrix_1d(h)
    uw = _interp_matrix_1d(w)
    u = jnp.einsum("Ih,Jw->IJhw", uh, uw).reshape(4 * h * w, h * w)
    return u.T


def _tap_masks(h, w):
    """(9, h*w) f32 border masks: mask[t] zeroes out-of-image taps."""
    pos = jnp.arange(h * w, dtype=jnp.int32)
    i, j = pos // w, pos % w
    rows = []
    for t in range(9):
        dh, dw = t // 3 - 1, t % 3 - 1
        ok = (i + dh >= 0) & (i + dh < h) & (j + dw >= 0) & (j + dw < w)
        rows.append(ok.astype(jnp.float32))
    return jnp.stack(rows, axis=0)


def _conv_bn(key, cin, cout):
    """Random Conv2d(3x3, bias=False) + eval-mode BatchNorm2d, scale folded."""
    ks = jax.random.split(key, 5)
    w = jax.random.normal(ks[0], (3, 3, cin, cout), jnp.float32) / jnp.sqrt(9.0 * cin)
    gamma = 1.0 + 0.1 * jax.random.normal(ks[1], (cout,), jnp.float32)
    beta = 0.1 * jax.random.normal(ks[2], (cout,), jnp.float32)
    mean = 0.1 * jax.random.normal(ks[3], (cout,), jnp.float32)
    var = jax.random.uniform(ks[4], (cout,), jnp.float32, minval=0.5, maxval=1.5)
    scale = gamma / jnp.sqrt(var + 1e-5)
    shift = beta - mean * scale
    return w * scale[None, None, None, :], shift


def _kstack(w):
    """(3,3,ci,co) -> (co, 9*ci) bf16; K-block t holds tap t's (co,ci) slice."""
    co = w.shape[-1]
    return jnp.transpose(w, (3, 0, 1, 2)).reshape(co, -1).astype(jnp.bfloat16)


def _col(shift):
    return shift.reshape(-1, 1).astype(jnp.float32)


def init_pdc_im_params(key, channel, s1):
    c = channel
    dims = {"up1": (c, c), "up2": (c, c), "up3": (c, c), "up4": (c, c),
            "up5": (2 * c, 2 * c), "cat2": (2 * c, 2 * c),
            "cat3": (3 * c, 3 * c), "c4": (3 * c, 3 * c)}
    names = list(dims)
    keys = jax.random.split(key, len(names) + 1)
    raw = {nm: _conv_bn(k, *dims[nm]) for nm, k in zip(names, keys[:-1])}

    p = {}
    # conv_upsample1 / conv_upsample4 read the same tensor -> row-fuse them.
    p["w_up14"] = jnp.concatenate([_kstack(raw["up1"][0]),
                                   _kstack(raw["up4"][0])], axis=0)
    p["s_up14"] = jnp.concatenate([_col(raw["up1"][1]),
                                   _col(raw["up4"][1])], axis=0)
    for nm in ("up2", "up3", "up5", "cat2", "cat3", "c4"):
        p["w_" + nm] = _kstack(raw[nm][0])
        p["s_" + nm] = _col(raw[nm][1])

    k5a, k5b = jax.random.split(keys[-1])
    p["w_c5"] = jax.random.normal(k5a, (1, 3 * c), jnp.float32) / jnp.sqrt(3.0 * c)
    p["b_c5"] = 0.1 * jax.random.normal(k5b, (1, 1), jnp.float32)

    p["m2"] = _tap_masks(2 * s1, 2 * s1)
    p["m3"] = _tap_masks(4 * s1, 4 * s1)
    u16t = _upsample_matrix_t(s1, s1)              # (s1^2, 4 s1^2)
    u32t = _upsample_matrix_t(2 * s1, 2 * s1)      # (4 s1^2, 16 s1^2)
    p["u16t"] = u16t
    p["u32t"] = u32t
    p["u64t"] = u16t @ u32t                        # precomposed double upsample
    return p


# ----------------------------------- main ------------------------------------

if __name__ == "__main__":
    key = jax.random.PRNGKey(0)
    k1, k2, k3, kp = jax.random.split(key, 4)

    n, c, s = 2, 8, 8      # x1: (2,8,8,8), x2: (2,8,16,16), x3: (2,8,32,32)
    x1 = jax.random.normal(k1, (n, c, s, s), jnp.float32)
    x2 = jax.random.normal(k2, (n, c, 2 * s, 2 * s), jnp.float32)
    x3 = jax.random.normal(k3, (n, c, 4 * s, 4 * s), jnp.float32)
    params = init_pdc_im_params(kp, c, s)

    y = jax.jit(pdc_im_forward)(params, x1, x2, x3)
    y = jax.block_until_ready(y)

    assert y.shape == (n, 1, 4 * s, 4 * s)
    assert bool(jnp.all(jnp.isfinite(y)))
    print("KERNEL_OK")
</pallas_src>

<mosaic_0001>
module attributes {stable_mosaic.version = 11 : i64} {
  func.func @kernel(%arg0: i32, %arg1: memref<1x8x64xf32, #tpu.memory_space<vmem>>, %arg2: memref<1x8x256xf32, #tpu.memory_space<vmem>>, %arg3: memref<1x8x1024xf32, #tpu.memory_space<vmem>>, %arg4: memref<9x256xf32, #tpu.memory_space<vmem>>, %arg5: memref<9x1024xf32, #tpu.memory_space<vmem>>, %arg6: memref<64x256xf32, #tpu.memory_space<vmem>>, %arg7: memref<256x1024xf32, #tpu.memory_space<vmem>>, %arg8: memref<64x1024xf32, #tpu.memory_space<vmem>>, %arg9: memref<16x72xbf16, #tpu.memory_space<vmem>>, %arg10: memref<16x1xf32, #tpu.memory_space<vmem>>, %arg11: memref<8x72xbf16, #tpu.memory_space<vmem>>, %arg12: memref<8x1xf32, #tpu.memory_space<vmem>>, %arg13: memref<8x72xbf16, #tpu.memory_space<vmem>>, %arg14: memref<8x1xf32, #tpu.memory_space<vmem>>, %arg15: memref<16x144xbf16, #tpu.memory_space<vmem>>, %arg16: memref<16x1xf32, #tpu.memory_space<vmem>>, %arg17: memref<16x144xbf16, #tpu.memory_space<vmem>>, %arg18: memref<16x1xf32, #tpu.memory_space<vmem>>, %arg19: memref<24x216xbf16, #tpu.memory_space<vmem>>, %arg20: memref<24x1xf32, #tpu.memory_space<vmem>>, %arg21: memref<24x216xbf16, #tpu.memory_space<vmem>>, %arg22: memref<24x1xf32, #tpu.memory_space<vmem>>, %arg23: memref<1x24xf32, #tpu.memory_space<vmem>>, %arg24: memref<1x1xf32, #tpu.memory_space<vmem>>, %arg25: memref<1x1x1024xf32, #tpu.memory_space<vmem>>) attributes {dimension_semantics = [#tpu.dimension_semantics<parallel>], iteration_bounds = array<i64: 2>, scalar_prefetch = 0 : i64, scratch_operands = 0 : i64, tpu.core_type = #tpu.core_type<tc>, window_params = [{transform_indices = @transform_0, window_bounds = array<i64: 1, 8, 64>}, {transform_indices = @transform_1, window_bounds = array<i64: 1, 8, 256>}, {transform_indices = @transform_2, window_bounds = array<i64: 1, 8, 1024>}, {pipeline_mode = #tpu.pipeline_mode<synchronous>, transform_indices = @transform_3, window_bounds = array<i64: 9, 256>}, {pipeline_mode = #tpu.pipeline_mode<synchronous>, transform_indices = @transform_4, window_bounds = array<i64: 9, 1024>}, {pipeline_mode = #tpu.pipeline_mode<synchronous>, transform_indices = @transform_5, window_bounds = array<i64: 64, 256>}, {pipeline_mode = #tpu.pipeline_mode<synchronous>, transform_indices = @transform_6, window_bounds = array<i64: 256, 1024>}, {pipeline_mode = #tpu.pipeline_mode<synchronous>, transform_indices = @transform_7, window_bounds = array<i64: 64, 1024>}, {pipeline_mode = #tpu.pipeline_mode<synchronous>, transform_indices = @transform_8, window_bounds = array<i64: 16, 72>}, {pipeline_mode = #tpu.pipeline_mode<synchronous>, transform_indices = @transform_9, window_bounds = array<i64: 16, 1>}, {pipeline_mode = #tpu.pipeline_mode<synchronous>, transform_indices = @transform_10, window_bounds = array<i64: 8, 72>}, {pipeline_mode = #tpu.pipeline_mode<synchronous>, transform_indices = @transform_11, window_bounds = array<i64: 8, 1>}, {pipeline_mode = #tpu.pipeline_mode<synchronous>, transform_indices = @transform_12, window_bounds = array<i64: 8, 72>}, {pipeline_mode = #tpu.pipeline_mode<synchronous>, transform_indices = @transform_13, window_bounds = array<i64: 8, 1>}, {pipeline_mode = #tpu.pipeline_mode<synchronous>, transform_indices = @transform_14, window_bounds = array<i64: 16, 144>}, {pipeline_mode = #tpu.pipeline_mode<synchronous>, transform_indices = @transform_15, window_bounds = array<i64: 16, 1>}, {pipeline_mode = #tpu.pipeline_mode<synchronous>, transform_indices = @transform_16, window_bounds = array<i64: 16, 144>}, {pipeline_mode = #tpu.pipeline_mode<synchronous>, transform_indices = @transform_17, window_bounds = array<i64: 16, 1>}, {pipeline_mode = #tpu.pipeline_mode<synchronous>, transform_indices = @transform_18, window_bounds = array<i64: 24, 216>}, {pipeline_mode = #tpu.pipeline_mode<synchronous>, transform_indices = @transform_19, window_bounds = array<i64: 24, 1>}, {pipeline_mode = #tpu.pipeline_mode<synchronous>, transform_indices = @transform_20, window_bounds = array<i64: 24, 216>}, {pipeline_mode = #tpu.pipeline_mode<synchronous>, transform_indices = @transform_21, window_bounds = array<i64: 24, 1>}, {pipeline_mode = #tpu.pipeline_mode<synchronous>, transform_indices = @transform_22, window_bounds = array<i64: 1, 24>}, {pipeline_mode = #tpu.pipeline_mode<synchronous>, transform_indices = @transform_23, window_bounds = array<i64: 1, 1>}, {transform_indices = @transform_24, window_bounds = array<i64: 1, 1, 1024>}]} {
    %c0 = arith.constant 0 : index
    %c0_0 = arith.constant 0 : index
    %c0_1 = arith.constant 0 : index
    %0 = vector.load %arg1[%c0, %c0_0, %c0_1] : memref<1x8x64xf32, #tpu.memory_space<vmem>>, vector<1x8x64xf32>
    %1 = vector.shape_cast %0 : vector<1x8x64xf32> to vector<8x64xf32>
    %c0_2 = arith.constant 0 : index
    %c0_3 = arith.constant 0 : index
    %c0_4 = arith.constant 0 : index
    %2 = vector.load %arg2[%c0_2, %c0_3, %c0_4] : memref<1x8x256xf32, #tpu.memory_space<vmem>>, vector<1x8x256xf32>
    %3 = vector.shape_cast %2 : vector<1x8x256xf32> to vector<8x256xf32>
    %c0_5 = arith.constant 0 : index
    %c0_6 = arith.constant 0 : index
    %c0_7 = arith.constant 0 : index
    %4 = vector.load %arg3[%c0_5, %c0_6, %c0_7] : memref<1x8x1024xf32, #tpu.memory_space<vmem>>, vector<1x8x1024xf32>
    %5 = vector.shape_cast %4 : vector<1x8x1024xf32> to vector<8x1024xf32>
    %c0_8 = arith.constant 0 : index
    %c0_9 = arith.constant 0 : index
    %6 = vector.load %arg4[%c0_8, %c0_9] : memref<9x256xf32, #tpu.memory_space<vmem>>, vector<9x256xf32>
    %c0_10 = arith.constant 0 : index
    %c0_11 = arith.constant 0 : index
    %7 = vector.load %arg5[%c0_10, %c0_11] : memref<9x1024xf32, #tpu.memory_space<vmem>>, vector<9x1024xf32>
    %c0_12 = arith.constant 0 : index
    %c0_13 = arith.constant 0 : index
    %8 = vector.load %arg6[%c0_12, %c0_13] : memref<64x256xf32, #tpu.memory_space<vmem>>, vector<64x256xf32>
    %cst = arith.constant dense<0.000000e+00> : vector<8x256xf32>
    %9 = tpu.matmul %1, %8, %cst {dimension_numbers = #tpu.dot_dimension_numbers<[1], [0], [0], [1], [0, 0, 1, 1], [], []>} : vector<8x64xf32>, vector<64x256xf32>, vector<8x256xf32> -> vector<8x256xf32>
    %c0_14 = arith.constant 0 : index
    %c0_15 = arith.constant 0 : index
    %10 = vector.load %arg8[%c0_14, %c0_15] : memref<64x1024xf32, #tpu.memory_space<vmem>>, vector<64x1024xf32>
    %cst_16 = arith.constant dense<0.000000e+00> : vector<8x1024xf32>
    %11 = tpu.matmul %1, %10, %cst_16 {dimension_numbers = #tpu.dot_dimension_numbers<[1], [0], [0], [1], [0, 0, 1, 1], [], []>} : vector<8x64xf32>, vector<64x1024xf32>, vector<8x1024xf32> -> vector<8x1024xf32>
    %c0_17 = arith.constant 0 : index
    %c0_18 = arith.constant 0 : index
    %12 = vector.load %arg7[%c0_17, %c0_18] : memref<256x1024xf32, #tpu.memory_space<vmem>>, vector<256x1024xf32>
    %cst_19 = arith.constant dense<0.000000e+00> : vector<8x1024xf32>
    %13 = tpu.matmul %3, %12, %cst_19 {dimension_numbers = #tpu.dot_dimension_numbers<[1], [0], [0], [1], [0, 0, 1, 1], [], []>} : vector<8x256xf32>, vector<256x1024xf32>, vector<8x1024xf32> -> vector<8x1024xf32>
    %14 = vector.extract_strided_slice %6 {offsets = [0, 0], sizes = [1, 256], strides = [1, 1]} : vector<9x256xf32> to vector<1x256xf32>
    %c17_i32 = arith.constant 17 : i32
    %15 = tpu.dynamic_rotate %9 by %c17_i32 dim 1 : vector<8x256xf32>, i32 -> vector<8x256xf32>
    %16 = vector.broadcast %14 : vector<1x256xf32> to vector<8x256xf32>
    %17 = arith.mulf %16, %15 : vector<8x256xf32>
    %18 = vector.extract_strided_slice %6 {offsets = [1, 0], sizes = [1, 256], strides = [1, 1]} : vector<9x256xf32> to vector<1x256xf32>
    %c16_i32 = arith.constant 16 : i32
    %19 = tpu.dynamic_rotate %9 by %c16_i32 dim 1 : vector<8x256xf32>, i32 -> vector<8x256xf32>
    %20 = vector.broadcast %18 : vector<1x256xf32> to vector<8x256xf32>
    %21 = arith.mulf %20, %19 : vector<8x256xf32>
    %22 = vector.extract_strided_slice %6 {offsets = [2, 0], sizes = [1, 256], strides = [1, 1]} : vector<9x256xf32> to vector<1x256xf32>
    %c15_i32 = arith.constant 15 : i32
    %23 = tpu.dynamic_rotate %9 by %c15_i32 dim 1 : vector<8x256xf32>, i32 -> vector<8x256xf32>
    %24 = vector.broadcast %22 : vector<1x256xf32> to vector<8x256xf32>
    %25 = arith.mulf %24, %23 : vector<8x256xf32>
    %26 = vector.extract_strided_slice %6 {offsets = [3, 0], sizes = [1, 256], strides = [1, 1]} : vector<9x256xf32> to vector<1x256xf32>
    %c1_i32 = arith.constant 1 : i32
    %27 = tpu.dynamic_rotate %9 by %c1_i32 dim 1 : vector<8x256xf32>, i32 -> vector<8x256xf32>
    %28 = vector.broadcast %26 : vector<1x256xf32> to vector<8x256xf32>
    %29 = arith.mulf %28, %27 : vector<8x256xf32>
    %30 = vector.extract_strided_slice %6 {offsets = [5, 0], sizes = [1, 256], strides = [1, 1]} : vector<9x256xf32> to vector<1x256xf32>
    %c255_i32 = arith.constant 255 : i32
    %31 = tpu.dynamic_rotate %9 by %c255_i32 dim 1 : vector<8x256xf32>, i32 -> vector<8x256xf32>
    %32 = vector.broadcast %30 : vector<1x256xf32> to vector<8x256xf32>
    %33 = arith.mulf %32, %31 : vector<8x256xf32>
    %34 = vector.extract_strided_slice %6 {offsets = [6, 0], sizes = [1, 256], strides = [1, 1]} : vector<9x256xf32> to vector<1x256xf32>
    %c241_i32 = arith.constant 241 : i32
    %35 = tpu.dynamic_rotate %9 by %c241_i32 dim 1 : vector<8x256xf32>, i32 -> vector<8x256xf32>
    %36 = vector.broadcast %34 : vector<1x256xf32> to vector<8x256xf32>
    %37 = arith.mulf %36, %35 : vector<8x256xf32>
    %38 = vector.extract_strided_slice %6 {offsets = [7, 0], sizes = [1, 256], strides = [1, 1]} : vector<9x256xf32> to vector<1x256xf32>
    %c240_i32 = arith.constant 240 : i32
    %39 = tpu.dynamic_rotate %9 by %c240_i32 dim 1 : vector<8x256xf32>, i32 -> vector<8x256xf32>
    %40 = vector.broadcast %38 : vector<1x256xf32> to vector<8x256xf32>
    %41 = arith.mulf %40, %39 : vector<8x256xf32>
    %42 = vector.extract_strided_slice %6 {offsets = [8, 0], sizes = [1, 256], strides = [1, 1]} : vector<9x256xf32> to vector<1x256xf32>
    %c239_i32 = arith.constant 239 : i32
    %43 = tpu.dynamic_rotate %9 by %c239_i32 dim 1 : vector<8x256xf32>, i32 -> vector<8x256xf32>
    %44 = vector.broadcast %42 : vector<1x256xf32> to vector<8x256xf32>
    %45 = arith.mulf %44, %43 : vector<8x256xf32>
    %46 = tpu.concatenate %17, %21, %25, %29, %9, %33, %37, %41, %45 in 0 : vector<8x256xf32>, vector<8x256xf32>, vector<8x256xf32>, vector<8x256xf32>, vector<8x256xf32>, vector<8x256xf32>, vector<8x256xf32>, vector<8x256xf32>, vector<8x256xf32> -> vector<72x256xf32>
    %47 = arith.truncf %46 : vector<72x256xf32> to vector<72x256xbf16>
    %c0_20 = arith.constant 0 : index
    %c0_21 = arith.constant 0 : index
    %48 = vector.load %arg9[%c0_20, %c0_21] : memref<16x72xbf16, #tpu.memory_space<vmem>>, vector<16x72xbf16>
    %cst_22 = arith.constant dense<0.000000e+00> : vector<16x256xf32>
    %49 = tpu.matmul %48, %47, %cst_22 {dimension_numbers = #tpu.dot_dimension_numbers<[1], [0], [0], [1], [0, 0, 1, 1], [], []>} : vector<16x72xbf16>, vector<72x256xbf16>, vector<16x256xf32> -> vector<16x256xf32>
    %c0_23 = arith.constant 0 : index
    %c0_24 = arith.constant 0 : index
    %50 = vector.load %arg10[%c0_23, %c0_24] : memref<16x1xf32, #tpu.memory_space<vmem>>, vector<16x1xf32>
    %51 = vector.broadcast %50 : vector<16x1xf32> to vector<16x256xf32>
    %52 = arith.addf %49, %51 : vector<16x256xf32>
    %53 = vector.extract_strided_slice %52 {offsets = [0, 0], sizes = [8, 256], strides = [1, 1]} : vector<16x256xf32> to vector<8x256xf32>
    %54 = vector.extract_strided_slice %52 {offsets = [8, 0], sizes = [8, 256], strides = [1, 1]} : vector<16x256xf32> to vector<8x256xf32>
    %55 = arith.mulf %53, %3 : vector<8x256xf32>
    %56 = vector.extract_strided_slice %7 {offsets = [0, 0], sizes = [1, 1024], strides = [1, 1]} : vector<9x1024xf32> to vector<1x1024xf32>
    %c33_i32 = arith.constant 33 : i32
    %57 = tpu.dynamic_rotate %11 by %c33_i32 dim 1 : vector<8x1024xf32>, i32 -> vector<8x1024xf32>
    %58 = vector.broadcast %56 : vector<1x1024xf32> to vector<8x1024xf32>
    %59 = arith.mulf %58, %57 : vector<8x1024xf32>
    %60 = vector.extract_strided_slice %7 {offsets = [1, 0], sizes = [1, 1024], strides = [1, 1]} : vector<9x1024xf32> to vector<1x1024xf32>
    %c32_i32 = arith.constant 32 : i32
    %61 = tpu.dynamic_rotate %11 by %c32_i32 dim 1 : vector<8x1024xf32>, i32 -> vector<8x1024xf32>
    %62 = vector.broadcast %60 : vector<1x1024xf32> to vector<8x1024xf32>
    %63 = arith.mulf %62, %61 : vector<8x1024xf32>
    %64 = vector.extract_strided_slice %7 {offsets = [2, 0], sizes = [1, 1024], strides = [1, 1]} : vector<9x1024xf32> to vector<1x1024xf32>
    %c31_i32 = arith.constant 31 : i32
    %65 = tpu.dynamic_rotate %11 by %c31_i32 dim 1 : vector<8x1024xf32>, i32 -> vector<8x1024xf32>
    %66 = vector.broadcast %64 : vector<1x1024xf32> to vector<8x1024xf32>
    %67 = arith.mulf %66, %65 : vector<8x1024xf32>
    %68 = vector.extract_strided_slice %7 {offsets = [3, 0], sizes = [1, 1024], strides = [1, 1]} : vector<9x1024xf32> to vector<1x1024xf32>
    %c1_i32_25 = arith.constant 1 : i32
    %69 = tpu.dynamic_rotate %11 by %c1_i32_25 dim 1 : vector<8x1024xf32>, i32 -> vector<8x1024xf32>
    %70 = vector.broadcast %68 : vector<1x1024xf32> to vector<8x1024xf32>
    %71 = arith.mulf %70, %69 : vector<8x1024xf32>
    %72 = vector.extract_strided_slice %7 {offsets = [5, 0], sizes = [1, 1024], strides = [1, 1]} : vector<9x1024xf32> to vector<1x1024xf32>
    %c1023_i32 = arith.constant 1023 : i32
    %73 = tpu.dynamic_rotate %11 by %c1023_i32 dim 1 : vector<8x1024xf32>, i32 -> vector<8x1024xf32>
    %74 = vector.broadcast %72 : vector<1x1024xf32> to vector<8x1024xf32>
    %75 = arith.mulf %74, %73 : vector<8x1024xf32>
    %76 = vector.extract_strided_slice %7 {offsets = [6, 0], sizes = [1, 1024], strides = [1, 1]} : vector<9x1024xf32> to vector<1x1024xf32>
    %c993_i32 = arith.constant 993 : i32
    %77 = tpu.dynamic_rotate %11 by %c993_i32 dim 1 : vector<8x1024xf32>, i32 -> vector<8x1024xf32>
    %78 = vector.broadcast %76 : vector<1x1024xf32> to vector<8x1024xf32>
    %79 = arith.mulf %78, %77 : vector<8x1024xf32>
    %80 = vector.extract_strided_slice %7 {offsets = [7, 0], sizes = [1, 1024], strides = [1, 1]} : vector<9x1024xf32> to vector<1x1024xf32>
    %c992_i32 = arith.constant 992 : i32
    %81 = tpu.dynamic_rotate %11 by %c992_i32 dim 1 : vector<8x1024xf32>, i32 -> vector<8x1024xf32>
    %82 = vector.broadcast %80 : vector<1x1024xf32> to vector<8x1024xf32>
    %83 = arith.mulf %82, %81 : vector<8x1024xf32>
    %84 = vector.extract_strided_slice %7 {offsets = [8, 0], sizes = [1, 1024], strides = [1, 1]} : vector<9x1024xf32> to vector<1x1024xf32>
    %c991_i32 = arith.constant 991 : i32
    %85 = tpu.dynamic_rotate %11 by %c991_i32 dim 1 : vector<8x1024xf32>, i32 -> vector<8x1024xf32>
    %86 = vector.broadcast %84 : vector<1x1024xf32> to vector<8x1024xf32>
    %87 = arith.mulf %86, %85 : vector<8x1024xf32>
    %88 = tpu.concatenate %59, %63, %67, %71, %11, %75, %79, %83, %87 in 0 : vector<8x1024xf32>, vector<8x1024xf32>, vector<8x1024xf32>, vector<8x1024xf32>, vector<8x1024xf32>, vector<8x1024xf32>, vector<8x1024xf32>, vector<8x1024xf32>, vector<8x1024xf32> -> vector<72x1024xf32>
    %89 = arith.truncf %88 : vector<72x1024xf32> to vector<72x1024xbf16>
    %c0_26 = arith.constant 0 : index
    %c0_27 = arith.constant 0 : index
    %90 = vector.load %arg11[%c0_26, %c0_27] : memref<8x72xbf16, #tpu.memory_space<vmem>>, vector<8x72xbf16>
    %cst_28 = arith.constant dense<0.000000e+00> : vector<8x1024xf32>
    %91 = tpu.matmul %90, %89, %cst_28 {dimension_numbers = #tpu.dot_dimension_numbers<[1], [0], [0], [1], [0, 0, 1, 1], [], []>} : vector<8x72xbf16>, vector<72x1024xbf16>, vector<8x1024xf32> -> vector<8x1024xf32>
    %c0_29 = arith.constant 0 : index
    %c0_30 = arith.constant 0 : index
    %92 = vector.load %arg12[%c0_29, %c0_30] : memref<8x1xf32, #tpu.memory_space<vmem>>, vector<8x1xf32>
    %93 = vector.broadcast %92 : vector<8x1xf32> to vector<8x1024xf32>
    %94 = arith.addf %91, %93 : vector<8x1024xf32>
    %95 = vector.extract_strided_slice %7 {offsets = [0, 0], sizes = [1, 1024], strides = [1, 1]} : vector<9x1024xf32> to vector<1x1024xf32>
    %c33_i32_31 = arith.constant 33 : i32
    %96 = tpu.dynamic_rotate %13 by %c33_i32_31 dim 1 : vector<8x1024xf32>, i32 -> vector<8x1024xf32>
    %97 = vector.broadcast %95 : vector<1x1024xf32> to vector<8x1024xf32>
    %98 = arith.mulf %97, %96 : vector<8x1024xf32>
    %99 = vector.extract_strided_slice %7 {offsets = [1, 0], sizes = [1, 1024], strides = [1, 1]} : vector<9x1024xf32> to vector<1x1024xf32>
    %c32_i32_32 = arith.constant 32 : i32
    %100 = tpu.dynamic_rotate %13 by %c32_i32_32 dim 1 : vector<8x1024xf32>, i32 -> vector<8x1024xf32>
    %101 = vector.broadcast %99 : vector<1x1024xf32> to vector<8x1024xf32>
    %102 = arith.mulf %101, %100 : vector<8x1024xf32>
    %103 = vector.extract_strided_slice %7 {offsets = [2, 0], sizes = [1, 1024], strides = [1, 1]} : vector<9x1024xf32> to vector<1x1024xf32>
    %c31_i32_33 = arith.constant 31 : i32
    %104 = tpu.dynamic_rotate %13 by %c31_i32_33 dim 1 : vector<8x1024xf32>, i32 -> vector<8x1024xf32>
    %105 = vector.broadcast %103 : vector<1x1024xf32> to vector<8x1024xf32>
    %106 = arith.mulf %105, %104 : vector<8x1024xf32>
    %107 = vector.extract_strided_slice %7 {offsets = [3, 0], sizes = [1, 1024], strides = [1, 1]} : vector<9x1024xf32> to vector<1x1024xf32>
    %c1_i32_34 = arith.constant 1 : i32
    %108 = tpu.dynamic_rotate %13 by %c1_i32_34 dim 1 : vector<8x1024xf32>, i32 -> vector<8x1024xf32>
    %109 = vector.broadcast %107 : vector<1x1024xf32> to vector<8x1024xf32>
    %110 = arith.mulf %109, %108 : vector<8x1024xf32>
    %111 = vector.extract_strided_slice %7 {offsets = [5, 0], sizes = [1, 1024], strides = [1, 1]} : vector<9x1024xf32> to vector<1x1024xf32>
    %c1023_i32_35 = arith.constant 1023 : i32
    %112 = tpu.dynamic_rotate %13 by %c1023_i32_35 dim 1 : vector<8x1024xf32>, i32 -> vector<8x1024xf32>
    %113 = vector.broadcast %111 : vector<1x1024xf32> to vector<8x1024xf32>
    %114 = arith.mulf %113, %112 : vector<8x1024xf32>
    %115 = vector.extract_strided_slice %7 {offsets = [6, 0], sizes = [1, 1024], strides = [1, 1]} : vector<9x1024xf32> to vector<1x1024xf32>
    %c993_i32_36 = arith.constant 993 : i32
    %116 = tpu.dynamic_rotate %13 by %c993_i32_36 dim 1 : vector<8x1024xf32>, i32 -> vector<8x1024xf32>
    %117 = vector.broadcast %115 : vector<1x1024xf32> to vector<8x1024xf32>
    %118 = arith.mulf %117, %116 : vector<8x1024xf32>
    %119 = vector.extract_strided_slice %7 {offsets = [7, 0], sizes = [1, 1024], strides = [1, 1]} : vector<9x1024xf32> to vector<1x1024xf32>
    %c992_i32_37 = arith.constant 992 : i32
    %120 = tpu.dynamic_rotate %13 by %c992_i32_37 dim 1 : vector<8x1024xf32>, i32 -> vector<8x1024xf32>
    %121 = vector.broadcast %119 : vector<1x1024xf32> to vector<8x1024xf32>
    %122 = arith.mulf %121, %120 : vector<8x1024xf32>
    %123 = vector.extract_strided_slice %7 {offsets = [8, 0], sizes = [1, 1024], strides = [1, 1]} : vector<9x1024xf32> to vector<1x1024xf32>
    %c991_i32_38 = arith.constant 991 : i32
    %124 = tpu.dynamic_rotate %13 by %c991_i32_38 dim 1 : vector<8x1024xf32>, i32 -> vector<8x1024xf32>
    %125 = vector.broadcast %123 : vector<1x1024xf32> to vector<8x1024xf32>
    %126 = arith.mulf %125, %124 : vector<8x1024xf32>
    %127 = tpu.concatenate %98, %102, %106, %110, %13, %114, %118, %122, %126 in 0 : vector<8x1024xf32>, vector<8x1024xf32>, vector<8x1024xf32>, vector<8x1024xf32>, vector<8x1024xf32>, vector<8x1024xf32>, vector<8x1024xf32>, vector<8x1024xf32>, vector<8x1024xf32> -> vector<72x1024xf32>
    %128 = arith.truncf %127 : vector<72x1024xf32> to vector<72x1024xbf16>
    %c0_39 = arith.constant 0 : index
    %c0_40 = arith.constant 0 : index
    %129 = vector.load %arg13[%c0_39, %c0_40] : memref<8x72xbf16, #tpu.memory_space<vmem>>, vector<8x72xbf16>
    %cst_41 = arith.constant dense<0.000000e+00> : vector<8x1024xf32>
    %130 = tpu.matmul %129, %128, %cst_41 {dimension_numbers = #tpu.dot_dimension_numbers<[1], [0], [0], [1], [0, 0, 1, 1], [], []>} : vector<8x72xbf16>, vector<72x1024xbf16>, vector<8x1024xf32> -> vector<8x1024xf32>
    %c0_42 = arith.constant 0 : index
    %c0_43 = arith.constant 0 : index
    %131 = vector.load %arg14[%c0_42, %c0_43] : memref<8x1xf32, #tpu.memory_space<vmem>>, vector<8x1xf32>
    %132 = vector.broadcast %131 : vector<8x1xf32> to vector<8x1024xf32>
    %133 = arith.addf %130, %132 : vector<8x1024xf32>
    %134 = arith.mulf %94, %133 : vector<8x1024xf32>
    %135 = arith.mulf %134, %5 : vector<8x1024xf32>
    %136 = vector.extract_strided_slice %6 {offsets = [0, 0], sizes = [1, 256], strides = [1, 1]} : vector<9x256xf32> to vector<1x256xf32>
    %c17_i32_44 = arith.constant 17 : i32
    %137 = tpu.dynamic_rotate %55 by %c17_i32_44 dim 1 : vector<8x256xf32>, i32 -> vector<8x256xf32>
    %138 = vector.broadcast %136 : vector<1x256xf32> to vector<8x256xf32>
    %139 = arith.mulf %138, %137 : vector<8x256xf32>
    %c17_i32_45 = arith.constant 17 : i32
    %140 = tpu.dynamic_rotate %54 by %c17_i32_45 dim 1 : vector<8x256xf32>, i32 -> vector<8x256xf32>
    %141 = vector.broadcast %136 : vector<1x256xf32> to vector<8x256xf32>
    %142 = arith.mulf %141, %140 : vector<8x256xf32>
    %143 = vector.extract_strided_slice %6 {offsets = [1, 0], sizes = [1, 256], strides = [1, 1]} : vector<9x256xf32> to vector<1x256xf32>
    %c16_i32_46 = arith.constant 16 : i32
    %144 = tpu.dynamic_rotate %55 by %c16_i32_46 dim 1 : vector<8x256xf32>, i32 -> vector<8x256xf32>
    %145 = vector.broadcast %143 : vector<1x256xf32> to vector<8x256xf32>
    %146 = arith.mulf %145, %144 : vector<8x256xf32>
    %c16_i32_47 = arith.constant 16 : i32
    %147 = tpu.dynamic_rotate %54 by %c16_i32_47 dim 1 : vector<8x256xf32>, i32 -> vector<8x256xf32>
    %148 = vector.broadcast %143 : vector<1x256xf32> to vector<8x256xf32>
    %149 = arith.mulf %148, %147 : vector<8x256xf32>
    %150 = vector.extract_strided_slice %6 {offsets = [2, 0], sizes = [1, 256], strides = [1, 1]} : vector<9x256xf32> to vector<1x256xf32>
    %c15_i32_48 = arith.constant 15 : i32
    %151 = tpu.dynamic_rotate %55 by %c15_i32_48 dim 1 : vector<8x256xf32>, i32 -> vector<8x256xf32>
    %152 = vector.broadcast %150 : vector<1x256xf32> to vector<8x256xf32>
    %153 = arith.mulf %152, %151 : vector<8x256xf32>
    %c15_i32_49 = arith.constant 15 : i32
    %154 = tpu.dynamic_rotate %54 by %c15_i32_49 dim 1 : vector<8x256xf32>, i32 -> vector<8x256xf32>
    %155 = vector.broadcast %150 : vector<1x256xf32> to vector<8x256xf32>
    %156 = arith.mulf %155, %154 : vector<8x256xf32>
    %157 = vector.extract_strided_slice %6 {offsets = [3, 0], sizes = [1, 256], strides = [1, 1]} : vector<9x256xf32> to vector<1x256xf32>
    %c1_i32_50 = arith.constant 1 : i32
    %158 = tpu.dynamic_rotate %55 by %c1_i32_50 dim 1 : vector<8x256xf32>, i32 -> vector<8x256xf32>
    %159 = vector.broadcast %157 : vector<1x256xf32> to vector<8x256xf32>
    %160 = arith.mulf %159, %158 : vector<8x256xf32>
    %c1_i32_51 = arith.constant 1 : i32
    %161 = tpu.dynamic_rotate %54 by %c1_i32_51 dim 1 : vector<8x256xf32>, i32 -> vector<8x256xf32>
    %162 = vector.broadcast %157 : vector<1x256xf32> to vector<8x256xf32>
    %163 = arith.mulf %162, %161 : vector<8x256xf32>
    %164 = vector.extract_strided_slice %6 {offsets = [5, 0], sizes = [1, 256], strides = [1, 1]} : vector<9x256xf32> to vector<1x256xf32>
    %c255_i32_52 = arith.constant 255 : i32
    %165 = tpu.dynamic_rotate %55 by %c255_i32_52 dim 1 : vector<8x256xf32>, i32 -> vector<8x256xf32>
    %166 = vector.broadcast %164 : vector<1x256xf32> to vector<8x256xf32>
    %167 = arith.mulf %166, %165 : vector<8x256xf32>
    %c255_i32_53 = arith.constant 255 : i32
    %168 = tpu.dynamic_rotate %54 by %c255_i32_53 dim 1 : vector<8x256xf32>, i32 -> vector<8x256xf32>
    %169 = vector.broadcast %164 : vector<1x256xf32> to vector<8x256xf32>
    %170 = arith.mulf %169, %168 : vector<8x256xf32>
    %171 = vector.extract_strided_slice %6 {offsets = [6, 0], sizes = [1, 256], strides = [1, 1]} : vector<9x256xf32> to vector<1x256xf32>
    %c241_i32_54 = arith.constant 241 : i32
    %172 = tpu.dynamic_rotate %55 by %c241_i32_54 dim 1 : vector<8x256xf32>, i32 -> vector<8x256xf32>
    %173 = vector.broadcast %171 : vector<1x256xf32> to vector<8x256xf32>
    %174 = arith.mulf %173, %172 : vector<8x256xf32>
    %c241_i32_55 = arith.constant 241 : i32
    %175 = tpu.dynamic_rotate %54 by %c241_i32_55 dim 1 : vector<8x256xf32>, i32 -> vector<8x256xf32>
    %176 = vector.broadcast %171 : vector<1x256xf32> to vector<8x256xf32>
    %177 = arith.mulf %176, %175 : vector<8x256xf32>
    %178 = vector.extract_strided_slice %6 {offsets = [7, 0], sizes = [1, 256], strides = [1, 1]} : vector<9x256xf32> to vector<1x256xf32>
    %c240_i32_56 = arith.constant 240 : i32
    %179 = tpu.dynamic_rotate %55 by %c240_i32_56 dim 1 : vector<8x256xf32>, i32 -> vector<8x256xf32>
    %180 = vector.broadcast %178 : vector<1x256xf32> to vector<8x256xf32>
    %181 = arith.mulf %180, %179 : vector<8x256xf32>
    %c240_i32_57 = arith.constant 240 : i32
    %182 = tpu.dynamic_rotate %54 by %c240_i32_57 dim 1 : vector<8x256xf32>, i32 -> vector<8x256xf32>
    %183 = vector.broadcast %178 : vector<1x256xf32> to vector<8x256xf32>
    %184 = arith.mulf %183, %182 : vector<8x256xf32>
    %185 = vector.extract_strided_slice %6 {offsets = [8, 0], sizes = [1, 256], strides = [1, 1]} : vector<9x256xf32> to vector<1x256xf32>
    %c239_i32_58 = arith.constant 239 : i32
    %186 = tpu.dynamic_rotate %55 by %c239_i32_58 dim 1 : vector<8x256xf32>, i32 -> vector<8x256xf32>
    %187 = vector.broadcast %185 : vector<1x256xf32> to vector<8x256xf32>
    %188 = arith.mulf %187, %186 : vector<8x256xf32>
    %c239_i32_59 = arith.constant 239 : i32
    %189 = tpu.dynamic_rotate %54 by %c239_i32_59 dim 1 : vector<8x256xf32>, i32 -> vector<8x256xf32>
    %190 = vector.broadcast %185 : vector<1x256xf32> to vector<8x256xf32>
    %191 = arith.mulf %190, %189 : vector<8x256xf32>
    %192 = tpu.concatenate %139, %142, %146, %149, %153, %156, %160, %163, %55, %54, %167, %170, %174, %177, %181, %184 in 0 : vector<8x256xf32>, vector<8x256xf32>, vector<8x256xf32>, vector<8x256xf32>, vector<8x256xf32>, vector<8x256xf32>, vector<8x256xf32>, vector<8x256xf32>, vector<8x256xf32>, vector<8x256xf32>, vector<8x256xf32>, vector<8x256xf32>, vector<8x256xf32>, vector<8x256xf32>, vector<8x256xf32>, vector<8x256xf32> -> vector<128x256xf32>
    %193 = tpu.concatenate %188, %191 in 0 : vector<8x256xf32>, vector<8x256xf32> -> vector<16x256xf32>
    %194 = tpu.concatenate %192, %193 in 0 : vector<128x256xf32>, vector<16x256xf32> -> vector<144x256xf32>
    %195 = arith.truncf %194 : vector<144x256xf32> to vector<144x256xbf16>
    %c0_60 = arith.constant 0 : index
    %c0_61 = arith.constant 0 : index
    %196 = vector.load %arg15[%c0_60, %c0_61] : memref<16x144xbf16, #tpu.memory_space<vmem>>, vector<16x144xbf16>
    %cst_62 = arith.constant dense<0.000000e+00> : vector<16x256xf32>
    %197 = tpu.matmul %196, %195, %cst_62 {dimension_numbers = #tpu.dot_dimension_numbers<[1], [0], [0], [1], [0, 0, 1, 1], [], []>} : vector<16x144xbf16>, vector<144x256xbf16>, vector<16x256xf32> -> vector<16x256xf32>
    %c0_63 = arith.constant 0 : index
    %c0_64 = arith.constant 0 : index
    %198 = vector.load %arg16[%c0_63, %c0_64] : memref<16x1xf32, #tpu.memory_space<vmem>>, vector<16x1xf32>
    %199 = vector.broadcast %198 : vector<16x1xf32> to vector<16x256xf32>
    %200 = arith.addf %197, %199 : vector<16x256xf32>
    %c0_65 = arith.constant 0 : index
    %c0_66 = arith.constant 0 : index
    %201 = vector.load %arg7[%c0_65, %c0_66] : memref<256x1024xf32, #tpu.memory_space<vmem>>, vector<256x1024xf32>
    %cst_67 = arith.constant dense<0.000000e+00> : vector<16x1024xf32>
    %202 = tpu.matmul %200, %201, %cst_67 {dimension_numbers = #tpu.dot_dimension_numbers<[1], [0], [0], [1], [0, 0, 1, 1], [], []>} : vector<16x256xf32>, vector<256x1024xf32>, vector<16x1024xf32> -> vector<16x1024xf32>
    %203 = vector.extract_strided_slice %7 {offsets = [0, 0], sizes = [1, 1024], strides = [1, 1]} : vector<9x1024xf32> to vector<1x1024xf32>
    %c33_i32_68 = arith.constant 33 : i32
    %204 = tpu.dynamic_rotate %202 by %c33_i32_68 dim 1 : vector<16x1024xf32>, i32 -> vector<16x1024xf32>
    %205 = vector.broadcast %203 : vector<1x1024xf32> to vector<16x1024xf32>
    %206 = arith.mulf %205, %204 : vector<16x1024xf32>
    %207 = vector.extract_strided_slice %7 {offsets = [1, 0], sizes = [1, 1024], strides = [1, 1]} : vector<9x1024xf32> to vector<1x1024xf32>
    %c32_i32_69 = arith.constant 32 : i32
    %208 = tpu.dynamic_rotate %202 by %c32_i32_69 dim 1 : vector<16x1024xf32>, i32 -> vector<16x1024xf32>
    %209 = vector.broadcast %207 : vector<1x1024xf32> to vector<16x1024xf32>
    %210 = arith.mulf %209, %208 : vector<16x1024xf32>
    %211 = vector.extract_strided_slice %7 {offsets = [2, 0], sizes = [1, 1024], strides = [1, 1]} : vector<9x1024xf32> to vector<1x1024xf32>
    %c31_i32_70 = arith.constant 31 : i32
    %212 = tpu.dynamic_rotate %202 by %c31_i32_70 dim 1 : vector<16x1024xf32>, i32 -> vector<16x1024xf32>
    %213 = vector.broadcast %211 : vector<1x1024xf32> to vector<16x1024xf32>
    %214 = arith.mulf %213, %212 : vector<16x1024xf32>
    %215 = vector.extract_strided_slice %7 {offsets = [3, 0], sizes = [1, 1024], strides = [1, 1]} : vector<9x1024xf32> to vector<1x1024xf32>
    %c1_i32_71 = arith.constant 1 : i32
    %216 = tpu.dynamic_rotate %202 by %c1_i32_71 dim 1 : vector<16x1024xf32>, i32 -> vector<16x1024xf32>
    %217 = vector.broadcast %215 : vector<1x1024xf32> to vector<16x1024xf32>
    %218 = arith.mulf %217, %216 : vector<16x1024xf32>
    %219 = vector.extract_strided_slice %7 {offsets = [5, 0], sizes = [1, 1024], strides = [1, 1]} : vector<9x1024xf32> to vector<1x1024xf32>
    %c1023_i32_72 = arith.constant 1023 : i32
    %220 = tpu.dynamic_rotate %202 by %c1023_i32_72 dim 1 : vector<16x1024xf32>, i32 -> vector<16x1024xf32>
    %221 = vector.broadcast %219 : vector<1x1024xf32> to vector<16x1024xf32>
    %222 = arith.mulf %221, %220 : vector<16x1024xf32>
    %223 = vector.extract_strided_slice %7 {offsets = [6, 0], sizes = [1, 1024], strides = [1, 1]} : vector<9x1024xf32> to vector<1x1024xf32>
    %c993_i32_73 = arith.constant 993 : i32
    %224 = tpu.dynamic_rotate %202 by %c993_i32_73 dim 1 : vector<16x1024xf32>, i32 -> vector<16x1024xf32>
    %225 = vector.broadcast %223 : vector<1x1024xf32> to vector<16x1024xf32>
    %226 = arith.mulf %225, %224 : vector<16x1024xf32>
    %227 = vector.extract_strided_slice %7 {offsets = [7, 0], sizes = [1, 1024], strides = [1, 1]} : vector<9x1024xf32> to vector<1x1024xf32>
    %c992_i32_74 = arith.constant 992 : i32
    %228 = tpu.dynamic_rotate %202 by %c992_i32_74 dim 1 : vector<16x1024xf32>, i32 -> vector<16x1024xf32>
    %229 = vector.broadcast %227 : vector<1x1024xf32> to vector<16x1024xf32>
    %230 = arith.mulf %229, %228 : vector<16x1024xf32>
    %231 = vector.extract_strided_slice %7 {offsets = [8, 0], sizes = [1, 1024], strides = [1, 1]} : vector<9x1024xf32> to vector<1x1024xf32>
    %c991_i32_75 = arith.constant 991 : i32
    %232 = tpu.dynamic_rotate %202 by %c991_i32_75 dim 1 : vector<16x1024xf32>, i32 -> vector<16x1024xf32>
    %233 = vector.broadcast %231 : vector<1x1024xf32> to vector<16x1024xf32>
    %234 = arith.mulf %233, %232 : vector<16x1024xf32>
    %235 = tpu.concatenate %206, %210, %214, %218, %202, %222, %226, %230, %234 in 0 : vector<16x1024xf32>, vector<16x1024xf32>, vector<16x1024xf32>, vector<16x1024xf32>, vector<16x1024xf32>, vector<16x1024xf32>, vector<16x1024xf32>, vector<16x1024xf32>, vector<16x1024xf32> -> vector<144x1024xf32>
    %236 = arith.truncf %235 : vector<144x1024xf32> to vector<144x1024xbf16>
    %c0_76 = arith.constant 0 : index
    %c0_77 = arith.constant 0 : index
    %237 = vector.load %arg17[%c0_76, %c0_77] : memref<16x144xbf16, #tpu.memory_space<vmem>>, vector<16x144xbf16>
    %cst_78 = arith.constant dense<0.000000e+00> : vector<16x1024xf32>
    %238 = tpu.matmul %237, %236, %cst_78 {dimension_numbers = #tpu.dot_dimension_numbers<[1], [0], [0], [1], [0, 0, 1, 1], [], []>} : vector<16x144xbf16>, vector<144x1024xbf16>, vector<16x1024xf32> -> vector<16x1024xf32>
    %c0_79 = arith.constant 0 : index
    %c0_80 = arith.constant 0 : index
    %239 = vector.load %arg18[%c0_79, %c0_80] : memref<16x1xf32, #tpu.memory_space<vmem>>, vector<16x1xf32>
    %240 = vector.broadcast %239 : vector<16x1xf32> to vector<16x1024xf32>
    %241 = arith.addf %238, %240 : vector<16x1024xf32>
    %242 = vector.extract_strided_slice %7 {offsets = [0, 0], sizes = [1, 1024], strides = [1, 1]} : vector<9x1024xf32> to vector<1x1024xf32>
    %c33_i32_81 = arith.constant 33 : i32
    %243 = tpu.dynamic_rotate %135 by %c33_i32_81 dim 1 : vector<8x1024xf32>, i32 -> vector<8x1024xf32>
    %244 = vector.broadcast %242 : vector<1x1024xf32> to vector<8x1024xf32>
    %245 = arith.mulf %244, %243 : vector<8x1024xf32>
    %c33_i32_82 = arith.constant 33 : i32
    %246 = tpu.dynamic_rotate %241 by %c33_i32_82 dim 1 : vector<16x1024xf32>, i32 -> vector<16x1024xf32>
    %247 = vector.broadcast %242 : vector<1x1024xf32> to vector<16x1024xf32>
    %248 = arith.mulf %247, %246 : vector<16x1024xf32>
    %249 = vector.extract_strided_slice %7 {offsets = [1, 0], sizes = [1, 1024], strides = [1, 1]} : vector<9x1024xf32> to vector<1x1024xf32>
    %c32_i32_83 = arith.constant 32 : i32
    %250 = tpu.dynamic_rotate %135 by %c32_i32_83 dim 1 : vector<8x1024xf32>, i32 -> vector<8x1024xf32>
    %251 = vector.broadcast %249 : vector<1x1024xf32> to vector<8x1024xf32>
    %252 = arith.mulf %251, %250 : vector<8x1024xf32>
    %c32_i32_84 = arith.constant 32 : i32
    %253 = tpu.dynamic_rotate %241 by %c32_i32_84 dim 1 : vector<16x1024xf32>, i32 -> vector<16x1024xf32>
    %254 = vector.broadcast %249 : vector<1x1024xf32> to vector<16x1024xf32>
    %255 = arith.mulf %254, %253 : vector<16x1024xf32>
    %256 = vector.extract_strided_slice %7 {offsets = [2, 0], sizes = [1, 1024], strides = [1, 1]} : vector<9x1024xf32> to vector<1x1024xf32>
    %c31_i32_85 = arith.constant 31 : i32
    %257 = tpu.dynamic_rotate %135 by %c31_i32_85 dim 1 : vector<8x1024xf32>, i32 -> vector<8x1024xf32>
    %258 = vector.broadcast %256 : vector<1x1024xf32> to vector<8x1024xf32>
    %259 = arith.mulf %258, %257 : vector<8x1024xf32>
    %c31_i32_86 = arith.constant 31 : i32
    %260 = tpu.dynamic_rotate %241 by %c31_i32_86 dim 1 : vector<16x1024xf32>, i32 -> vector<16x1024xf32>
    %261 = vector.broadcast %256 : vector<1x1024xf32> to vector<16x1024xf32>
    %262 = arith.mulf %261, %260 : vector<16x1024xf32>
    %263 = vector.extract_strided_slice %7 {offsets = [3, 0], sizes = [1, 1024], strides = [1, 1]} : vector<9x1024xf32> to vector<1x1024xf32>
    %c1_i32_87 = arith.constant 1 : i32
    %264 = tpu.dynamic_rotate %135 by %c1_i32_87 dim 1 : vector<8x1024xf32>, i32 -> vector<8x1024xf32>
    %265 = vector.broadcast %263 : vector<1x1024xf32> to vector<8x1024xf32>
    %266 = arith.mulf %265, %264 : vector<8x1024xf32>
    %c1_i32_88 = arith.constant 1 : i32
    %267 = tpu.dynamic_rotate %241 by %c1_i32_88 dim 1 : vector<16x1024xf32>, i32 -> vector<16x1024xf32>
    %268 = vector.broadcast %263 : vector<1x1024xf32> to vector<16x1024xf32>
    %269 = arith.mulf %268, %267 : vector<16x1024xf32>
    %270 = vector.extract_strided_slice %7 {offsets = [5, 0], sizes = [1, 1024], strides = [1, 1]} : vector<9x1024xf32> to vector<1x1024xf32>
    %c1023_i32_89 = arith.constant 1023 : i32
    %271 = tpu.dynamic_rotate %135 by %c1023_i32_89 dim 1 : vector<8x1024xf32>, i32 -> vector<8x1024xf32>
    %272 = vector.broadcast %270 : vector<1x1024xf32> to vector<8x1024xf32>
    %273 = arith.mulf %272, %271 : vector<8x1024xf32>
    %c1023_i32_90 = arith.constant 1023 : i32
    %274 = tpu.dynamic_rotate %241 by %c1023_i32_90 dim 1 : vector<16x1024xf32>, i32 -> vector<16x1024xf32>
    %275 = vector.broadcast %270 : vector<1x1024xf32> to vector<16x1024xf32>
    %276 = arith.mulf %275, %274 : vector<16x1024xf32>
    %277 = vector.extract_strided_slice %7 {offsets = [6, 0], sizes = [1, 1024], strides = [1, 1]} : vector<9x1024xf32> to vector<1x1024xf32>
    %c993_i32_91 = arith.constant 993 : i32
    %278 = tpu.dynamic_rotate %135 by %c993_i32_91 dim 1 : vector<8x1024xf32>, i32 -> vector<8x1024xf32>
    %279 = vector.broadcast %277 : vector<1x1024xf32> to vector<8x1024xf32>
    %280 = arith.mulf %279, %278 : vector<8x1024xf32>
    %c993_i32_92 = arith.constant 993 : i32
    %281 = tpu.dynamic_rotate %241 by %c993_i32_92 dim 1 : vector<16x1024xf32>, i32 -> vector<16x1024xf32>
    %282 = vector.broadcast %277 : vector<1x1024xf32> to vector<16x1024xf32>
    %283 = arith.mulf %282, %281 : vector<16x1024xf32>
    %284 = vector.extract_strided_slice %7 {offsets = [7, 0], sizes = [1, 1024], strides = [1, 1]} : vector<9x1024xf32> to vector<1x1024xf32>
    %c992_i32_93 = arith.constant 992 : i32
    %285 = tpu.dynamic_rotate %135 by %c992_i32_93 dim 1 : vector<8x1024xf32>, i32 -> vector<8x1024xf32>
    %286 = vector.broadcast %284 : vector<1x1024xf32> to vector<8x1024xf32>
    %287 = arith.mulf %286, %285 : vector<8x1024xf32>
    %c992_i32_94 = arith.constant 992 : i32
    %288 = tpu.dynamic_rotate %241 by %c992_i32_94 dim 1 : vector<16x1024xf32>, i32 -> vector<16x1024xf32>
    %289 = vector.broadcast %284 : vector<1x1024xf32> to vector<16x1024xf32>
    %290 = arith.mulf %289, %288 : vector<16x1024xf32>
    %291 = vector.extract_strided_slice %7 {offsets = [8, 0], sizes = [1, 1024], strides = [1, 1]} : vector<9x1024xf32> to vector<1x1024xf32>
    %c991_i32_95 = arith.constant 991 : i32
    %292 = tpu.dynamic_rotate %135 by %c991_i32_95 dim 1 : vector<8x1024xf32>, i32 -> vector<8x1024xf32>
    %293 = vector.broadcast %291 : vector<1x1024xf32> to vector<8x1024xf32>
    %294 = arith.mulf %293, %292 : vector<8x1024xf32>
    %c991_i32_96 = arith.constant 991 : i32
    %295 = tpu.dynamic_rotate %241 by %c991_i32_96 dim 1 : vector<16x1024xf32>, i32 -> vector<16x1024xf32>
    %296 = vector.broadcast %291 : vector<1x1024xf32> to vector<16x1024xf32>
    %297 = arith.mulf %296, %295 : vector<16x1024xf32>
    %298 = tpu.concatenate %245, %248, %252, %255, %259, %262, %266, %269, %135, %241, %273, %276, %280, %283, %287, %290 in 0 : vector<8x1024xf32>, vector<16x1024xf32>, vector<8x1024xf32>, vector<16x1024xf32>, vector<8x1024xf32>, vector<16x1024xf32>, vector<8x1024xf32>, vector<16x1024xf32>, vector<8x1024xf32>, vector<16x1024xf32>, vector<8x1024xf32>, vector<16x1024xf32>, vector<8x1024xf32>, vector<16x1024xf32>, vector<8x1024xf32>, vector<16x1024xf32> -> vector<192x1024xf32>
    %299 = tpu.concatenate %294, %297 in 0 : vector<8x1024xf32>, vector<16x1024xf32> -> vector<24x1024xf32>
    %300 = tpu.concatenate %298, %299 in 0 : vector<192x1024xf32>, vector<24x1024xf32> -> vector<216x1024xf32>
    %301 = arith.truncf %300 : vector<216x1024xf32> to vector<216x1024xbf16>
    %c0_97 = arith.constant 0 : index
    %c0_98 = arith.constant 0 : index
    %302 = vector.load %arg19[%c0_97, %c0_98] : memref<24x216xbf16, #tpu.memory_space<vmem>>, vector<24x216xbf16>
    %cst_99 = arith.constant dense<0.000000e+00> : vector<24x1024xf32>
    %303 = tpu.matmul %302, %301, %cst_99 {dimension_numbers = #tpu.dot_dimension_numbers<[1], [0], [0], [1], [0, 0, 1, 1], [], []>} : vector<24x216xbf16>, vector<216x1024xbf16>, vector<24x1024xf32> -> vector<24x1024xf32>
    %c0_100 = arith.constant 0 : index
    %c0_101 = arith.constant 0 : index
    %304 = vector.load %arg20[%c0_100, %c0_101] : memref<24x1xf32, #tpu.memory_space<vmem>>, vector<24x1xf32>
    %305 = vector.broadcast %304 : vector<24x1xf32> to vector<24x1024xf32>
    %306 = arith.addf %303, %305 : vector<24x1024xf32>
    %307 = vector.extract_strided_slice %7 {offsets = [0, 0], sizes = [1, 1024], strides = [1, 1]} : vector<9x1024xf32> to vector<1x1024xf32>
    %c33_i32_102 = arith.constant 33 : i32
    %308 = tpu.dynamic_rotate %306 by %c33_i32_102 dim 1 : vector<24x1024xf32>, i32 -> vector<24x1024xf32>
    %309 = vector.broadcast %307 : vector<1x1024xf32> to vector<24x1024xf32>
    %310 = arith.mulf %309, %308 : vector<24x1024xf32>
    %311 = vector.extract_strided_slice %7 {offsets = [1, 0], sizes = [1, 1024], strides = [1, 1]} : vector<9x1024xf32> to vector<1x1024xf32>
    %c32_i32_103 = arith.constant 32 : i32
    %312 = tpu.dynamic_rotate %306 by %c32_i32_103 dim 1 : vector<24x1024xf32>, i32 -> vector<24x1024xf32>
    %313 = vector.broadcast %311 : vector<1x1024xf32> to vector<24x1024xf32>
    %314 = arith.mulf %313, %312 : vector<24x1024xf32>
    %315 = vector.extract_strided_slice %7 {offsets = [2, 0], sizes = [1, 1024], strides = [1, 1]} : vector<9x1024xf32> to vector<1x1024xf32>
    %c31_i32_104 = arith.constant 31 : i32
    %316 = tpu.dynamic_rotate %306 by %c31_i32_104 dim 1 : vector<24x1024xf32>, i32 -> vector<24x1024xf32>
    %317 = vector.broadcast %315 : vector<1x1024xf32> to vector<24x1024xf32>
    %318 = arith.mulf %317, %316 : vector<24x1024xf32>
    %319 = vector.extract_strided_slice %7 {offsets = [3, 0], sizes = [1, 1024], strides = [1, 1]} : vector<9x1024xf32> to vector<1x1024xf32>
    %c1_i32_105 = arith.constant 1 : i32
    %320 = tpu.dynamic_rotate %306 by %c1_i32_105 dim 1 : vector<24x1024xf32>, i32 -> vector<24x1024xf32>
    %321 = vector.broadcast %319 : vector<1x1024xf32> to vector<24x1024xf32>
    %322 = arith.mulf %321, %320 : vector<24x1024xf32>
    %323 = vector.extract_strided_slice %7 {offsets = [5, 0], sizes = [1, 1024], strides = [1, 1]} : vector<9x1024xf32> to vector<1x1024xf32>
    %c1023_i32_106 = arith.constant 1023 : i32
    %324 = tpu.dynamic_rotate %306 by %c1023_i32_106 dim 1 : vector<24x1024xf32>, i32 -> vector<24x1024xf32>
    %325 = vector.broadcast %323 : vector<1x1024xf32> to vector<24x1024xf32>
    %326 = arith.mulf %325, %324 : vector<24x1024xf32>
    %327 = vector.extract_strided_slice %7 {offsets = [6, 0], sizes = [1, 1024], strides = [1, 1]} : vector<9x1024xf32> to vector<1x1024xf32>
    %c993_i32_107 = arith.constant 993 : i32
    %328 = tpu.dynamic_rotate %306 by %c993_i32_107 dim 1 : vector<24x1024xf32>, i32 -> vector<24x1024xf32>
    %329 = vector.broadcast %327 : vector<1x1024xf32> to vector<24x1024xf32>
    %330 = arith.mulf %329, %328 : vector<24x1024xf32>
    %331 = vector.extract_strided_slice %7 {offsets = [7, 0], sizes = [1, 1024], strides = [1, 1]} : vector<9x1024xf32> to vector<1x1024xf32>
    %c992_i32_108 = arith.constant 992 : i32
    %332 = tpu.dynamic_rotate %306 by %c992_i32_108 dim 1 : vector<24x1024xf32>, i32 -> vector<24x1024xf32>
    %333 = vector.broadcast %331 : vector<1x1024xf32> to vector<24x1024xf32>
    %334 = arith.mulf %333, %332 : vector<24x1024xf32>
    %335 = vector.extract_strided_slice %7 {offsets = [8, 0], sizes = [1, 1024], strides = [1, 1]} : vector<9x1024xf32> to vector<1x1024xf32>
    %c991_i32_109 = arith.constant 991 : i32
    %336 = tpu.dynamic_rotate %306 by %c991_i32_109 dim 1 : vector<24x1024xf32>, i32 -> vector<24x1024xf32>
    %337 = vector.broadcast %335 : vector<1x1024xf32> to vector<24x1024xf32>
    %338 = arith.mulf %337, %336 : vector<24x1024xf32>
    %339 = tpu.concatenate %310, %314, %318, %322, %306, %326, %330, %334, %338 in 0 : vector<24x1024xf32>, vector<24x1024xf32>, vector<24x1024xf32>, vector<24x1024xf32>, vector<24x1024xf32>, vector<24x1024xf32>, vector<24x1024xf32>, vector<24x1024xf32>, vector<24x1024xf32> -> vector<216x1024xf32>
    %340 = arith.truncf %339 : vector<216x1024xf32> to vector<216x1024xbf16>
    %c0_110 = arith.constant 0 : index
    %c0_111 = arith.constant 0 : index
    %341 = vector.load %arg21[%c0_110, %c0_111] : memref<24x216xbf16, #tpu.memory_space<vmem>>, vector<24x216xbf16>
    %cst_112 = arith.constant dense<0.000000e+00> : vector<24x1024xf32>
    %342 = tpu.matmul %341, %340, %cst_112 {dimension_numbers = #tpu.dot_dimension_numbers<[1], [0], [0], [1], [0, 0, 1, 1], [], []>} : vector<24x216xbf16>, vector<216x1024xbf16>, vector<24x1024xf32> -> vector<24x1024xf32>
    %c0_113 = arith.constant 0 : index
    %c0_114 = arith.constant 0 : index
    %343 = vector.load %arg22[%c0_113, %c0_114] : memref<24x1xf32, #tpu.memory_space<vmem>>, vector<24x1xf32>
    %344 = vector.broadcast %343 : vector<24x1xf32> to vector<24x1024xf32>
    %345 = arith.addf %342, %344 : vector<24x1024xf32>
    %c0_115 = arith.constant 0 : index
    %c0_116 = arith.constant 0 : index
    %346 = vector.load %arg23[%c0_115, %c0_116] : memref<1x24xf32, #tpu.memory_space<vmem>>, vector<1x24xf32>
    %cst_117 = arith.constant dense<0.000000e+00> : vector<1x1024xf32>
    %347 = tpu.matmul %346, %345, %cst_117 {dimension_numbers = #tpu.dot_dimension_numbers<[1], [0], [0], [1], [0, 0, 1, 1], [], []>} : vector<1x24xf32>, vector<24x1024xf32>, vector<1x1024xf32> -> vector<1x1024xf32>
    %c0_118 = arith.constant 0 : index
    %c0_119 = arith.constant 0 : index
    %348 = vector.load %arg24[%c0_118, %c0_119] : memref<1x1xf32, #tpu.memory_space<vmem>>, vector<1x1xf32>
    %349 = vector.broadcast %348 : vector<1x1xf32> to vector<1x1024xf32>
    %350 = arith.addf %347, %349 : vector<1x1024xf32>
    %c0_120 = arith.constant 0 : index
    %c0_121 = arith.constant 0 : index
    %c0_122 = arith.constant 0 : index
    %351 = vector.load %arg25[%c0_120, %c0_121, %c0_122] : memref<1x1x1024xf32, #tpu.memory_space<vmem>>, vector<1x1x1024xf32>
    %352 = vector.shape_cast %351 : vector<1x1x1024xf32> to vector<1x1024xf32>
    %353 = vector.shape_cast %350 : vector<1x1024xf32> to vector<1x1x1024xf32>
    tpu.vector_store %arg25[%c0_120, %c0_121, %c0_122], %353 {strides = array<i32>} : memref<1x1x1024xf32, #tpu.memory_space<vmem>>, vector<1x1x1024xf32>,
    return
  }
  func.func @transform_0(%arg0: i32) -> (i32, i32, i32) {
    %c0_i32 = arith.constant 0 : i32
    %c0_i32_0 = arith.constant 0 : i32
    %c0_i32_1 = arith.constant 0 : i32
    return %arg0, %c0_i32, %c0_i32_0 : i32, i32, i32
  }
  func.func @transform_1(%arg0: i32) -> (i32, i32, i32) {
    %c0_i32 = arith.constant 0 : i32
    %c0_i32_0 = arith.constant 0 : i32
    %c0_i32_1 = arith.constant 0 : i32
    return %arg0, %c0_i32, %c0_i32_0 : i32, i32, i32
  }
  func.func @transform_2(%arg0: i32) -> (i32, i32, i32) {
    %c0_i32 = arith.constant 0 : i32
    %c0_i32_0 = arith.constant 0 : i32
    %c0_i32_1 = arith.constant 0 : i32
    return %arg0, %c0_i32, %c0_i32_0 : i32, i32, i32
  }
  func.func @transform_3(%arg0: i32) -> (i32, i32) {
    %c0_i32 = arith.constant 0 : i32
    %c0_i32_0 = arith.constant 0 : i32
    %c0_i32_1 = arith.constant 0 : i32
    return %c0_i32, %c0_i32_0 : i32, i32
  }
  func.func @transform_4(%arg0: i32) -> (i32, i32) {
    %c0_i32 = arith.constant 0 : i32
    %c0_i32_0 = arith.constant 0 : i32
    %c0_i32_1 = arith.constant 0 : i32
    return %c0_i32, %c0_i32_0 : i32, i32
  }
  func.func @transform_5(%arg0: i32) -> (i32, i32) {
    %c0_i32 = arith.constant 0 : i32
    %c0_i32_0 = arith.constant 0 : i32
    %c0_i32_1 = arith.constant 0 : i32
    return %c0_i32, %c0_i32_0 : i32, i32
  }
  func.func @transform_6(%arg0: i32) -> (i32, i32) {
    %c0_i32 = arith.constant 0 : i32
    %c0_i32_0 = arith.constant 0 : i32
    %c0_i32_1 = arith.constant 0 : i32
    return %c0_i32, %c0_i32_0 : i32, i32
  }
  func.func @transform_7(%arg0: i32) -> (i32, i32) {
    %c0_i32 = arith.constant 0 : i32
    %c0_i32_0 = arith.constant 0 : i32
    %c0_i32_1 = arith.constant 0 : i32
    return %c0_i32, %c0_i32_0 : i32, i32
  }
  func.func @transform_8(%arg0: i32) -> (i32, i32) {
    %c0_i32 = arith.constant 0 : i32
    %c0_i32_0 = arith.constant 0 : i32
    %c0_i32_1 = arith.constant 0 : i32
    return %c0_i32, %c0_i32_0 : i32, i32
  }
  func.func @transform_9(%arg0: i32) -> (i32, i32) {
    %c0_i32 = arith.constant 0 : i32
    %c0_i32_0 = arith.constant 0 : i32
    %c0_i32_1 = arith.constant 0 : i32
    return %c0_i32, %c0_i32_0 : i32, i32
  }
  func.func @transform_10(%arg0: i32) -> (i32, i32) {
    %c0_i32 = arith.constant 0 : i32
    %c0_i32_0 = arith.constant 0 : i32
    %c0_i32_1 = arith.constant 0 : i32
    return %c0_i32, %c0_i32_0 : i32, i32
  }
  func.func @transform_11(%arg0: i32) -> (i32, i32) {
    %c0_i32 = arith.constant 0 : i32
    %c0_i32_0 = arith.constant 0 : i32
    %c0_i32_1 = arith.constant 0 : i32
    return %c0_i32, %c0_i32_0 : i32, i32
  }
  func.func @transform_12(%arg0: i32) -> (i32, i32) {
    %c0_i32 = arith.constant 0 : i32
    %c0_i32_0 = arith.constant 0 : i32
    %c0_i32_1 = arith.constant 0 : i32
    return %c0_i32, %c0_i32_0 : i32, i32
  }
  func.func @transform_13(%arg0: i32) -> (i32, i32) {
    %c0_i32 = arith.constant 0 : i32
    %c0_i32_0 = arith.constant 0 : i32
    %c0_i32_1 = arith.constant 0 : i32
    return %c0_i32, %c0_i32_0 : i32, i32
  }
  func.func @transform_14(%arg0: i32) -> (i32, i32) {
    %c0_i32 = arith.constant 0 : i32
    %c0_i32_0 = arith.constant 0 : i32
    %c0_i32_1 = arith.constant 0 : i32
    return %c0_i32, %c0_i32_0 : i32, i32
  }
  func.func @transform_15(%arg0: i32) -> (i32, i32) {
    %c0_i32 = arith.constant 0 : i32
    %c0_i32_0 = arith.constant 0 : i32
    %c0_i32_1 = arith.constant 0 : i32
    return %c0_i32, %c0_i32_0 : i32, i32
  }
  func.func @transform_16(%arg0: i32) -> (i32, i32) {
    %c0_i32 = arith.constant 0 : i32
    %c0_i32_0 = arith.constant 0 : i32
    %c0_i32_1 = arith.constant 0 : i32
    return %c0_i32, %c0_i32_0 : i32, i32
  }
  func.func @transform_17(%arg0: i32) -> (i32, i32) {
    %c0_i32 = arith.constant 0 : i32
    %c0_i32_0 = arith.constant 0 : i32
    %c0_i32_1 = arith.constant 0 : i32
    return %c0_i32, %c0_i32_0 : i32, i32
  }
  func.func @transform_18(%arg0: i32) -> (i32, i32) {
    %c0_i32 = arith.constant 0 : i32
    %c0_i32_0 = arith.constant 0 : i32
    %c0_i32_1 = arith.constant 0 : i32
    return %c0_i32, %c0_i32_0 : i32, i32
  }
  func.func @transform_19(%arg0: i32) -> (i32, i32) {
    %c0_i32 = arith.constant 0 : i32
    %c0_i32_0 = arith.constant 0 : i32
    %c0_i32_1 = arith.constant 0 : i32
    return %c0_i32, %c0_i32_0 : i32, i32
  }
  func.func @transform_20(%arg0: i32) -> (i32, i32) {
    %c0_i32 = arith.constant 0 : i32
    %c0_i32_0 = arith.constant 0 : i32
    %c0_i32_1 = arith.constant 0 : i32
    return %c0_i32, %c0_i32_0 : i32, i32
  }
  func.func @transform_21(%arg0: i32) -> (i32, i32) {
    %c0_i32 = arith.constant 0 : i32
    %c0_i32_0 = arith.constant 0 : i32
    %c0_i32_1 = arith.constant 0 : i32
    return %c0_i32, %c0_i32_0 : i32, i32
  }
  func.func @transform_22(%arg0: i32) -> (i32, i32) {
    %c0_i32 = arith.constant 0 : i32
    %c0_i32_0 = arith.constant 0 : i32
    %c0_i32_1 = arith.constant 0 : i32
    return %c0_i32, %c0_i32_0 : i32, i32
  }
  func.func @transform_23(%arg0: i32) -> (i32, i32) {
    %c0_i32 = arith.constant 0 : i32
    %c0_i32_0 = arith.constant 0 : i32
    %c0_i32_1 = arith.constant 0 : i32
    return %c0_i32, %c0_i32_0 : i32, i32
  }
  func.func @transform_24(%arg0: i32) -> (i32, i32, i32) {
    %c0_i32 = arith.constant 0 : i32
    %c0_i32_0 = arith.constant 0 : i32
    %c0_i32_1 = arith.constant 0 : i32
    return %arg0, %c0_i32, %c0_i32_0 : i32, i32, i32
  }
}

</mosaic_0001>

<llo_original>
// kernel: pdc_im_forward.1
$region0: #{pdc_im_forward.1}
  #allocation0 [shape = 'u32[]', space=smem, size = 0x4, offset = 0x4, fixed_abs, tag = 'smem constant byte address 0x4 - core index']
  #allocation1 [shape = 'u32[144,128]{1,0:T(1,128)}', space=vmem, size = 0x12000, scoped, tag = 'internal scratch']
  #allocation2 [shape = 'f32[1,1]{1,0:T(1,128)S(1)}', space=vmem, size = 0x200, scoped, tag = 'scoped memory for pdc_im_forward.1']
  %s0 = inlined_call_operand.vmem [shape: f32[2,8,64], index: 0, kind: input, shape index: {}]
  %s1 = inlined_call_operand.vmem [shape: f32[2,8,256], index: 1, kind: input, shape index: {}]
  %s2 = inlined_call_operand.vmem [shape: f32[2,8,1024], index: 2, kind: input, shape index: {}]
  %s3 = inlined_call_operand.vmem [shape: f32[9,256], index: 3, kind: input, shape index: {}]
  %s4 = inlined_call_operand.vmem [shape: f32[9,1024], index: 4, kind: input, shape index: {}]
  %s5 = inlined_call_operand.hbm [shape: f32[64,256], index: 5, kind: input, shape index: {}]
  %s6 = inlined_call_operand.hbm [shape: f32[256,1024], index: 6, kind: input, shape index: {}]
  %s7 = inlined_call_operand.vmem [shape: f32[64,1024], index: 7, kind: input, shape index: {}]
  %s8 = inlined_call_operand.hbm [shape: bf16[16,72], index: 8, kind: input, shape index: {}]
  %s9 = inlined_call_operand.vmem [shape: f32[16,1], index: 9, kind: input, shape index: {}]
  %s10 = inlined_call_operand.hbm [shape: bf16[8,72], index: 10, kind: input, shape index: {}]
  %s11 = inlined_call_operand.vmem [shape: f32[8,1], index: 11, kind: input, shape index: {}]
  %s12 = inlined_call_operand.hbm [shape: bf16[8,72], index: 12, kind: input, shape index: {}]
  %s13 = inlined_call_operand.vmem [shape: f32[8,1], index: 13, kind: input, shape index: {}]
  %s14 = inlined_call_operand.hbm [shape: bf16[16,144], index: 14, kind: input, shape index: {}]
  %s15 = inlined_call_operand.vmem [shape: f32[16,1], index: 15, kind: input, shape index: {}]
  %s16 = inlined_call_operand.hbm [shape: bf16[16,144], index: 16, kind: input, shape index: {}]
  %s17 = inlined_call_operand.vmem [shape: f32[16,1], index: 17, kind: input, shape index: {}]
  %s18 = inlined_call_operand.vmem [shape: bf16[24,216], index: 18, kind: input, shape index: {}]
  %s19 = inlined_call_operand.vmem [shape: f32[24,1], index: 19, kind: input, shape index: {}]
  %s20 = inlined_call_operand.vmem [shape: bf16[24,216], index: 20, kind: input, shape index: {}]
  %s21 = inlined_call_operand.vmem [shape: f32[24,1], index: 21, kind: input, shape index: {}]
  %s22 = inlined_call_operand.vmem [shape: f32[1,24], index: 22, kind: input, shape index: {}]
  %s23 = inlined_call_operand.<no memory space> [shape: f32[1,1], index: 23, kind: input, shape index: {}]
  %s24 = inlined_call_operand.vmem [shape: f32[2,1,1024], index: 24, kind: output, shape index: {}]
  %s25 = sld [smem:[#allocation0]]
  $region157: #{pdc_im_forward.1} parent=0
    _
  %s27 = ssub.s32 1, %s25
  %s28 = scalar_select 0, %s27, %s25
  %v29 = vstv %s23
  %30 = vst [vmem:[#allocation2] sm:$0x1] %v29
  $region1: #{pdc_im_forward.1} parent=0
    #allocation3 [shape = 'u8[65536]{0}', space=vmem, size = 0x10000, scoped, tag = 'input window, operand 5, single buffered']
    #allocation4 [shape = 's32[2]{0}', space=sflag, size = 0x8, scoped, tag = 'scoped memory for pdc_im_forward.1']
    #allocation5 [shape = 'u8[1048576]{0}', space=vmem, size = 0x100000, scoped, tag = 'input window, operand 6, single buffered']
    #allocation6 [shape = 's32[1]{0}', space=sflag, size = 0x4, scoped, tag = 'scoped memory for pdc_im_forward.1']
    #allocation7 [shape = 'u8[4096]{0}', space=vmem, size = 0x1000, scoped, tag = 'input window, operand 8, single buffered']
    #allocation8 [shape = 'u8[2048]{0}', space=vmem, size = 0x800, scoped, tag = 'input window, operand 10, single buffered']
    #allocation9 [shape = 's32[1]{0}', space=sflag, size = 0x4, scoped, tag = 'scoped memory for pdc_im_forward.1']
    #allocation10 [shape = 'u8[2048]{0}', space=vmem, size = 0x800, scoped, tag = 'input window, operand 12, single buffered']
    #allocation11 [shape = 'u8[8192]{0}', space=vmem, size = 0x2000, scoped, tag = 'input window, operand 14, single buffered']
    #allocation12 [shape = 's32[1]{0}', space=sflag, size = 0x4, scoped, tag = 'scoped memory for pdc_im_forward.1']
    #allocation13 [shape = 'u8[8192]{0}', space=vmem, size = 0x2000, scoped, tag = 'input window, operand 16, single buffered']
    %31 = vsyncpa [#allocation4], 0
    %32 = vsyncpa [#allocation6], 0
    %33 = vsyncpa [#allocation9], 0
    %34 = vsyncpa [#allocation12], 0
    loop: start=0, step=1, limit=4
    $region2: #{pdc_im_forward.1} parent=1 // loop_pre_header
      _
    $region3: #{pdc_im_forward.1} parent=1 // loop_header
      %s36 = sphi 0, %s40
      %p37 = scmp.ge.s32.totalorder %s36, 4
      %s46 = sphi 0, %s48
      %s49 = sphi 0, %s46
      %s50 = sphi 0, %s49
      %s66 = sphi 0, %s50
      %s72 = sphi 0, %s74
      %s75 = sphi 0, %s72
      %s76 = sphi 0, %s75
      %s92 = sphi 0, %s76
      %s98 = sphi 0, %s100
      %s101 = sphi 0, %s98
      %s102 = sphi 0, %s101
      %s118 = sphi 0, %s102
      %s122 = sphi 0, %s122
      %s124 = sphi 0, %s122
      %s125 = sphi 0, %s124
      %s139 = sphi 0, %s125
      %s143 = sphi 0, %s143
      %s145 = sphi 0, %s143
      %s146 = sphi 0, %s145
      %s160 = sphi 0, %s146
      %s164 = sphi 0, %s164
      %s166 = sphi 0, %s164
      %s167 = sphi 0, %s166
      %s181 = sphi 0, %s167
      %s185 = sphi 0, %s185
      %s187 = sphi 0, %s185
      %s188 = sphi 0, %s187
      %s202 = sphi 0, %s188
      %s206 = sphi 0, %s206
      %s208 = sphi 0, %s206
      %s209 = sphi 0, %s208
      %s223 = sphi 0, %s209
      %s227 = sphi 0, %s227
      %s229 = sphi 0, %s227
      %s230 = sphi 0, %s229
      %s244 = sphi 0, %s230
      %s248 = sphi 0, %s248
      %s250 = sphi 0, %s248
      %s251 = sphi 0, %s250
      %s265 = sphi 0, %s251
      %s269 = sphi 0, %s269
      %s271 = sphi 0, %s269
      %s272 = sphi 0, %s271
      %s286 = sphi 0, %s272
      %s290 = sphi 0, %s290
      %s292 = sphi 0, %s290
      %s293 = sphi 0, %s292
      %s307 = sphi 0, %s293
      %s311 = sphi 0, %s311
      %s313 = sphi 0, %s311
      %s314 = sphi 0, %s313
      %s328 = sphi 0, %s314
      %s332 = sphi 0, %s332
      %s334 = sphi 0, %s332
      %s335 = sphi 0, %s334
      %s349 = sphi 0, %s335
      %s353 = sphi 0, %s353
      %s355 = sphi 0, %s353
      %s356 = sphi 0, %s355
      %s370 = sphi 0, %s356
      %s374 = sphi 0, %s374
      %s376 = sphi 0, %s374
      %s377 = sphi 0, %s376
      %s391 = sphi 0, %s377
      %s395 = sphi 0, %s395
      %s397 = sphi 0, %s395
      %s398 = sphi 0, %s397
      %s412 = sphi 0, %s398
      %s416 = sphi 0, %s416
      %s418 = sphi 0, %s416
      %s419 = sphi 0, %s418
      %s433 = sphi 0, %s419
      %s437 = sphi 0, %s437
      %s439 = sphi 0, %s437
      %s440 = sphi 0, %s439
      %s454 = sphi 0, %s440
      %s458 = sphi 0, %s458
      %s460 = sphi 0, %s458
      %s461 = sphi 0, %s460
      %s475 = sphi 0, %s461
      %s479 = sphi 0, %s479
      %s481 = sphi 0, %s479
      %s482 = sphi 0, %s481
      %s496 = sphi 0, %s482
      %s500 = sphi 0, %s500
      %s502 = sphi 0, %s500
      %s503 = sphi 0, %s502
      %s517 = sphi 0, %s503
      %s521 = sphi 0, %s521
      %s523 = sphi 0, %s521
      %s524 = sphi 0, %s523
      %s538 = sphi 0, %s524
      %s542 = sphi 0, %s542
      %s544 = sphi 0, %s542
      %s545 = sphi 0, %s544
      %s559 = sphi 0, %s545
      %s565 = sphi 0, %s567
      %s568 = sphi 0, %s565
      %s569 = sphi 0, %s568
      %s585 = sphi 0, %s569
    $region4: #{pdc_im_forward.1} parent=1 // loop_header_branch
      %39 = sbr.rel (%p37) target = $region8
    $region5: #{pdc_im_forward.1} parent=1 // loop_body
      %s41 = ssub.s32 %s36, 1
      %s42 = ssub.s32 %s36, 2
      %s43 = sadd.s32 %s36, 1
      %s44 = ssub.s32 %s36, %s43
      %p45 = scmp.eq.s32.totalorder %s44, 0
      %s47 = sadd.s32 %s46, 1
      %s48 = scalar_select %p45, %s46, %s47
      %p51 = pneg %p45
      %p52 = scmp.eq.s32.totalorder %s36, 1
      %p53 = por %p51, %p52
      %p54 = scmp.ne.s32.totalorder %s46, %s49
      %p55 = scmp.eq.s32.totalorder %s36, 0
      %p56 = por %p54, %p55
      %p57 = scmp.ne.s32.totalorder %s46, %s49
      %p58 = scmp.eq.s32.totalorder %s41, 1
      %p59 = por %p57, %p58
      %p60 = scmp.ne.s32.totalorder %s49, %s50
      %p61 = scmp.eq.s32.totalorder %s41, 0
      %p62 = por %p60, %p61
      %p63 = scmp.ne.s32.totalorder %s49, %s50
      %p64 = scmp.eq.s32.totalorder %s42, 1
      %p65 = por %p63, %p64
      %p67 = scmp.ne.s32.totalorder %s50, %s66
      %p68 = scmp.eq.s32.totalorder %s42, 0
      %p69 = por %p67, %p68
      %s70 = ssub.s32 %s36, %s43
      %p71 = scmp.eq.s32.totalorder %s70, 0
      %s73 = sadd.s32 %s72, 1
      %s74 = scalar_select %p71, %s72, %s73
      %p77 = pneg %p71
      %p78 = scmp.eq.s32.totalorder %s36, 1
      %p79 = por %p77, %p78
      %p80 = scmp.ne.s32.totalorder %s72, %s75
      %p81 = scmp.eq.s32.totalorder %s36, 0
      %p82 = por %p80, %p81
      %p83 = scmp.ne.s32.totalorder %s72, %s75
      %p84 = scmp.eq.s32.totalorder %s41, 1
      %p85 = por %p83, %p84
      %p86 = scmp.ne.s32.totalorder %s75, %s76
      %p87 = scmp.eq.s32.totalorder %s41, 0
      %p88 = por %p86, %p87
      %p89 = scmp.ne.s32.totalorder %s75, %s76
      %p90 = scmp.eq.s32.totalorder %s42, 1
      %p91 = por %p89, %p90
      %p93 = scmp.ne.s32.totalorder %s76, %s92
      %p94 = scmp.eq.s32.totalorder %s42, 0
      %p95 = por %p93, %p94
      %s96 = ssub.s32 %s36, %s43
      %p97 = scmp.eq.s32.totalorder %s96, 0
      %s99 = sadd.s32 %s98, 1
      %s100 = scalar_select %p97, %s98, %s99
      %p103 = pneg %p97
      %p104 = scmp.eq.s32.totalorder %s36, 1
      %p105 = por %p103, %p104
      %p106 = scmp.ne.s32.totalorder %s98, %s101
      %p107 = scmp.eq.s32.totalorder %s36, 0
      %p108 = por %p106, %p107
      %p109 = scmp.ne.s32.totalorder %s98, %s101
      %p110 = scmp.eq.s32.totalorder %s41, 1
      %p111 = por %p109, %p110
      %p112 = scmp.ne.s32.totalorder %s101, %s102
      %p113 = scmp.eq.s32.totalorder %s41, 0
      %p114 = por %p112, %p113
      %p115 = scmp.ne.s32.totalorder %s101, %s102
      %p116 = scmp.eq.s32.totalorder %s42, 1
      %p117 = por %p115, %p116
      %p119 = scmp.ne.s32.totalorder %s102, %s118
      %p120 = scmp.eq.s32.totalorder %s42, 0
      %p121 = por %p119, %p120
      %s123 = sadd.s32 %s122, 1
      %p126 = scmp.eq.s32.totalorder %s36, 1
      %p127 = scmp.ne.s32.totalorder %s122, %s124
      %p128 = scmp.eq.s32.totalorder %s36, 0
      %p129 = por %p127, %p128
      %p130 = scmp.ne.s32.totalorder %s122, %s124
      %p131 = scmp.eq.s32.totalorder %s41, 1
      %p132 = por %p130, %p131
      %p133 = scmp.ne.s32.totalorder %s124, %s125
      %p134 = scmp.eq.s32.totalorder %s41, 0
      %p135 = por %p133, %p134
      %p136 = scmp.ne.s32.totalorder %s124, %s125
      %p137 = scmp.eq.s32.totalorder %s42, 1
      %p138 = por %p136, %p137
      %p140 = scmp.ne.s32.totalorder %s125, %s139
      %p141 = scmp.eq.s32.totalorder %s42, 0
      %p142 = por %p140, %p141
      %s144 = sadd.s32 %s143, 1
      %p147 = scmp.eq.s32.totalorder %s36, 1
      %p148 = scmp.ne.s32.totalorder %s143, %s145
      %p149 = scmp.eq.s32.totalorder %s36, 0
      %p150 = por %p148, %p149
      %p151 = scmp.ne.s32.totalorder %s143, %s145
      %p152 = scmp.eq.s32.totalorder %s41, 1
      %p153 = por %p151, %p152
      %p154 = scmp.ne.s32.totalorder %s145, %s146
      %p155 = scmp.eq.s32.totalorder %s41, 0
      %p156 = por %p154, %p155
      %p157 = scmp.ne.s32.totalorder %s145, %s146
      %p158 = scmp.eq.s32.totalorder %s42, 1
      %p159 = por %p157, %p158
      %p161 = scmp.ne.s32.totalorder %s146, %s160
      %p162 = scmp.eq.s32.totalorder %s42, 0
      %p163 = por %p161, %p162
      %s165 = sadd.s32 %s164, 1
      %p168 = scmp.eq.s32.totalorder %s36, 1
      %p169 = scmp.ne.s32.totalorder %s164, %s166
      %p170 = scmp.eq.s32.totalorder %s36, 0
      %p171 = por %p169, %p170
      %p172 = scmp.ne.s32.totalorder %s164, %s166
      %p173 = scmp.eq.s32.totalorder %s41, 1
      %p174 = por %p172, %p173
      %p175 = scmp.ne.s32.totalorder %s166, %s167
      %p176 = scmp.eq.s32.totalorder %s41, 0
      %p177 = por %p175, %p176
      %p178 = scmp.ne.s32.totalorder %s166, %s167
      %p179 = scmp.eq.s32.totalorder %s42, 1
      %p180 = por %p178, %p179
      %p182 = scmp.ne.s32.totalorder %s167, %s181
      %p183 = scmp.eq.s32.totalorder %s42, 0
      %p184 = por %p182, %p183
      %s186 = sadd.s32 %s185, 1
      %p189 = scmp.eq.s32.totalorder %s36, 1
      %p190 = scmp.ne.s32.totalorder %s185, %s187
      %p191 = scmp.eq.s32.totalorder %s36, 0
      %p192 = por %p190, %p191
      %p193 = scmp.ne.s32.totalorder %s185, %s187
      %p194 = scmp.eq.s32.totalorder %s41, 1
      %p195 = por %p193, %p194
      %p196 = scmp.ne.s32.totalorder %s187, %s188
      %p197 = scmp.eq.s32.totalorder %s41, 0
      %p198 = por %p196, %p197
      %p199 = scmp.ne.s32.totalorder %s187, %s188
      %p200 = scmp.eq.s32.totalorder %s42, 1
      %p201 = por %p199, %p200
      %p203 = scmp.ne.s32.totalorder %s188, %s202
      %p204 = scmp.eq.s32.totalorder %s42, 0
      %p205 = por %p203, %p204
      %s207 = sadd.s32 %s206, 1
      %p210 = scmp.eq.s32.totalorder %s36, 1
      %p211 = scmp.ne.s32.totalorder %s206, %s208
      %p212 = scmp.eq.s32.totalorder %s36, 0
      %p213 = por %p211, %p212
      %p214 = scmp.ne.s32.totalorder %s206, %s208
      %p215 = scmp.eq.s32.totalorder %s41, 1
      %p216 = por %p214, %p215
      %p217 = scmp.ne.s32.totalorder %s208, %s209
      %p218 = scmp.eq.s32.totalorder %s41, 0
      %p219 = por %p217, %p218
      %p220 = scmp.ne.s32.totalorder %s208, %s209
      %p221 = scmp.eq.s32.totalorder %s42, 1
      %p222 = por %p220, %p221
      %p224 = scmp.ne.s32.totalorder %s209, %s223
      %p225 = scmp.eq.s32.totalorder %s42, 0
      %p226 = por %p224, %p225
      %s228 = sadd.s32 %s227, 1
      %p231 = scmp.eq.s32.totalorder %s36, 1
      %p232 = scmp.ne.s32.totalorder %s227, %s229
      %p233 = scmp.eq.s32.totalorder %s36, 0
      %p234 = por %p232, %p233
      %p235 = scmp.ne.s32.totalorder %s227, %s229
      %p236 = scmp.eq.s32.totalorder %s41, 1
      %p237 = por %p235, %p236
      %p238 = scmp.ne.s32.totalorder %s229, %s230
      %p239 = scmp.eq.s32.totalorder %s41, 0
      %p240 = por %p238, %p239
      %p241 = scmp.ne.s32.totalorder %s229, %s230
      %p242 = scmp.eq.s32.totalorder %s42, 1
      %p243 = por %p241, %p242
      %p245 = scmp.ne.s32.totalorder %s230, %s244
      %p246 = scmp.eq.s32.totalorder %s42, 0
      %p247 = por %p245, %p246
      %s249 = sadd.s32 %s248, 1
      %p252 = scmp.eq.s32.totalorder %s36, 1
      %p253 = scmp.ne.s32.totalorder %s248, %s250
      %p254 = scmp.eq.s32.totalorder %s36, 0
      %p255 = por %p253, %p254
      %p256 = scmp.ne.s32.totalorder %s248, %s250
      %p257 = scmp.eq.s32.totalorder %s41, 1
      %p258 = por %p256, %p257
      %p259 = scmp.ne.s32.totalorder %s250, %s251
      %p260 = scmp.eq.s32.totalorder %s41, 0
      %p261 = por %p259, %p260
      %p262 = scmp.ne.s32.totalorder %s250, %s251
      %p263 = scmp.eq.s32.totalorder %s42, 1
      %p264 = por %p262, %p263
      %p266 = scmp.ne.s32.totalorder %s251, %s265
      %p267 = scmp.eq.s32.totalorder %s42, 0
      %p268 = por %p266, %p267
      %s270 = sadd.s32 %s269, 1
      %p273 = scmp.eq.s32.totalorder %s36, 1
      %p274 = scmp.ne.s32.totalorder %s269, %s271
      %p275 = scmp.eq.s32.totalorder %s36, 0
      %p276 = por %p274, %p275
      %p277 = scmp.ne.s32.totalorder %s269, %s271
      %p278 = scmp.eq.s32.totalorder %s41, 1
      %p279 = por %p277, %p278
      %p280 = scmp.ne.s32.totalorder %s271, %s272
      %p281 = scmp.eq.s32.totalorder %s41, 0
      %p282 = por %p280, %p281
      %p283 = scmp.ne.s32.totalorder %s271, %s272
      %p284 = scmp.eq.s32.totalorder %s42, 1
      %p285 = por %p283, %p284
      %p287 = scmp.ne.s32.totalorder %s272, %s286
      %p288 = scmp.eq.s32.totalorder %s42, 0
      %p289 = por %p287, %p288
      %s291 = sadd.s32 %s290, 1
      %p294 = scmp.eq.s32.totalorder %s36, 1
      %p295 = scmp.ne.s32.totalorder %s290, %s292
      %p296 = scmp.eq.s32.totalorder %s36, 0
      %p297 = por %p295, %p296
      %p298 = scmp.ne.s32.totalorder %s290, %s292
      %p299 = scmp.eq.s32.totalorder %s41, 1
      %p300 = por %p298, %p299
      %p301 = scmp.ne.s32.totalorder %s292, %s293
      %p302 = scmp.eq.s32.totalorder %s41, 0
      %p303 = por %p301, %p302
      %p304 = scmp.ne.s32.totalorder %s292, %s293
      %p305 = scmp.eq.s32.totalorder %s42, 1
      %p306 = por %p304, %p305
      %p308 = scmp.ne.s32.totalorder %s293, %s307
      %p309 = scmp.eq.s32.totalorder %s42, 0
      %p310 = por %p308, %p309
      %s312 = sadd.s32 %s311, 1
      %p315 = scmp.eq.s32.totalorder %s36, 1
      %p316 = scmp.ne.s32.totalorder %s311, %s313
      %p317 = scmp.eq.s32.totalorder %s36, 0
      %p318 = por %p316, %p317
      %p319 = scmp.ne.s32.totalorder %s311, %s313
      %p320 = scmp.eq.s32.totalorder %s41, 1
      %p321 = por %p319, %p320
      %p322 = scmp.ne.s32.totalorder %s313, %s314
      %p323 = scmp.eq.s32.totalorder %s41, 0
      %p324 = por %p322, %p323
      %p325 = scmp.ne.s32.totalorder %s313, %s314
      %p326 = scmp.eq.s32.totalorder %s42, 1
      %p327 = por %p325, %p326
      %p329 = scmp.ne.s32.totalorder %s314, %s328
      %p330 = scmp.eq.s32.totalorder %s42, 0
      %p331 = por %p329, %p330
      %s333 = sadd.s32 %s332, 1
      %p336 = scmp.eq.s32.totalorder %s36, 1
      %p337 = scmp.ne.s32.totalorder %s332, %s334
      %p338 = scmp.eq.s32.totalorder %s36, 0
      %p339 = por %p337, %p338
      %p340 = scmp.ne.s32.totalorder %s332, %s334
      %p341 = scmp.eq.s32.totalorder %s41, 1
      %p342 = por %p340, %p341
      %p343 = scmp.ne.s32.totalorder %s334, %s335
      %p344 = scmp.eq.s32.totalorder %s41, 0
      %p345 = por %p343, %p344
      %p346 = scmp.ne.s32.totalorder %s334, %s335
      %p347 = scmp.eq.s32.totalorder %s42, 1
      %p348 = por %p346, %p347
      %p350 = scmp.ne.s32.totalorder %s335, %s349
      %p351 = scmp.eq.s32.totalorder %s42, 0
      %p352 = por %p350, %p351
      %s354 = sadd.s32 %s353, 1
      %p357 = scmp.eq.s32.totalorder %s36, 1
      %p358 = scmp.ne.s32.totalorder %s353, %s355
      %p359 = scmp.eq.s32.totalorder %s36, 0
      %p360 = por %p358, %p359
      %p361 = scmp.ne.s32.totalorder %s353, %s355
      %p362 = scmp.eq.s32.totalorder %s41, 1
      %p363 = por %p361, %p362
      %p364 = scmp.ne.s32.totalorder %s355, %s356
      %p365 = scmp.eq.s32.totalorder %s41, 0
      %p366 = por %p364, %p365
      %p367 = scmp.ne.s32.totalorder %s355, %s356
      %p368 = scmp.eq.s32.totalorder %s42, 1
      %p369 = por %p367, %p368
      %p371 = scmp.ne.s32.totalorder %s356, %s370
      %p372 = scmp.eq.s32.totalorder %s42, 0
      %p373 = por %p371, %p372
      %s375 = sadd.s32 %s374, 1
      %p378 = scmp.eq.s32.totalorder %s36, 1
      %p379 = scmp.ne.s32.totalorder %s374, %s376
      %p380 = scmp.eq.s32.totalorder %s36, 0
      %p381 = por %p379, %p380
      %p382 = scmp.ne.s32.totalorder %s374, %s376
      %p383 = scmp.eq.s32.totalorder %s41, 1
      %p384 = por %p382, %p383
      %p385 = scmp.ne.s32.totalorder %s376, %s377
      %p386 = scmp.eq.s32.totalorder %s41, 0
      %p387 = por %p385, %p386
      %p388 = scmp.ne.s32.totalorder %s376, %s377
      %p389 = scmp.eq.s32.totalorder %s42, 1
      %p390 = por %p388, %p389
      %p392 = scmp.ne.s32.totalorder %s377, %s391
      %p393 = scmp.eq.s32.totalorder %s42, 0
      %p394 = por %p392, %p393
      %s396 = sadd.s32 %s395, 1
      %p399 = scmp.eq.s32.totalorder %s36, 1
      %p400 = scmp.ne.s32.totalorder %s395, %s397
      %p401 = scmp.eq.s32.totalorder %s36, 0
      %p402 = por %p400, %p401
      %p403 = scmp.ne.s32.totalorder %s395, %s397
      %p404 = scmp.eq.s32.totalorder %s41, 1
      %p405 = por %p403, %p404
      %p406 = scmp.ne.s32.totalorder %s397, %s398
      %p407 = scmp.eq.s32.totalorder %s41, 0
      %p408 = por %p406, %p407
      %p409 = scmp.ne.s32.totalorder %s397, %s398
      %p410 = scmp.eq.s32.totalorder %s42, 1
      %p411 = por %p409, %p410
      %p413 = scmp.ne.s32.totalorder %s398, %s412
      %p414 = scmp.eq.s32.totalorder %s42, 0
      %p415 = por %p413, %p414
      %s417 = sadd.s32 %s416, 1
      %p420 = scmp.eq.s32.totalorder %s36, 1
      %p421 = scmp.ne.s32.totalorder %s416, %s418
      %p422 = scmp.eq.s32.totalorder %s36, 0
      %p423 = por %p421, %p422
      %p424 = scmp.ne.s32.totalorder %s416, %s418
      %p425 = scmp.eq.s32.totalorder %s41, 1
      %p426 = por %p424, %p425
      %p427 = scmp.ne.s32.totalorder %s418, %s419
      %p428 = scmp.eq.s32.totalorder %s41, 0
      %p429 = por %p427, %p428
      %p430 = scmp.ne.s32.totalorder %s418, %s419
      %p431 = scmp.eq.s32.totalorder %s42, 1
      %p432 = por %p430, %p431
      %p434 = scmp.ne.s32.totalorder %s419, %s433
      %p435 = scmp.eq.s32.totalorder %s42, 0
      %p436 = por %p434, %p435
      %s438 = sadd.s32 %s437, 1
      %p441 = scmp.eq.s32.totalorder %s36, 1
      %p442 = scmp.ne.s32.totalorder %s437, %s439
      %p443 = scmp.eq.s32.totalorder %s36, 0
      %p444 = por %p442, %p443
      %p445 = scmp.ne.s32.totalorder %s437, %s439
      %p446 = scmp.eq.s32.totalorder %s41, 1
      %p447 = por %p445, %p446
      %p448 = scmp.ne.s32.totalorder %s439, %s440
      %p449 = scmp.eq.s32.totalorder %s41, 0
      %p450 = por %p448, %p449
      %p451 = scmp.ne.s32.totalorder %s439, %s440
      %p452 = scmp.eq.s32.totalorder %s42, 1
      %p453 = por %p451, %p452
      %p455 = scmp.ne.s32.totalorder %s440, %s454
      %p456 = scmp.eq.s32.totalorder %s42, 0
      %p457 = por %p455, %p456
      %s459 = sadd.s32 %s458, 1
      %p462 = scmp.eq.s32.totalorder %s36, 1
      %p463 = scmp.ne.s32.totalorder %s458, %s460
      %p464 = scmp.eq.s32.totalorder %s36, 0
      %p465 = por %p463, %p464
      %p466 = scmp.ne.s32.totalorder %s458, %s460
      %p467 = scmp.eq.s32.totalorder %s41, 1
      %p468 = por %p466, %p467
      %p469 = scmp.ne.s32.totalorder %s460, %s461
      %p470 = scmp.eq.s32.totalorder %s41, 0
      %p471 = por %p469, %p470
      %p472 = scmp.ne.s32.totalorder %s460, %s461
      %p473 = scmp.eq.s32.totalorder %s42, 1
      %p474 = por %p472, %p473
      %p476 = scmp.ne.s32.totalorder %s461, %s475
      %p477 = scmp.eq.s32.totalorder %s42, 0
      %p478 = por %p476, %p477
      %s480 = sadd.s32 %s479, 1
      %p483 = scmp.eq.s32.totalorder %s36, 1
      %p484 = scmp.ne.s32.totalorder %s479, %s481
      %p485 = scmp.eq.s32.totalorder %s36, 0
      %p486 = por %p484, %p485
      %p487 = scmp.ne.s32.totalorder %s479, %s481
      %p488 = scmp.eq.s32.totalorder %s41, 1
      %p489 = por %p487, %p488
      %p490 = scmp.ne.s32.totalorder %s481, %s482
      %p491 = scmp.eq.s32.totalorder %s41, 0
      %p492 = por %p490, %p491
      %p493 = scmp.ne.s32.totalorder %s481, %s482
      %p494 = scmp.eq.s32.totalorder %s42, 1
      %p495 = por %p493, %p494
      %p497 = scmp.ne.s32.totalorder %s482, %s496
      %p498 = scmp.eq.s32.totalorder %s42, 0
      %p499 = por %p497, %p498
      %s501 = sadd.s32 %s500, 1
      %p504 = scmp.eq.s32.totalorder %s36, 1
      %p505 = scmp.ne.s32.totalorder %s500, %s502
      %p506 = scmp.eq.s32.totalorder %s36, 0
      %p507 = por %p505, %p506
      %p508 = scmp.ne.s32.totalorder %s500, %s502
      %p509 = scmp.eq.s32.totalorder %s41, 1
      %p510 = por %p508, %p509
      %p511 = scmp.ne.s32.totalorder %s502, %s503
      %p512 = scmp.eq.s32.totalorder %s41, 0
      %p513 = por %p511, %p512
      %p514 = scmp.ne.s32.totalorder %s502, %s503
      %p515 = scmp.eq.s32.totalorder %s42, 1
      %p516 = por %p514, %p515
      %p518 = scmp.ne.s32.totalorder %s503, %s517
      %p519 = scmp.eq.s32.totalorder %s42, 0
      %p520 = por %p518, %p519
      %s522 = sadd.s32 %s521, 1
      %p525 = scmp.eq.s32.totalorder %s36, 1
      %p526 = scmp.ne.s32.totalorder %s521, %s523
      %p527 = scmp.eq.s32.totalorder %s36, 0
      %p528 = por %p526, %p527
      %p529 = scmp.ne.s32.totalorder %s521, %s523
      %p530 = scmp.eq.s32.totalorder %s41, 1
      %p531 = por %p529, %p530
      %p532 = scmp.ne.s32.totalorder %s523, %s524
      %p533 = scmp.eq.s32.totalorder %s41, 0
      %p534 = por %p532, %p533
      %p535 = scmp.ne.s32.totalorder %s523, %s524
      %p536 = scmp.eq.s32.totalorder %s42, 1
      %p537 = por %p535, %p536
      %p539 = scmp.ne.s32.totalorder %s524, %s538
      %p540 = scmp.eq.s32.totalorder %s42, 0
      %p541 = por %p539, %p540
      %s543 = sadd.s32 %s542, 1
      %p546 = scmp.eq.s32.totalorder %s36, 1
      %p547 = scmp.ne.s32.totalorder %s542, %s544
      %p548 = scmp.eq.s32.totalorder %s36, 0
      %p549 = por %p547, %p548
      %p550 = scmp.ne.s32.totalorder %s542, %s544
      %p551 = scmp.eq.s32.totalorder %s41, 1
      %p552 = por %p550, %p551
      %p553 = scmp.ne.s32.totalorder %s544, %s545
      %p554 = scmp.eq.s32.totalorder %s41, 0
      %p555 = por %p553, %p554
      %p556 = scmp.ne.s32.totalorder %s544, %s545
      %p557 = scmp.eq.s32.totalorder %s42, 1
      %p558 = por %p556, %p557
      %p560 = scmp.ne.s32.totalorder %s545, %s559
      %p561 = scmp.eq.s32.totalorder %s42, 0
      %p562 = por %p560, %p561
      %s563 = ssub.s32 %s36, %s43
      %p564 = scmp.eq.s32.totalorder %s563, 0
      %s566 = sadd.s32 %s565, 1
      %s567 = scalar_select %p564, %s565, %s566
      %p570 = pneg %p564
      %p571 = scmp.eq.s32.totalorder %s36, 1
      %p572 = por %p570, %p571
      %p573 = scmp.ne.s32.totalorder %s565, %s568
      %p574 = scmp.eq.s32.totalorder %s36, 0
      %p575 = por %p573, %p574
      %p576 = scmp.ne.s32.totalorder %s565, %s568
      %p577 = scmp.eq.s32.totalorder %s41, 1
      %p578 = por %p576, %p577
      %p579 = scmp.ne.s32.totalorder %s568, %s569
      %p580 = scmp.eq.s32.totalorder %s41, 0
      %p581 = por %p579, %p580
      %p582 = scmp.ne.s32.totalorder %s568, %s569
      %p583 = scmp.eq.s32.totalorder %s42, 1
      %p584 = por %p582, %p583
      %p586 = scmp.ne.s32.totalorder %s569, %s585
      %p587 = scmp.eq.s32.totalorder %s42, 0
      %p588 = por %p586, %p587
      %p589 = scmp.le.s32.totalorder 1, %s36
      %p590 = scmp.lt.s32.totalorder %s36, 3
      %p591 = pnand %p589, %p590
      %p592 = pneg %p591
      // Predicated region
      $region9: #{pdc_im_forward.1} parent=5 // pred_check
        _
      $region10: #{pdc_im_forward.1} parent=5 // pred_check_branch
        %594 = sbr.rel (%p591) target = $region12
      $region11: #{pdc_im_forward.1} parent=5 // pred_region
        %s595 = ssub.s32 %s36, 1
        // Predicated region
        $region13: #{pdc_im_forward.1} parent=11 // pred_check
          %p596 = pneg %p135
        $region14: #{pdc_im_forward.1} parent=11 // pred_check_branch
          %598 = sbr.rel (%p596) target = $region16
        $region15: #{pdc_im_forward.1} parent=11 // pred_region
          _
        $region16: #{pdc_im_forward.1} parent=11 // pred_fallthru
          _
        // Predicated region
        $region17: #{pdc_im_forward.1} parent=11 // pred_check
          %p599 = pneg %p156
        $region18: #{pdc_im_forward.1} parent=11 // pred_check_branch
          %601 = sbr.rel (%p599) target = $region20
        $region19: #{pdc_im_forward.1} parent=11 // pred_region
          _
        $region20: #{pdc_im_forward.1} parent=11 // pred_fallthru
          _
        // Predicated region
        $region21: #{pdc_im_forward.1} parent=11 // pred_check
          %p602 = pneg %p177
        $region22: #{pdc_im_forward.1} parent=11 // pred_check_branch
          %604 = sbr.rel (%p602) target = $region24
        $region23: #{pdc_im_forward.1} parent=11 // pred_region
          %s606 = ssub.s32 2048, 2048
          %607 = vsyncadd [#allocation4], %s606
          %s608 = sshll.u32 [#allocation3], 4
          %s609 = int_to_ptr.vmem [resolvable:$true] %s608
          %614 = dma.hbm_to_vmem [thread:$0]  %s5, 2048, %s609, [#allocation4], 256, 256, 16
        $region24: #{pdc_im_forward.1} parent=11 // pred_fallthru
          _
        // Predicated region
        $region25: #{pdc_im_forward.1} parent=11 // pred_check
          %p615 = pneg %p198
        $region26: #{pdc_im_forward.1} parent=11 // pred_check_branch
          %617 = sbr.rel (%p615) target = $region28
        $region27: #{pdc_im_forward.1} parent=11 // pred_region
          %s619 = ssub.s32 32768, 32768
          %620 = vsyncadd [#allocation6], %s619
          %s621 = sshll.u32 [#allocation5], 4
          %s622 = int_to_ptr.vmem [resolvable:$true] %s621
          %627 = dma.hbm_to_vmem [thread:$0]  %s6, 32768, %s622, [#allocation6], 1024, 1024, 64
        $region28: #{pdc_im_forward.1} parent=11 // pred_fallthru
          _
        // Predicated region
        $region29: #{pdc_im_forward.1} parent=11 // pred_check
          %p628 = pneg %p219
        $region30: #{pdc_im_forward.1} parent=11 // pred_check_branch
          %630 = sbr.rel (%p628) target = $region32
        $region31: #{pdc_im_forward.1} parent=11 // pred_region
          _
        $region32: #{pdc_im_forward.1} parent=11 // pred_fallthru
          _
        // Predicated region
        $region33: #{pdc_im_forward.1} parent=11 // pred_check
          %p631 = pneg %p240
        $region34: #{pdc_im_forward.1} parent=11 // pred_check_branch
          %633 = sbr.rel (%p631) target = $region36
        $region35: #{pdc_im_forward.1} parent=11 // pred_region
          %s635 = ssub.s32 128, 128
          %636 = vsyncadd [#allocation6], %s635
          %s637 = sshll.u32 [#allocation7], 4
          %s638 = int_to_ptr.vmem [resolvable:$true] %s637
          %643 = dma.hbm_to_vmem [thread:$0]  %s8, 128, %s638, [#allocation6], 64, 64, 4
        $region36: #{pdc_im_forward.1} parent=11 // pred_fallthru
          _
        // Predicated region
        $region37: #{pdc_im_forward.1} parent=11 // pred_check
          %p644 = pneg %p261
        $region38: #{pdc_im_forward.1} parent=11 // pred_check_branch
          %646 = sbr.rel (%p644) target = $region40
        $region39: #{pdc_im_forward.1} parent=11 // pred_region
          _
        $region40: #{pdc_im_forward.1} parent=11 // pred_fallthru
          _
        // Predicated region
        $region41: #{pdc_im_forward.1} parent=11 // pred_check
          %p647 = pneg %p282
        $region42: #{pdc_im_forward.1} parent=11 // pred_check_branch
          %649 = sbr.rel (%p647) target = $region44
        $region43: #{pdc_im_forward.1} parent=11 // pred_region
          %s651 = ssub.s32 64, 64
          %652 = vsyncadd [#allocation9], %s651
          %s654 = sshll.u32 [#allocation8], 4
          %s655 = int_to_ptr.vmem [resolvable:$true] %s654
          %657 = dma.hbm_to_vmem [thread:$0]  %s10, 64, %s655, [#allocation9]
        $region44: #{pdc_im_forward.1} parent=11 // pred_fallthru
          _
        // Predicated region
        $region45: #{pdc_im_forward.1} parent=11 // pred_check
          %p658 = pneg %p303
        $region46: #{pdc_im_forward.1} parent=11 // pred_check_branch
          %660 = sbr.rel (%p658) target = $region48
        $region47: #{pdc_im_forward.1} parent=11 // pred_region
          _
        $region48: #{pdc_im_forward.1} parent=11 // pred_fallthru
          _
        // Predicated region
        $region49: #{pdc_im_forward.1} parent=11 // pred_check
          %p661 = pneg %p324
        $region50: #{pdc_im_forward.1} parent=11 // pred_check_branch
          %663 = sbr.rel (%p661) target = $region52
        $region51: #{pdc_im_forward.1} parent=11 // pred_region
          %s665 = ssub.s32 64, 64
          %666 = vsyncadd [#allocation9], %s665
          %s668 = sshll.u32 [#allocation10], 4
          %s669 = int_to_ptr.vmem [resolvable:$true] %s668
          %671 = dma.hbm_to_vmem [thread:$0]  %s12, 64, %s669, [#allocation9]
        $region52: #{pdc_im_forward.1} parent=11 // pred_fallthru
          _
        // Predicated region
        $region53: #{pdc_im_forward.1} parent=11 // pred_check
          %p672 = pneg %p345
        $region54: #{pdc_im_forward.1} parent=11 // pred_check_branch
          %674 = sbr.rel (%p672) target = $region56
        $region55: #{pdc_im_forward.1} parent=11 // pred_region
          _
        $region56: #{pdc_im_forward.1} parent=11 // pred_fallthru
          _
        // Predicated region
        $region57: #{pdc_im_forward.1} parent=11 // pred_check
          %p675 = pneg %p366
        $region58: #{pdc_im_forward.1} parent=11 // pred_check_branch
          %677 = sbr.rel (%p675) target = $region60
        $region59: #{pdc_im_forward.1} parent=11 // pred_region
          %s679 = ssub.s32 256, 256
          %680 = vsyncadd [#allocation12], %s679
          %s681 = sshll.u32 [#allocation11], 4
          %s682 = int_to_ptr.vmem [resolvable:$true] %s681
          %687 = dma.hbm_to_vmem [thread:$0]  %s14, 256, %s682, [#allocation12], 128, 128, 8
        $region60: #{pdc_im_forward.1} parent=11 // pred_fallthru
          _
        // Predicated region
        $region61: #{pdc_im_forward.1} parent=11 // pred_check
          %p688 = pneg %p387
        $region62: #{pdc_im_forward.1} parent=11 // pred_check_branch
          %690 = sbr.rel (%p688) target = $region64
        $region63: #{pdc_im_forward.1} parent=11 // pred_region
          _
        $region64: #{pdc_im_forward.1} parent=11 // pred_fallthru
          _
        // Predicated region
        $region65: #{pdc_im_forward.1} parent=11 // pred_check
          %p691 = pneg %p408
        $region66: #{pdc_im_forward.1} parent=11 // pred_check_branch
          %693 = sbr.rel (%p691) target = $region68
        $region67: #{pdc_im_forward.1} parent=11 // pred_region
          %s695 = ssub.s32 256, 256
          %696 = vsyncadd [#allocation12], %s695
          %s697 = sshll.u32 [#allocation13], 4
          %s698 = int_to_ptr.vmem [resolvable:$true] %s697
          %703 = dma.hbm_to_vmem [thread:$0]  %s16, 256, %s698, [#allocation12], 128, 128, 8
        $region68: #{pdc_im_forward.1} parent=11 // pred_fallthru
          _
        // Predicated region
        $region69: #{pdc_im_forward.1} parent=11 // pred_check
          %p704 = pneg %p429
        $region70: #{pdc_im_forward.1} parent=11 // pred_check_branch
          %706 = sbr.rel (%p704) target = $region72
        $region71: #{pdc_im_forward.1} parent=11 // pred_region
          _
        $region72: #{pdc_im_forward.1} parent=11 // pred_fallthru
          _
        // Predicated region
        $region73: #{pdc_im_forward.1} parent=11 // pred_check
          %p707 = pneg %p450
        $region74: #{pdc_im_forward.1} parent=11 // pred_check_branch
          %709 = sbr.rel (%p707) target = $region76
        $region75: #{pdc_im_forward.1} parent=11 // pred_region
          _
        $region76: #{pdc_im_forward.1} parent=11 // pred_fallthru
          _
        // Predicated region
        $region77: #{pdc_im_forward.1} parent=11 // pred_check
          %p710 = pneg %p471
        $region78: #{pdc_im_forward.1} parent=11 // pred_check_branch
          %712 = sbr.rel (%p710) target = $region80
        $region79: #{pdc_im_forward.1} parent=11 // pred_region
          _
        $region80: #{pdc_im_forward.1} parent=11 // pred_fallthru
          _
        // Predicated region
        $region81: #{pdc_im_forward.1} parent=11 // pred_check
          %p713 = pneg %p492
        $region82: #{pdc_im_forward.1} parent=11 // pred_check_branch
          %715 = sbr.rel (%p713) target = $region84
        $region83: #{pdc_im_forward.1} parent=11 // pred_region
          _
        $region84: #{pdc_im_forward.1} parent=11 // pred_fallthru
          _
        // Predicated region
        $region85: #{pdc_im_forward.1} parent=11 // pred_check
          %p716 = pneg %p513
        $region86: #{pdc_im_forward.1} parent=11 // pred_check_branch
          %718 = sbr.rel (%p716) target = $region88
        $region87: #{pdc_im_forward.1} parent=11 // pred_region
          _
        $region88: #{pdc_im_forward.1} parent=11 // pred_fallthru
          _
        // Predicated region
        $region89: #{pdc_im_forward.1} parent=11 // pred_check
          %p719 = pneg %p534
        $region90: #{pdc_im_forward.1} parent=11 // pred_check_branch
          %721 = sbr.rel (%p719) target = $region92
        $region91: #{pdc_im_forward.1} parent=11 // pred_region
          _
        $region92: #{pdc_im_forward.1} parent=11 // pred_fallthru
          _
        // Predicated region
        $region93: #{pdc_im_forward.1} parent=11 // pred_check
          %p722 = pneg %p555
        $region94: #{pdc_im_forward.1} parent=11 // pred_check_branch
          %724 = sbr.rel (%p722) target = $region96
        $region95: #{pdc_im_forward.1} parent=11 // pred_region
          _
        $region96: #{pdc_im_forward.1} parent=11 // pred_fallthru
          _
      $region12: #{pdc_im_forward.1} parent=5 // pred_fallthru
        _
      %p725 = scmp.lt.s32.totalorder %s36, 2
      // Predicated region
      $region97: #{pdc_im_forward.1} parent=5 // pred_check
        %p726 = pneg %p725
      $region98: #{pdc_im_forward.1} parent=5 // pred_check_branch
        %728 = sbr.rel (%p726) target = $region100
      $region99: #{pdc_im_forward.1} parent=5 // pred_region
        // Predicated region
        $region101: #{pdc_im_forward.1} parent=99 // pred_check
          %p729 = pneg %p56
        $region102: #{pdc_im_forward.1} parent=99 // pred_check_branch
          %731 = sbr.rel (%p729) target = $region104
        $region103: #{pdc_im_forward.1} parent=99 // pred_region
          %p732 = scmp.lt.s32.totalorder %s36, 1
          %s733 = scalar_select %p732, %s36, 1
          %s734 = smul.addr %s733, 8
          %s735 = scalar_lea.vmem %s0, %s734
        $region104: #{pdc_im_forward.1} parent=99 // pred_fallthru
          _
        // Predicated region
        $region105: #{pdc_im_forward.1} parent=99 // pred_check
          %p736 = pneg %p82
        $region106: #{pdc_im_forward.1} parent=99 // pred_check_branch
          %738 = sbr.rel (%p736) target = $region108
        $region107: #{pdc_im_forward.1} parent=99 // pred_region
          %p739 = scmp.lt.s32.totalorder %s36, 1
          %s740 = scalar_select %p739, %s36, 1
          %s741 = smul.addr %s740, 2
          %s742 = smul.addr %s741, 8
          %s743 = scalar_lea.vmem %s1, %s742
        $region108: #{pdc_im_forward.1} parent=99 // pred_fallthru
          _
        // Predicated region
        $region109: #{pdc_im_forward.1} parent=99 // pred_check
          %p744 = pneg %p108
        $region110: #{pdc_im_forward.1} parent=99 // pred_check_branch
          %746 = sbr.rel (%p744) target = $region112
        $region111: #{pdc_im_forward.1} parent=99 // pred_region
          %p747 = scmp.lt.s32.totalorder %s36, 1
          %s748 = scalar_select %p747, %s36, 1
          %s749 = smul.addr %s748, 8
          %s750 = smul.addr %s749, 8
          %s751 = scalar_lea.vmem %s2, %s750
        $region112: #{pdc_im_forward.1} parent=99 // pred_fallthru
          _
      $region100: #{pdc_im_forward.1} parent=5 // pred_fallthru
        _
      %p752 = scmp.le.s32.totalorder 1, %s36
      %p753 = scmp.lt.s32.totalorder %s36, 3
      %p754 = pnand %p752, %p753
      %p755 = pneg %p754
      // Predicated region
      $region113: #{pdc_im_forward.1} parent=5 // pred_check
        _
      $region114: #{pdc_im_forward.1} parent=5 // pred_check_branch
        %757 = sbr.rel (%p754) target = $region116
      $region115: #{pdc_im_forward.1} parent=5 // pred_region
        %s758 = ssub.s32 %s36, 1
        // Predicated region
        $region117: #{pdc_im_forward.1} parent=115 // pred_check
          %p759 = pneg %p177
        $region118: #{pdc_im_forward.1} parent=115 // pred_check_branch
          %761 = sbr.rel (%p759) target = $region120
        $region119: #{pdc_im_forward.1} parent=115 // pred_region
          %762 = dma.done [#allocation4], 2048
        $region120: #{pdc_im_forward.1} parent=115 // pred_fallthru
          _
        // Predicated region
        $region121: #{pdc_im_forward.1} parent=115 // pred_check
          %p763 = pneg %p198
        $region122: #{pdc_im_forward.1} parent=115 // pred_check_branch
          %765 = sbr.rel (%p763) target = $region124
        $region123: #{pdc_im_forward.1} parent=115 // pred_region
          %766 = dma.done [#allocation6], 32768
        $region124: #{pdc_im_forward.1} parent=115 // pred_fallthru
          _
        // Predicated region
        $region125: #{pdc_im_forward.1} parent=115 // pred_check
          %p767 = pneg %p240
        $region126: #{pdc_im_forward.1} parent=115 // pred_check_branch
          %769 = sbr.rel (%p767) target = $region128
        $region127: #{pdc_im_forward.1} parent=115 // pred_region
          %770 = dma.done [#allocation6], 128
        $region128: #{pdc_im_forward.1} parent=115 // pred_fallthru
          _
        // Predicated region
        $region129: #{pdc_im_forward.1} parent=115 // pred_check
          %p771 = pneg %p282
        $region130: #{pdc_im_forward.1} parent=115 // pred_check_branch
          %773 = sbr.rel (%p771) target = $region132
        $region131: #{pdc_im_forward.1} parent=115 // pred_region
          %774 = dma.done [#allocation9], 64
        $region132: #{pdc_im_forward.1} parent=115 // pred_fallthru
          _
        // Predicated region
        $region133: #{pdc_im_forward.1} parent=115 // pred_check
          %p775 = pneg %p324
        $region134: #{pdc_im_forward.1} parent=115 // pred_check_branch
          %777 = sbr.rel (%p775) target = $region136
        $region135: #{pdc_im_forward.1} parent=115 // pred_region
          %778 = dma.done [#allocation9], 64
        $region136: #{pdc_im_forward.1} parent=115 // pred_fallthru
          _
        // Predicated region
        $region137: #{pdc_im_forward.1} parent=115 // pred_check
          %p779 = pneg %p366
        $region138: #{pdc_im_forward.1} parent=115 // pred_check_branch
          %781 = sbr.rel (%p779) target = $region140
        $region139: #{pdc_im_forward.1} parent=115 // pred_region
          %782 = dma.done [#allocation12], 256
        $region140: #{pdc_im_forward.1} parent=115 // pred_fallthru
          _
        // Predicated region
        $region141: #{pdc_im_forward.1} parent=115 // pred_check
          %p783 = pneg %p408
        $region142: #{pdc_im_forward.1} parent=115 // pred_check_branch
          %785 = sbr.rel (%p783) target = $region144
        $region143: #{pdc_im_forward.1} parent=115 // pred_region
          %786 = dma.done [#allocation12], 256
        $region144: #{pdc_im_forward.1} parent=115 // pred_fallthru
          _
        %p787 = scmp.lt.s32.totalorder %s41, 1
        %s788 = scalar_select %p787, %s41, 1
        %s789 = smul.addr %s788, 8
        %s790 = scalar_lea.vmem %s0, %s789
        %p791 = pneg %p62
        %p792 = pneg %p59
        %p793 = scmp.lt.s32.totalorder %s41, 1
        %s794 = scalar_select %p793, %s41, 1
        %s795 = smul.addr %s794, 2
        %s796 = smul.addr %s795, 8
        %s797 = scalar_lea.vmem %s1, %s796
        %p798 = pneg %p88
        %p799 = pneg %p85
        %p800 = scmp.lt.s32.totalorder %s41, 1
        %s801 = scalar_select %p800, %s41, 1
        %s802 = smul.addr %s801, 8
        %s803 = smul.addr %s802, 8
        %s804 = scalar_lea.vmem %s2, %s803
        %p805 = pneg %p114
        %p806 = pneg %p111
        %p807 = pneg %p135
        %p808 = pneg %p132
        %p809 = pneg %p156
        %p810 = pneg %p153
        %p811 = pneg %p177
        %p812 = pneg %p174
        %p813 = pneg %p198
        %p814 = pneg %p195
        %p815 = pneg %p219
        %p816 = pneg %p216
        %p817 = pneg %p240
        %p818 = pneg %p237
        %p819 = pneg %p261
        %p820 = pneg %p258
        %p821 = pneg %p282
        %p822 = pneg %p279
        %p823 = pneg %p303
        %p824 = pneg %p300
        %p825 = pneg %p324
        %p826 = pneg %p321
        %p827 = pneg %p345
        %p828 = pneg %p342
        %p829 = pneg %p366
        %p830 = pneg %p363
        %p831 = pneg %p387
        %p832 = pneg %p384
        %p833 = pneg %p408
        %p834 = pneg %p405
        %p835 = pneg %p429
        %p836 = pneg %p426
        %p837 = pneg %p450
        %p838 = pneg %p447
        %p839 = pneg %p471
        %p840 = pneg %p468
        %p841 = pneg %p492
        %p842 = pneg %p489
        %p843 = pneg %p513
        %p844 = pneg %p510
        %p845 = pneg %p534
        %p846 = pneg %p531
        %p847 = pneg %p555
        %p848 = pneg %p552
        %p849 = pneg %p581
        %p850 = pneg %p578
        %p851 = scmp.lt.s32.totalorder %s41, 1
        %s852 = scalar_select %p851, %s41, 1
        %s853 = smul.addr %s852, 8
        %s854 = scalar_lea.vmem %s24, %s853
        %p855 = scmp.lt.s32.totalorder %s41, 1
        %s856 = scalar_select %p855, %s41, 1
        %s857 = smul.addr %s856, 8
        %s858 = scalar_lea.vmem %s0, %s857
        %p859 = scmp.lt.s32.totalorder %s41, 1
        %s860 = scalar_select %p859, %s41, 1
        %s861 = smul.addr %s860, 2
        %s862 = smul.addr %s861, 8
        %s863 = scalar_lea.vmem %s1, %s862
        %p864 = scmp.lt.s32.totalorder %s41, 1
        %s865 = scalar_select %p864, %s41, 1
        %s866 = smul.addr %s865, 8
        %s867 = smul.addr %s866, 8
        %s868 = scalar_lea.vmem %s2, %s867
        %p869 = scmp.lt.s32.totalorder %s41, 1
        %s870 = scalar_select %p869, %s41, 1
        %s871 = smul.addr %s870, 8
        %s872 = scalar_lea.vmem %s24, %s871
        %v874 = vld [vmem:[%s858] sm:$0xff]
        %v875 = vld [vmem:[%s863] sm:$0xff]
        %v876 = vld [vmem:[%s863 + $0x8] sm:$0xff]
        %v877 = vld [vmem:[%s868] sm:$0xff]
        %v878 = vld [vmem:[%s868 + $0x8] sm:$0xff]
        %v879 = vld [vmem:[%s868 + $0x10] sm:$0xff]
        %v880 = vld [vmem:[%s868 + $0x18] sm:$0xff]
        %v881 = vld [vmem:[%s868 + $0x20] sm:$0xff]
        %v882 = vld [vmem:[%s868 + $0x28] sm:$0xff]
        %v883 = vld [vmem:[%s868 + $0x30] sm:$0xff]
        %v884 = vld [vmem:[%s868 + $0x38] sm:$0xff]
        %v885 = vld [vmem:[%s3] sm:$0xff]
        %v886 = vld [vmem:[%s3 + $0x8] sm:$0xff]
        %v887 = vld [vmem:[%s3 + $0x10] sm:$0x1]
        %v888 = vld [vmem:[%s3 + $0x18] sm:$0x1]
        %v889 = vld [vmem:[%s4] sm:$0xff]
        %v890 = vld [vmem:[%s4 + $0x8] sm:$0xff]
        %v891 = vld [vmem:[%s4 + $0x10] sm:$0xff]
        %v892 = vld [vmem:[%s4 + $0x18] sm:$0xff]
        %v893 = vld [vmem:[%s4 + $0x20] sm:$0xff]
        %v894 = vld [vmem:[%s4 + $0x28] sm:$0xff]
        %v895 = vld [vmem:[%s4 + $0x30] sm:$0xff]
        %v896 = vld [vmem:[%s4 + $0x38] sm:$0xff]
        %v897 = vld [vmem:[%s4 + $0x40] sm:$0x1]
        %v898 = vld [vmem:[%s4 + $0x48] sm:$0x1]
        %v899 = vld [vmem:[%s4 + $0x50] sm:$0x1]
        %v900 = vld [vmem:[%s4 + $0x58] sm:$0x1]
        %v901 = vld [vmem:[%s4 + $0x60] sm:$0x1]
        %v902 = vld [vmem:[%s4 + $0x68] sm:$0x1]
        %v903 = vld [vmem:[%s4 + $0x70] sm:$0x1]
        %v904 = vld [vmem:[%s4 + $0x78] sm:$0x1]
        %v905 = vld [vmem:[#allocation3] sm:$0xff]
        %v906 = vld [vmem:[#allocation3 + $0x8] sm:$0xff]
        %v907 = vld [vmem:[#allocation3 + $0x10] sm:$0xff]
        %v908 = vld [vmem:[#allocation3 + $0x18] sm:$0xff]
        %v909 = vld [vmem:[#allocation3 + $0x20] sm:$0xff]
        %v910 = vld [vmem:[#allocation3 + $0x28] sm:$0xff]
        %v911 = vld [vmem:[#allocation3 + $0x30] sm:$0xff]
        %v912 = vld [vmem:[#allocation3 + $0x38] sm:$0xff]
        %v913 = vld [vmem:[#allocation3 + $0x40] sm:$0xff]
        %v914 = vld [vmem:[#allocation3 + $0x48] sm:$0xff]
        %v915 = vld [vmem:[#allocation3 + $0x50] sm:$0xff]
        %v916 = vld [vmem:[#allocation3 + $0x58] sm:$0xff]
        %v917 = vld [vmem:[#allocation3 + $0x60] sm:$0xff]
        %v918 = vld [vmem:[#allocation3 + $0x68] sm:$0xff]
        %v919 = vld [vmem:[#allocation3 + $0x70] sm:$0xff]
        %v920 = vld [vmem:[#allocation3 + $0x78] sm:$0xff]
        %vm921 = vcmask 523264
        %v923 = vsel %vm921, %v874, 0
        %925 = vmatprep.subr.mxu0 0.0
        %926 = vmatpush1.msra.mxu0 0.0
        %927 = vmatprep.subr.mxu0 0.0
        %928 = vmatpush1.msra.mxu0 0.0
        %929 = vmatprep.subr.mxu0 0.0
        %930 = vmatpush1.msra.mxu0 0.0
        %931 = vmatprep.subr.mxu0 0.0
        %932 = vmatpush1.msra.mxu0 0.0
        %933 = vmatprep.subr.mxu0 0.0
        %934 = vmatpush1.msra.mxu0 0.0
        %935 = vmatprep.subr.mxu0 0.0
        %936 = vmatpush1.msra.mxu0 0.0
        %937 = vmatprep.subr.mxu0 0.0
        %938 = vmatpush1.msra.mxu0 0.0
        %939 = vmatprep.subr.mxu0 0.0
        %940 = vmatpush1.msra.mxu0 0.0
        %941 = vmatprep.subr.mxu0 %v920
        %942 = vmatpush1.msra.mxu0 %v919
        %943 = vmatprep.subr.mxu0 %v918
        %944 = vmatpush1.msra.mxu0 %v917
        %945 = vmatprep.subr.mxu0 %v916
        %946 = vmatpush1.msra.mxu0 %v915
        %947 = vmatprep.subr.mxu0 %v914
        %948 = vmatpush1.msra.mxu0 %v913
        %949 = vmatprep.subr.mxu0 %v912
        %950 = vmatpush1.msra.mxu0 %v911
        %951 = vmatprep.subr.mxu0 %v910
        %952 = vmatpush1.msra.mxu0 %v909
        %953 = vmatprep.subr.mxu0 %v908
        %954 = vmatpush1.msra.mxu0 %v907
        %955 = vmatprep.subr.mxu0 %v906
        %956 = vmatpush1.msra.mxu0 %v905
        %957 = vmatprep.subr.mxu0 0.0
        %958 = vmatpush2.msra.mxu0 0.0
        %959 = vmatprep.subr.mxu0 0.0
        %960 = vmatpush2.msra.mxu0 0.0
        %961 = vmatprep.subr.mxu0 0.0
        %962 = vmatpush2.msra.mxu0 0.0
        %963 = vmatprep.subr.mxu0 0.0
        %964 = vmatpush2.msra.mxu0 0.0
        %965 = vmatprep.subr.mxu0 0.0
        %966 = vmatpush2.msra.mxu0 0.0
        %967 = vmatprep.subr.mxu0 0.0
        %968 = vmatpush2.msra.mxu0 0.0
        %969 = vmatprep.subr.mxu0 0.0
        %970 = vmatpush2.msra.mxu0 0.0
        %971 = vmatprep.subr.mxu0 0.0
        %972 = vmatpush2.msra.mxu0 0.0
        %973 = vmatprep.subr.mxu0 0.0
        %974 = vmatpush2.msra.mxu0 0.0
        %975 = vmatprep.subr.mxu0 0.0
        %976 = vmatpush2.msra.mxu0 0.0
        %977 = vmatprep.subr.mxu0 0.0
        %978 = vmatpush2.msra.mxu0 0.0
        %979 = vmatprep.subr.mxu0 0.0
        %980 = vmatpush2.msra.mxu0 0.0
        %981 = vmatprep.subr.mxu0 0.0
        %982 = vmatpush2.msra.mxu0 0.0
        %983 = vmatprep.subr.mxu0 0.0
        %984 = vmatpush2.msra.mxu0 0.0
        %985 = vmatprep.subr.mxu0 0.0
        %986 = vmatpush2.msra.mxu0 0.0
        %987 = vmatprep.subr.mxu0 0.0
        %988 = vmatpush2.msra.mxu0 0.0
        %989 = vmatprep.mubr.f32.mxu0 0.0
        %990 = vmatmul.mubr.f32.gmra.mxu0 %v923
        %v991 = vpop.f32.mrf.mxu0
        %v992 = vadd.f32 0.0, %v991
        %v993 = vpop.f32.mrf.mxu0
        %v994 = vadd.f32 0.0, %v993
        %995 = vdwg.mxu0
        %v996 = vld [vmem:[%s7] sm:$0xff]
        %v997 = vld [vmem:[%s7 + $0x8] sm:$0xff]
        %v998 = vld [vmem:[%s7 + $0x10] sm:$0xff]
        %v999 = vld [vmem:[%s7 + $0x18] sm:$0xff]
        %v1000 = vld [vmem:[%s7 + $0x20] sm:$0xff]
        %v1001 = vld [vmem:[%s7 + $0x28] sm:$0xff]
        %v1002 = vld [vmem:[%s7 + $0x30] sm:$0xff]
        %v1003 = vld [vmem:[%s7 + $0x38] sm:$0xff]
        %v1004 = vld [vmem:[%s7 + $0x40] sm:$0xff]
        %v1005 = vld [vmem:[%s7 + $0x48] sm:$0xff]
        %v1006 = vld [vmem:[%s7 + $0x50] sm:$0xff]
        %v1007 = vld [vmem:[%s7 + $0x58] sm:$0xff]
        %v1008 = vld [vmem:[%s7 + $0x60] sm:$0xff]
        %v1009 = vld [vmem:[%s7 + $0x68] sm:$0xff]
        %v1010 = vld [vmem:[%s7 + $0x70] sm:$0xff]
        %v1011 = vld [vmem:[%s7 + $0x78] sm:$0xff]
        %v1012 = vld [vmem:[%s7 + $0x80] sm:$0xff]
        %v1013 = vld [vmem:[%s7 + $0x88] sm:$0xff]
        %v1014 = vld [vmem:[%s7 + $0x90] sm:$0xff]
        %v1015 = vld [vmem:[%s7 + $0x98] sm:$0xff]
        %v1016 = vld [vmem:[%s7 + $0xa0] sm:$0xff]
        %v1017 = vld [vmem:[%s7 + $0xa8] sm:$0xff]
        %v1018 = vld [vmem:[%s7 + $0xb0] sm:$0xff]
        %v1019 = vld [vmem:[%s7 + $0xb8] sm:$0xff]
        %v1020 = vld [vmem:[%s7 + $0xc0] sm:$0xff]
        %v1021 = vld [vmem:[%s7 + $0xc8] sm:$0xff]
        %v1022 = vld [vmem:[%s7 + $0xd0] sm:$0xff]
        %v1023 = vld [vmem:[%s7 + $0xd8] sm:$0xff]
        %v1024 = vld [vmem:[%s7 + $0xe0] sm:$0xff]
        %v1025 = vld [vmem:[%s7 + $0xe8] sm:$0xff]
        %v1026 = vld [vmem:[%s7 + $0xf0] sm:$0xff]
        %v1027 = vld [vmem:[%s7 + $0xf8] sm:$0xff]
        %v1028 = vld [vmem:[%s7 + $0x100] sm:$0xff]
        %v1029 = vld [vmem:[%s7 + $0x108] sm:$0xff]
        %v1030 = vld [vmem:[%s7 + $0x110] sm:$0xff]
        %v1031 = vld [vmem:[%s7 + $0x118] sm:$0xff]
        %v1032 = vld [vmem:[%s7 + $0x120] sm:$0xff]
        %v1033 = vld [vmem:[%s7 + $0x128] sm:$0xff]
        %v1034 = vld [vmem:[%s7 + $0x130] sm:$0xff]
        %v1035 = vld [vmem:[%s7 + $0x138] sm:$0xff]
        %v1036 = vld [vmem:[%s7 + $0x140] sm:$0xff]
        %v1037 = vld [vmem:[%s7 + $0x148] sm:$0xff]
        %v1038 = vld [vmem:[%s7 + $0x150] sm:$0xff]
        %v1039 = vld [vmem:[%s7 + $0x158] sm:$0xff]
        %v1040 = vld [vmem:[%s7 + $0x160] sm:$0xff]
        %v1041 = vld [vmem:[%s7 + $0x168] sm:$0xff]
        %v1042 = vld [vmem:[%s7 + $0x170] sm:$0xff]
        %v1043 = vld [vmem:[%s7 + $0x178] sm:$0xff]
        %v1044 = vld [vmem:[%s7 + $0x180] sm:$0xff]
        %v1045 = vld [vmem:[%s7 + $0x188] sm:$0xff]
        %v1046 = vld [vmem:[%s7 + $0x190] sm:$0xff]
        %v1047 = vld [vmem:[%s7 + $0x198] sm:$0xff]
        %v1048 = vld [vmem:[%s7 + $0x1a0] sm:$0xff]
        %v1049 = vld [vmem:[%s7 + $0x1a8] sm:$0xff]
        %v1050 = vld [vmem:[%s7 + $0x1b0] sm:$0xff]
        %v1051 = vld [vmem:[%s7 + $0x1b8] sm:$0xff]
        %v1052 = vld [vmem:[%s7 + $0x1c0] sm:$0xff]
        %v1053 = vld [vmem:[%s7 + $0x1c8] sm:$0xff]
        %v1054 = vld [vmem:[%s7 + $0x1d0] sm:$0xff]
        %v1055 = vld [vmem:[%s7 + $0x1d8] sm:$0xff]
        %v1056 = vld [vmem:[%s7 + $0x1e0] sm:$0xff]
        %v1057 = vld [vmem:[%s7 + $0x1e8] sm:$0xff]
        %v1058 = vld [vmem:[%s7 + $0x1f0] sm:$0xff]
        %v1059 = vld [vmem:[%s7 + $0x1f8] sm:$0xff]
        %1060 = vmatprep.subr.mxu0 0.0
        %1061 = vmatpush1.msra.mxu0 0.0
        %1062 = vmatprep.subr.mxu0 0.0
        %1063 = vmatpush1.msra.mxu0 0.0
        %1064 = vmatprep.subr.mxu0 0.0
        %1065 = vmatpush1.msra.mxu0 0.0
        %1066 = vmatprep.subr.mxu0 0.0
        %1067 = vmatpush1.msra.mxu0 0.0
        %1068 = vmatprep.subr.mxu0 0.0
        %1069 = vmatpush1.msra.mxu0 0.0
        %1070 = vmatprep.subr.mxu0 0.0
        %1071 = vmatpush1.msra.mxu0 0.0
        %1072 = vmatprep.subr.mxu0 0.0
        %1073 = vmatpush1.msra.mxu0 0.0
        %1074 = vmatprep.subr.mxu0 0.0
        %1075 = vmatpush1.msra.mxu0 0.0
        %1076 = vmatprep.subr.mxu0 %v1053
        %1077 = vmatpush1.msra.mxu0 %v1052
        %1078 = vmatprep.subr.mxu0 %v1045
        %1079 = vmatpush1.msra.mxu0 %v1044
        %1080 = vmatprep.subr.mxu0 %v1037
        %1081 = vmatpush1.msra.mxu0 %v1036
        %1082 = vmatprep.subr.mxu0 %v1029
        %1083 = vmatpush1.msra.mxu0 %v1028
        %1084 = vmatprep.subr.mxu0 %v1021
        %1085 = vmatpush1.msra.mxu0 %v1020
        %1086 = vmatprep.subr.mxu0 %v1013
        %1087 = vmatpush1.msra.mxu0 %v1012
        %1088 = vmatprep.subr.mxu0 %v1005
        %1089 = vmatpush1.msra.mxu0 %v1004
        %1090 = vmatprep.subr.mxu0 %v997
        %1091 = vmatpush1.msra.mxu0 %v996
        %1092 = vmatprep.subr.mxu0 0.0
        %1093 = vmatpush2.msra.mxu0 0.0
        %1094 = vmatprep.subr.mxu0 0.0
        %1095 = vmatpush2.msra.mxu0 0.0
        %1096 = vmatprep.subr.mxu0 0.0
        %1097 = vmatpush2.msra.mxu0 0.0
        %1098 = vmatprep.subr.mxu0 0.0
        %1099 = vmatpush2.msra.mxu0 0.0
        %1100 = vmatprep.subr.mxu0 0.0
        %1101 = vmatpush2.msra.mxu0 0.0
        %1102 = vmatprep.subr.mxu0 0.0
        %1103 = vmatpush2.msra.mxu0 0.0
        %1104 = vmatprep.subr.mxu0 0.0
        %1105 = vmatpush2.msra.mxu0 0.0
        %1106 = vmatprep.subr.mxu0 0.0
        %1107 = vmatpush2.msra.mxu0 0.0
        %1108 = vmatprep.subr.mxu0 0.0
        %1109 = vmatpush2.msra.mxu0 0.0
        %1110 = vmatprep.subr.mxu0 0.0
        %1111 = vmatpush2.msra.mxu0 0.0
        %1112 = vmatprep.subr.mxu0 0.0
        %1113 = vmatpush2.msra.mxu0 0.0
        %1114 = vmatprep.subr.mxu0 0.0
        %1115 = vmatpush2.msra.mxu0 0.0
        %1116 = vmatprep.subr.mxu0 0.0
        %1117 = vmatpush2.msra.mxu0 0.0
        %1118 = vmatprep.subr.mxu0 0.0
        %1119 = vmatpush2.msra.mxu0 0.0
        %1120 = vmatprep.subr.mxu0 0.0
        %1121 = vmatpush2.msra.mxu0 0.0
        %1122 = vmatprep.subr.mxu0 0.0
        %1123 = vmatpush2.msra.mxu0 0.0
        %1124 = vmatprep.mubr.f32.mxu0 0.0
        %1125 = vmatmul.mubr.f32.gmra.mxu0 %v923
        %v1126 = vpop.f32.mrf.mxu0
        %v1127 = vadd.f32 0.0, %v1126
        %v1128 = vpop.f32.mrf.mxu0
        %v1129 = vadd.f32 0.0, %v1128
        %1130 = vdwg.mxu0
        %1131 = vmatprep.subr.mxu0 0.0
        %1132 = vmatpush1.msra.mxu0 0.0
        %1133 = vmatprep.subr.mxu0 0.0
        %1134 = vmatpush1.msra.mxu0 0.0
        %1135 = vmatprep.subr.mxu0 0.0
        %1136 = vmatpush1.msra.mxu0 0.0
        %1137 = vmatprep.subr.mxu0 0.0
        %1138 = vmatpush1.msra.mxu0 0.0
        %1139 = vmatprep.subr.mxu0 0.0
        %1140 = vmatpush1.msra.mxu0 0.0
        %1141 = vmatprep.subr.mxu0 0.0
        %1142 = vmatpush1.msra.mxu0 0.0
        %1143 = vmatprep.subr.mxu0 0.0
        %1144 = vmatpush1.msra.mxu0 0.0
        %1145 = vmatprep.subr.mxu0 0.0
        %1146 = vmatpush1.msra.mxu0 0.0
        %1147 = vmatprep.subr.mxu0 %v1055
        %1148 = vmatpush1.msra.mxu0 %v1054
        %1149 = vmatprep.subr.mxu0 %v1047
        %1150 = vmatpush1.msra.mxu0 %v1046
        %1151 = vmatprep.subr.mxu0 %v1039
        %1152 = vmatpush1.msra.mxu0 %v1038
        %1153 = vmatprep.subr.mxu0 %v1031
        %1154 = vmatpush1.msra.mxu0 %v1030
        %1155 = vmatprep.subr.mxu0 %v1023
        %1156 = vmatpush1.msra.mxu0 %v1022
        %1157 = vmatprep.subr.mxu0 %v1015
        %1158 = vmatpush1.msra.mxu0 %v1014
        %1159 = vmatprep.subr.mxu0 %v1007
        %1160 = vmatpush1.msra.mxu0 %v1006
        %1161 = vmatprep.subr.mxu0 %v999
        %1162 = vmatpush1.msra.mxu0 %v998
        %1163 = vmatprep.subr.mxu0 0.0
        %1164 = vmatpush2.msra.mxu0 0.0
        %1165 = vmatprep.subr.mxu0 0.0
        %1166 = vmatpush2.msra.mxu0 0.0
        %1167 = vmatprep.subr.mxu0 0.0
        %1168 = vmatpush2.msra.mxu0 0.0
        %1169 = vmatprep.subr.mxu0 0.0
        %1170 = vmatpush2.msra.mxu0 0.0
        %1171 = vmatprep.subr.mxu0 0.0
        %1172 = vmatpush2.msra.mxu0 0.0
        %1173 = vmatprep.subr.mxu0 0.0
        %1174 = vmatpush2.msra.mxu0 0.0
        %1175 = vmatprep.subr.mxu0 0.0
        %1176 = vmatpush2.msra.mxu0 0.0
        %1177 = vmatprep.subr.mxu0 0.0
        %1178 = vmatpush2.msra.mxu0 0.0
        %1179 = vmatprep.subr.mxu0 0.0
        %1180 = vmatpush2.msra.mxu0 0.0
        %1181 = vmatprep.subr.mxu0 0.0
        %1182 = vmatpush2.msra.mxu0 0.0
        %1183 = vmatprep.subr.mxu0 0.0
        %1184 = vmatpush2.msra.mxu0 0.0
        %1185 = vmatprep.subr.mxu0 0.0
        %1186 = vmatpush2.msra.mxu0 0.0
        %1187 = vmatprep.subr.mxu0 0.0
        %1188 = vmatpush2.msra.mxu0 0.0
        %1189 = vmatprep.subr.mxu0 0.0
        %1190 = vmatpush2.msra.mxu0 0.0
        %1191 = vmatprep.subr.mxu0 0.0
        %1192 = vmatpush2.msra.mxu0 0.0
        %1193 = vmatprep.subr.mxu0 0.0
        %1194 = vmatpush2.msra.mxu0 0.0
        %1195 = vmatprep.mubr.f32.mxu0 0.0
        %1196 = vmatmul.mubr.f32.gmra.mxu0 %v923
        %v1197 = vpop.f32.mrf.mxu0
        %v1198 = vadd.f32 0.0, %v1197
        %v1199 = vpop.f32.mrf.mxu0
        %v1200 = vadd.f32 0.0, %v1199
        %1201 = vdwg.mxu0
        %1202 = vmatprep.subr.mxu0 0.0
        %1203 = vmatpush1.msra.mxu0 0.0
        %1204 = vmatprep.subr.mxu0 0.0
        %1205 = vmatpush1.msra.mxu0 0.0
        %1206 = vmatprep.subr.mxu0 0.0
        %1207 = vmatpush1.msra.mxu0 0.0
        %1208 = vmatprep.subr.mxu0 0.0
        %1209 = vmatpush1.msra.mxu0 0.0
        %1210 = vmatprep.subr.mxu0 0.0
        %1211 = vmatpush1.msra.mxu0 0.0
        %1212 = vmatprep.subr.mxu0 0.0
        %1213 = vmatpush1.msra.mxu0 0.0
        %1214 = vmatprep.subr.mxu0 0.0
        %1215 = vmatpush1.msra.mxu0 0.0
        %1216 = vmatprep.subr.mxu0 0.0
        %1217 = vmatpush1.msra.mxu0 0.0
        %1218 = vmatprep.subr.mxu0 %v1057
        %1219 = vmatpush1.msra.mxu0 %v1056
        %1220 = vmatprep.subr.mxu0 %v1049
        %1221 = vmatpush1.msra.mxu0 %v1048
        %1222 = vmatprep.subr.mxu0 %v1041
        %1223 = vmatpush1.msra.mxu0 %v1040
        %1224 = vmatprep.subr.mxu0 %v1033
        %1225 = vmatpush1.msra.mxu0 %v1032
        %1226 = vmatprep.subr.mxu0 %v1025
        %1227 = vmatpush1.msra.mxu0 %v1024
        %1228 = vmatprep.subr.mxu0 %v1017
        %1229 = vmatpush1.msra.mxu0 %v1016
        %1230 = vmatprep.subr.mxu0 %v1009
        %1231 = vmatpush1.msra.mxu0 %v1008
        %1232 = vmatprep.subr.mxu0 %v1001
        %1233 = vmatpush1.msra.mxu0 %v1000
        %1234 = vmatprep.subr.mxu0 0.0
        %1235 = vmatpush2.msra.mxu0 0.0
        %1236 = vmatprep.subr.mxu0 0.0
        %1237 = vmatpush2.msra.mxu0 0.0
        %1238 = vmatprep.subr.mxu0 0.0
        %1239 = vmatpush2.msra.mxu0 0.0
        %1240 = vmatprep.subr.mxu0 0.0
        %1241 = vmatpush2.msra.mxu0 0.0
        %1242 = vmatprep.subr.mxu0 0.0
        %1243 = vmatpush2.msra.mxu0 0.0
        %1244 = vmatprep.subr.mxu0 0.0
        %1245 = vmatpush2.msra.mxu0 0.0
        %1246 = vmatprep.subr.mxu0 0.0
        %1247 = vmatpush2.msra.mxu0 0.0
        %1248 = vmatprep.subr.mxu0 0.0
        %1249 = vmatpush2.msra.mxu0 0.0
        %1250 = vmatprep.subr.mxu0 0.0
        %1251 = vmatpush2.msra.mxu0 0.0
        %1252 = vmatprep.subr.mxu0 0.0
        %1253 = vmatpush2.msra.mxu0 0.0
        %1254 = vmatprep.subr.mxu0 0.0
        %1255 = vmatpush2.msra.mxu0 0.0
        %1256 = vmatprep.subr.mxu0 0.0
        %1257 = vmatpush2.msra.mxu0 0.0
        %1258 = vmatprep.subr.mxu0 0.0
        %1259 = vmatpush2.msra.mxu0 0.0
        %1260 = vmatprep.subr.mxu0 0.0
        %1261 = vmatpush2.msra.mxu0 0.0
        %1262 = vmatprep.subr.mxu0 0.0
        %1263 = vmatpush2.msra.mxu0 0.0
        %1264 = vmatprep.subr.mxu0 0.0
        %1265 = vmatpush2.msra.mxu0 0.0
        %1266 = vmatprep.mubr.f32.mxu0 0.0
        %1267 = vmatmul.mubr.f32.gmra.mxu0 %v923
        %v1268 = vpop.f32.mrf.mxu0
        %v1269 = vadd.f32 0.0, %v1268
        %v1270 = vpop.f32.mrf.mxu0
        %v1271 = vadd.f32 0.0, %v1270
        %1272 = vdwg.mxu0
        %1273 = vmatprep.subr.mxu0 0.0
        %1274 = vmatpush1.msra.mxu0 0.0
        %1275 = vmatprep.subr.mxu0 0.0
        %1276 = vmatpush1.msra.mxu0 0.0
        %1277 = vmatprep.subr.mxu0 0.0
        %1278 = vmatpush1.msra.mxu0 0.0
        %1279 = vmatprep.subr.mxu0 0.0
        %1280 = vmatpush1.msra.mxu0 0.0
        %1281 = vmatprep.subr.mxu0 0.0
        %1282 = vmatpush1.msra.mxu0 0.0
        %1283 = vmatprep.subr.mxu0 0.0
        %1284 = vmatpush1.msra.mxu0 0.0
        %1285 = vmatprep.subr.mxu0 0.0
        %1286 = vmatpush1.msra.mxu0 0.0
        %1287 = vmatprep.subr.mxu0 0.0
        %1288 = vmatpush1.msra.mxu0 0.0
        %1289 = vmatprep.subr.mxu0 %v1059
        %1290 = vmatpush1.msra.mxu0 %v1058
        %1291 = vmatprep.subr.mxu0 %v1051
        %1292 = vmatpush1.msra.mxu0 %v1050
        %1293 = vmatprep.subr.mxu0 %v1043
        %1294 = vmatpush1.msra.mxu0 %v1042
        %1295 = vmatprep.subr.mxu0 %v1035
        %1296 = vmatpush1.msra.mxu0 %v1034
        %1297 = vmatprep.subr.mxu0 %v1027
        %1298 = vmatpush1.msra.mxu0 %v1026
        %1299 = vmatprep.subr.mxu0 %v1019
        %1300 = vmatpush1.msra.mxu0 %v1018
        %1301 = vmatprep.subr.mxu0 %v1011
        %1302 = vmatpush1.msra.mxu0 %v1010
        %1303 = vmatprep.subr.mxu0 %v1003
        %1304 = vmatpush1.msra.mxu0 %v1002
        %1305 = vmatprep.subr.mxu0 0.0
        %1306 = vmatpush2.msra.mxu0 0.0
        %1307 = vmatprep.subr.mxu0 0.0
        %1308 = vmatpush2.msra.mxu0 0.0
        %1309 = vmatprep.subr.mxu0 0.0
        %1310 = vmatpush2.msra.mxu0 0.0
        %1311 = vmatprep.subr.mxu0 0.0
        %1312 = vmatpush2.msra.mxu0 0.0
        %1313 = vmatprep.subr.mxu0 0.0
        %1314 = vmatpush2.msra.mxu0 0.0
        %1315 = vmatprep.subr.mxu0 0.0
        %1316 = vmatpush2.msra.mxu0 0.0
        %1317 = vmatprep.subr.mxu0 0.0
        %1318 = vmatpush2.msra.mxu0 0.0
        %1319 = vmatprep.subr.mxu0 0.0
        %1320 = vmatpush2.msra.mxu0 0.0
        %1321 = vmatprep.subr.mxu0 0.0
        %1322 = vmatpush2.msra.mxu0 0.0
        %1323 = vmatprep.subr.mxu0 0.0
        %1324 = vmatpush2.msra.mxu0 0.0
        %1325 = vmatprep.subr.mxu0 0.0
        %1326 = vmatpush2.msra.mxu0 0.0
        %1327 = vmatprep.subr.mxu0 0.0
        %1328 = vmatpush2.msra.mxu0 0.0
        %1329 = vmatprep.subr.mxu0 0.0
        %1330 = vmatpush2.msra.mxu0 0.0
        %1331 = vmatprep.subr.mxu0 0.0
        %1332 = vmatpush2.msra.mxu0 0.0
        %1333 = vmatprep.subr.mxu0 0.0
        %1334 = vmatpush2.msra.mxu0 0.0
        %1335 = vmatprep.subr.mxu0 0.0
        %1336 = vmatpush2.msra.mxu0 0.0
        %1337 = vmatprep.mubr.f32.mxu0 0.0
        %1338 = vmatmul.mubr.f32.gmra.mxu0 %v923
        %v1339 = vpop.f32.mrf.mxu0
        %v1340 = vadd.f32 0.0, %v1339
        %v1341 = vpop.f32.mrf.mxu0
        %v1342 = vadd.f32 0.0, %v1341
        %1343 = vdwg.mxu0
        %v1344 = vld [vmem:[#allocation5] sm:$0xff]
        %v1345 = vld [vmem:[#allocation5 + $0x8] sm:$0xff]
        %v1346 = vld [vmem:[#allocation5 + $0x10] sm:$0xff]
        %v1347 = vld [vmem:[#allocation5 + $0x18] sm:$0xff]
        %v1348 = vld [vmem:[#allocation5 + $0x20] sm:$0xff]
        %v1349 = vld [vmem:[#allocation5 + $0x28] sm:$0xff]
        %v1350 = vld [vmem:[#allocation5 + $0x30] sm:$0xff]
        %v1351 = vld [vmem:[#allocation5 + $0x38] sm:$0xff]
        %v1352 = vld [vmem:[#allocation5 + $0x40] sm:$0xff]
        %v1353 = vld [vmem:[#allocation5 + $0x48] sm:$0xff]
        %v1354 = vld [vmem:[#allocation5 + $0x50] sm:$0xff]
        %v1355 = vld [vmem:[#allocation5 + $0x58] sm:$0xff]
        %v1356 = vld [vmem:[#allocation5 + $0x60] sm:$0xff]
        %v1357 = vld [vmem:[#allocation5 + $0x68] sm:$0xff]
        %v1358 = vld [vmem:[#allocation5 + $0x70] sm:$0xff]
        %v1359 = vld [vmem:[#allocation5 + $0x78] sm:$0xff]
        %v1360 = vld [vmem:[#allocation5 + $0x80] sm:$0xff]
        %v1361 = vld [vmem:[#allocation5 + $0x88] sm:$0xff]
        %v1362 = vld [vmem:[#allocation5 + $0x90] sm:$0xff]
        %v1363 = vld [vmem:[#allocation5 + $0x98] sm:$0xff]
        %v1364 = vld [vmem:[#allocation5 + $0xa0] sm:$0xff]
        %v1365 = vld [vmem:[#allocation5 + $0xa8] sm:$0xff]
        %v1366 = vld [vmem:[#allocation5 + $0xb0] sm:$0xff]
        %v1367 = vld [vmem:[#allocation5 + $0xb8] sm:$0xff]
        %v1368 = vld [vmem:[#allocation5 + $0xc0] sm:$0xff]
        %v1369 = vld [vmem:[#allocation5 + $0xc8] sm:$0xff]
        %v1370 = vld [vmem:[#allocation5 + $0xd0] sm:$0xff]
        %v1371 = vld [vmem:[#allocation5 + $0xd8] sm:$0xff]
        %v1372 = vld [vmem:[#allocation5 + $0xe0] sm:$0xff]
        %v1373 = vld [vmem:[#allocation5 + $0xe8] sm:$0xff]
        %v1374 = vld [vmem:[#allocation5 + $0xf0] sm:$0xff]
        %v1375 = vld [vmem:[#allocation5 + $0xf8] sm:$0xff]
        %v1376 = vld [vmem:[#allocation5 + $0x100] sm:$0xff]
        %v1377 = vld [vmem:[#allocation5 + $0x108] sm:$0xff]
        %v1378 = vld [vmem:[#allocation5 + $0x110] sm:$0xff]
        %v1379 = vld [vmem:[#allocation5 + $0x118] sm:$0xff]
        %v1380 = vld [vmem:[#allocation5 + $0x120] sm:$0xff]
        %v1381 = vld [vmem:[#allocation5 + $0x128] sm:$0xff]
        %v1382 = vld [vmem:[#allocation5 + $0x130] sm:$0xff]
        %v1383 = vld [vmem:[#allocation5 + $0x138] sm:$0xff]
        %v1384 = vld [vmem:[#allocation5 + $0x140] sm:$0xff]
        %v1385 = vld [vmem:[#allocation5 + $0x148] sm:$0xff]
        %v1386 = vld [vmem:[#allocation5 + $0x150] sm:$0xff]
        %v1387 = vld [vmem:[#allocation5 + $0x158] sm:$0xff]
        %v1388 = vld [vmem:[#allocation5 + $0x160] sm:$0xff]
        %v1389 = vld [vmem:[#allocation5 + $0x168] sm:$0xff]
        %v1390 = vld [vmem:[#allocation5 + $0x170] sm:$0xff]
        %v1391 = vld [vmem:[#allocation5 + $0x178] sm:$0xff]
        %v1392 = vld [vmem:[#allocation5 + $0x180] sm:$0xff]
        %v1393 = vld [vmem:[#allocation5 + $0x188] sm:$0xff]
        %v1394 = vld [vmem:[#allocation5 + $0x190] sm:$0xff]
        %v1395 = vld [vmem:[#allocation5 + $0x198] sm:$0xff]
        %v1396 = vld [vmem:[#allocation5 + $0x1a0] sm:$0xff]
        %v1397 = vld [vmem:[#allocation5 + $0x1a8] sm:$0xff]
        %v1398 = vld [vmem:[#allocation5 + $0x1b0] sm:$0xff]
        %v1399 = vld [vmem:[#allocation5 + $0x1b8] sm:$0xff]
        %v1400 = vld [vmem:[#allocation5 + $0x1c0] sm:$0xff]
        %v1401 = vld [vmem:[#allocation5 + $0x1c8] sm:$0xff]
        %v1402 = vld [vmem:[#allocation5 + $0x1d0] sm:$0xff]
        %v1403 = vld [vmem:[#allocation5 + $0x1d8] sm:$0xff]
        %v1404 = vld [vmem:[#allocation5 + $0x1e0] sm:$0xff]
        %v1405 = vld [vmem:[#allocation5 + $0x1e8] sm:$0xff]
        %v1406 = vld [vmem:[#allocation5 + $0x1f0] sm:$0xff]
        %v1407 = vld [vmem:[#allocation5 + $0x1f8] sm:$0xff]
        %v1408 = vld [vmem:[#allocation5 + $0x200] sm:$0xff]
        %v1409 = vld [vmem:[#allocation5 + $0x208] sm:$0xff]
        %v1410 = vld [vmem:[#allocation5 + $0x210] sm:$0xff]
        %v1411 = vld [vmem:[#allocation5 + $0x218] sm:$0xff]
        %v1412 = vld [vmem:[#allocation5 + $0x220] sm:$0xff]
        %v1413 = vld [vmem:[#allocation5 + $0x228] sm:$0xff]
        %v1414 = vld [vmem:[#allocation5 + $0x230] sm:$0xff]
        %v1415 = vld [vmem:[#allocation5 + $0x238] sm:$0xff]
        %v1416 = vld [vmem:[#allocation5 + $0x240] sm:$0xff]
        %v1417 = vld [vmem:[#allocation5 + $0x248] sm:$0xff]
        %v1418 = vld [vmem:[#allocation5 + $0x250] sm:$0xff]
        %v1419 = vld [vmem:[#allocation5 + $0x258] sm:$0xff]
        %v1420 = vld [vmem:[#allocation5 + $0x260] sm:$0xff]
        %v1421 = vld [vmem:[#allocation5 + $0x268] sm:$0xff]
        %v1422 = vld [vmem:[#allocation5 + $0x270] sm:$0xff]
        %v1423 = vld [vmem:[#allocation5 + $0x278] sm:$0xff]
        %v1424 = vld [vmem:[#allocation5 + $0x280] sm:$0xff]
        %v1425 = vld [vmem:[#allocation5 + $0x288] sm:$0xff]
        %v1426 = vld [vmem:[#allocation5 + $0x290] sm:$0xff]
        %v1427 = vld [vmem:[#allocation5 + $0x298] sm:$0xff]
        %v1428 = vld [vmem:[#allocation5 + $0x2a0] sm:$0xff]
        %v1429 = vld [vmem:[#allocation5 + $0x2a8] sm:$0xff]
        %v1430 = vld [vmem:[#allocation5 + $0x2b0] sm:$0xff]
        %v1431 = vld [vmem:[#allocation5 + $0x2b8] sm:$0xff]
        %v1432 = vld [vmem:[#allocation5 + $0x2c0] sm:$0xff]
        %v1433 = vld [vmem:[#allocation5 + $0x2c8] sm:$0xff]
        %v1434 = vld [vmem:[#allocation5 + $0x2d0] sm:$0xff]
        %v1435 = vld [vmem:[#allocation5 + $0x2d8] sm:$0xff]
        %v1436 = vld [vmem:[#allocation5 + $0x2e0] sm:$0xff]
        %v1437 = vld [vmem:[#allocation5 + $0x2e8] sm:$0xff]
        %v1438 = vld [vmem:[#allocation5 + $0x2f0] sm:$0xff]
        %v1439 = vld [vmem:[#allocation5 + $0x2f8] sm:$0xff]
        %v1440 = vld [vmem:[#allocation5 + $0x300] sm:$0xff]
        %v1441 = vld [vmem:[#allocation5 + $0x308] sm:$0xff]
        %v1442 = vld [vmem:[#allocation5 + $0x310] sm:$0xff]
        %v1443 = vld [vmem:[#allocation5 + $0x318] sm:$0xff]
        %v1444 = vld [vmem:[#allocation5 + $0x320] sm:$0xff]
        %v1445 = vld [vmem:[#allocation5 + $0x328] sm:$0xff]
        %v1446 = vld [vmem:[#allocation5 + $0x330] sm:$0xff]
        %v1447 = vld [vmem:[#allocation5 + $0x338] sm:$0xff]
        %v1448 = vld [vmem:[#allocation5 + $0x340] sm:$0xff]
        %v1449 = vld [vmem:[#allocation5 + $0x348] sm:$0xff]
        %v1450 = vld [vmem:[#allocation5 + $0x350] sm:$0xff]
        %v1451 = vld [vmem:[#allocation5 + $0x358] sm:$0xff]
        %v1452 = vld [vmem:[#allocation5 + $0x360] sm:$0xff]
        %v1453 = vld [vmem:[#allocation5 + $0x368] sm:$0xff]
        %v1454 = vld [vmem:[#allocation5 + $0x370] sm:$0xff]
        %v1455 = vld [vmem:[#allocation5 + $0x378] sm:$0xff]
        %v1456 = vld [vmem:[#allocation5 + $0x380] sm:$0xff]
        %v1457 = vld [vmem:[#allocation5 + $0x388] sm:$0xff]
        %v1458 = vld [vmem:[#allocation5 + $0x390] sm:$0xff]
        %v1459 = vld [vmem:[#allocation5 + $0x398] sm:$0xff]
        %v1460 = vld [vmem:[#allocation5 + $0x3a0] sm:$0xff]
        %v1461 = vld [vmem:[#allocation5 + $0x3a8] sm:$0xff]
        %v1462 = vld [vmem:[#allocation5 + $0x3b0] sm:$0xff]
        %v1463 = vld [vmem:[#allocation5 + $0x3b8] sm:$0xff]
        %v1464 = vld [vmem:[#allocation5 + $0x3c0] sm:$0xff]
        %v1465 = vld [vmem:[#allocation5 + $0x3c8] sm:$0xff]
        %v1466 = vld [vmem:[#allocation5 + $0x3d0] sm:$0xff]
        %v1467 = vld [vmem:[#allocation5 + $0x3d8] sm:$0xff]
        %v1468 = vld [vmem:[#allocation5 + $0x3e0] sm:$0xff]
        %v1469 = vld [vmem:[#allocation5 + $0x3e8] sm:$0xff]
        %v1470 = vld [vmem:[#allocation5 + $0x3f0] sm:$0xff]
        %v1471 = vld [vmem:[#allocation5 + $0x3f8] sm:$0xff]
        %v1472 = vld [vmem:[#allocation5 + $0x400] sm:$0xff]
        %v1473 = vld [vmem:[#allocation5 + $0x408] sm:$0xff]
        %v1474 = vld [vmem:[#allocation5 + $0x410] sm:$0xff]
        %v1475 = vld [vmem:[#allocation5 + $0x418] sm:$0xff]
        %v1476 = vld [vmem:[#allocation5 + $0x420] sm:$0xff]
        %v1477 = vld [vmem:[#allocation5 + $0x428] sm:$0xff]
        %v1478 = vld [vmem:[#allocation5 + $0x430] sm:$0xff]
        %v1479 = vld [vmem:[#allocation5 + $0x438] sm:$0xff]
        %v1480 = vld [vmem:[#allocation5 + $0x440] sm:$0xff]
        %v1481 = vld [vmem:[#allocation5 + $0x448] sm:$0xff]
        %v1482 = vld [vmem:[#allocation5 + $0x450] sm:$0xff]
        %v1483 = vld [vmem:[#allocation5 + $0x458] sm:$0xff]
        %v1484 = vld [vmem:[#allocation5 + $0x460] sm:$0xff]
        %v1485 = vld [vmem:[#allocation5 + $0x468] sm:$0xff]
        %v1486 = vld [vmem:[#allocation5 + $0x470] sm:$0xff]
        %v1487 = vld [vmem:[#allocation5 + $0x478] sm:$0xff]
        %v1488 = vld [vmem:[#allocation5 + $0x480] sm:$0xff]
        %v1489 = vld [vmem:[#allocation5 + $0x488] sm:$0xff]
        %v1490 = vld [vmem:[#allocation5 + $0x490] sm:$0xff]
        %v1491 = vld [vmem:[#allocation5 + $0x498] sm:$0xff]
        %v1492 = vld [vmem:[#allocation5 + $0x4a0] sm:$0xff]
        %v1493 = vld [vmem:[#allocation5 + $0x4a8] sm:$0xff]
        %v1494 = vld [vmem:[#allocation5 + $0x4b0] sm:$0xff]
        %v1495 = vld [vmem:[#allocation5 + $0x4b8] sm:$0xff]
        %v1496 = vld [vmem:[#allocation5 + $0x4c0] sm:$0xff]
        %v1497 = vld [vmem:[#allocation5 + $0x4c8] sm:$0xff]
        %v1498 = vld [vmem:[#allocation5 + $0x4d0] sm:$0xff]
        %v1499 = vld [vmem:[#allocation5 + $0x4d8] sm:$0xff]
        %v1500 = vld [vmem:[#allocation5 + $0x4e0] sm:$0xff]
        %v1501 = vld [vmem:[#allocation5 + $0x4e8] sm:$0xff]
        %v1502 = vld [vmem:[#allocation5 + $0x4f0] sm:$0xff]
        %v1503 = vld [vmem:[#allocation5 + $0x4f8] sm:$0xff]
        %v1504 = vld [vmem:[#allocation5 + $0x500] sm:$0xff]
        %v1505 = vld [vmem:[#allocation5 + $0x508] sm:$0xff]
        %v1506 = vld [vmem:[#allocation5 + $0x510] sm:$0xff]
        %v1507 = vld [vmem:[#allocation5 + $0x518] sm:$0xff]
        %v1508 = vld [vmem:[#allocation5 + $0x520] sm:$0xff]
        %v1509 = vld [vmem:[#allocation5 + $0x528] sm:$0xff]
        %v1510 = vld [vmem:[#allocation5 + $0x530] sm:$0xff]
        %v1511 = vld [vmem:[#allocation5 + $0x538] sm:$0xff]
        %v1512 = vld [vmem:[#allocation5 + $0x540] sm:$0xff]
        %v1513 = vld [vmem:[#allocation5 + $0x548] sm:$0xff]
        %v1514 = vld [vmem:[#allocation5 + $0x550] sm:$0xff]
        %v1515 = vld [vmem:[#allocation5 + $0x558] sm:$0xff]
        %v1516 = vld [vmem:[#allocation5 + $0x560] sm:$0xff]
        %v1517 = vld [vmem:[#allocation5 + $0x568] sm:$0xff]
        %v1518 = vld [vmem:[#allocation5 + $0x570] sm:$0xff]
        %v1519 = vld [vmem:[#allocation5 + $0x578] sm:$0xff]
        %v1520 = vld [vmem:[#allocation5 + $0x580] sm:$0xff]
        %v1521 = vld [vmem:[#allocation5 + $0x588] sm:$0xff]
        %v1522 = vld [vmem:[#allocation5 + $0x590] sm:$0xff]
        %v1523 = vld [vmem:[#allocation5 + $0x598] sm:$0xff]
        %v1524 = vld [vmem:[#allocation5 + $0x5a0] sm:$0xff]
        %v1525 = vld [vmem:[#allocation5 + $0x5a8] sm:$0xff]
        %v1526 = vld [vmem:[#allocation5 + $0x5b0] sm:$0xff]
        %v1527 = vld [vmem:[#allocation5 + $0x5b8] sm:$0xff]
        %v1528 = vld [vmem:[#allocation5 + $0x5c0] sm:$0xff]
        %v1529 = vld [vmem:[#allocation5 + $0x5c8] sm:$0xff]
        %v1530 = vld [vmem:[#allocation5 + $0x5d0] sm:$0xff]
        %v1531 = vld [vmem:[#allocation5 + $0x5d8] sm:$0xff]
        %v1532 = vld [vmem:[#allocation5 + $0x5e0] sm:$0xff]
        %v1533 = vld [vmem:[#allocation5 + $0x5e8] sm:$0xff]
        %v1534 = vld [vmem:[#allocation5 + $0x5f0] sm:$0xff]
        %v1535 = vld [vmem:[#allocation5 + $0x5f8] sm:$0xff]
        %v1536 = vld [vmem:[#allocation5 + $0x600] sm:$0xff]
        %v1537 = vld [vmem:[#allocation5 + $0x608] sm:$0xff]
        %v1538 = vld [vmem:[#allocation5 + $0x610] sm:$0xff]
        %v1539 = vld [vmem:[#allocation5 + $0x618] sm:$0xff]
        %v1540 = vld [vmem:[#allocation5 + $0x620] sm:$0xff]
        %v1541 = vld [vmem:[#allocation5 + $0x628] sm:$0xff]
        %v1542 = vld [vmem:[#allocation5 + $0x630] sm:$0xff]
        %v1543 = vld [vmem:[#allocation5 + $0x638] sm:$0xff]
        %v1544 = vld [vmem:[#allocation5 + $0x640] sm:$0xff]
        %v1545 = vld [vmem:[#allocation5 + $0x648] sm:$0xff]
        %v1546 = vld [vmem:[#allocation5 + $0x650] sm:$0xff]
        %v1547 = vld [vmem:[#allocation5 + $0x658] sm:$0xff]
        %v1548 = vld [vmem:[#allocation5 + $0x660] sm:$0xff]
        %v1549 = vld [vmem:[#allocation5 + $0x668] sm:$0xff]
        %v1550 = vld [vmem:[#allocation5 + $0x670] sm:$0xff]
        %v1551 = vld [vmem:[#allocation5 + $0x678] sm:$0xff]
        %v1552 = vld [vmem:[#allocation5 + $0x680] sm:$0xff]
        %v1553 = vld [vmem:[#allocation5 + $0x688] sm:$0xff]
        %v1554 = vld [vmem:[#allocation5 + $0x690] sm:$0xff]
        %v1555 = vld [vmem:[#allocation5 + $0x698] sm:$0xff]
        %v1556 = vld [vmem:[#allocation5 + $0x6a0] sm:$0xff]
        %v1557 = vld [vmem:[#allocation5 + $0x6a8] sm:$0xff]
        %v1558 = vld [vmem:[#allocation5 + $0x6b0] sm:$0xff]
        %v1559 = vld [vmem:[#allocation5 + $0x6b8] sm:$0xff]
        %v1560 = vld [vmem:[#allocation5 + $0x6c0] sm:$0xff]
        %v1561 = vld [vmem:[#allocation5 + $0x6c8] sm:$0xff]
        %v1562 = vld [vmem:[#allocation5 + $0x6d0] sm:$0xff]
        %v1563 = vld [vmem:[#allocation5 + $0x6d8] sm:$0xff]
        %v1564 = vld [vmem:[#allocation5 + $0x6e0] sm:$0xff]
        %v1565 = vld [vmem:[#allocation5 + $0x6e8] sm:$0xff]
        %v1566 = vld [vmem:[#allocation5 + $0x6f0] sm:$0xff]
        %v1567 = vld [vmem:[#allocation5 + $0x6f8] sm:$0xff]
        %v1568 = vld [vmem:[#allocation5 + $0x700] sm:$0xff]
        %v1569 = vld [vmem:[#allocation5 + $0x708] sm:$0xff]
        %v1570 = vld [vmem:[#allocation5 + $0x710] sm:$0xff]
        %v1571 = vld [vmem:[#allocation5 + $0x718] sm:$0xff]
        %v1572 = vld [vmem:[#allocation5 + $0x720] sm:$0xff]
        %v1573 = vld [vmem:[#allocation5 + $0x728] sm:$0xff]
        %v1574 = vld [vmem:[#allocation5 + $0x730] sm:$0xff]
        %v1575 = vld [vmem:[#allocation5 + $0x738] sm:$0xff]
        %v1576 = vld [vmem:[#allocation5 + $0x740] sm:$0xff]
        %v1577 = vld [vmem:[#allocation5 + $0x748] sm:$0xff]
        %v1578 = vld [vmem:[#allocation5 + $0x750] sm:$0xff]
        %v1579 = vld [vmem:[#allocation5 + $0x758] sm:$0xff]
        %v1580 = vld [vmem:[#allocation5 + $0x760] sm:$0xff]
        %v1581 = vld [vmem:[#allocation5 + $0x768] sm:$0xff]
        %v1582 = vld [vmem:[#allocation5 + $0x770] sm:$0xff]
        %v1583 = vld [vmem:[#allocation5 + $0x778] sm:$0xff]
        %v1584 = vld [vmem:[#allocation5 + $0x780] sm:$0xff]
        %v1585 = vld [vmem:[#allocation5 + $0x788] sm:$0xff]
        %v1586 = vld [vmem:[#allocation5 + $0x790] sm:$0xff]
        %v1587 = vld [vmem:[#allocation5 + $0x798] sm:$0xff]
        %v1588 = vld [vmem:[#allocation5 + $0x7a0] sm:$0xff]
        %v1589 = vld [vmem:[#allocation5 + $0x7a8] sm:$0xff]
        %v1590 = vld [vmem:[#allocation5 + $0x7b0] sm:$0xff]
        %v1591 = vld [vmem:[#allocation5 + $0x7b8] sm:$0xff]
        %v1592 = vld [vmem:[#allocation5 + $0x7c0] sm:$0xff]
        %v1593 = vld [vmem:[#allocation5 + $0x7c8] sm:$0xff]
        %v1594 = vld [vmem:[#allocation5 + $0x7d0] sm:$0xff]
        %v1595 = vld [vmem:[#allocation5 + $0x7d8] sm:$0xff]
        %v1596 = vld [vmem:[#allocation5 + $0x7e0] sm:$0xff]
        %v1597 = vld [vmem:[#allocation5 + $0x7e8] sm:$0xff]
        %v1598 = vld [vmem:[#allocation5 + $0x7f0] sm:$0xff]
        %v1599 = vld [vmem:[#allocation5 + $0x7f8] sm:$0xff]
        %1600 = vmatprep.subr.mxu0 %v1465
        %1601 = vmatpush1.msra.mxu0 %v1464
        %1602 = vmatprep.subr.mxu0 %v1457
        %1603 = vmatpush1.msra.mxu0 %v1456
        %1604 = vmatprep.subr.mxu0 %v1449
        %1605 = vmatpush1.msra.mxu0 %v1448
        %1606 = vmatprep.subr.mxu0 %v1441
        %1607 = vmatpush1.msra.mxu0 %v1440
        %1608 = vmatprep.subr.mxu0 %v1433
        %1609 = vmatpush1.msra.mxu0 %v1432
        %1610 = vmatprep.subr.mxu0 %v1425
        %1611 = vmatpush1.msra.mxu0 %v1424
        %1612 = vmatprep.subr.mxu0 %v1417
        %1613 = vmatpush1.msra.mxu0 %v1416
        %1614 = vmatprep.subr.mxu0 %v1409
        %1615 = vmatpush1.msra.mxu0 %v1408
        %1616 = vmatprep.subr.mxu0 %v1401
        %1617 = vmatpush1.msra.mxu0 %v1400
        %1618 = vmatprep.subr.mxu0 %v1393
        %1619 = vmatpush1.msra.mxu0 %v1392
        %1620 = vmatprep.subr.mxu0 %v1385
        %1621 = vmatpush1.msra.mxu0 %v1384
        %1622 = vmatprep.subr.mxu0 %v1377
        %1623 = vmatpush1.msra.mxu0 %v1376
        %1624 = vmatprep.subr.mxu0 %v1369
        %1625 = vmatpush1.msra.mxu0 %v1368
        %1626 = vmatprep.subr.mxu0 %v1361
        %1627 = vmatpush1.msra.mxu0 %v1360
        %1628 = vmatprep.subr.mxu0 %v1353
        %1629 = vmatpush1.msra.mxu0 %v1352
        %1630 = vmatprep.subr.mxu0 %v1345
        %1631 = vmatpush1.msra.mxu0 %v1344
        %1632 = vmatprep.subr.mxu0 %v1593
        %1633 = vmatpush2.msra.mxu0 %v1592
        %1634 = vmatprep.subr.mxu0 %v1585
        %1635 = vmatpush2.msra.mxu0 %v1584
        %1636 = vmatprep.subr.mxu0 %v1577
        %1637 = vmatpush2.msra.mxu0 %v1576
        %1638 = vmatprep.subr.mxu0 %v1569
        %1639 = vmatpush2.msra.mxu0 %v1568
        %1640 = vmatprep.subr.mxu0 %v1561
        %1641 = vmatpush2.msra.mxu0 %v1560
        %1642 = vmatprep.subr.mxu0 %v1553
        %1643 = vmatpush2.msra.mxu0 %v1552
        %1644 = vmatprep.subr.mxu0 %v1545
        %1645 = vmatpush2.msra.mxu0 %v1544
        %1646 = vmatprep.subr.mxu0 %v1537
        %1647 = vmatpush2.msra.mxu0 %v1536
        %1648 = vmatprep.subr.mxu0 %v1529
        %1649 = vmatpush2.msra.mxu0 %v1528
        %1650 = vmatprep.subr.mxu0 %v1521
        %1651 = vmatpush2.msra.mxu0 %v1520
        %1652 = vmatprep.subr.mxu0 %v1513
        %1653 = vmatpush2.msra.mxu0 %v1512
        %1654 = vmatprep.subr.mxu0 %v1505
        %1655 = vmatpush2.msra.mxu0 %v1504
        %1656 = vmatprep.subr.mxu0 %v1497
        %1657 = vmatpush2.msra.mxu0 %v1496
        %1658 = vmatprep.subr.mxu0 %v1489
        %1659 = vmatpush2.msra.mxu0 %v1488
        %1660 = vmatprep.subr.mxu0 %v1481
        %1661 = vmatpush2.msra.mxu0 %v1480
        %1662 = vmatprep.subr.mxu0 %v1473
        %1663 = vmatpush2.msra.mxu0 %v1472
        %1664 = vmatprep.mubr.f32.mxu0 %v876
        %1665 = vmatmul.mubr.f32.gmra.mxu0 %v875
        %v1666 = vpop.f32.mrf.mxu0
        %v1667 = vadd.f32 0.0, %v1666
        %v1668 = vpop.f32.mrf.mxu0
        %v1669 = vadd.f32 0.0, %v1668
        %1670 = vdwg.mxu0
        %1671 = vmatprep.subr.mxu0 %v1467
        %1672 = vmatpush1.msra.mxu0 %v1466
        %1673 = vmatprep.subr.mxu0 %v1459
        %1674 = vmatpush1.msra.mxu0 %v1458
        %1675 = vmatprep.subr.mxu0 %v1451
        %1676 = vmatpush1.msra.mxu0 %v1450
        %1677 = vmatprep.subr.mxu0 %v1443
        %1678 = vmatpush1.msra.mxu0 %v1442
        %1679 = vmatprep.subr.mxu0 %v1435
        %1680 = vmatpush1.msra.mxu0 %v1434
        %1681 = vmatprep.subr.mxu0 %v1427
        %1682 = vmatpush1.msra.mxu0 %v1426
        %1683 = vmatprep.subr.mxu0 %v1419
        %1684 = vmatpush1.msra.mxu0 %v1418
        %1685 = vmatprep.subr.mxu0 %v1411
        %1686 = vmatpush1.msra.mxu0 %v1410
        %1687 = vmatprep.subr.mxu0 %v1403
        %1688 = vmatpush1.msra.mxu0 %v1402
        %1689 = vmatprep.subr.mxu0 %v1395
        %1690 = vmatpush1.msra.mxu0 %v1394
        %1691 = vmatprep.subr.mxu0 %v1387
        %1692 = vmatpush1.msra.mxu0 %v1386
        %1693 = vmatprep.subr.mxu0 %v1379
        %1694 = vmatpush1.msra.mxu0 %v1378
        %1695 = vmatprep.subr.mxu0 %v1371
        %1696 = vmatpush1.msra.mxu0 %v1370
        %1697 = vmatprep.subr.mxu0 %v1363
        %1698 = vmatpush1.msra.mxu0 %v1362
        %1699 = vmatprep.subr.mxu0 %v1355
        %1700 = vmatpush1.msra.mxu0 %v1354
        %1701 = vmatprep.subr.mxu0 %v1347
        %1702 = vmatpush1.msra.mxu0 %v1346
        %1703 = vmatprep.subr.mxu0 %v1595
        %1704 = vmatpush2.msra.mxu0 %v1594
        %1705 = vmatprep.subr.mxu0 %v1587
        %1706 = vmatpush2.msra.mxu0 %v1586
        %1707 = vmatprep.subr.mxu0 %v1579
        %1708 = vmatpush2.msra.mxu0 %v1578
        %1709 = vmatprep.subr.mxu0 %v1571
        %1710 = vmatpush2.msra.mxu0 %v1570
        %1711 = vmatprep.subr.mxu0 %v1563
        %1712 = vmatpush2.msra.mxu0 %v1562
        %1713 = vmatprep.subr.mxu0 %v1555
        %1714 = vmatpush2.msra.mxu0 %v1554
        %1715 = vmatprep.subr.mxu0 %v1547
        %1716 = vmatpush2.msra.mxu0 %v1546
        %1717 = vmatprep.subr.mxu0 %v1539
        %1718 = vmatpush2.msra.mxu0 %v1538
        %1719 = vmatprep.subr.mxu0 %v1531
        %1720 = vmatpush2.msra.mxu0 %v1530
        %1721 = vmatprep.subr.mxu0 %v1523
        %1722 = vmatpush2.msra.mxu0 %v1522
        %1723 = vmatprep.subr.mxu0 %v1515
        %1724 = vmatpush2.msra.mxu0 %v1514
        %1725 = vmatprep.subr.mxu0 %v1507
        %1726 = vmatpush2.msra.mxu0 %v1506
        %1727 = vmatprep.subr.mxu0 %v1499
        %1728 = vmatpush2.msra.mxu0 %v1498
        %1729 = vmatprep.subr.mxu0 %v1491
        %1730 = vmatpush2.msra.mxu0 %v1490
        %1731 = vmatprep.subr.mxu0 %v1483
        %1732 = vmatpush2.msra.mxu0 %v1482
        %1733 = vmatprep.subr.mxu0 %v1475
        %1734 = vmatpush2.msra.mxu0 %v1474
        %1735 = vmatprep.mubr.f32.mxu0 %v876
        %1736 = vmatmul.mubr.f32.gmra.mxu0 %v875
        %v1737 = vpop.f32.mrf.mxu0
        %v1738 = vadd.f32 0.0, %v1737
        %v1739 = vpop.f32.mrf.mxu0
        %v1740 = vadd.f32 0.0, %v1739
        %1741 = vdwg.mxu0
        %1742 = vmatprep.subr.mxu0 %v1469
        %1743 = vmatpush1.msra.mxu0 %v1468
        %1744 = vmatprep.subr.mxu0 %v1461
        %1745 = vmatpush1.msra.mxu0 %v1460
        %1746 = vmatprep.subr.mxu0 %v1453
        %1747 = vmatpush1.msra.mxu0 %v1452
        %1748 = vmatprep.subr.mxu0 %v1445
        %1749 = vmatpush1.msra.mxu0 %v1444
        %1750 = vmatprep.subr.mxu0 %v1437
        %1751 = vmatpush1.msra.mxu0 %v1436
        %1752 = vmatprep.subr.mxu0 %v1429
        %1753 = vmatpush1.msra.mxu0 %v1428
        %1754 = vmatprep.subr.mxu0 %v1421
        %1755 = vmatpush1.msra.mxu0 %v1420
        %1756 = vmatprep.subr.mxu0 %v1413
        %1757 = vmatpush1.msra.mxu0 %v1412
        %1758 = vmatprep.subr.mxu0 %v1405
        %1759 = vmatpush1.msra.mxu0 %v1404
        %1760 = vmatprep.subr.mxu0 %v1397
        %1761 = vmatpush1.msra.mxu0 %v1396
        %1762 = vmatprep.subr.mxu0 %v1389
        %1763 = vmatpush1.msra.mxu0 %v1388
        %1764 = vmatprep.subr.mxu0 %v1381
        %1765 = vmatpush1.msra.mxu0 %v1380
        %1766 = vmatprep.subr.mxu0 %v1373
        %1767 = vmatpush1.msra.mxu0 %v1372
        %1768 = vmatprep.subr.mxu0 %v1365
        %1769 = vmatpush1.msra.mxu0 %v1364
        %1770 = vmatprep.subr.mxu0 %v1357
        %1771 = vmatpush1.msra.mxu0 %v1356
        %1772 = vmatprep.subr.mxu0 %v1349
        %1773 = vmatpush1.msra.mxu0 %v1348
        %1774 = vmatprep.subr.mxu0 %v1597
        %1775 = vmatpush2.msra.mxu0 %v1596
        %1776 = vmatprep.subr.mxu0 %v1589
        %1777 = vmatpush2.msra.mxu0 %v1588
        %1778 = vmatprep.subr.mxu0 %v1581
        %1779 = vmatpush2.msra.mxu0 %v1580
        %1780 = vmatprep.subr.mxu0 %v1573
        %1781 = vmatpush2.msra.mxu0 %v1572
        %1782 = vmatprep.subr.mxu0 %v1565
        %1783 = vmatpush2.msra.mxu0 %v1564
        %1784 = vmatprep.subr.mxu0 %v1557
        %1785 = vmatpush2.msra.mxu0 %v1556
        %1786 = vmatprep.subr.mxu0 %v1549
        %1787 = vmatpush2.msra.mxu0 %v1548
        %1788 = vmatprep.subr.mxu0 %v1541
        %1789 = vmatpush2.msra.mxu0 %v1540
        %1790 = vmatprep.subr.mxu0 %v1533
        %1791 = vmatpush2.msra.mxu0 %v1532
        %1792 = vmatprep.subr.mxu0 %v1525
        %1793 = vmatpush2.msra.mxu0 %v1524
        %1794 = vmatprep.subr.mxu0 %v1517
        %1795 = vmatpush2.msra.mxu0 %v1516
        %1796 = vmatprep.subr.mxu0 %v1509
        %1797 = vmatpush2.msra.mxu0 %v1508
        %1798 = vmatprep.subr.mxu0 %v1501
        %1799 = vmatpush2.msra.mxu0 %v1500
        %1800 = vmatprep.subr.mxu0 %v1493
        %1801 = vmatpush2.msra.mxu0 %v1492
        %1802 = vmatprep.subr.mxu0 %v1485
        %1803 = vmatpush2.msra.mxu0 %v1484
        %1804 = vmatprep.subr.mxu0 %v1477
        %1805 = vmatpush2.msra.mxu0 %v1476
        %1806 = vmatprep.mubr.f32.mxu0 %v876
        %1807 = vmatmul.mubr.f32.gmra.mxu0 %v875
        %v1808 = vpop.f32.mrf.mxu0
        %v1809 = vadd.f32 0.0, %v1808
        %v1810 = vpop.f32.mrf.mxu0
        %v1811 = vadd.f32 0.0, %v1810
        %1812 = vdwg.mxu0
        %1813 = vmatprep.subr.mxu0 %v1471
        %1814 = vmatpush1.msra.mxu0 %v1470
        %1815 = vmatprep.subr.mxu0 %v1463
        %1816 = vmatpush1.msra.mxu0 %v1462
        %1817 = vmatprep.subr.mxu0 %v1455
        %1818 = vmatpush1.msra.mxu0 %v1454
        %1819 = vmatprep.subr.mxu0 %v1447
        %1820 = vmatpush1.msra.mxu0 %v1446
        %1821 = vmatprep.subr.mxu0 %v1439
        %1822 = vmatpush1.msra.mxu0 %v1438
        %1823 = vmatprep.subr.mxu0 %v1431
        %1824 = vmatpush1.msra.mxu0 %v1430
        %1825 = vmatprep.subr.mxu0 %v1423
        %1826 = vmatpush1.msra.mxu0 %v1422
        %1827 = vmatprep.subr.mxu0 %v1415
        %1828 = vmatpush1.msra.mxu0 %v1414
        %1829 = vmatprep.subr.mxu0 %v1407
        %1830 = vmatpush1.msra.mxu0 %v1406
        %1831 = vmatprep.subr.mxu0 %v1399
        %1832 = vmatpush1.msra.mxu0 %v1398
        %1833 = vmatprep.subr.mxu0 %v1391
        %1834 = vmatpush1.msra.mxu0 %v1390
        %1835 = vmatprep.subr.mxu0 %v1383
        %1836 = vmatpush1.msra.mxu0 %v1382
        %1837 = vmatprep.subr.mxu0 %v1375
        %1838 = vmatpush1.msra.mxu0 %v1374
        %1839 = vmatprep.subr.mxu0 %v1367
        %1840 = vmatpush1.msra.mxu0 %v1366
        %1841 = vmatprep.subr.mxu0 %v1359
        %1842 = vmatpush1.msra.mxu0 %v1358
        %1843 = vmatprep.subr.mxu0 %v1351
        %1844 = vmatpush1.msra.mxu0 %v1350
        %1845 = vmatprep.subr.mxu0 %v1599
        %1846 = vmatpush2.msra.mxu0 %v1598
        %1847 = vmatprep.subr.mxu0 %v1591
        %1848 = vmatpush2.msra.mxu0 %v1590
        %1849 = vmatprep.subr.mxu0 %v1583
        %1850 = vmatpush2.msra.mxu0 %v1582
        %1851 = vmatprep.subr.mxu0 %v1575
        %1852 = vmatpush2.msra.mxu0 %v1574
        %1853 = vmatprep.subr.mxu0 %v1567
        %1854 = vmatpush2.msra.mxu0 %v1566
        %1855 = vmatprep.subr.mxu0 %v1559
        %1856 = vmatpush2.msra.mxu0 %v1558
        %1857 = vmatprep.subr.mxu0 %v1551
        %1858 = vmatpush2.msra.mxu0 %v1550
        %1859 = vmatprep.subr.mxu0 %v1543
        %1860 = vmatpush2.msra.mxu0 %v1542
        %1861 = vmatprep.subr.mxu0 %v1535
        %1862 = vmatpush2.msra.mxu0 %v1534
        %1863 = vmatprep.subr.mxu0 %v1527
        %1864 = vmatpush2.msra.mxu0 %v1526
        %1865 = vmatprep.subr.mxu0 %v1519
        %1866 = vmatpush2.msra.mxu0 %v1518
        %1867 = vmatprep.subr.mxu0 %v1511
        %1868 = vmatpush2.msra.mxu0 %v1510
        %1869 = vmatprep.subr.mxu0 %v1503
        %1870 = vmatpush2.msra.mxu0 %v1502
        %1871 = vmatprep.subr.mxu0 %v1495
        %1872 = vmatpush2.msra.mxu0 %v1494
        %1873 = vmatprep.subr.mxu0 %v1487
        %1874 = vmatpush2.msra.mxu0 %v1486
        %1875 = vmatprep.subr.mxu0 %v1479
        %1876 = vmatpush2.msra.mxu0 %v1478
        %1877 = vmatprep.mubr.f32.mxu0 %v876
        %1878 = vmatmul.mubr.f32.gmra.mxu0 %v875
        %v1879 = vpop.f32.mrf.mxu0
        %v1880 = vadd.f32 0.0, %v1879
        %v1881 = vpop.f32.mrf.mxu0
        %v1882 = vadd.f32 0.0, %v1881
        %1883 = vdwg.mxu0
        %1884 = vrot.lane.b32.xlu0 %v992, 17
        %v1885 = vpop.permute.xlu0 %1884
        %1886 = vrot.lane.b32.xlu0 %v994, 17
        %v1887 = vpop.permute.xlu0 %1886
        %v1888 = vlaneseq
        %v1889 = vand.u32 %v1888, 127
        %vm1890 = vcmp.lt.s32.totalorder %v1889, 17
        %v1891 = vsel %vm1890, %v1885, %v1887
        %v1892 = vsel %vm1890, %v1887, %v1885
        %v1893 = vlaneseq
        %v1894 = vshrl.u32 %v1893, 7
        %v1895 = vsub.s32 0, %v1894
        %v1896 = vrot.slane %v885, %v1895
        %v1897 = vlaneseq
        %v1898 = vshrl.u32 %v1897, 7
        %v1899 = vsub.s32 0, %v1898
        %v1900 = vrot.slane %v886, %v1899
        %v1901 = vmul.f32 %v1896, %v1892
        %v1902 = vmul.f32 %v1900, %v1891
        %1903 = vrot.lane.b32.xlu0 %v992, 16
        %v1904 = vpop.permute.xlu0 %1903
        %1905 = vrot.lane.b32.xlu0 %v994, 16
        %v1906 = vpop.permute.xlu0 %1905
        %vm1907 = vcmp.lt.s32.totalorder %v1889, 16
        %v1908 = vsel %vm1907, %v1904, %v1906
        %v1909 = vsel %vm1907, %v1906, %v1904
        %v1910 = vlaneseq
        %v1911 = vshrl.u32 %v1910, 7
        %v1912 = vsub.s32 1, %v1911
        %v1913 = vrot.slane %v885, %v1912
        %v1914 = vlaneseq
        %v1915 = vshrl.u32 %v1914, 7
        %v1916 = vsub.s32 1, %v1915
        %v1917 = vrot.slane %v886, %v1916
        %v1918 = vmul.f32 %v1913, %v1909
        %v1919 = vmul.f32 %v1917, %v1908
        %1920 = vrot.lane.b32.xlu0 %v992, 15
        %v1921 = vpop.permute.xlu0 %1920
        %1922 = vrot.lane.b32.xlu0 %v994, 15
        %v1923 = vpop.permute.xlu0 %1922
        %vm1924 = vcmp.lt.s32.totalorder %v1889, 15
        %v1925 = vsel %vm1924, %v1921, %v1923
        %v1926 = vsel %vm1924, %v1923, %v1921
        %v1927 = vlaneseq
        %v1928 = vshrl.u32 %v1927, 7
        %v1929 = vsub.s32 2, %v1928
        %v1930 = vrot.slane %v885, %v1929
        %v1931 = vlaneseq
        %v1932 = vshrl.u32 %v1931, 7
        %v1933 = vsub.s32 2, %v1932
        %v1934 = vrot.slane %v886, %v1933
        %v1935 = vmul.f32 %v1930, %v1926
        %v1936 = vmul.f32 %v1934, %v1925
        %1937 = vrot.lane.b32.xlu0 %v992, 1
        %v1938 = vpop.permute.xlu0 %1937
        %1939 = vrot.lane.b32.xlu0 %v994, 1
        %v1940 = vpop.permute.xlu0 %1939
        %vm1941 = vcmp.lt.s32.totalorder %v1889, 1
        %v1942 = vsel %vm1941, %v1938, %v1940
        %v1943 = vsel %vm1941, %v1940, %v1938
        %v1944 = vlaneseq
        %v1945 = vshrl.u32 %v1944, 7
        %v1946 = vsub.s32 3, %v1945
        %v1947 = vrot.slane %v885, %v1946
        %v1948 = vlaneseq
        %v1949 = vshrl.u32 %v1948, 7
        %v1950 = vsub.s32 3, %v1949
        %v1951 = vrot.slane %v886, %v1950
        %v1952 = vmul.f32 %v1947, %v1943
        %v1953 = vmul.f32 %v1951, %v1942
        %1954 = vrot.lane.b32.xlu0 %v992, 127
        %v1955 = vpop.permute.xlu0 %1954
        %1956 = vrot.lane.b32.xlu0 %v994, 127
        %v1957 = vpop.permute.xlu0 %1956
        %vm1958 = vcmp.lt.s32.totalorder %v1889, 127
        %v1959 = vsel %vm1958, %v1955, %v1957
        %v1960 = vsel %vm1958, %v1957, %v1955
        %v1961 = vlaneseq
        %v1962 = vshrl.u32 %v1961, 7
        %v1963 = vsub.s32 5, %v1962
        %v1964 = vrot.slane %v885, %v1963
        %v1965 = vlaneseq
        %v1966 = vshrl.u32 %v1965, 7
        %v1967 = vsub.s32 5, %v1966
        %v1968 = vrot.slane %v886, %v1967
        %v1969 = vmul.f32 %v1964, %v1959
        %v1970 = vmul.f32 %v1968, %v1960
        %1971 = vrot.lane.b32.xlu0 %v992, 113
        %v1972 = vpop.permute.xlu0 %1971
        %1973 = vrot.lane.b32.xlu0 %v994, 113
        %v1974 = vpop.permute.xlu0 %1973
        %vm1975 = vcmp.lt.s32.totalorder %v1889, 113
        %v1976 = vsel %vm1975, %v1972, %v1974
        %v1977 = vsel %vm1975, %v1974, %v1972
        %v1978 = vlaneseq
        %v1979 = vshrl.u32 %v1978, 7
        %v1980 = vsub.s32 6, %v1979
        %v1981 = vrot.slane %v885, %v1980
        %v1982 = vlaneseq
        %v1983 = vshrl.u32 %v1982, 7
        %v1984 = vsub.s32 6, %v1983
        %v1985 = vrot.slane %v886, %v1984
        %v1986 = vmul.f32 %v1981, %v1976
        %v1987 = vmul.f32 %v1985, %v1977
        %1988 = vrot.lane.b32.xlu0 %v992, 112
        %v1989 = vpop.permute.xlu0 %1988
        %1990 = vrot.lane.b32.xlu0 %v994, 112
        %v1991 = vpop.permute.xlu0 %1990
        %vm1992 = vcmp.lt.s32.totalorder %v1889, 112
        %v1993 = vsel %vm1992, %v1989, %v1991
        %v1994 = vsel %vm1992, %v1991, %v1989
        %v1995 = vlaneseq
        %v1996 = vshrl.u32 %v1995, 7
        %v1997 = vsub.s32 7, %v1996
        %v1998 = vrot.slane %v885, %v1997
        %v1999 = vlaneseq
        %v2000 = vshrl.u32 %v1999, 7
        %v2001 = vsub.s32 7, %v2000
        %v2002 = vrot.slane %v886, %v2001
        %v2003 = vmul.f32 %v1998, %v1993
        %v2004 = vmul.f32 %v2002, %v1994
        %2005 = vrot.lane.b32.xlu0 %v992, 111
        %v2006 = vpop.permute.xlu0 %2005
        %2007 = vrot.lane.b32.xlu0 %v994, 111
        %v2008 = vpop.permute.xlu0 %2007
        %vm2009 = vcmp.lt.s32.totalorder %v1889, 111
        %v2010 = vsel %vm2009, %v2006, %v2008
        %v2011 = vsel %vm2009, %v2008, %v2006
        %v2012 = vlaneseq
        %v2013 = vshrl.u32 %v2012, 7
        %v2014 = vsub.s32 0, %v2013
        %v2015 = vrot.slane %v887, %v2014
        %v2016 = vlaneseq
        %v2017 = vshrl.u32 %v2016, 7
        %v2018 = vsub.s32 0, %v2017
        %v2019 = vrot.slane %v888, %v2018
        %v2020 = vmul.f32 %v2015, %v2010
        %v2021 = vmul.f32 %v2019, %v2011
        %v2022 = vpack.c.bf16 %v1918, %v1901
        %v2023 = vpack.c.bf16 %v1919, %v1902
        %v2024 = vpack.c.bf16 %v1952, %v1935
        %v2025 = vpack.c.bf16 %v1953, %v1936
        %v2026 = vpack.c.bf16 %v1969, %v992
        %v2027 = vpack.c.bf16 %v1970, %v994
        %v2028 = vpack.c.bf16 %v2003, %v1986
        %v2029 = vpack.c.bf16 %v2004, %v1987
        %v2030 = vpack.c.bf16 %v2020, %v2020
        %v2031 = vpack.c.bf16 %v2021, %v2021
        %v2032 = vld [vmem:[#allocation7] sm:$0xf]
        %v2033 = vld [vmem:[#allocation7 + $0x4] sm:$0xf]
        %v2034 = vld [vmem:[%s9] sm:$0xff]
        %v2035 = vld [vmem:[%s9 + $0x8] sm:$0xff]
        %2037 = vset.pattern.permute.xlu0 0
        %2038 = vperm.xlu0 %2037, %v2034
        %v2039 = vpop.permute.xlu0 %2038
        %2042 = vset.pattern.permute.xlu0 0
        %2043 = vperm.xlu0 %2042, %v2035
        %v2044 = vpop.permute.xlu0 %2043
        %v2048 = vunpack.c.l.b16 %v2032
        %v2049 = vunpack.c.l.b16 %v2033
        %v2050 = vpack.c.b16 %v2049, %v2048
        %vm2051 = vcmask 588800
        %v2053 = vsel %vm2051, %v2050, 0
        %vm2055 = vcmask 1043456
        %v2057 = vsel %vm2055, %v2030, 0
        %v2060 = vsel %vm2055, %v2031, 0
        %2062 = vmatprep.subr.bf16.mxu0 0
        %2063 = vmatpush1.bf16.msra.mxu0 0
        %2064 = vmatprep.subr.bf16.mxu0 0
        %2065 = vmatpush1.bf16.msra.mxu0 0
        %2066 = vmatprep.subr.bf16.mxu0 0
        %2067 = vmatpush1.bf16.msra.mxu0 0
        %2068 = vmatprep.subr.bf16.mxu0 %v2060
        %2069 = vmatpush1.bf16.msra.mxu0 %v2057
        %2070 = vmatprep.subr.bf16.mxu0 %v2029
        %2071 = vmatpush1.bf16.msra.mxu0 %v2028
        %2072 = vmatprep.subr.bf16.mxu0 %v2027
        %2073 = vmatpush1.bf16.msra.mxu0 %v2026
        %2074 = vmatprep.subr.bf16.mxu0 %v2025
        %2075 = vmatpush1.bf16.msra.mxu0 %v2024
        %2076 = vmatprep.subr.bf16.mxu0 %v2023
        %2077 = vmatpush1.bf16.msra.mxu0 %v2022
        %2078 = vmatprep.subr.bf16.mxu0 0
        %2079 = vmatpush2.bf16.msra.mxu0 0
        %2080 = vmatprep.subr.bf16.mxu0 0
        %2081 = vmatpush2.bf16.msra.mxu0 0
        %2082 = vmatprep.subr.bf16.mxu0 0
        %2083 = vmatpush2.bf16.msra.mxu0 0
        %2084 = vmatprep.subr.bf16.mxu0 0
        %2085 = vmatpush2.bf16.msra.mxu0 0
        %2086 = vmatprep.subr.bf16.mxu0 0
        %2087 = vmatpush2.bf16.msra.mxu0 0
        %2088 = vmatprep.subr.bf16.mxu0 0
        %2089 = vmatpush2.bf16.msra.mxu0 0
        %2090 = vmatprep.subr.bf16.mxu0 0
        %2091 = vmatpush2.bf16.msra.mxu0 0
        %2092 = vmatprep.subr.bf16.mxu0 0
        %2093 = vmatpush2.bf16.msra.mxu0 0
        %2094 = vmatprep.mubr.bf16.mxu0 0
        %2095 = vmatmul.mubr.bf16.gmra.mxu0 %v2053
        %v2096 = vpop.f32.mrf.mxu0
        %v2097 = vadd.f32 %v2039, %v2096
        %v2098 = vpop.f32.mrf.mxu0
        %v2099 = vadd.f32 %v2039, %v2098
        %v2100 = vpop.f32.mrf.mxu0
        %v2101 = vadd.f32 %v2044, %v2100
        %v2102 = vpop.f32.mrf.mxu0
        %v2103 = vadd.f32 %v2044, %v2102
        %2104 = vdwg.mxu0
        %v2105 = vmul.f32 %v2097, %v875
        %v2106 = vmul.f32 %v2099, %v876
        %2107 = vrot.lane.b32.xlu0 %v1127, 33
        %v2108 = vpop.permute.xlu0 %2107
        %2109 = vrot.lane.b32.xlu0 %v1129, 33
        %v2110 = vpop.permute.xlu0 %2109
        %2111 = vrot.lane.b32.xlu0 %v1198, 33
        %v2112 = vpop.permute.xlu0 %2111
        %2113 = vrot.lane.b32.xlu0 %v1200, 33
        %v2114 = vpop.permute.xlu0 %2113
        %2115 = vrot.lane.b32.xlu0 %v1269, 33
        %v2116 = vpop.permute.xlu0 %2115
        %2117 = vrot.lane.b32.xlu0 %v1271, 33
        %v2118 = vpop.permute.xlu0 %2117
        %2119 = vrot.lane.b32.xlu0 %v1340, 33
        %v2120 = vpop.permute.xlu0 %2119
        %2121 = vrot.lane.b32.xlu0 %v1342, 33
        %v2122 = vpop.permute.xlu0 %2121
        %vm2123 = vcmp.lt.s32.totalorder %v1889, 33
        %v2124 = vsel %vm2123, %v2120, %v2122
        %v2125 = vsel %vm2123, %v2118, %v2120
        %v2126 = vsel %vm2123, %v2116, %v2118
        %v2127 = vsel %vm2123, %v2114, %v2116
        %v2128 = vsel %vm2123, %v2112, %v2114
        %v2129 = vsel %vm2123, %v2110, %v2112
        %v2130 = vsel %vm2123, %v2108, %v2110
        %v2131 = vsel %vm2123, %v2122, %v2108
        %v2132 = vlaneseq
        %v2133 = vshrl.u32 %v2132, 7
        %v2134 = vsub.s32 0, %v2133
        %v2135 = vrot.slane %v889, %v2134
        %v2136 = vlaneseq
        %v2137 = vshrl.u32 %v2136, 7
        %v2138 = vsub.s32 0, %v2137
        %v2139 = vrot.slane %v890, %v2138
        %v2140 = vlaneseq
        %v2141 = vshrl.u32 %v2140, 7
        %v2142 = vsub.s32 0, %v2141
        %v2143 = vrot.slane %v891, %v2142
        %v2144 = vlaneseq
        %v2145 = vshrl.u32 %v2144, 7
        %v2146 = vsub.s32 0, %v2145
        %v2147 = vrot.slane %v892, %v2146
        %v2148 = vlaneseq
        %v2149 = vshrl.u32 %v2148, 7
        %v2150 = vsub.s32 0, %v2149
        %v2151 = vrot.slane %v893, %v2150
        %v2152 = vlaneseq
        %v2153 = vshrl.u32 %v2152, 7
        %v2154 = vsub.s32 0, %v2153
        %v2155 = vrot.slane %v894, %v2154
        %v2156 = vlaneseq
        %v2157 = vshrl.u32 %v2156, 7
        %v2158 = vsub.s32 0, %v2157
        %v2159 = vrot.slane %v895, %v2158
        %v2160 = vlaneseq
        %v2161 = vshrl.u32 %v2160, 7
        %v2162 = vsub.s32 0, %v2161
        %v2163 = vrot.slane %v896, %v2162
        %v2164 = vmul.f32 %v2135, %v2131
        %v2165 = vmul.f32 %v2139, %v2130
        %v2166 = vmul.f32 %v2143, %v2129
        %v2167 = vmul.f32 %v2147, %v2128
        %v2168 = vmul.f32 %v2151, %v2127
        %v2169 = vmul.f32 %v2155, %v2126
        %v2170 = vmul.f32 %v2159, %v2125
        %v2171 = vmul.f32 %v2163, %v2124
        %2172 = vrot.lane.b32.xlu0 %v1127, 32
        %v2173 = vpop.permute.xlu0 %2172
        %2174 = vrot.lane.b32.xlu0 %v1129, 32
        %v2175 = vpop.permute.xlu0 %2174
        %2176 = vrot.lane.b32.xlu0 %v1198, 32
        %v2177 = vpop.permute.xlu0 %2176
        %2178 = vrot.lane.b32.xlu0 %v1200, 32
        %v2179 = vpop.permute.xlu0 %2178
        %2180 = vrot.lane.b32.xlu0 %v1269, 32
        %v2181 = vpop.permute.xlu0 %2180
        %2182 = vrot.lane.b32.xlu0 %v1271, 32
        %v2183 = vpop.permute.xlu0 %2182
        %2184 = vrot.lane.b32.xlu0 %v1340, 32
        %v2185 = vpop.permute.xlu0 %2184
        %2186 = vrot.lane.b32.xlu0 %v1342, 32
        %v2187 = vpop.permute.xlu0 %2186
        %vm2188 = vcmp.lt.s32.totalorder %v1889, 32
        %v2189 = vsel %vm2188, %v2185, %v2187
        %v2190 = vsel %vm2188, %v2183, %v2185
        %v2191 = vsel %vm2188, %v2181, %v2183
        %v2192 = vsel %vm2188, %v2179, %v2181
        %v2193 = vsel %vm2188, %v2177, %v2179
        %v2194 = vsel %vm2188, %v2175, %v2177
        %v2195 = vsel %vm2188, %v2173, %v2175
        %v2196 = vsel %vm2188, %v2187, %v2173
        %v2197 = vlaneseq
        %v2198 = vshrl.u32 %v2197, 7
        %v2199 = vsub.s32 1, %v2198
        %v2200 = vrot.slane %v889, %v2199
        %v2201 = vlaneseq
        %v2202 = vshrl.u32 %v2201, 7
        %v2203 = vsub.s32 1, %v2202
        %v2204 = vrot.slane %v890, %v2203
        %v2205 = vlaneseq
        %v2206 = vshrl.u32 %v2205, 7
        %v2207 = vsub.s32 1, %v2206
        %v2208 = vrot.slane %v891, %v2207
        %v2209 = vlaneseq
        %v2210 = vshrl.u32 %v2209, 7
        %v2211 = vsub.s32 1, %v2210
        %v2212 = vrot.slane %v892, %v2211
        %v2213 = vlaneseq
        %v2214 = vshrl.u32 %v2213, 7
        %v2215 = vsub.s32 1, %v2214
        %v2216 = vrot.slane %v893, %v2215
        %v2217 = vlaneseq
        %v2218 = vshrl.u32 %v2217, 7
        %v2219 = vsub.s32 1, %v2218
        %v2220 = vrot.slane %v894, %v2219
        %v2221 = vlaneseq
        %v2222 = vshrl.u32 %v2221, 7
        %v2223 = vsub.s32 1, %v2222
        %v2224 = vrot.slane %v895, %v2223
        %v2225 = vlaneseq
        %v2226 = vshrl.u32 %v2225, 7
        %v2227 = vsub.s32 1, %v2226
        %v2228 = vrot.slane %v896, %v2227
        %v2229 = vmul.f32 %v2200, %v2196
        %v2230 = vmul.f32 %v2204, %v2195
        %v2231 = vmul.f32 %v2208, %v2194
        %v2232 = vmul.f32 %v2212, %v2193
        %v2233 = vmul.f32 %v2216, %v2192
        %v2234 = vmul.f32 %v2220, %v2191
        %v2235 = vmul.f32 %v2224, %v2190
        %v2236 = vmul.f32 %v2228, %v2189
        %2237 = vrot.lane.b32.xlu0 %v1127, 31
        %v2238 = vpop.permute.xlu0 %2237
        %2239 = vrot.lane.b32.xlu0 %v1129, 31
        %v2240 = vpop.permute.xlu0 %2239
        %2241 = vrot.lane.b32.xlu0 %v1198, 31
        %v2242 = vpop.permute.xlu0 %2241
        %2243 = vrot.lane.b32.xlu0 %v1200, 31
        %v2244 = vpop.permute.xlu0 %2243
        %2245 = vrot.lane.b32.xlu0 %v1269, 31
        %v2246 = vpop.permute.xlu0 %2245
        %2247 = vrot.lane.b32.xlu0 %v1271, 31
        %v2248 = vpop.permute.xlu0 %2247
        %2249 = vrot.lane.b32.xlu0 %v1340, 31
        %v2250 = vpop.permute.xlu0 %2249
        %2251 = vrot.lane.b32.xlu0 %v1342, 31
        %v2252 = vpop.permute.xlu0 %2251
        %vm2253 = vcmp.lt.s32.totalorder %v1889, 31
        %v2254 = vsel %vm2253, %v2250, %v2252
        %v2255 = vsel %vm2253, %v2248, %v2250
        %v2256 = vsel %vm2253, %v2246, %v2248
        %v2257 = vsel %vm2253, %v2244, %v2246
        %v2258 = vsel %vm2253, %v2242, %v2244
        %v2259 = vsel %vm2253, %v2240, %v2242
        %v2260 = vsel %vm2253, %v2238, %v2240
        %v2261 = vsel %vm2253, %v2252, %v2238
        %v2262 = vlaneseq
        %v2263 = vshrl.u32 %v2262, 7
        %v2264 = vsub.s32 2, %v2263
        %v2265 = vrot.slane %v889, %v2264
        %v2266 = vlaneseq
        %v2267 = vshrl.u32 %v2266, 7
        %v2268 = vsub.s32 2, %v2267
        %v2269 = vrot.slane %v890, %v2268
        %v2270 = vlaneseq
        %v2271 = vshrl.u32 %v2270, 7
        %v2272 = vsub.s32 2, %v2271
        %v2273 = vrot.slane %v891, %v2272
        %v2274 = vlaneseq
        %v2275 = vshrl.u32 %v2274, 7
        %v2276 = vsub.s32 2, %v2275
        %v2277 = vrot.slane %v892, %v2276
        %v2278 = vlaneseq
        %v2279 = vshrl.u32 %v2278, 7
        %v2280 = vsub.s32 2, %v2279
        %v2281 = vrot.slane %v893, %v2280
        %v2282 = vlaneseq
        %v2283 = vshrl.u32 %v2282, 7
        %v2284 = vsub.s32 2, %v2283
        %v2285 = vrot.slane %v894, %v2284
        %v2286 = vlaneseq
        %v2287 = vshrl.u32 %v2286, 7
        %v2288 = vsub.s32 2, %v2287
        %v2289 = vrot.slane %v895, %v2288
        %v2290 = vlaneseq
        %v2291 = vshrl.u32 %v2290, 7
        %v2292 = vsub.s32 2, %v2291
        %v2293 = vrot.slane %v896, %v2292
        %v2294 = vmul.f32 %v2265, %v2261
        %v2295 = vmul.f32 %v2269, %v2260
        %v2296 = vmul.f32 %v2273, %v2259
        %v2297 = vmul.f32 %v2277, %v2258
        %v2298 = vmul.f32 %v2281, %v2257
        %v2299 = vmul.f32 %v2285, %v2256
        %v2300 = vmul.f32 %v2289, %v2255
        %v2301 = vmul.f32 %v2293, %v2254
        %2302 = vrot.lane.b32.xlu0 %v1127, 1
        %v2303 = vpop.permute.xlu0 %2302
        %2304 = vrot.lane.b32.xlu0 %v1129, 1
        %v2305 = vpop.permute.xlu0 %2304
        %2306 = vrot.lane.b32.xlu0 %v1198, 1
        %v2307 = vpop.permute.xlu0 %2306
        %2308 = vrot.lane.b32.xlu0 %v1200, 1
        %v2309 = vpop.permute.xlu0 %2308
        %2310 = vrot.lane.b32.xlu0 %v1269, 1
        %v2311 = vpop.permute.xlu0 %2310
        %2312 = vrot.lane.b32.xlu0 %v1271, 1
        %v2313 = vpop.permute.xlu0 %2312
        %2314 = vrot.lane.b32.xlu0 %v1340, 1
        %v2315 = vpop.permute.xlu0 %2314
        %2316 = vrot.lane.b32.xlu0 %v1342, 1
        %v2317 = vpop.permute.xlu0 %2316
        %v2318 = vsel %vm1941, %v2315, %v2317
        %v2319 = vsel %vm1941, %v2313, %v2315
        %v2320 = vsel %vm1941, %v2311, %v2313
        %v2321 = vsel %vm1941, %v2309, %v2311
        %v2322 = vsel %vm1941, %v2307, %v2309
        %v2323 = vsel %vm1941, %v2305, %v2307
        %v2324 = vsel %vm1941, %v2303, %v2305
        %v2325 = vsel %vm1941, %v2317, %v2303
        %v2326 = vlaneseq
        %v2327 = vshrl.u32 %v2326, 7
        %v2328 = vsub.s32 3, %v2327
        %v2329 = vrot.slane %v889, %v2328
        %v2330 = vlaneseq
        %v2331 = vshrl.u32 %v2330, 7
        %v2332 = vsub.s32 3, %v2331
        %v2333 = vrot.slane %v890, %v2332
        %v2334 = vlaneseq
        %v2335 = vshrl.u32 %v2334, 7
        %v2336 = vsub.s32 3, %v2335
        %v2337 = vrot.slane %v891, %v2336
        %v2338 = vlaneseq
        %v2339 = vshrl.u32 %v2338, 7
        %v2340 = vsub.s32 3, %v2339
        %v2341 = vrot.slane %v892, %v2340
        %v2342 = vlaneseq
        %v2343 = vshrl.u32 %v2342, 7
        %v2344 = vsub.s32 3, %v2343
        %v2345 = vrot.slane %v893, %v2344
        %v2346 = vlaneseq
        %v2347 = vshrl.u32 %v2346, 7
        %v2348 = vsub.s32 3, %v2347
        %v2349 = vrot.slane %v894, %v2348
        %v2350 = vlaneseq
        %v2351 = vshrl.u32 %v2350, 7
        %v2352 = vsub.s32 3, %v2351
        %v2353 = vrot.slane %v895, %v2352
        %v2354 = vlaneseq
        %v2355 = vshrl.u32 %v2354, 7
        %v2356 = vsub.s32 3, %v2355
        %v2357 = vrot.slane %v896, %v2356
        %v2358 = vmul.f32 %v2329, %v2325
        %v2359 = vmul.f32 %v2333, %v2324
        %v2360 = vmul.f32 %v2337, %v2323
        %v2361 = vmul.f32 %v2341, %v2322
        %v2362 = vmul.f32 %v2345, %v2321
        %v2363 = vmul.f32 %v2349, %v2320
        %v2364 = vmul.f32 %v2353, %v2319
        %v2365 = vmul.f32 %v2357, %v2318
        %2366 = vrot.lane.b32.xlu0 %v1127, 127
        %v2367 = vpop.permute.xlu0 %2366
        %2368 = vrot.lane.b32.xlu0 %v1129, 127
        %v2369 = vpop.permute.xlu0 %2368
        %2370 = vrot.lane.b32.xlu0 %v1198, 127
        %v2371 = vpop.permute.xlu0 %2370
        %2372 = vrot.lane.b32.xlu0 %v1200, 127
        %v2373 = vpop.permute.xlu0 %2372
        %2374 = vrot.lane.b32.xlu0 %v1269, 127
        %v2375 = vpop.permute.xlu0 %2374
        %2376 = vrot.lane.b32.xlu0 %v1271, 127
        %v2377 = vpop.permute.xlu0 %2376
        %2378 = vrot.lane.b32.xlu0 %v1340, 127
        %v2379 = vpop.permute.xlu0 %2378
        %2380 = vrot.lane.b32.xlu0 %v1342, 127
        %v2381 = vpop.permute.xlu0 %2380
        %v2382 = vsel %vm1958, %v2379, %v2381
        %v2383 = vsel %vm1958, %v2377, %v2379
        %v2384 = vsel %vm1958, %v2375, %v2377
        %v2385 = vsel %vm1958, %v2373, %v2375
        %v2386 = vsel %vm1958, %v2371, %v2373
        %v2387 = vsel %vm1958, %v2369, %v2371
        %v2388 = vsel %vm1958, %v2367, %v2369
        %v2389 = vsel %vm1958, %v2381, %v2367
        %v2390 = vlaneseq
        %v2391 = vshrl.u32 %v2390, 7
        %v2392 = vsub.s32 5, %v2391
        %v2393 = vrot.slane %v889, %v2392
        %v2394 = vlaneseq
        %v2395 = vshrl.u32 %v2394, 7
        %v2396 = vsub.s32 5, %v2395
        %v2397 = vrot.slane %v890, %v2396
        %v2398 = vlaneseq
        %v2399 = vshrl.u32 %v2398, 7
        %v2400 = vsub.s32 5, %v2399
        %v2401 = vrot.slane %v891, %v2400
        %v2402 = vlaneseq
        %v2403 = vshrl.u32 %v2402, 7
        %v2404 = vsub.s32 5, %v2403
        %v2405 = vrot.slane %v892, %v2404
        %v2406 = vlaneseq
        %v2407 = vshrl.u32 %v2406, 7
        %v2408 = vsub.s32 5, %v2407
        %v2409 = vrot.slane %v893, %v2408
        %v2410 = vlaneseq
        %v2411 = vshrl.u32 %v2410, 7
        %v2412 = vsub.s32 5, %v2411
        %v2413 = vrot.slane %v894, %v2412
        %v2414 = vlaneseq
        %v2415 = vshrl.u32 %v2414, 7
        %v2416 = vsub.s32 5, %v2415
        %v2417 = vrot.slane %v895, %v2416
        %v2418 = vlaneseq
        %v2419 = vshrl.u32 %v2418, 7
        %v2420 = vsub.s32 5, %v2419
        %v2421 = vrot.slane %v896, %v2420
        %v2422 = vmul.f32 %v2393, %v2388
        %v2423 = vmul.f32 %v2397, %v2387
        %v2424 = vmul.f32 %v2401, %v2386
        %v2425 = vmul.f32 %v2405, %v2385
        %v2426 = vmul.f32 %v2409, %v2384
        %v2427 = vmul.f32 %v2413, %v2383
        %v2428 = vmul.f32 %v2417, %v2382
        %v2429 = vmul.f32 %v2421, %v2389
        %2430 = vrot.lane.b32.xlu0 %v1127, 97
        %v2431 = vpop.permute.xlu0 %2430
        %2432 = vrot.lane.b32.xlu0 %v1129, 97
        %v2433 = vpop.permute.xlu0 %2432
        %2434 = vrot.lane.b32.xlu0 %v1198, 97
        %v2435 = vpop.permute.xlu0 %2434
        %2436 = vrot.lane.b32.xlu0 %v1200, 97
        %v2437 = vpop.permute.xlu0 %2436
        %2438 = vrot.lane.b32.xlu0 %v1269, 97
        %v2439 = vpop.permute.xlu0 %2438
        %2440 = vrot.lane.b32.xlu0 %v1271, 97
        %v2441 = vpop.permute.xlu0 %2440
        %2442 = vrot.lane.b32.xlu0 %v1340, 97
        %v2443 = vpop.permute.xlu0 %2442
        %2444 = vrot.lane.b32.xlu0 %v1342, 97
        %v2445 = vpop.permute.xlu0 %2444
        %vm2446 = vcmp.lt.s32.totalorder %v1889, 97
        %v2447 = vsel %vm2446, %v2443, %v2445
        %v2448 = vsel %vm2446, %v2441, %v2443
        %v2449 = vsel %vm2446, %v2439, %v2441
        %v2450 = vsel %vm2446, %v2437, %v2439
        %v2451 = vsel %vm2446, %v2435, %v2437
        %v2452 = vsel %vm2446, %v2433, %v2435
        %v2453 = vsel %vm2446, %v2431, %v2433
        %v2454 = vsel %vm2446, %v2445, %v2431
        %v2455 = vlaneseq
        %v2456 = vshrl.u32 %v2455, 7
        %v2457 = vsub.s32 6, %v2456
        %v2458 = vrot.slane %v889, %v2457
        %v2459 = vlaneseq
        %v2460 = vshrl.u32 %v2459, 7
        %v2461 = vsub.s32 6, %v2460
        %v2462 = vrot.slane %v890, %v2461
        %v2463 = vlaneseq
        %v2464 = vshrl.u32 %v2463, 7
        %v2465 = vsub.s32 6, %v2464
        %v2466 = vrot.slane %v891, %v2465
        %v2467 = vlaneseq
        %v2468 = vshrl.u32 %v2467, 7
        %v2469 = vsub.s32 6, %v2468
        %v2470 = vrot.slane %v892, %v2469
        %v2471 = vlaneseq
        %v2472 = vshrl.u32 %v2471, 7
        %v2473 = vsub.s32 6, %v2472
        %v2474 = vrot.slane %v893, %v2473
        %v2475 = vlaneseq
        %v2476 = vshrl.u32 %v2475, 7
        %v2477 = vsub.s32 6, %v2476
        %v2478 = vrot.slane %v894, %v2477
        %v2479 = vlaneseq
        %v2480 = vshrl.u32 %v2479, 7
        %v2481 = vsub.s32 6, %v2480
        %v2482 = vrot.slane %v895, %v2481
        %v2483 = vlaneseq
        %v2484 = vshrl.u32 %v2483, 7
        %v2485 = vsub.s32 6, %v2484
        %v2486 = vrot.slane %v896, %v2485
        %v2487 = vmul.f32 %v2458, %v2453
        %v2488 = vmul.f32 %v2462, %v2452
        %v2489 = vmul.f32 %v2466, %v2451
        %v2490 = vmul.f32 %v2470, %v2450
        %v2491 = vmul.f32 %v2474, %v2449
        %v2492 = vmul.f32 %v2478, %v2448
        %v2493 = vmul.f32 %v2482, %v2447
        %v2494 = vmul.f32 %v2486, %v2454
        %2495 = vrot.lane.b32.xlu0 %v1127, 96
        %v2496 = vpop.permute.xlu0 %2495
        %2497 = vrot.lane.b32.xlu0 %v1129, 96
        %v2498 = vpop.permute.xlu0 %2497
        %2499 = vrot.lane.b32.xlu0 %v1198, 96
        %v2500 = vpop.permute.xlu0 %2499
        %2501 = vrot.lane.b32.xlu0 %v1200, 96
        %v2502 = vpop.permute.xlu0 %2501
        %2503 = vrot.lane.b32.xlu0 %v1269, 96
        %v2504 = vpop.permute.xlu0 %2503
        %2505 = vrot.lane.b32.xlu0 %v1271, 96
        %v2506 = vpop.permute.xlu0 %2505
        %2507 = vrot.lane.b32.xlu0 %v1340, 96
        %v2508 = vpop.permute.xlu0 %2507
        %2509 = vrot.lane.b32.xlu0 %v1342, 96
        %v2510 = vpop.permute.xlu0 %2509
        %vm2511 = vcmp.lt.s32.totalorder %v1889, 96
        %v2512 = vsel %vm2511, %v2508, %v2510
        %v2513 = vsel %vm2511, %v2506, %v2508
        %v2514 = vsel %vm2511, %v2504, %v2506
        %v2515 = vsel %vm2511, %v2502, %v2504
        %v2516 = vsel %vm2511, %v2500, %v2502
        %v2517 = vsel %vm2511, %v2498, %v2500
        %v2518 = vsel %vm2511, %v2496, %v2498
        %v2519 = vsel %vm2511, %v2510, %v2496
        %v2520 = vlaneseq
        %v2521 = vshrl.u32 %v2520, 7
        %v2522 = vsub.s32 7, %v2521
        %v2523 = vrot.slane %v889, %v2522
        %v2524 = vlaneseq
        %v2525 = vshrl.u32 %v2524, 7
        %v2526 = vsub.s32 7, %v2525
        %v2527 = vrot.slane %v890, %v2526
        %v2528 = vlaneseq
        %v2529 = vshrl.u32 %v2528, 7
        %v2530 = vsub.s32 7, %v2529
        %v2531 = vrot.slane %v891, %v2530
        %v2532 = vlaneseq
        %v2533 = vshrl.u32 %v2532, 7
        %v2534 = vsub.s32 7, %v2533
        %v2535 = vrot.slane %v892, %v2534
        %v2536 = vlaneseq
        %v2537 = vshrl.u32 %v2536, 7
        %v2538 = vsub.s32 7, %v2537
        %v2539 = vrot.slane %v893, %v2538
        %v2540 = vlaneseq
        %v2541 = vshrl.u32 %v2540, 7
        %v2542 = vsub.s32 7, %v2541
        %v2543 = vrot.slane %v894, %v2542
        %v2544 = vlaneseq
        %v2545 = vshrl.u32 %v2544, 7
        %v2546 = vsub.s32 7, %v2545
        %v2547 = vrot.slane %v895, %v2546
        %v2548 = vlaneseq
        %v2549 = vshrl.u32 %v2548, 7
        %v2550 = vsub.s32 7, %v2549
        %v2551 = vrot.slane %v896, %v2550
        %v2552 = vmul.f32 %v2523, %v2518
        %v2553 = vmul.f32 %v2527, %v2517
        %v2554 = vmul.f32 %v2531, %v2516
        %v2555 = vmul.f32 %v2535, %v2515
        %v2556 = vmul.f32 %v2539, %v2514
        %v2557 = vmul.f32 %v2543, %v2513
        %v2558 = vmul.f32 %v2547, %v2512
        %v2559 = vmul.f32 %v2551, %v2519
        %2560 = vrot.lane.b32.xlu0 %v1127, 95
        %v2561 = vpop.permute.xlu0 %2560
        %2562 = vrot.lane.b32.xlu0 %v1129, 95
        %v2563 = vpop.permute.xlu0 %2562
        %2564 = vrot.lane.b32.xlu0 %v1198, 95
        %v2565 = vpop.permute.xlu0 %2564
        %2566 = vrot.lane.b32.xlu0 %v1200, 95
        %v2567 = vpop.permute.xlu0 %2566
        %2568 = vrot.lane.b32.xlu0 %v1269, 95
        %v2569 = vpop.permute.xlu0 %2568
        %2570 = vrot.lane.b32.xlu0 %v1271, 95
        %v2571 = vpop.permute.xlu0 %2570
        %2572 = vrot.lane.b32.xlu0 %v1340, 95
        %v2573 = vpop.permute.xlu0 %2572
        %2574 = vrot.lane.b32.xlu0 %v1342, 95
        %v2575 = vpop.permute.xlu0 %2574
        %vm2576 = vcmp.lt.s32.totalorder %v1889, 95
        %v2577 = vsel %vm2576, %v2573, %v2575
        %v2578 = vsel %vm2576, %v2571, %v2573
        %v2579 = vsel %vm2576, %v2569, %v2571
        %v2580 = vsel %vm2576, %v2567, %v2569
        %v2581 = vsel %vm2576, %v2565, %v2567
        %v2582 = vsel %vm2576, %v2563, %v2565
        %v2583 = vsel %vm2576, %v2561, %v2563
        %v2584 = vsel %vm2576, %v2575, %v2561
        %v2585 = vlaneseq
        %v2586 = vshrl.u32 %v2585, 7
        %v2587 = vsub.s32 0, %v2586
        %v2588 = vrot.slane %v897, %v2587
        %v2589 = vlaneseq
        %v2590 = vshrl.u32 %v2589, 7
        %v2591 = vsub.s32 0, %v2590
        %v2592 = vrot.slane %v898, %v2591
        %v2593 = vlaneseq
        %v2594 = vshrl.u32 %v2593, 7
        %v2595 = vsub.s32 0, %v2594
        %v2596 = vrot.slane %v899, %v2595
        %v2597 = vlaneseq
        %v2598 = vshrl.u32 %v2597, 7
        %v2599 = vsub.s32 0, %v2598
        %v2600 = vrot.slane %v900, %v2599
        %v2601 = vlaneseq
        %v2602 = vshrl.u32 %v2601, 7
        %v2603 = vsub.s32 0, %v2602
        %v2604 = vrot.slane %v901, %v2603
        %v2605 = vlaneseq
        %v2606 = vshrl.u32 %v2605, 7
        %v2607 = vsub.s32 0, %v2606
        %v2608 = vrot.slane %v902, %v2607
        %v2609 = vlaneseq
        %v2610 = vshrl.u32 %v2609, 7
        %v2611 = vsub.s32 0, %v2610
        %v2612 = vrot.slane %v903, %v2611
        %v2613 = vlaneseq
        %v2614 = vshrl.u32 %v2613, 7
        %v2615 = vsub.s32 0, %v2614
        %v2616 = vrot.slane %v904, %v2615
        %v2617 = vmul.f32 %v2588, %v2583
        %v2618 = vmul.f32 %v2592, %v2582
        %v2619 = vmul.f32 %v2596, %v2581
        %v2620 = vmul.f32 %v2600, %v2580
        %v2621 = vmul.f32 %v2604, %v2579
        %v2622 = vmul.f32 %v2608, %v2578
        %v2623 = vmul.f32 %v2612, %v2577
        %v2624 = vmul.f32 %v2616, %v2584
        %v2625 = vpack.c.bf16 %v2229, %v2164
        %v2626 = vpack.c.bf16 %v2230, %v2165
        %v2627 = vpack.c.bf16 %v2231, %v2166
        %v2628 = vpack.c.bf16 %v2232, %v2167
        %v2629 = vpack.c.bf16 %v2233, %v2168
        %v2630 = vpack.c.bf16 %v2234, %v2169
        %v2631 = vpack.c.bf16 %v2235, %v2170
        %v2632 = vpack.c.bf16 %v2236, %v2171
        %v2633 = vpack.c.bf16 %v2358, %v2294
        %v2634 = vpack.c.bf16 %v2359, %v2295
        %v2635 = vpack.c.bf16 %v2360, %v2296
        %v2636 = vpack.c.bf16 %v2361, %v2297
        %v2637 = vpack.c.bf16 %v2362, %v2298
        %v2638 = vpack.c.bf16 %v2363, %v2299
        %v2639 = vpack.c.bf16 %v2364, %v2300
        %v2640 = vpack.c.bf16 %v2365, %v2301
        %v2641 = vpack.c.bf16 %v2422, %v1127
        %v2642 = vpack.c.bf16 %v2423, %v1129
        %v2643 = vpack.c.bf16 %v2424, %v1198
        %v2644 = vpack.c.bf16 %v2425, %v1200
        %v2645 = vpack.c.bf16 %v2426, %v1269
        %v2646 = vpack.c.bf16 %v2427, %v1271
        %v2647 = vpack.c.bf16 %v2428, %v1340
        %v2648 = vpack.c.bf16 %v2429, %v1342
        %v2649 = vpack.c.bf16 %v2552, %v2487
        %v2650 = vpack.c.bf16 %v2553, %v2488
        %v2651 = vpack.c.bf16 %v2554, %v2489
        %v2652 = vpack.c.bf16 %v2555, %v2490
        %v2653 = vpack.c.bf16 %v2556, %v2491
        %v2654 = vpack.c.bf16 %v2557, %v2492
        %v2655 = vpack.c.bf16 %v2558, %v2493
        %v2656 = vpack.c.bf16 %v2559, %v2494
        %v2657 = vpack.c.bf16 %v2617, %v2617
        %v2658 = vpack.c.bf16 %v2618, %v2618
        %v2659 = vpack.c.bf16 %v2619, %v2619
        %v2660 = vpack.c.bf16 %v2620, %v2620
        %v2661 = vpack.c.bf16 %v2621, %v2621
        %v2662 = vpack.c.bf16 %v2622, %v2622
        %v2663 = vpack.c.bf16 %v2623, %v2623
        %v2664 = vpack.c.bf16 %v2624, %v2624
        %v2665 = vld [vmem:[#allocation8] sm:$0xf]
        %v2666 = vld [vmem:[%s11] sm:$0xff]
        %2668 = vset.pattern.permute.xlu0 0
        %2669 = vperm.xlu0 %2668, %v2666
        %v2670 = vpop.permute.xlu0 %2669
        %v2673 = vsel %vm2051, %v2665, 0
        %v2676 = vsel %vm2055, %v2657, 0
        %v2679 = vsel %vm2055, %v2658, 0
        %v2682 = vsel %vm2055, %v2659, 0
        %v2685 = vsel %vm2055, %v2660, 0
        %v2688 = vsel %vm2055, %v2661, 0
        %v2691 = vsel %vm2055, %v2662, 0
        %v2694 = vsel %vm2055, %v2663, 0
        %v2697 = vsel %vm2055, %v2664, 0
        %2699 = vmatprep.subr.bf16.mxu0 0
        %2700 = vmatpush1.bf16.msra.mxu0 0
        %2701 = vmatprep.subr.bf16.mxu0 0
        %2702 = vmatpush1.bf16.msra.mxu0 0
        %2703 = vmatprep.subr.bf16.mxu0 0
        %2704 = vmatpush1.bf16.msra.mxu0 0
        %2705 = vmatprep.subr.bf16.mxu0 %v2679
        %2706 = vmatpush1.bf16.msra.mxu0 %v2676
        %2707 = vmatprep.subr.bf16.mxu0 %v2650
        %2708 = vmatpush1.bf16.msra.mxu0 %v2649
        %2709 = vmatprep.subr.bf16.mxu0 %v2642
        %2710 = vmatpush1.bf16.msra.mxu0 %v2641
        %2711 = vmatprep.subr.bf16.mxu0 %v2634
        %2712 = vmatpush1.bf16.msra.mxu0 %v2633
        %2713 = vmatprep.subr.bf16.mxu0 %v2626
        %2714 = vmatpush1.bf16.msra.mxu0 %v2625
        %2715 = vmatprep.subr.bf16.mxu0 0
        %2716 = vmatpush2.bf16.msra.mxu0 0
        %2717 = vmatprep.subr.bf16.mxu0 0
        %2718 = vmatpush2.bf16.msra.mxu0 0
        %2719 = vmatprep.subr.bf16.mxu0 0
        %2720 = vmatpush2.bf16.msra.mxu0 0
        %2721 = vmatprep.subr.bf16.mxu0 0
        %2722 = vmatpush2.bf16.msra.mxu0 0
        %2723 = vmatprep.subr.bf16.mxu0 0
        %2724 = vmatpush2.bf16.msra.mxu0 0
        %2725 = vmatprep.subr.bf16.mxu0 0
        %2726 = vmatpush2.bf16.msra.mxu0 0
        %2727 = vmatprep.subr.bf16.mxu0 0
        %2728 = vmatpush2.bf16.msra.mxu0 0
        %2729 = vmatprep.subr.bf16.mxu0 0
        %2730 = vmatpush2.bf16.msra.mxu0 0
        %2731 = vmatprep.mubr.bf16.mxu0 0
        %2732 = vmatmul.mubr.bf16.gmra.mxu0 %v2673
        %v2733 = vpop.f32.mrf.mxu0
        %v2734 = vadd.f32 %v2670, %v2733
        %v2735 = vpop.f32.mrf.mxu0
        %v2736 = vadd.f32 %v2670, %v2735
        %v2737 = vpop.f32.mrf.mxu0
        %v2738 = vpop.f32.mrf.mxu0
        %2739 = vdwg.mxu0
        %2740 = vmatprep.subr.bf16.mxu0 0
        %2741 = vmatpush1.bf16.msra.mxu0 0
        %2742 = vmatprep.subr.bf16.mxu0 0
        %2743 = vmatpush1.bf16.msra.mxu0 0
        %2744 = vmatprep.subr.bf16.mxu0 0
        %2745 = vmatpush1.bf16.msra.mxu0 0
        %2746 = vmatprep.subr.bf16.mxu0 %v2685
        %2747 = vmatpush1.bf16.msra.mxu0 %v2682
        %2748 = vmatprep.subr.bf16.mxu0 %v2652
        %2749 = vmatpush1.bf16.msra.mxu0 %v2651
        %2750 = vmatprep.subr.bf16.mxu0 %v2644
        %2751 = vmatpush1.bf16.msra.mxu0 %v2643
        %2752 = vmatprep.subr.bf16.mxu0 %v2636
        %2753 = vmatpush1.bf16.msra.mxu0 %v2635
        %2754 = vmatprep.subr.bf16.mxu0 %v2628
        %2755 = vmatpush1.bf16.msra.mxu0 %v2627
        %2756 = vmatprep.subr.bf16.mxu0 0
        %2757 = vmatpush2.bf16.msra.mxu0 0
        %2758 = vmatprep.subr.bf16.mxu0 0
        %2759 = vmatpush2.bf16.msra.mxu0 0
        %2760 = vmatprep.subr.bf16.mxu0 0
        %2761 = vmatpush2.bf16.msra.mxu0 0
        %2762 = vmatprep.subr.bf16.mxu0 0
        %2763 = vmatpush2.bf16.msra.mxu0 0
        %2764 = vmatprep.subr.bf16.mxu0 0
        %2765 = vmatpush2.bf16.msra.mxu0 0
        %2766 = vmatprep.subr.bf16.mxu0 0
        %2767 = vmatpush2.bf16.msra.mxu0 0
        %2768 = vmatprep.subr.bf16.mxu0 0
        %2769 = vmatpush2.bf16.msra.mxu0 0
        %2770 = vmatprep.subr.bf16.mxu0 0
        %2771 = vmatpush2.bf16.msra.mxu0 0
        %2772 = vmatprep.mubr.bf16.mxu0 0
        %2773 = vmatmul.mubr.bf16.gmra.mxu0 %v2673
        %v2774 = vpop.f32.mrf.mxu0
        %v2775 = vadd.f32 %v2670, %v2774
        %v2776 = vpop.f32.mrf.mxu0
        %v2777 = vadd.f32 %v2670, %v2776
        %v2778 = vpop.f32.mrf.mxu0
        %v2779 = vpop.f32.mrf.mxu0
        %2780 = vdwg.mxu0
        %2781 = vmatprep.subr.bf16.mxu0 0
        %2782 = vmatpush1.bf16.msra.mxu0 0
        %2783 = vmatprep.subr.bf16.mxu0 0
        %2784 = vmatpush1.bf16.msra.mxu0 0
        %2785 = vmatprep.subr.bf16.mxu0 0
        %2786 = vmatpush1.bf16.msra.mxu0 0
        %2787 = vmatprep.subr.bf16.mxu0 %v2691
        %2788 = vmatpush1.bf16.msra.mxu0 %v2688
        %2789 = vmatprep.subr.bf16.mxu0 %v2654
        %2790 = vmatpush1.bf16.msra.mxu0 %v2653
        %2791 = vmatprep.subr.bf16.mxu0 %v2646
        %2792 = vmatpush1.bf16.msra.mxu0 %v2645
        %2793 = vmatprep.subr.bf16.mxu0 %v2638
        %2794 = vmatpush1.bf16.msra.mxu0 %v2637
        %2795 = vmatprep.subr.bf16.mxu0 %v2630
        %2796 = vmatpush1.bf16.msra.mxu0 %v2629
        %2797 = vmatprep.subr.bf16.mxu0 0
        %2798 = vmatpush2.bf16.msra.mxu0 0
        %2799 = vmatprep.subr.bf16.mxu0 0
        %2800 = vmatpush2.bf16.msra.mxu0 0
        %2801 = vmatprep.subr.bf16.mxu0 0
        %2802 = vmatpush2.bf16.msra.mxu0 0
        %2803 = vmatprep.subr.bf16.mxu0 0
        %2804 = vmatpush2.bf16.msra.mxu0 0
        %2805 = vmatprep.subr.bf16.mxu0 0
        %2806 = vmatpush2.bf16.msra.mxu0 0
        %2807 = vmatprep.subr.bf16.mxu0 0
        %2808 = vmatpush2.bf16.msra.mxu0 0
        %2809 = vmatprep.subr.bf16.mxu0 0
        %2810 = vmatpush2.bf16.msra.mxu0 0
        %2811 = vmatprep.subr.bf16.mxu0 0
        %2812 = vmatpush2.bf16.msra.mxu0 0
        %2813 = vmatprep.mubr.bf16.mxu0 0
        %2814 = vmatmul.mubr.bf16.gmra.mxu0 %v2673
        %v2815 = vpop.f32.mrf.mxu0
        %v2816 = vadd.f32 %v2670, %v2815
        %v2817 = vpop.f32.mrf.mxu0
        %v2818 = vadd.f32 %v2670, %v2817
        %v2819 = vpop.f32.mrf.mxu0
        %v2820 = vpop.f32.mrf.mxu0
        %2821 = vdwg.mxu0
        %2822 = vmatprep.subr.bf16.mxu0 0
        %2823 = vmatpush1.bf16.msra.mxu0 0
        %2824 = vmatprep.subr.bf16.mxu0 0
        %2825 = vmatpush1.bf16.msra.mxu0 0
        %2826 = vmatprep.subr.bf16.mxu0 0
        %2827 = vmatpush1.bf16.msra.mxu0 0
        %2828 = vmatprep.subr.bf16.mxu0 %v2697
        %2829 = vmatpush1.bf16.msra.mxu0 %v2694
        %2830 = vmatprep.subr.bf16.mxu0 %v2656
        %2831 = vmatpush1.bf16.msra.mxu0 %v2655
        %2832 = vmatprep.subr.bf16.mxu0 %v2648
        %2833 = vmatpush1.bf16.msra.mxu0 %v2647
        %2834 = vmatprep.subr.bf16.mxu0 %v2640
        %2835 = vmatpush1.bf16.msra.mxu0 %v2639
        %2836 = vmatprep.subr.bf16.mxu0 %v2632
        %2837 = vmatpush1.bf16.msra.mxu0 %v2631
        %2838 = vmatprep.subr.bf16.mxu0 0
        %2839 = vmatpush2.bf16.msra.mxu0 0
        %2840 = vmatprep.subr.bf16.mxu0 0
        %2841 = vmatpush2.bf16.msra.mxu0 0
        %2842 = vmatprep.subr.bf16.mxu0 0
        %2843 = vmatpush2.bf16.msra.mxu0 0
        %2844 = vmatprep.subr.bf16.mxu0 0
        %2845 = vmatpush2.bf16.msra.mxu0 0
        %2846 = vmatprep.subr.bf16.mxu0 0
        %2847 = vmatpush2.bf16.msra.mxu0 0
        %2848 = vmatprep.subr.bf16.mxu0 0
        %2849 = vmatpush2.bf16.msra.mxu0 0
        %2850 = vmatprep.subr.bf16.mxu0 0
        %2851 = vmatpush2.bf16.msra.mxu0 0
        %2852 = vmatprep.subr.bf16.mxu0 0
        %2853 = vmatpush2.bf16.msra.mxu0 0
        %2854 = vmatprep.mubr.bf16.mxu0 0
        %2855 = vmatmul.mubr.bf16.gmra.mxu0 %v2673
        %v2856 = vpop.f32.mrf.mxu0
        %v2857 = vadd.f32 %v2670, %v2856
        %v2858 = vpop.f32.mrf.mxu0
        %v2859 = vadd.f32 %v2670, %v2858
        %v2860 = vpop.f32.mrf.mxu0
        %v2861 = vpop.f32.mrf.mxu0
        %2862 = vdwg.mxu0
        %2863 = vrot.lane.b32.xlu0 %v1667, 33
        %v2864 = vpop.permute.xlu0 %2863
        %2865 = vrot.lane.b32.xlu0 %v1669, 33
        %v2866 = vpop.permute.xlu0 %2865
        %2867 = vrot.lane.b32.xlu0 %v1738, 33
        %v2868 = vpop.permute.xlu0 %2867
        %2869 = vrot.lane.b32.xlu0 %v1740, 33
        %v2870 = vpop.permute.xlu0 %2869
        %2871 = vrot.lane.b32.xlu0 %v1809, 33
        %v2872 = vpop.permute.xlu0 %2871
        %2873 = vrot.lane.b32.xlu0 %v1811, 33
        %v2874 = vpop.permute.xlu0 %2873
        %2875 = vrot.lane.b32.xlu0 %v1880, 33
        %v2876 = vpop.permute.xlu0 %2875
        %2877 = vrot.lane.b32.xlu0 %v1882, 33
        %v2878 = vpop.permute.xlu0 %2877
        %v2879 = vsel %vm2123, %v2876, %v2878
        %v2880 = vsel %vm2123, %v2874, %v2876
        %v2881 = vsel %vm2123, %v2872, %v2874
        %v2882 = vsel %vm2123, %v2870, %v2872
        %v2883 = vsel %vm2123, %v2868, %v2870
        %v2884 = vsel %vm2123, %v2866, %v2868
        %v2885 = vsel %vm2123, %v2864, %v2866
        %v2886 = vsel %vm2123, %v2878, %v2864
        %v2887 = vmul.f32 %v2135, %v2886
        %v2888 = vmul.f32 %v2139, %v2885
        %v2889 = vmul.f32 %v2143, %v2884
        %v2890 = vmul.f32 %v2147, %v2883
        %v2891 = vmul.f32 %v2151, %v2882
        %v2892 = vmul.f32 %v2155, %v2881
        %v2893 = vmul.f32 %v2159, %v2880
        %v2894 = vmul.f32 %v2163, %v2879
        %2895 = vrot.lane.b32.xlu0 %v1667, 32
        %v2896 = vpop.permute.xlu0 %2895
        %2897 = vrot.lane.b32.xlu0 %v1669, 32
        %v2898 = vpop.permute.xlu0 %2897
        %2899 = vrot.lane.b32.xlu0 %v1738, 32
        %v2900 = vpop.permute.xlu0 %2899
        %2901 = vrot.lane.b32.xlu0 %v1740, 32
        %v2902 = vpop.permute.xlu0 %2901
        %2903 = vrot.lane.b32.xlu0 %v1809, 32
        %v2904 = vpop.permute.xlu0 %2903
        %2905 = vrot.lane.b32.xlu0 %v1811, 32
        %v2906 = vpop.permute.xlu0 %2905
        %2907 = vrot.lane.b32.xlu0 %v1880, 32
        %v2908 = vpop.permute.xlu0 %2907
        %2909 = vrot.lane.b32.xlu0 %v1882, 32
        %v2910 = vpop.permute.xlu0 %2909
        %v2911 = vsel %vm2188, %v2908, %v2910
        %v2912 = vsel %vm2188, %v2906, %v2908
        %v2913 = vsel %vm2188, %v2904, %v2906
        %v2914 = vsel %vm2188, %v2902, %v2904
        %v2915 = vsel %vm2188, %v2900, %v2902
        %v2916 = vsel %vm2188, %v2898, %v2900
        %v2917 = vsel %vm2188, %v2896, %v2898
        %v2918 = vsel %vm2188, %v2910, %v2896
        %v2919 = vmul.f32 %v2200, %v2918
        %v2920 = vmul.f32 %v2204, %v2917
        %v2921 = vmul.f32 %v2208, %v2916
        %v2922 = vmul.f32 %v2212, %v2915
        %v2923 = vmul.f32 %v2216, %v2914
        %v2924 = vmul.f32 %v2220, %v2913
        %v2925 = vmul.f32 %v2224, %v2912
        %v2926 = vmul.f32 %v2228, %v2911
        %2927 = vrot.lane.b32.xlu0 %v1667, 31
        %v2928 = vpop.permute.xlu0 %2927
        %2929 = vrot.lane.b32.xlu0 %v1669, 31
        %v2930 = vpop.permute.xlu0 %2929
        %2931 = vrot.lane.b32.xlu0 %v1738, 31
        %v2932 = vpop.permute.xlu0 %2931
        %2933 = vrot.lane.b32.xlu0 %v1740, 31
        %v2934 = vpop.permute.xlu0 %2933
        %2935 = vrot.lane.b32.xlu0 %v1809, 31
        %v2936 = vpop.permute.xlu0 %2935
        %2937 = vrot.lane.b32.xlu0 %v1811, 31
        %v2938 = vpop.permute.xlu0 %2937
        %2939 = vrot.lane.b32.xlu0 %v1880, 31
        %v2940 = vpop.permute.xlu0 %2939
        %2941 = vrot.lane.b32.xlu0 %v1882, 31
        %v2942 = vpop.permute.xlu0 %2941
        %v2943 = vsel %vm2253, %v2940, %v2942
        %v2944 = vsel %vm2253, %v2938, %v2940
        %v2945 = vsel %vm2253, %v2936, %v2938
        %v2946 = vsel %vm2253, %v2934, %v2936
        %v2947 = vsel %vm2253, %v2932, %v2934
        %v2948 = vsel %vm2253, %v2930, %v2932
        %v2949 = vsel %vm2253, %v2928, %v2930
        %v2950 = vsel %vm2253, %v2942, %v2928
        %v2951 = vmul.f32 %v2265, %v2950
        %v2952 = vmul.f32 %v2269, %v2949
        %v2953 = vmul.f32 %v2273, %v2948
        %v2954 = vmul.f32 %v2277, %v2947
        %v2955 = vmul.f32 %v2281, %v2946
        %v2956 = vmul.f32 %v2285, %v2945
        %v2957 = vmul.f32 %v2289, %v2944
        %v2958 = vmul.f32 %v2293, %v2943
        %2959 = vrot.lane.b32.xlu0 %v1667, 1
        %v2960 = vpop.permute.xlu0 %2959
        %2961 = vrot.lane.b32.xlu0 %v1669, 1
        %v2962 = vpop.permute.xlu0 %2961
        %2963 = vrot.lane.b32.xlu0 %v1738, 1
        %v2964 = vpop.permute.xlu0 %2963
        %2965 = vrot.lane.b32.xlu0 %v1740, 1
        %v2966 = vpop.permute.xlu0 %2965
        %2967 = vrot.lane.b32.xlu0 %v1809, 1
        %v2968 = vpop.permute.xlu0 %2967
        %2969 = vrot.lane.b32.xlu0 %v1811, 1
        %v2970 = vpop.permute.xlu0 %2969
        %2971 = vrot.lane.b32.xlu0 %v1880, 1
        %v2972 = vpop.permute.xlu0 %2971
        %2973 = vrot.lane.b32.xlu0 %v1882, 1
        %v2974 = vpop.permute.xlu0 %2973
        %v2975 = vsel %vm1941, %v2972, %v2974
        %v2976 = vsel %vm1941, %v2970, %v2972
        %v2977 = vsel %vm1941, %v2968, %v2970
        %v2978 = vsel %vm1941, %v2966, %v2968
        %v2979 = vsel %vm1941, %v2964, %v2966
        %v2980 = vsel %vm1941, %v2962, %v2964
        %v2981 = vsel %vm1941, %v2960, %v2962
        %v2982 = vsel %vm1941, %v2974, %v2960
        %v2983 = vmul.f32 %v2329, %v2982
        %v2984 = vmul.f32 %v2333, %v2981
        %v2985 = vmul.f32 %v2337, %v2980
        %v2986 = vmul.f32 %v2341, %v2979
        %v2987 = vmul.f32 %v2345, %v2978
        %v2988 = vmul.f32 %v2349, %v2977
        %v2989 = vmul.f32 %v2353, %v2976
        %v2990 = vmul.f32 %v2357, %v2975
        %2991 = vrot.lane.b32.xlu0 %v1667, 127
        %v2992 = vpop.permute.xlu0 %2991
        %2993 = vrot.lane.b32.xlu0 %v1669, 127
        %v2994 = vpop.permute.xlu0 %2993
        %2995 = vrot.lane.b32.xlu0 %v1738, 127
        %v2996 = vpop.permute.xlu0 %2995
        %2997 = vrot.lane.b32.xlu0 %v1740, 127
        %v2998 = vpop.permute.xlu0 %2997
        %2999 = vrot.lane.b32.xlu0 %v1809, 127
        %v3000 = vpop.permute.xlu0 %2999
        %3001 = vrot.lane.b32.xlu0 %v1811, 127
        %v3002 = vpop.permute.xlu0 %3001
        %3003 = vrot.lane.b32.xlu0 %v1880, 127
        %v3004 = vpop.permute.xlu0 %3003
        %3005 = vrot.lane.b32.xlu0 %v1882, 127
        %v3006 = vpop.permute.xlu0 %3005
        %v3007 = vsel %vm1958, %v3004, %v3006
        %v3008 = vsel %vm1958, %v3002, %v3004
        %v3009 = vsel %vm1958, %v3000, %v3002
        %v3010 = vsel %vm1958, %v2998, %v3000
        %v3011 = vsel %vm1958, %v2996, %v2998
        %v3012 = vsel %vm1958, %v2994, %v2996
        %v3013 = vsel %vm1958, %v2992, %v2994
        %v3014 = vsel %vm1958, %v3006, %v2992
        %v3015 = vmul.f32 %v2393, %v3013
        %v3016 = vmul.f32 %v2397, %v3012
        %v3017 = vmul.f32 %v2401, %v3011
        %v3018 = vmul.f32 %v2405, %v3010
        %v3019 = vmul.f32 %v2409, %v3009
        %v3020 = vmul.f32 %v2413, %v3008
        %v3021 = vmul.f32 %v2417, %v3007
        %v3022 = vmul.f32 %v2421, %v3014
        %3023 = vrot.lane.b32.xlu0 %v1667, 97
        %v3024 = vpop.permute.xlu0 %3023
        %3025 = vrot.lane.b32.xlu0 %v1669, 97
        %v3026 = vpop.permute.xlu0 %3025
        %3027 = vrot.lane.b32.xlu0 %v1738, 97
        %v3028 = vpop.permute.xlu0 %3027
        %3029 = vrot.lane.b32.xlu0 %v1740, 97
        %v3030 = vpop.permute.xlu0 %3029
        %3031 = vrot.lane.b32.xlu0 %v1809, 97
        %v3032 = vpop.permute.xlu0 %3031
        %3033 = vrot.lane.b32.xlu0 %v1811, 97
        %v3034 = vpop.permute.xlu0 %3033
        %3035 = vrot.lane.b32.xlu0 %v1880, 97
        %v3036 = vpop.permute.xlu0 %3035
        %3037 = vrot.lane.b32.xlu0 %v1882, 97
        %v3038 = vpop.permute.xlu0 %3037
        %v3039 = vsel %vm2446, %v3036, %v3038
        %v3040 = vsel %vm2446, %v3034, %v3036
        %v3041 = vsel %vm2446, %v3032, %v3034
        %v3042 = vsel %vm2446, %v3030, %v3032
        %v3043 = vsel %vm2446, %v3028, %v3030
        %v3044 = vsel %vm2446, %v3026, %v3028
        %v3045 = vsel %vm2446, %v3024, %v3026
        %v3046 = vsel %vm2446, %v3038, %v3024
        %v3047 = vmul.f32 %v2458, %v3045
        %v3048 = vmul.f32 %v2462, %v3044
        %v3049 = vmul.f32 %v2466, %v3043
        %v3050 = vmul.f32 %v2470, %v3042
        %v3051 = vmul.f32 %v2474, %v3041
        %v3052 = vmul.f32 %v2478, %v3040
        %v3053 = vmul.f32 %v2482, %v3039
        %v3054 = vmul.f32 %v2486, %v3046
        %3055 = vrot.lane.b32.xlu0 %v1667, 96
        %v3056 = vpop.permute.xlu0 %3055
        %3057 = vrot.lane.b32.xlu0 %v1669, 96
        %v3058 = vpop.permute.xlu0 %3057
        %3059 = vrot.lane.b32.xlu0 %v1738, 96
        %v3060 = vpop.permute.xlu0 %3059
        %3061 = vrot.lane.b32.xlu0 %v1740, 96
        %v3062 = vpop.permute.xlu0 %3061
        %3063 = vrot.lane.b32.xlu0 %v1809, 96
        %v3064 = vpop.permute.xlu0 %3063
        %3065 = vrot.lane.b32.xlu0 %v1811, 96
        %v3066 = vpop.permute.xlu0 %3065
        %3067 = vrot.lane.b32.xlu0 %v1880, 96
        %v3068 = vpop.permute.xlu0 %3067
        %3069 = vrot.lane.b32.xlu0 %v1882, 96
        %v3070 = vpop.permute.xlu0 %3069
        %v3071 = vsel %vm2511, %v3068, %v3070
        %v3072 = vsel %vm2511, %v3066, %v3068
        %v3073 = vsel %vm2511, %v3064, %v3066
        %v3074 = vsel %vm2511, %v3062, %v3064
        %v3075 = vsel %vm2511, %v3060, %v3062
        %v3076 = vsel %vm2511, %v3058, %v3060
        %v3077 = vsel %vm2511, %v3056, %v3058
        %v3078 = vsel %vm2511, %v3070, %v3056
        %v3079 = vmul.f32 %v2523, %v3077
        %v3080 = vmul.f32 %v2527, %v3076
        %v3081 = vmul.f32 %v2531, %v3075
        %v3082 = vmul.f32 %v2535, %v3074
        %v3083 = vmul.f32 %v2539, %v3073
        %v3084 = vmul.f32 %v2543, %v3072
        %v3085 = vmul.f32 %v2547, %v3071
        %v3086 = vmul.f32 %v2551, %v3078
        %3087 = vrot.lane.b32.xlu0 %v1667, 95
        %v3088 = vpop.permute.xlu0 %3087
        %3089 = vrot.lane.b32.xlu0 %v1669, 95
        %v3090 = vpop.permute.xlu0 %3089
        %3091 = vrot.lane.b32.xlu0 %v1738, 95
        %v3092 = vpop.permute.xlu0 %3091
        %3093 = vrot.lane.b32.xlu0 %v1740, 95
        %v3094 = vpop.permute.xlu0 %3093
        %3095 = vrot.lane.b32.xlu0 %v1809, 95
        %v3096 = vpop.permute.xlu0 %3095
        %3097 = vrot.lane.b32.xlu0 %v1811, 95
        %v3098 = vpop.permute.xlu0 %3097
        %3099 = vrot.lane.b32.xlu0 %v1880, 95
        %v3100 = vpop.permute.xlu0 %3099
        %3101 = vrot.lane.b32.xlu0 %v1882, 95
        %v3102 = vpop.permute.xlu0 %3101
        %v3103 = vsel %vm2576, %v3100, %v3102
        %v3104 = vsel %vm2576, %v3098, %v3100
        %v3105 = vsel %vm2576, %v3096, %v3098
        %v3106 = vsel %vm2576, %v3094, %v3096
        %v3107 = vsel %vm2576, %v3092, %v3094
        %v3108 = vsel %vm2576, %v3090, %v3092
        %v3109 = vsel %vm2576, %v3088, %v3090
        %v3110 = vsel %vm2576, %v3102, %v3088
        %v3111 = vmul.f32 %v2588, %v3109
        %v3112 = vmul.f32 %v2592, %v3108
        %v3113 = vmul.f32 %v2596, %v3107
        %v3114 = vmul.f32 %v2600, %v3106
        %v3115 = vmul.f32 %v2604, %v3105
        %v3116 = vmul.f32 %v2608, %v3104
        %v3117 = vmul.f32 %v2612, %v3103
        %v3118 = vmul.f32 %v2616, %v3110
        %v3119 = vpack.c.bf16 %v2919, %v2887
        %v3120 = vpack.c.bf16 %v2920, %v2888
        %v3121 = vpack.c.bf16 %v2921, %v2889
        %v3122 = vpack.c.bf16 %v2922, %v2890
        %v3123 = vpack.c.bf16 %v2923, %v2891
        %v3124 = vpack.c.bf16 %v2924, %v2892
        %v3125 = vpack.c.bf16 %v2925, %v2893
        %v3126 = vpack.c.bf16 %v2926, %v2894
        %v3127 = vpack.c.bf16 %v2983, %v2951
        %v3128 = vpack.c.bf16 %v2984, %v2952
        %v3129 = vpack.c.bf16 %v2985, %v2953
        %v3130 = vpack.c.bf16 %v2986, %v2954
        %v3131 = vpack.c.bf16 %v2987, %v2955
        %v3132 = vpack.c.bf16 %v2988, %v2956
        %v3133 = vpack.c.bf16 %v2989, %v2957
        %v3134 = vpack.c.bf16 %v2990, %v2958
        %v3135 = vpack.c.bf16 %v3015, %v1667
        %v3136 = vpack.c.bf16 %v3016, %v1669
        %v3137 = vpack.c.bf16 %v3017, %v1738
        %v3138 = vpack.c.bf16 %v3018, %v1740
        %v3139 = vpack.c.bf16 %v3019, %v1809
        %v3140 = vpack.c.bf16 %v3020, %v1811
        %v3141 = vpack.c.bf16 %v3021, %v1880
        %v3142 = vpack.c.bf16 %v3022, %v1882
        %v3143 = vpack.c.bf16 %v3079, %v3047
        %v3144 = vpack.c.bf16 %v3080, %v3048
        %v3145 = vpack.c.bf16 %v3081, %v3049
        %v3146 = vpack.c.bf16 %v3082, %v3050
        %v3147 = vpack.c.bf16 %v3083, %v3051
        %v3148 = vpack.c.bf16 %v3084, %v3052
        %v3149 = vpack.c.bf16 %v3085, %v3053
        %v3150 = vpack.c.bf16 %v3086, %v3054
        %v3151 = vpack.c.bf16 %v3111, %v3111
        %v3152 = vpack.c.bf16 %v3112, %v3112
        %v3153 = vpack.c.bf16 %v3113, %v3113
        %v3154 = vpack.c.bf16 %v3114, %v3114
        %v3155 = vpack.c.bf16 %v3115, %v3115
        %v3156 = vpack.c.bf16 %v3116, %v3116
        %v3157 = vpack.c.bf16 %v3117, %v3117
        %v3158 = vpack.c.bf16 %v3118, %v3118
        %v3159 = vld [vmem:[#allocation10] sm:$0xf]
        %v3160 = vld [vmem:[%s13] sm:$0xff]
        %3162 = vset.pattern.permute.xlu0 0
        %3163 = vperm.xlu0 %3162, %v3160
        %v3164 = vpop.permute.xlu0 %3163
        %v3167 = vsel %vm2051, %v3159, 0
        %v3170 = vsel %vm2055, %v3151, 0
        %v3173 = vsel %vm2055, %v3152, 0
        %v3176 = vsel %vm2055, %v3153, 0
        %v3179 = vsel %vm2055, %v3154, 0
        %v3182 = vsel %vm2055, %v3155, 0
        %v3185 = vsel %vm2055, %v3156, 0
        %v3188 = vsel %vm2055, %v3157, 0
        %v3191 = vsel %vm2055, %v3158, 0
        %3193 = vmatprep.subr.bf16.mxu0 0
        %3194 = vmatpush1.bf16.msra.mxu0 0
        %3195 = vmatprep.subr.bf16.mxu0 0
        %3196 = vmatpush1.bf16.msra.mxu0 0
        %3197 = vmatprep.subr.bf16.mxu0 0
        %3198 = vmatpush1.bf16.msra.mxu0 0
        %3199 = vmatprep.subr.bf16.mxu0 %v3173
        %3200 = vmatpush1.bf16.msra.mxu0 %v3170
        %3201 = vmatprep.subr.bf16.mxu0 %v3144
        %3202 = vmatpush1.bf16.msra.mxu0 %v3143
        %3203 = vmatprep.subr.bf16.mxu0 %v3136
        %3204 = vmatpush1.bf16.msra.mxu0 %v3135
        %3205 = vmatprep.subr.bf16.mxu0 %v3128
        %3206 = vmatpush1.bf16.msra.mxu0 %v3127
        %3207 = vmatprep.subr.bf16.mxu0 %v3120
        %3208 = vmatpush1.bf16.msra.mxu0 %v3119
        %3209 = vmatprep.subr.bf16.mxu0 0
        %3210 = vmatpush2.bf16.msra.mxu0 0
        %3211 = vmatprep.subr.bf16.mxu0 0
        %3212 = vmatpush2.bf16.msra.mxu0 0
        %3213 = vmatprep.subr.bf16.mxu0 0
        %3214 = vmatpush2.bf16.msra.mxu0 0
        %3215 = vmatprep.subr.bf16.mxu0 0
        %3216 = vmatpush2.bf16.msra.mxu0 0
        %3217 = vmatprep.subr.bf16.mxu0 0
        %3218 = vmatpush2.bf16.msra.mxu0 0
        %3219 = vmatprep.subr.bf16.mxu0 0
        %3220 = vmatpush2.bf16.msra.mxu0 0
        %3221 = vmatprep.subr.bf16.mxu0 0
        %3222 = vmatpush2.bf16.msra.mxu0 0
        %3223 = vmatprep.subr.bf16.mxu0 0
        %3224 = vmatpush2.bf16.msra.mxu0 0
        %3225 = vmatprep.mubr.bf16.mxu0 0
        %3226 = vmatmul.mubr.bf16.gmra.mxu0 %v3167
        %v3227 = vpop.f32.mrf.mxu0
        %v3228 = vadd.f32 %v3164, %v3227
        %v3229 = vpop.f32.mrf.mxu0
        %v3230 = vadd.f32 %v3164, %v3229
        %v3231 = vpop.f32.mrf.mxu0
        %v3232 = vpop.f32.mrf.mxu0
        %3233 = vdwg.mxu0
        %3234 = vmatprep.subr.bf16.mxu0 0
        %3235 = vmatpush1.bf16.msra.mxu0 0
        %3236 = vmatprep.subr.bf16.mxu0 0
        %3237 = vmatpush1.bf16.msra.mxu0 0
        %3238 = vmatprep.subr.bf16.mxu0 0
        %3239 = vmatpush1.bf16.msra.mxu0 0
        %3240 = vmatprep.subr.bf16.mxu0 %v3179
        %3241 = vmatpush1.bf16.msra.mxu0 %v3176
        %3242 = vmatprep.subr.bf16.mxu0 %v3146
        %3243 = vmatpush1.bf16.msra.mxu0 %v3145
        %3244 = vmatprep.subr.bf16.mxu0 %v3138
        %3245 = vmatpush1.bf16.msra.mxu0 %v3137
        %3246 = vmatprep.subr.bf16.mxu0 %v3130
        %3247 = vmatpush1.bf16.msra.mxu0 %v3129
        %3248 = vmatprep.subr.bf16.mxu0 %v3122
        %3249 = vmatpush1.bf16.msra.mxu0 %v3121
        %3250 = vmatprep.subr.bf16.mxu0 0
        %3251 = vmatpush2.bf16.msra.mxu0 0
        %3252 = vmatprep.subr.bf16.mxu0 0
        %3253 = vmatpush2.bf16.msra.mxu0 0
        %3254 = vmatprep.subr.bf16.mxu0 0
        %3255 = vmatpush2.bf16.msra.mxu0 0
        %3256 = vmatprep.subr.bf16.mxu0 0
        %3257 = vmatpush2.bf16.msra.mxu0 0
        %3258 = vmatprep.subr.bf16.mxu0 0
        %3259 = vmatpush2.bf16.msra.mxu0 0
        %3260 = vmatprep.subr.bf16.mxu0 0
        %3261 = vmatpush2.bf16.msra.mxu0 0
        %3262 = vmatprep.subr.bf16.mxu0 0
        %3263 = vmatpush2.bf16.msra.mxu0 0
        %3264 = vmatprep.subr.bf16.mxu0 0
        %3265 = vmatpush2.bf16.msra.mxu0 0
        %3266 = vmatprep.mubr.bf16.mxu0 0
        %3267 = vmatmul.mubr.bf16.gmra.mxu0 %v3167
        %v3268 = vpop.f32.mrf.mxu0
        %v3269 = vadd.f32 %v3164, %v3268
        %v3270 = vpop.f32.mrf.mxu0
        %v3271 = vadd.f32 %v3164, %v3270
        %v3272 = vpop.f32.mrf.mxu0
        %v3273 = vpop.f32.mrf.mxu0
        %3274 = vdwg.mxu0
        %3275 = vmatprep.subr.bf16.mxu0 0
        %3276 = vmatpush1.bf16.msra.mxu0 0
        %3277 = vmatprep.subr.bf16.mxu0 0
        %3278 = vmatpush1.bf16.msra.mxu0 0
        %3279 = vmatprep.subr.bf16.mxu0 0
        %3280 = vmatpush1.bf16.msra.mxu0 0
        %3281 = vmatprep.subr.bf16.mxu0 %v3185
        %3282 = vmatpush1.bf16.msra.mxu0 %v3182
        %3283 = vmatprep.subr.bf16.mxu0 %v3148
        %3284 = vmatpush1.bf16.msra.mxu0 %v3147
        %3285 = vmatprep.subr.bf16.mxu0 %v3140
        %3286 = vmatpush1.bf16.msra.mxu0 %v3139
        %3287 = vmatprep.subr.bf16.mxu0 %v3132
        %3288 = vmatpush1.bf16.msra.mxu0 %v3131
        %3289 = vmatprep.subr.bf16.mxu0 %v3124
        %3290 = vmatpush1.bf16.msra.mxu0 %v3123
        %3291 = vmatprep.subr.bf16.mxu0 0
        %3292 = vmatpush2.bf16.msra.mxu0 0
        %3293 = vmatprep.subr.bf16.mxu0 0
        %3294 = vmatpush2.bf16.msra.mxu0 0
        %3295 = vmatprep.subr.bf16.mxu0 0
        %3296 = vmatpush2.bf16.msra.mxu0 0
        %3297 = vmatprep.subr.bf16.mxu0 0
        %3298 = vmatpush2.bf16.msra.mxu0 0
        %3299 = vmatprep.subr.bf16.mxu0 0
        %3300 = vmatpush2.bf16.msra.mxu0 0
        %3301 = vmatprep.subr.bf16.mxu0 0
        %3302 = vmatpush2.bf16.msra.mxu0 0
        %3303 = vmatprep.subr.bf16.mxu0 0
        %3304 = vmatpush2.bf16.msra.mxu0 0
        %3305 = vmatprep.subr.bf16.mxu0 0
        %3306 = vmatpush2.bf16.msra.mxu0 0
        %3307 = vmatprep.mubr.bf16.mxu0 0
        %3308 = vmatmul.mubr.bf16.gmra.mxu0 %v3167
        %v3309 = vpop.f32.mrf.mxu0
        %v3310 = vadd.f32 %v3164, %v3309
        %v3311 = vpop.f32.mrf.mxu0
        %v3312 = vadd.f32 %v3164, %v3311
        %v3313 = vpop.f32.mrf.mxu0
        %v3314 = vpop.f32.mrf.mxu0
        %3315 = vdwg.mxu0
        %3316 = vmatprep.subr.bf16.mxu0 0
        %3317 = vmatpush1.bf16.msra.mxu0 0
        %3318 = vmatprep.subr.bf16.mxu0 0
        %3319 = vmatpush1.bf16.msra.mxu0 0
        %3320 = vmatprep.subr.bf16.mxu0 0
        %3321 = vmatpush1.bf16.msra.mxu0 0
        %3322 = vmatprep.subr.bf16.mxu0 %v3191
        %3323 = vmatpush1.bf16.msra.mxu0 %v3188
        %3324 = vmatprep.subr.bf16.mxu0 %v3150
        %3325 = vmatpush1.bf16.msra.mxu0 %v3149
        %3326 = vmatprep.subr.bf16.mxu0 %v3142
        %3327 = vmatpush1.bf16.msra.mxu0 %v3141
        %3328 = vmatprep.subr.bf16.mxu0 %v3134
        %3329 = vmatpush1.bf16.msra.mxu0 %v3133
        %3330 = vmatprep.subr.bf16.mxu0 %v3126
        %3331 = vmatpush1.bf16.msra.mxu0 %v3125
        %3332 = vmatprep.subr.bf16.mxu0 0
        %3333 = vmatpush2.bf16.msra.mxu0 0
        %3334 = vmatprep.subr.bf16.mxu0 0
        %3335 = vmatpush2.bf16.msra.mxu0 0
        %3336 = vmatprep.subr.bf16.mxu0 0
        %3337 = vmatpush2.bf16.msra.mxu0 0
        %3338 = vmatprep.subr.bf16.mxu0 0
        %3339 = vmatpush2.bf16.msra.mxu0 0
        %3340 = vmatprep.subr.bf16.mxu0 0
        %3341 = vmatpush2.bf16.msra.mxu0 0
        %3342 = vmatprep.subr.bf16.mxu0 0
        %3343 = vmatpush2.bf16.msra.mxu0 0
        %3344 = vmatprep.subr.bf16.mxu0 0
        %3345 = vmatpush2.bf16.msra.mxu0 0
        %3346 = vmatprep.subr.bf16.mxu0 0
        %3347 = vmatpush2.bf16.msra.mxu0 0
        %3348 = vmatprep.mubr.bf16.mxu0 0
        %3349 = vmatmul.mubr.bf16.gmra.mxu0 %v3167
        %v3350 = vpop.f32.mrf.mxu0
        %v3351 = vadd.f32 %v3164, %v3350
        %v3352 = vpop.f32.mrf.mxu0
        %v3353 = vadd.f32 %v3164, %v3352
        %v3354 = vpop.f32.mrf.mxu0
        %v3355 = vpop.f32.mrf.mxu0
        %3356 = vdwg.mxu0
        %v3357 = vmul.f32 %v2734, %v3228
        %v3358 = vmul.f32 %v2736, %v3230
        %v3359 = vmul.f32 %v2775, %v3269
        %v3360 = vmul.f32 %v2777, %v3271
        %v3361 = vmul.f32 %v2816, %v3310
        %v3362 = vmul.f32 %v2818, %v3312
        %v3363 = vmul.f32 %v2857, %v3351
        %v3364 = vmul.f32 %v2859, %v3353
        %v3365 = vmul.f32 %v3357, %v877
        %v3366 = vmul.f32 %v3358, %v878
        %v3367 = vmul.f32 %v3359, %v879
        %v3368 = vmul.f32 %v3360, %v880
        %v3369 = vmul.f32 %v3361, %v881
        %v3370 = vmul.f32 %v3362, %v882
        %v3371 = vmul.f32 %v3363, %v883
        %v3372 = vmul.f32 %v3364, %v884
        %3373 = vrot.lane.b32.xlu0 %v2105, 17
        %v3374 = vpop.permute.xlu0 %3373
        %3375 = vrot.lane.b32.xlu0 %v2106, 17
        %v3376 = vpop.permute.xlu0 %3375
        %v3377 = vsel %vm1890, %v3374, %v3376
        %v3378 = vsel %vm1890, %v3376, %v3374
        %v3379 = vmul.f32 %v1896, %v3378
        %v3380 = vmul.f32 %v1900, %v3377
        %3381 = vrot.lane.b32.xlu0 %v2101, 17
        %v3382 = vpop.permute.xlu0 %3381
        %3383 = vrot.lane.b32.xlu0 %v2103, 17
        %v3384 = vpop.permute.xlu0 %3383
        %v3385 = vsel %vm1890, %v3382, %v3384
        %v3386 = vsel %vm1890, %v3384, %v3382
        %v3387 = vmul.f32 %v1896, %v3386
        %v3388 = vmul.f32 %v1900, %v3385
        %3389 = vrot.lane.b32.xlu0 %v2105, 16
        %v3390 = vpop.permute.xlu0 %3389
        %3391 = vrot.lane.b32.xlu0 %v2106, 16
        %v3392 = vpop.permute.xlu0 %3391
        %v3393 = vsel %vm1907, %v3390, %v3392
        %v3394 = vsel %vm1907, %v3392, %v3390
        %v3395 = vmul.f32 %v1913, %v3394
        %v3396 = vmul.f32 %v1917, %v3393
        %3397 = vrot.lane.b32.xlu0 %v2101, 16
        %v3398 = vpop.permute.xlu0 %3397
        %3399 = vrot.lane.b32.xlu0 %v2103, 16
        %v3400 = vpop.permute.xlu0 %3399
        %v3401 = vsel %vm1907, %v3398, %v3400
        %v3402 = vsel %vm1907, %v3400, %v3398
        %v3403 = vmul.f32 %v1913, %v3402
        %v3404 = vmul.f32 %v1917, %v3401
        %3405 = vrot.lane.b32.xlu0 %v2105, 15
        %v3406 = vpop.permute.xlu0 %3405
        %3407 = vrot.lane.b32.xlu0 %v2106, 15
        %v3408 = vpop.permute.xlu0 %3407
        %v3409 = vsel %vm1924, %v3406, %v3408
        %v3410 = vsel %vm1924, %v3408, %v3406
        %v3411 = vmul.f32 %v1930, %v3410
        %v3412 = vmul.f32 %v1934, %v3409
        %3413 = vrot.lane.b32.xlu0 %v2101, 15
        %v3414 = vpop.permute.xlu0 %3413
        %3415 = vrot.lane.b32.xlu0 %v2103, 15
        %v3416 = vpop.permute.xlu0 %3415
        %v3417 = vsel %vm1924, %v3414, %v3416
        %v3418 = vsel %vm1924, %v3416, %v3414
        %v3419 = vmul.f32 %v1930, %v3418
        %v3420 = vmul.f32 %v1934, %v3417
        %3421 = vrot.lane.b32.xlu0 %v2105, 1
        %v3422 = vpop.permute.xlu0 %3421
        %3423 = vrot.lane.b32.xlu0 %v2106, 1
        %v3424 = vpop.permute.xlu0 %3423
        %v3425 = vsel %vm1941, %v3422, %v3424
        %v3426 = vsel %vm1941, %v3424, %v3422
        %v3427 = vmul.f32 %v1947, %v3426
        %v3428 = vmul.f32 %v1951, %v3425
        %3429 = vrot.lane.b32.xlu0 %v2101, 1
        %v3430 = vpop.permute.xlu0 %3429
        %3431 = vrot.lane.b32.xlu0 %v2103, 1
        %v3432 = vpop.permute.xlu0 %3431
        %v3433 = vsel %vm1941, %v3430, %v3432
        %v3434 = vsel %vm1941, %v3432, %v3430
        %v3435 = vmul.f32 %v1947, %v3434
        %v3436 = vmul.f32 %v1951, %v3433
        %3437 = vrot.lane.b32.xlu0 %v2105, 127
        %v3438 = vpop.permute.xlu0 %3437
        %3439 = vrot.lane.b32.xlu0 %v2106, 127
        %v3440 = vpop.permute.xlu0 %3439
        %v3441 = vsel %vm1958, %v3438, %v3440
        %v3442 = vsel %vm1958, %v3440, %v3438
        %v3443 = vmul.f32 %v1964, %v3441
        %v3444 = vmul.f32 %v1968, %v3442
        %3445 = vrot.lane.b32.xlu0 %v2101, 127
        %v3446 = vpop.permute.xlu0 %3445
        %3447 = vrot.lane.b32.xlu0 %v2103, 127
        %v3448 = vpop.permute.xlu0 %3447
        %v3449 = vsel %vm1958, %v3446, %v3448
        %v3450 = vsel %vm1958, %v3448, %v3446
        %v3451 = vmul.f32 %v1964, %v3449
        %v3452 = vmul.f32 %v1968, %v3450
        %3453 = vrot.lane.b32.xlu0 %v2105, 113
        %v3454 = vpop.permute.xlu0 %3453
        %3455 = vrot.lane.b32.xlu0 %v2106, 113
        %v3456 = vpop.permute.xlu0 %3455
        %v3457 = vsel %vm1975, %v3454, %v3456
        %v3458 = vsel %vm1975, %v3456, %v3454
        %v3459 = vmul.f32 %v1981, %v3457
        %v3460 = vmul.f32 %v1985, %v3458
        %3461 = vrot.lane.b32.xlu0 %v2101, 113
        %v3462 = vpop.permute.xlu0 %3461
        %3463 = vrot.lane.b32.xlu0 %v2103, 113
        %v3464 = vpop.permute.xlu0 %3463
        %v3465 = vsel %vm1975, %v3462, %v3464
        %v3466 = vsel %vm1975, %v3464, %v3462
        %v3467 = vmul.f32 %v1981, %v3465
        %v3468 = vmul.f32 %v1985, %v3466
        %3469 = vrot.lane.b32.xlu0 %v2105, 112
        %v3470 = vpop.permute.xlu0 %3469
        %3471 = vrot.lane.b32.xlu0 %v2106, 112
        %v3472 = vpop.permute.xlu0 %3471
        %v3473 = vsel %vm1992, %v3470, %v3472
        %v3474 = vsel %vm1992, %v3472, %v3470
        %v3475 = vmul.f32 %v1998, %v3473
        %v3476 = vmul.f32 %v2002, %v3474
        %3477 = vrot.lane.b32.xlu0 %v2101, 112
        %v3478 = vpop.permute.xlu0 %3477
        %3479 = vrot.lane.b32.xlu0 %v2103, 112
        %v3480 = vpop.permute.xlu0 %3479
        %v3481 = vsel %vm1992, %v3478, %v3480
        %v3482 = vsel %vm1992, %v3480, %v3478
        %v3483 = vmul.f32 %v1998, %v3481
        %v3484 = vmul.f32 %v2002, %v3482
        %3485 = vrot.lane.b32.xlu0 %v2105, 111
        %v3486 = vpop.permute.xlu0 %3485
        %3487 = vrot.lane.b32.xlu0 %v2106, 111
        %v3488 = vpop.permute.xlu0 %3487
        %v3489 = vsel %vm2009, %v3486, %v3488
        %v3490 = vsel %vm2009, %v3488, %v3486
        %v3491 = vmul.f32 %v2015, %v3489
        %v3492 = vmul.f32 %v2019, %v3490
        %3493 = vrot.lane.b32.xlu0 %v2101, 111
        %v3494 = vpop.permute.xlu0 %3493
        %3495 = vrot.lane.b32.xlu0 %v2103, 111
        %v3496 = vpop.permute.xlu0 %3495
        %v3497 = vsel %vm2009, %v3494, %v3496
        %v3498 = vsel %vm2009, %v3496, %v3494
        %v3499 = vmul.f32 %v2015, %v3497
        %v3500 = vmul.f32 %v2019, %v3498
        %v3501 = vpack.c.bf16 %v3387, %v3379
        %v3502 = vpack.c.bf16 %v3388, %v3380
        %v3503 = vpack.c.bf16 %v3403, %v3395
        %v3504 = vpack.c.bf16 %v3404, %v3396
        %v3505 = vpack.c.bf16 %v3419, %v3411
        %v3506 = vpack.c.bf16 %v3420, %v3412
        %v3507 = vpack.c.bf16 %v3435, %v3427
        %v3508 = vpack.c.bf16 %v3436, %v3428
        %v3509 = vpack.c.bf16 %v2101, %v2105
        %v3510 = vpack.c.bf16 %v2103, %v2106
        %v3511 = vpack.c.bf16 %v3451, %v3443
        %v3512 = vpack.c.bf16 %v3452, %v3444
        %v3513 = vpack.c.bf16 %v3467, %v3459
        %v3514 = vpack.c.bf16 %v3468, %v3460
        %v3515 = vpack.c.bf16 %v3483, %v3475
        %v3516 = vpack.c.bf16 %v3484, %v3476
        %v3517 = vpack.c.bf16 %v3499, %v3491
        %v3518 = vpack.c.bf16 %v3500, %v3492
        %v3519 = vld [vmem:[#allocation11] sm:$0xff]
        %v3520 = vld [vmem:[#allocation11 + $0x8] sm:$0xff]
        %v3521 = vld [vmem:[%s15] sm:$0xff]
        %v3522 = vld [vmem:[%s15 + $0x8] sm:$0xff]
        %3524 = vset.pattern.permute.xlu0 0
        %3525 = vperm.xlu0 %3524, %v3521
        %v3526 = vpop.permute.xlu0 %3525
        %3529 = vset.pattern.permute.xlu0 0
        %3530 = vperm.xlu0 %3529, %v3522
        %v3531 = vpop.permute.xlu0 %3530
        %v3535 = vunpack.c.l.b16 %v3519
        %v3536 = vunpack.c.h.b16 %v3519
        %v3537 = vunpack.c.l.b16 %v3520
        %v3538 = vunpack.c.h.b16 %v3520
        %v3539 = vpack.c.b16 %v3537, %v3535
        %v3540 = vpack.c.b16 %v3538, %v3536
        %vm3542 = vcmask 130048
        %v3544 = vsel %vm3542, %v3540, 0
        %3546 = vmatprep.subr.bf16.mxu0 %v3516
        %3547 = vmatpush1.bf16.msra.mxu0 %v3515
        %3548 = vmatprep.subr.bf16.mxu0 %v3514
        %3549 = vmatpush1.bf16.msra.mxu0 %v3513
        %3550 = vmatprep.subr.bf16.mxu0 %v3512
        %3551 = vmatpush1.bf16.msra.mxu0 %v3511
        %3552 = vmatprep.subr.bf16.mxu0 %v3510
        %3553 = vmatpush1.bf16.msra.mxu0 %v3509
        %3554 = vmatprep.subr.bf16.mxu0 %v3508
        %3555 = vmatpush1.bf16.msra.mxu0 %v3507
        %3556 = vmatprep.subr.bf16.mxu0 %v3506
        %3557 = vmatpush1.bf16.msra.mxu0 %v3505
        %3558 = vmatprep.subr.bf16.mxu0 %v3504
        %3559 = vmatpush1.bf16.msra.mxu0 %v3503
        %3560 = vmatprep.subr.bf16.mxu0 %v3502
        %3561 = vmatpush1.bf16.msra.mxu0 %v3501
        %3562 = vmatprep.subr.bf16.mxu0 0
        %3563 = vmatpush2.bf16.msra.mxu0 0
        %3564 = vmatprep.subr.bf16.mxu0 0
        %3565 = vmatpush2.bf16.msra.mxu0 0
        %3566 = vmatprep.subr.bf16.mxu0 0
        %3567 = vmatpush2.bf16.msra.mxu0 0
        %3568 = vmatprep.subr.bf16.mxu0 0
        %3569 = vmatpush2.bf16.msra.mxu0 0
        %3570 = vmatprep.subr.bf16.mxu0 0
        %3571 = vmatpush2.bf16.msra.mxu0 0
        %3572 = vmatprep.subr.bf16.mxu0 0
        %3573 = vmatpush2.bf16.msra.mxu0 0
        %3574 = vmatprep.subr.bf16.mxu0 0
        %3575 = vmatpush2.bf16.msra.mxu0 0
        %3576 = vmatprep.subr.bf16.mxu0 %v3518
        %3577 = vmatpush2.bf16.msra.mxu0 %v3517
        %3578 = vmatprep.mubr.bf16.mxu0 %v3544
        %3579 = vmatmul.mubr.bf16.gmra.mxu0 %v3539
        %v3580 = vpop.f32.mrf.mxu0
        %v3581 = vadd.f32 %v3526, %v3580
        %v3582 = vpop.f32.mrf.mxu0
        %v3583 = vadd.f32 %v3526, %v3582
        %v3584 = vpop.f32.mrf.mxu0
        %v3585 = vadd.f32 %v3531, %v3584
        %v3586 = vpop.f32.mrf.mxu0
        %v3587 = vadd.f32 %v3531, %v3586
        %3588 = vdwg.mxu0
        %3589 = vmatprep.subr.mxu0 %v1465
        %3590 = vmatpush1.msra.mxu0 %v1464
        %3591 = vmatprep.subr.mxu0 %v1457
        %3592 = vmatpush1.msra.mxu0 %v1456
        %3593 = vmatprep.subr.mxu0 %v1449
        %3594 = vmatpush1.msra.mxu0 %v1448
        %3595 = vmatprep.subr.mxu0 %v1441
        %3596 = vmatpush1.msra.mxu0 %v1440
        %3597 = vmatprep.subr.mxu0 %v1433
        %3598 = vmatpush1.msra.mxu0 %v1432
        %3599 = vmatprep.subr.mxu0 %v1425
        %3600 = vmatpush1.msra.mxu0 %v1424
        %3601 = vmatprep.subr.mxu0 %v1417
        %3602 = vmatpush1.msra.mxu0 %v1416
        %3603 = vmatprep.subr.mxu0 %v1409
        %3604 = vmatpush1.msra.mxu0 %v1408
        %3605 = vmatprep.subr.mxu0 %v1401
        %3606 = vmatpush1.msra.mxu0 %v1400
        %3607 = vmatprep.subr.mxu0 %v1393
        %3608 = vmatpush1.msra.mxu0 %v1392
        %3609 = vmatprep.subr.mxu0 %v1385
        %3610 = vmatpush1.msra.mxu0 %v1384
        %3611 = vmatprep.subr.mxu0 %v1377
        %3612 = vmatpush1.msra.mxu0 %v1376
        %3613 = vmatprep.subr.mxu0 %v1369
        %3614 = vmatpush1.msra.mxu0 %v1368
        %3615 = vmatprep.subr.mxu0 %v1361
        %3616 = vmatpush1.msra.mxu0 %v1360
        %3617 = vmatprep.subr.mxu0 %v1353
        %3618 = vmatpush1.msra.mxu0 %v1352
        %3619 = vmatprep.subr.mxu0 %v1345
        %3620 = vmatpush1.msra.mxu0 %v1344
        %3621 = vmatprep.subr.mxu0 %v1593
        %3622 = vmatpush2.msra.mxu0 %v1592
        %3623 = vmatprep.subr.mxu0 %v1585
        %3624 = vmatpush2.msra.mxu0 %v1584
        %3625 = vmatprep.subr.mxu0 %v1577
        %3626 = vmatpush2.msra.mxu0 %v1576
        %3627 = vmatprep.subr.mxu0 %v1569
        %3628 = vmatpush2.msra.mxu0 %v1568
        %3629 = vmatprep.subr.mxu0 %v1561
        %3630 = vmatpush2.msra.mxu0 %v1560
        %3631 = vmatprep.subr.mxu0 %v1553
        %3632 = vmatpush2.msra.mxu0 %v1552
        %3633 = vmatprep.subr.mxu0 %v1545
        %3634 = vmatpush2.msra.mxu0 %v1544
        %3635 = vmatprep.subr.mxu0 %v1537
        %3636 = vmatpush2.msra.mxu0 %v1536
        %3637 = vmatprep.subr.mxu0 %v1529
        %3638 = vmatpush2.msra.mxu0 %v1528
        %3639 = vmatprep.subr.mxu0 %v1521
        %3640 = vmatpush2.msra.mxu0 %v1520
        %3641 = vmatprep.subr.mxu0 %v1513
        %3642 = vmatpush2.msra.mxu0 %v1512
        %3643 = vmatprep.subr.mxu0 %v1505
        %3644 = vmatpush2.msra.mxu0 %v1504
        %3645 = vmatprep.subr.mxu0 %v1497
        %3646 = vmatpush2.msra.mxu0 %v1496
        %3647 = vmatprep.subr.mxu0 %v1489
        %3648 = vmatpush2.msra.mxu0 %v1488
        %3649 = vmatprep.subr.mxu0 %v1481
        %3650 = vmatpush2.msra.mxu0 %v1480
        %3651 = vmatprep.subr.mxu0 %v1473
        %3652 = vmatpush2.msra.mxu0 %v1472
        %3653 = vmatprep.mubr.f32.mxu0 %v3583
        %3654 = vmatmul.mubr.f32.gmra.mxu0 %v3581
        %v3655 = vpop.f32.mrf.mxu0
        %v3656 = vadd.f32 0.0, %v3655
        %v3657 = vpop.f32.mrf.mxu0
        %v3658 = vadd.f32 0.0, %v3657
        %3659 = vmatprep.mubr.f32.mxu0 %v3587
        %3660 = vmatmul.mubr.f32.gmra.mxu0 %v3585
        %v3661 = vpop.f32.mrf.mxu0
        %v3662 = vadd.f32 0.0, %v3661
        %v3663 = vpop.f32.mrf.mxu0
        %v3664 = vadd.f32 0.0, %v3663
        %3665 = vdwg.mxu0
        %3666 = vmatprep.subr.mxu0 %v1467
        %3667 = vmatpush1.msra.mxu0 %v1466
        %3668 = vmatprep.subr.mxu0 %v1459
        %3669 = vmatpush1.msra.mxu0 %v1458
        %3670 = vmatprep.subr.mxu0 %v1451
        %3671 = vmatpush1.msra.mxu0 %v1450
        %3672 = vmatprep.subr.mxu0 %v1443
        %3673 = vmatpush1.msra.mxu0 %v1442
        %3674 = vmatprep.subr.mxu0 %v1435
        %3675 = vmatpush1.msra.mxu0 %v1434
        %3676 = vmatprep.subr.mxu0 %v1427
        %3677 = vmatpush1.msra.mxu0 %v1426
        %3678 = vmatprep.subr.mxu0 %v1419
        %3679 = vmatpush1.msra.mxu0 %v1418
        %3680 = vmatprep.subr.mxu0 %v1411
        %3681 = vmatpush1.msra.mxu0 %v1410
        %3682 = vmatprep.subr.mxu0 %v1403
        %3683 = vmatpush1.msra.mxu0 %v1402
        %3684 = vmatprep.subr.mxu0 %v1395
        %3685 = vmatpush1.msra.mxu0 %v1394
        %3686 = vmatprep.subr.mxu0 %v1387
        %3687 = vmatpush1.msra.mxu0 %v1386
        %3688 = vmatprep.subr.mxu0 %v1379
        %3689 = vmatpush1.msra.mxu0 %v1378
        %3690 = vmatprep.subr.mxu0 %v1371
        %3691 = vmatpush1.msra.mxu0 %v1370
        %3692 = vmatprep.subr.mxu0 %v1363
        %3693 = vmatpush1.msra.mxu0 %v1362
        %3694 = vmatprep.subr.mxu0 %v1355
        %3695 = vmatpush1.msra.mxu0 %v1354
        %3696 = vmatprep.subr.mxu0 %v1347
        %3697 = vmatpush1.msra.mxu0 %v1346
        %3698 = vmatprep.subr.mxu0 %v1595
        %3699 = vmatpush2.msra.mxu0 %v1594
        %3700 = vmatprep.subr.mxu0 %v1587
        %3701 = vmatpush2.msra.mxu0 %v1586
        %3702 = vmatprep.subr.mxu0 %v1579
        %3703 = vmatpush2.msra.mxu0 %v1578
        %3704 = vmatprep.subr.mxu0 %v1571
        %3705 = vmatpush2.msra.mxu0 %v1570
        %3706 = vmatprep.subr.mxu0 %v1563
        %3707 = vmatpush2.msra.mxu0 %v1562
        %3708 = vmatprep.subr.mxu0 %v1555
        %3709 = vmatpush2.msra.mxu0 %v1554
        %3710 = vmatprep.subr.mxu0 %v1547
        %3711 = vmatpush2.msra.mxu0 %v1546
        %3712 = vmatprep.subr.mxu0 %v1539
        %3713 = vmatpush2.msra.mxu0 %v1538
        %3714 = vmatprep.subr.mxu0 %v1531
        %3715 = vmatpush2.msra.mxu0 %v1530
        %3716 = vmatprep.subr.mxu0 %v1523
        %3717 = vmatpush2.msra.mxu0 %v1522
        %3718 = vmatprep.subr.mxu0 %v1515
        %3719 = vmatpush2.msra.mxu0 %v1514
        %3720 = vmatprep.subr.mxu0 %v1507
        %3721 = vmatpush2.msra.mxu0 %v1506
        %3722 = vmatprep.subr.mxu0 %v1499
        %3723 = vmatpush2.msra.mxu0 %v1498
        %3724 = vmatprep.subr.mxu0 %v1491
        %3725 = vmatpush2.msra.mxu0 %v1490
        %3726 = vmatprep.subr.mxu0 %v1483
        %3727 = vmatpush2.msra.mxu0 %v1482
        %3728 = vmatprep.subr.mxu0 %v1475
        %3729 = vmatpush2.msra.mxu0 %v1474
        %3730 = vmatprep.mubr.f32.mxu0 %v3583
        %3731 = vmatmul.mubr.f32.gmra.mxu0 %v3581
        %v3732 = vpop.f32.mrf.mxu0
        %v3733 = vadd.f32 0.0, %v3732
        %v3734 = vpop.f32.mrf.mxu0
        %v3735 = vadd.f32 0.0, %v3734
        %3736 = vmatprep.mubr.f32.mxu0 %v3587
        %3737 = vmatmul.mubr.f32.gmra.mxu0 %v3585
        %v3738 = vpop.f32.mrf.mxu0
        %v3739 = vadd.f32 0.0, %v3738
        %v3740 = vpop.f32.mrf.mxu0
        %v3741 = vadd.f32 0.0, %v3740
        %3742 = vdwg.mxu0
        %3743 = vmatprep.subr.mxu0 %v1469
        %3744 = vmatpush1.msra.mxu0 %v1468
        %3745 = vmatprep.subr.mxu0 %v1461
        %3746 = vmatpush1.msra.mxu0 %v1460
        %3747 = vmatprep.subr.mxu0 %v1453
        %3748 = vmatpush1.msra.mxu0 %v1452
        %3749 = vmatprep.subr.mxu0 %v1445
        %3750 = vmatpush1.msra.mxu0 %v1444
        %3751 = vmatprep.subr.mxu0 %v1437
        %3752 = vmatpush1.msra.mxu0 %v1436
        %3753 = vmatprep.subr.mxu0 %v1429
        %3754 = vmatpush1.msra.mxu0 %v1428
        %3755 = vmatprep.subr.mxu0 %v1421
        %3756 = vmatpush1.msra.mxu0 %v1420
        %3757 = vmatprep.subr.mxu0 %v1413
        %3758 = vmatpush1.msra.mxu0 %v1412
        %3759 = vmatprep.subr.mxu0 %v1405
        %3760 = vmatpush1.msra.mxu0 %v1404
        %3761 = vmatprep.subr.mxu0 %v1397
        %3762 = vmatpush1.msra.mxu0 %v1396
        %3763 = vmatprep.subr.mxu0 %v1389
        %3764 = vmatpush1.msra.mxu0 %v1388
        %3765 = vmatprep.subr.mxu0 %v1381
        %3766 = vmatpush1.msra.mxu0 %v1380
        %3767 = vmatprep.subr.mxu0 %v1373
        %3768 = vmatpush1.msra.mxu0 %v1372
        %3769 = vmatprep.subr.mxu0 %v1365
        %3770 = vmatpush1.msra.mxu0 %v1364
        %3771 = vmatprep.subr.mxu0 %v1357
        %3772 = vmatpush1.msra.mxu0 %v1356
        %3773 = vmatprep.subr.mxu0 %v1349
        %3774 = vmatpush1.msra.mxu0 %v1348
        %3775 = vmatprep.subr.mxu0 %v1597
        %3776 = vmatpush2.msra.mxu0 %v1596
        %3777 = vmatprep.subr.mxu0 %v1589
        %3778 = vmatpush2.msra.mxu0 %v1588
        %3779 = vmatprep.subr.mxu0 %v1581
        %3780 = vmatpush2.msra.mxu0 %v1580
        %3781 = vmatprep.subr.mxu0 %v1573
        %3782 = vmatpush2.msra.mxu0 %v1572
        %3783 = vmatprep.subr.mxu0 %v1565
        %3784 = vmatpush2.msra.mxu0 %v1564
        %3785 = vmatprep.subr.mxu0 %v1557
        %3786 = vmatpush2.msra.mxu0 %v1556
        %3787 = vmatprep.subr.mxu0 %v1549
        %3788 = vmatpush2.msra.mxu0 %v1548
        %3789 = vmatprep.subr.mxu0 %v1541
        %3790 = vmatpush2.msra.mxu0 %v1540
        %3791 = vmatprep.subr.mxu0 %v1533
        %3792 = vmatpush2.msra.mxu0 %v1532
        %3793 = vmatprep.subr.mxu0 %v1525
        %3794 = vmatpush2.msra.mxu0 %v1524
        %3795 = vmatprep.subr.mxu0 %v1517
        %3796 = vmatpush2.msra.mxu0 %v1516
        %3797 = vmatprep.subr.mxu0 %v1509
        %3798 = vmatpush2.msra.mxu0 %v1508
        %3799 = vmatprep.subr.mxu0 %v1501
        %3800 = vmatpush2.msra.mxu0 %v1500
        %3801 = vmatprep.subr.mxu0 %v1493
        %3802 = vmatpush2.msra.mxu0 %v1492
        %3803 = vmatprep.subr.mxu0 %v1485
        %3804 = vmatpush2.msra.mxu0 %v1484
        %3805 = vmatprep.subr.mxu0 %v1477
        %3806 = vmatpush2.msra.mxu0 %v1476
        %3807 = vmatprep.mubr.f32.mxu0 %v3583
        %3808 = vmatmul.mubr.f32.gmra.mxu0 %v3581
        %v3809 = vpop.f32.mrf.mxu0
        %v3810 = vadd.f32 0.0, %v3809
        %v3811 = vpop.f32.mrf.mxu0
        %v3812 = vadd.f32 0.0, %v3811
        %3813 = vmatprep.mubr.f32.mxu0 %v3587
        %3814 = vmatmul.mubr.f32.gmra.mxu0 %v3585
        %v3815 = vpop.f32.mrf.mxu0
        %v3816 = vadd.f32 0.0, %v3815
        %v3817 = vpop.f32.mrf.mxu0
        %v3818 = vadd.f32 0.0, %v3817
        %3819 = vdwg.mxu0
        %3820 = vmatprep.subr.mxu0 %v1471
        %3821 = vmatpush1.msra.mxu0 %v1470
        %3822 = vmatprep.subr.mxu0 %v1463
        %3823 = vmatpush1.msra.mxu0 %v1462
        %3824 = vmatprep.subr.mxu0 %v1455
        %3825 = vmatpush1.msra.mxu0 %v1454
        %3826 = vmatprep.subr.mxu0 %v1447
        %3827 = vmatpush1.msra.mxu0 %v1446
        %3828 = vmatprep.subr.mxu0 %v1439
        %3829 = vmatpush1.msra.mxu0 %v1438
        %3830 = vmatprep.subr.mxu0 %v1431
        %3831 = vmatpush1.msra.mxu0 %v1430
        %3832 = vmatprep.subr.mxu0 %v1423
        %3833 = vmatpush1.msra.mxu0 %v1422
        %3834 = vmatprep.subr.mxu0 %v1415
        %3835 = vmatpush1.msra.mxu0 %v1414
        %3836 = vmatprep.subr.mxu0 %v1407
        %3837 = vmatpush1.msra.mxu0 %v1406
        %3838 = vmatprep.subr.mxu0 %v1399
        %3839 = vmatpush1.msra.mxu0 %v1398
        %3840 = vmatprep.subr.mxu0 %v1391
        %3841 = vmatpush1.msra.mxu0 %v1390
        %3842 = vmatprep.subr.mxu0 %v1383
        %3843 = vmatpush1.msra.mxu0 %v1382
        %3844 = vmatprep.subr.mxu0 %v1375
        %3845 = vmatpush1.msra.mxu0 %v1374
        %3846 = vmatprep.subr.mxu0 %v1367
        %3847 = vmatpush1.msra.mxu0 %v1366
        %3848 = vmatprep.subr.mxu0 %v1359
        %3849 = vmatpush1.msra.mxu0 %v1358
        %3850 = vmatprep.subr.mxu0 %v1351
        %3851 = vmatpush1.msra.mxu0 %v1350
        %3852 = vmatprep.subr.mxu0 %v1599
        %3853 = vmatpush2.msra.mxu0 %v1598
        %3854 = vmatprep.subr.mxu0 %v1591
        %3855 = vmatpush2.msra.mxu0 %v1590
        %3856 = vmatprep.subr.mxu0 %v1583
        %3857 = vmatpush2.msra.mxu0 %v1582
        %3858 = vmatprep.subr.mxu0 %v1575
        %3859 = vmatpush2.msra.mxu0 %v1574
        %3860 = vmatprep.subr.mxu0 %v1567
        %3861 = vmatpush2.msra.mxu0 %v1566
        %3862 = vmatprep.subr.mxu0 %v1559
        %3863 = vmatpush2.msra.mxu0 %v1558
        %3864 = vmatprep.subr.mxu0 %v1551
        %3865 = vmatpush2.msra.mxu0 %v1550
        %3866 = vmatprep.subr.mxu0 %v1543
        %3867 = vmatpush2.msra.mxu0 %v1542
        %3868 = vmatprep.subr.mxu0 %v1535
        %3869 = vmatpush2.msra.mxu0 %v1534
        %3870 = vmatprep.subr.mxu0 %v1527
        %3871 = vmatpush2.msra.mxu0 %v1526
        %3872 = vmatprep.subr.mxu0 %v1519
        %3873 = vmatpush2.msra.mxu0 %v1518
        %3874 = vmatprep.subr.mxu0 %v1511
        %3875 = vmatpush2.msra.mxu0 %v1510
        %3876 = vmatprep.subr.mxu0 %v1503
        %3877 = vmatpush2.msra.mxu0 %v1502
        %3878 = vmatprep.subr.mxu0 %v1495
        %3879 = vmatpush2.msra.mxu0 %v1494
        %3880 = vmatprep.subr.mxu0 %v1487
        %3881 = vmatpush2.msra.mxu0 %v1486
        %3882 = vmatprep.subr.mxu0 %v1479
        %3883 = vmatpush2.msra.mxu0 %v1478
        %3884 = vmatprep.mubr.f32.mxu0 %v3583
        %3885 = vmatmul.mubr.f32.gmra.mxu0 %v3581
        %v3886 = vpop.f32.mrf.mxu0
        %v3887 = vadd.f32 0.0, %v3886
        %v3888 = vpop.f32.mrf.mxu0
        %v3889 = vadd.f32 0.0, %v3888
        %3890 = vmatprep.mubr.f32.mxu0 %v3587
        %3891 = vmatmul.mubr.f32.gmra.mxu0 %v3585
        %v3892 = vpop.f32.mrf.mxu0
        %v3893 = vadd.f32 0.0, %v3892
        %v3894 = vpop.f32.mrf.mxu0
        %v3895 = vadd.f32 0.0, %v3894
        %3896 = vdwg.mxu0
        %3897 = vrot.lane.b32.xlu0 %v3656, 33
        %v3898 = vpop.permute.xlu0 %3897
        %3899 = vrot.lane.b32.xlu0 %v3662, 33
        %v3900 = vpop.permute.xlu0 %3899
        %3901 = vrot.lane.b32.xlu0 %v3658, 33
        %v3902 = vpop.permute.xlu0 %3901
        %3903 = vrot.lane.b32.xlu0 %v3664, 33
        %v3904 = vpop.permute.xlu0 %3903
        %3905 = vrot.lane.b32.xlu0 %v3733, 33
        %v3906 = vpop.permute.xlu0 %3905
        %3907 = vrot.lane.b32.xlu0 %v3739, 33
        %v3908 = vpop.permute.xlu0 %3907
        %3909 = vrot.lane.b32.xlu0 %v3735, 33
        %v3910 = vpop.permute.xlu0 %3909
        %3911 = vrot.lane.b32.xlu0 %v3741, 33
        %v3912 = vpop.permute.xlu0 %3911
        %3913 = vrot.lane.b32.xlu0 %v3810, 33
        %v3914 = vpop.permute.xlu0 %3913
        %3915 = vrot.lane.b32.xlu0 %v3816, 33
        %v3916 = vpop.permute.xlu0 %3915
        %3917 = vrot.lane.b32.xlu0 %v3812, 33
        %v3918 = vpop.permute.xlu0 %3917
        %3919 = vrot.lane.b32.xlu0 %v3818, 33
        %v3920 = vpop.permute.xlu0 %3919
        %3921 = vrot.lane.b32.xlu0 %v3887, 33
        %v3922 = vpop.permute.xlu0 %3921
        %3923 = vrot.lane.b32.xlu0 %v3893, 33
        %v3924 = vpop.permute.xlu0 %3923
        %3925 = vrot.lane.b32.xlu0 %v3889, 33
        %v3926 = vpop.permute.xlu0 %3925
        %3927 = vrot.lane.b32.xlu0 %v3895, 33
        %v3928 = vpop.permute.xlu0 %3927
        %v3929 = vsel %vm2123, %v3922, %v3926
        %v3930 = vsel %vm2123, %v3924, %v3928
        %v3931 = vsel %vm2123, %v3918, %v3922
        %v3932 = vsel %vm2123, %v3920, %v3924
        %v3933 = vsel %vm2123, %v3914, %v3918
        %v3934 = vsel %vm2123, %v3916, %v3920
        %v3935 = vsel %vm2123, %v3910, %v3914
        %v3936 = vsel %vm2123, %v3912, %v3916
        %v3937 = vsel %vm2123, %v3906, %v3910
        %v3938 = vsel %vm2123, %v3908, %v3912
        %v3939 = vsel %vm2123, %v3902, %v3906
        %v3940 = vsel %vm2123, %v3904, %v3908
        %v3941 = vsel %vm2123, %v3898, %v3902
        %v3942 = vsel %vm2123, %v3900, %v3904
        %v3943 = vsel %vm2123, %v3926, %v3898
        %v3944 = vsel %vm2123, %v3928, %v3900
        %v3945 = vmul.f32 %v2135, %v3943
        %v3946 = vmul.f32 %v2139, %v3941
        %v3947 = vmul.f32 %v2143, %v3939
        %v3948 = vmul.f32 %v2147, %v3937
        %v3949 = vmul.f32 %v2151, %v3935
        %v3950 = vmul.f32 %v2155, %v3933
        %v3951 = vmul.f32 %v2159, %v3931
        %v3952 = vmul.f32 %v2163, %v3929
        %v3953 = vmul.f32 %v2135, %v3944
        %v3954 = vmul.f32 %v2139, %v3942
        %v3955 = vmul.f32 %v2143, %v3940
        %v3956 = vmul.f32 %v2147, %v3938
        %v3957 = vmul.f32 %v2151, %v3936
        %v3958 = vmul.f32 %v2155, %v3934
        %v3959 = vmul.f32 %v2159, %v3932
        %v3960 = vmul.f32 %v2163, %v3930
        %3961 = vrot.lane.b32.xlu0 %v3656, 32
        %v3962 = vpop.permute.xlu0 %3961
        %3963 = vrot.lane.b32.xlu0 %v3662, 32
        %v3964 = vpop.permute.xlu0 %3963
        %3965 = vrot.lane.b32.xlu0 %v3658, 32
        %v3966 = vpop.permute.xlu0 %3965
        %3967 = vrot.lane.b32.xlu0 %v3664, 32
        %v3968 = vpop.permute.xlu0 %3967
        %3969 = vrot.lane.b32.xlu0 %v3733, 32
        %v3970 = vpop.permute.xlu0 %3969
        %3971 = vrot.lane.b32.xlu0 %v3739, 32
        %v3972 = vpop.permute.xlu0 %3971
        %3973 = vrot.lane.b32.xlu0 %v3735, 32
        %v3974 = vpop.permute.xlu0 %3973
        %3975 = vrot.lane.b32.xlu0 %v3741, 32
        %v3976 = vpop.permute.xlu0 %3975
        %3977 = vrot.lane.b32.xlu0 %v3810, 32
        %v3978 = vpop.permute.xlu0 %3977
        %3979 = vrot.lane.b32.xlu0 %v3816, 32
        %v3980 = vpop.permute.xlu0 %3979
        %3981 = vrot.lane.b32.xlu0 %v3812, 32
        %v3982 = vpop.permute.xlu0 %3981
        %3983 = vrot.lane.b32.xlu0 %v3818, 32
        %v3984 = vpop.permute.xlu0 %3983
        %3985 = vrot.lane.b32.xlu0 %v3887, 32
        %v3986 = vpop.permute.xlu0 %3985
        %3987 = vrot.lane.b32.xlu0 %v3893, 32
        %v3988 = vpop.permute.xlu0 %3987
        %3989 = vrot.lane.b32.xlu0 %v3889, 32
        %v3990 = vpop.permute.xlu0 %3989
        %3991 = vrot.lane.b32.xlu0 %v3895, 32
        %v3992 = vpop.permute.xlu0 %3991
        %v3993 = vsel %vm2188, %v3986, %v3990
        %v3994 = vsel %vm2188, %v3988, %v3992
        %v3995 = vsel %vm2188, %v3982, %v3986
        %v3996 = vsel %vm2188, %v3984, %v3988
        %v3997 = vsel %vm2188, %v3978, %v3982
        %v3998 = vsel %vm2188, %v3980, %v3984
        %v3999 = vsel %vm2188, %v3974, %v3978
        %v4000 = vsel %vm2188, %v3976, %v3980
        %v4001 = vsel %vm2188, %v3970, %v3974
        %v4002 = vsel %vm2188, %v3972, %v3976
        %v4003 = vsel %vm2188, %v3966, %v3970
        %v4004 = vsel %vm2188, %v3968, %v3972
        %v4005 = vsel %vm2188, %v3962, %v3966
        %v4006 = vsel %vm2188, %v3964, %v3968
        %v4007 = vsel %vm2188, %v3990, %v3962
        %v4008 = vsel %vm2188, %v3992, %v3964
        %v4009 = vmul.f32 %v2200, %v4007
        %v4010 = vmul.f32 %v2204, %v4005
        %v4011 = vmul.f32 %v2208, %v4003
        %v4012 = vmul.f32 %v2212, %v4001
        %v4013 = vmul.f32 %v2216, %v3999
        %v4014 = vmul.f32 %v2220, %v3997
        %v4015 = vmul.f32 %v2224, %v3995
        %v4016 = vmul.f32 %v2228, %v3993
        %v4017 = vmul.f32 %v2200, %v4008
        %v4018 = vmul.f32 %v2204, %v4006
        %v4019 = vmul.f32 %v2208, %v4004
        %v4020 = vmul.f32 %v2212, %v4002
        %v4021 = vmul.f32 %v2216, %v4000
        %v4022 = vmul.f32 %v2220, %v3998
        %v4023 = vmul.f32 %v2224, %v3996
        %v4024 = vmul.f32 %v2228, %v3994
        %4025 = vrot.lane.b32.xlu0 %v3656, 31
        %v4026 = vpop.permute.xlu0 %4025
        %4027 = vrot.lane.b32.xlu0 %v3662, 31
        %v4028 = vpop.permute.xlu0 %4027
        %4029 = vrot.lane.b32.xlu0 %v3658, 31
        %v4030 = vpop.permute.xlu0 %4029
        %4031 = vrot.lane.b32.xlu0 %v3664, 31
        %v4032 = vpop.permute.xlu0 %4031
        %4033 = vrot.lane.b32.xlu0 %v3733, 31
        %v4034 = vpop.permute.xlu0 %4033
        %4035 = vrot.lane.b32.xlu0 %v3739, 31
        %v4036 = vpop.permute.xlu0 %4035
        %4037 = vrot.lane.b32.xlu0 %v3735, 31
        %v4038 = vpop.permute.xlu0 %4037
        %4039 = vrot.lane.b32.xlu0 %v3741, 31
        %v4040 = vpop.permute.xlu0 %4039
        %4041 = vrot.lane.b32.xlu0 %v3810, 31
        %v4042 = vpop.permute.xlu0 %4041
        %4043 = vrot.lane.b32.xlu0 %v3816, 31
        %v4044 = vpop.permute.xlu0 %4043
        %4045 = vrot.lane.b32.xlu0 %v3812, 31
        %v4046 = vpop.permute.xlu0 %4045
        %4047 = vrot.lane.b32.xlu0 %v3818, 31
        %v4048 = vpop.permute.xlu0 %4047
        %4049 = vrot.lane.b32.xlu0 %v3887, 31
        %v4050 = vpop.permute.xlu0 %4049
        %4051 = vrot.lane.b32.xlu0 %v3893, 31
        %v4052 = vpop.permute.xlu0 %4051
        %4053 = vrot.lane.b32.xlu0 %v3889, 31
        %v4054 = vpop.permute.xlu0 %4053
        %4055 = vrot.lane.b32.xlu0 %v3895, 31
        %v4056 = vpop.permute.xlu0 %4055
        %v4057 = vsel %vm2253, %v4050, %v4054
        %v4058 = vsel %vm2253, %v4052, %v4056
        %v4059 = vsel %vm2253, %v4046, %v4050
        %v4060 = vsel %vm2253, %v4048, %v4052
        %v4061 = vsel %vm2253, %v4042, %v4046
        %v4062 = vsel %vm2253, %v4044, %v4048
        %v4063 = vsel %vm2253, %v4038, %v4042
        %v4064 = vsel %vm2253, %v4040, %v4044
        %v4065 = vsel %vm2253, %v4034, %v4038
        %v4066 = vsel %vm2253, %v4036, %v4040
        %v4067 = vsel %vm2253, %v4030, %v4034
        %v4068 = vsel %vm2253, %v4032, %v4036
        %v4069 = vsel %vm2253, %v4026, %v4030
        %v4070 = vsel %vm2253, %v4028, %v4032
        %v4071 = vsel %vm2253, %v4054, %v4026
        %v4072 = vsel %vm2253, %v4056, %v4028
        %v4073 = vmul.f32 %v2265, %v4071
        %v4074 = vmul.f32 %v2269, %v4069
        %v4075 = vmul.f32 %v2273, %v4067
        %v4076 = vmul.f32 %v2277, %v4065
        %v4077 = vmul.f32 %v2281, %v4063
        %v4078 = vmul.f32 %v2285, %v4061
        %v4079 = vmul.f32 %v2289, %v4059
        %v4080 = vmul.f32 %v2293, %v4057
        %v4081 = vmul.f32 %v2265, %v4072
        %v4082 = vmul.f32 %v2269, %v4070
        %v4083 = vmul.f32 %v2273, %v4068
        %v4084 = vmul.f32 %v2277, %v4066
        %v4085 = vmul.f32 %v2281, %v4064
        %v4086 = vmul.f32 %v2285, %v4062
        %v4087 = vmul.f32 %v2289, %v4060
        %v4088 = vmul.f32 %v2293, %v4058
        %4089 = vrot.lane.b32.xlu0 %v3656, 1
        %v4090 = vpop.permute.xlu0 %4089
        %4091 = vrot.lane.b32.xlu0 %v3662, 1
        %v4092 = vpop.permute.xlu0 %4091
        %4093 = vrot.lane.b32.xlu0 %v3658, 1
        %v4094 = vpop.permute.xlu0 %4093
        %4095 = vrot.lane.b32.xlu0 %v3664, 1
        %v4096 = vpop.permute.xlu0 %4095
        %4097 = vrot.lane.b32.xlu0 %v3733, 1
        %v4098 = vpop.permute.xlu0 %4097
        %4099 = vrot.lane.b32.xlu0 %v3739, 1
        %v4100 = vpop.permute.xlu0 %4099
        %4101 = vrot.lane.b32.xlu0 %v3735, 1
        %v4102 = vpop.permute.xlu0 %4101
        %4103 = vrot.lane.b32.xlu0 %v3741, 1
        %v4104 = vpop.permute.xlu0 %4103
        %4105 = vrot.lane.b32.xlu0 %v3810, 1
        %v4106 = vpop.permute.xlu0 %4105
        %4107 = vrot.lane.b32.xlu0 %v3816, 1
        %v4108 = vpop.permute.xlu0 %4107
        %4109 = vrot.lane.b32.xlu0 %v3812, 1
        %v4110 = vpop.permute.xlu0 %4109
        %4111 = vrot.lane.b32.xlu0 %v3818, 1
        %v4112 = vpop.permute.xlu0 %4111
        %4113 = vrot.lane.b32.xlu0 %v3887, 1
        %v4114 = vpop.permute.xlu0 %4113
        %4115 = vrot.lane.b32.xlu0 %v3893, 1
        %v4116 = vpop.permute.xlu0 %4115
        %4117 = vrot.lane.b32.xlu0 %v3889, 1
        %v4118 = vpop.permute.xlu0 %4117
        %4119 = vrot.lane.b32.xlu0 %v3895, 1
        %v4120 = vpop.permute.xlu0 %4119
        %v4121 = vsel %vm1941, %v4114, %v4118
        %v4122 = vsel %vm1941, %v4116, %v4120
        %v4123 = vsel %vm1941, %v4110, %v4114
        %v4124 = vsel %vm1941, %v4112, %v4116
        %v4125 = vsel %vm1941, %v4106, %v4110
        %v4126 = vsel %vm1941, %v4108, %v4112
        %v4127 = vsel %vm1941, %v4102, %v4106
        %v4128 = vsel %vm1941, %v4104, %v4108
        %v4129 = vsel %vm1941, %v4098, %v4102
        %v4130 = vsel %vm1941, %v4100, %v4104
        %v4131 = vsel %vm1941, %v4094, %v4098
        %v4132 = vsel %vm1941, %v4096, %v4100
        %v4133 = vsel %vm1941, %v4090, %v4094
        %v4134 = vsel %vm1941, %v4092, %v4096
        %v4135 = vsel %vm1941, %v4118, %v4090
        %v4136 = vsel %vm1941, %v4120, %v4092
        %v4137 = vmul.f32 %v2329, %v4135
        %v4138 = vmul.f32 %v2333, %v4133
        %v4139 = vmul.f32 %v2337, %v4131
        %v4140 = vmul.f32 %v2341, %v4129
        %v4141 = vmul.f32 %v2345, %v4127
        %v4142 = vmul.f32 %v2349, %v4125
        %v4143 = vmul.f32 %v2353, %v4123
        %v4144 = vmul.f32 %v2357, %v4121
        %v4145 = vmul.f32 %v2329, %v4136
        %v4146 = vmul.f32 %v2333, %v4134
        %v4147 = vmul.f32 %v2337, %v4132
        %v4148 = vmul.f32 %v2341, %v4130
        %v4149 = vmul.f32 %v2345, %v4128
        %v4150 = vmul.f32 %v2349, %v4126
        %v4151 = vmul.f32 %v2353, %v4124
        %v4152 = vmul.f32 %v2357, %v4122
        %4153 = vrot.lane.b32.xlu0 %v3656, 127
        %v4154 = vpop.permute.xlu0 %4153
        %4155 = vrot.lane.b32.xlu0 %v3662, 127
        %v4156 = vpop.permute.xlu0 %4155
        %4157 = vrot.lane.b32.xlu0 %v3658, 127
        %v4158 = vpop.permute.xlu0 %4157
        %4159 = vrot.lane.b32.xlu0 %v3664, 127
        %v4160 = vpop.permute.xlu0 %4159
        %4161 = vrot.lane.b32.xlu0 %v3733, 127
        %v4162 = vpop.permute.xlu0 %4161
        %4163 = vrot.lane.b32.xlu0 %v3739, 127
        %v4164 = vpop.permute.xlu0 %4163
        %4165 = vrot.lane.b32.xlu0 %v3735, 127
        %v4166 = vpop.permute.xlu0 %4165
        %4167 = vrot.lane.b32.xlu0 %v3741, 127
        %v4168 = vpop.permute.xlu0 %4167
        %4169 = vrot.lane.b32.xlu0 %v3810, 127
        %v4170 = vpop.permute.xlu0 %4169
        %4171 = vrot.lane.b32.xlu0 %v3816, 127
        %v4172 = vpop.permute.xlu0 %4171
        %4173 = vrot.lane.b32.xlu0 %v3812, 127
        %v4174 = vpop.permute.xlu0 %4173
        %4175 = vrot.lane.b32.xlu0 %v3818, 127
        %v4176 = vpop.permute.xlu0 %4175
        %4177 = vrot.lane.b32.xlu0 %v3887, 127
        %v4178 = vpop.permute.xlu0 %4177
        %4179 = vrot.lane.b32.xlu0 %v3893, 127
        %v4180 = vpop.permute.xlu0 %4179
        %4181 = vrot.lane.b32.xlu0 %v3889, 127
        %v4182 = vpop.permute.xlu0 %4181
        %4183 = vrot.lane.b32.xlu0 %v3895, 127
        %v4184 = vpop.permute.xlu0 %4183
        %v4185 = vsel %vm1958, %v4178, %v4182
        %v4186 = vsel %vm1958, %v4180, %v4184
        %v4187 = vsel %vm1958, %v4174, %v4178
        %v4188 = vsel %vm1958, %v4176, %v4180
        %v4189 = vsel %vm1958, %v4170, %v4174
        %v4190 = vsel %vm1958, %v4172, %v4176
        %v4191 = vsel %vm1958, %v4166, %v4170
        %v4192 = vsel %vm1958, %v4168, %v4172
        %v4193 = vsel %vm1958, %v4162, %v4166
        %v4194 = vsel %vm1958, %v4164, %v4168
        %v4195 = vsel %vm1958, %v4158, %v4162
        %v4196 = vsel %vm1958, %v4160, %v4164
        %v4197 = vsel %vm1958, %v4154, %v4158
        %v4198 = vsel %vm1958, %v4156, %v4160
        %v4199 = vsel %vm1958, %v4182, %v4154
        %v4200 = vsel %vm1958, %v4184, %v4156
        %v4201 = vmul.f32 %v2393, %v4197
        %v4202 = vmul.f32 %v2397, %v4195
        %v4203 = vmul.f32 %v2401, %v4193
        %v4204 = vmul.f32 %v2405, %v4191
        %v4205 = vmul.f32 %v2409, %v4189
        %v4206 = vmul.f32 %v2413, %v4187
        %v4207 = vmul.f32 %v2417, %v4185
        %v4208 = vmul.f32 %v2421, %v4199
        %v4209 = vmul.f32 %v2393, %v4198
        %v4210 = vmul.f32 %v2397, %v4196
        %v4211 = vmul.f32 %v2401, %v4194
        %v4212 = vmul.f32 %v2405, %v4192
        %v4213 = vmul.f32 %v2409, %v4190
        %v4214 = vmul.f32 %v2413, %v4188
        %v4215 = vmul.f32 %v2417, %v4186
        %v4216 = vmul.f32 %v2421, %v4200
        %4217 = vrot.lane.b32.xlu0 %v3656, 97
        %v4218 = vpop.permute.xlu0 %4217
        %4219 = vrot.lane.b32.xlu0 %v3662, 97
        %v4220 = vpop.permute.xlu0 %4219
        %4221 = vrot.lane.b32.xlu0 %v3658, 97
        %v4222 = vpop.permute.xlu0 %4221
        %4223 = vrot.lane.b32.xlu0 %v3664, 97
        %v4224 = vpop.permute.xlu0 %4223
        %4225 = vrot.lane.b32.xlu0 %v3733, 97
        %v4226 = vpop.permute.xlu0 %4225
        %4227 = vrot.lane.b32.xlu0 %v3739, 97
        %v4228 = vpop.permute.xlu0 %4227
        %4229 = vrot.lane.b32.xlu0 %v3735, 97
        %v4230 = vpop.permute.xlu0 %4229
        %4231 = vrot.lane.b32.xlu0 %v3741, 97
        %v4232 = vpop.permute.xlu0 %4231
        %4233 = vrot.lane.b32.xlu0 %v3810, 97
        %v4234 = vpop.permute.xlu0 %4233
        %4235 = vrot.lane.b32.xlu0 %v3816, 97
        %v4236 = vpop.permute.xlu0 %4235
        %4237 = vrot.lane.b32.xlu0 %v3812, 97
        %v4238 = vpop.permute.xlu0 %4237
        %4239 = vrot.lane.b32.xlu0 %v3818, 97
        %v4240 = vpop.permute.xlu0 %4239
        %4241 = vrot.lane.b32.xlu0 %v3887, 97
        %v4242 = vpop.permute.xlu0 %4241
        %4243 = vrot.lane.b32.xlu0 %v3893, 97
        %v4244 = vpop.permute.xlu0 %4243
        %4245 = vrot.lane.b32.xlu0 %v3889, 97
        %v4246 = vpop.permute.xlu0 %4245
        %4247 = vrot.lane.b32.xlu0 %v3895, 97
        %v4248 = vpop.permute.xlu0 %4247
        %v4249 = vsel %vm2446, %v4242, %v4246
        %v4250 = vsel %vm2446, %v4244, %v4248
        %v4251 = vsel %vm2446, %v4238, %v4242
        %v4252 = vsel %vm2446, %v4240, %v4244
        %v4253 = vsel %vm2446, %v4234, %v4238
        %v4254 = vsel %vm2446, %v4236, %v4240
        %v4255 = vsel %vm2446, %v4230, %v4234
        %v4256 = vsel %vm2446, %v4232, %v4236
        %v4257 = vsel %vm2446, %v4226, %v4230
        %v4258 = vsel %vm2446, %v4228, %v4232
        %v4259 = vsel %vm2446, %v4222, %v4226
        %v4260 = vsel %vm2446, %v4224, %v4228
        %v4261 = vsel %vm2446, %v4218, %v4222
        %v4262 = vsel %vm2446, %v4220, %v4224
        %v4263 = vsel %vm2446, %v4246, %v4218
        %v4264 = vsel %vm2446, %v4248, %v4220
        %v4265 = vmul.f32 %v2458, %v4261
        %v4266 = vmul.f32 %v2462, %v4259
        %v4267 = vmul.f32 %v2466, %v4257
        %v4268 = vmul.f32 %v2470, %v4255
        %v4269 = vmul.f32 %v2474, %v4253
        %v4270 = vmul.f32 %v2478, %v4251
        %v4271 = vmul.f32 %v2482, %v4249
        %v4272 = vmul.f32 %v2486, %v4263
        %v4273 = vmul.f32 %v2458, %v4262
        %v4274 = vmul.f32 %v2462, %v4260
        %v4275 = vmul.f32 %v2466, %v4258
        %v4276 = vmul.f32 %v2470, %v4256
        %v4277 = vmul.f32 %v2474, %v4254
        %v4278 = vmul.f32 %v2478, %v4252
        %v4279 = vmul.f32 %v2482, %v4250
        %v4280 = vmul.f32 %v2486, %v4264
        %4281 = vrot.lane.b32.xlu0 %v3656, 96
        %v4282 = vpop.permute.xlu0 %4281
        %4283 = vrot.lane.b32.xlu0 %v3662, 96
        %v4284 = vpop.permute.xlu0 %4283
        %4285 = vrot.lane.b32.xlu0 %v3658, 96
        %v4286 = vpop.permute.xlu0 %4285
        %4287 = vrot.lane.b32.xlu0 %v3664, 96
        %v4288 = vpop.permute.xlu0 %4287
        %4289 = vrot.lane.b32.xlu0 %v3733, 96
        %v4290 = vpop.permute.xlu0 %4289
        %4291 = vrot.lane.b32.xlu0 %v3739, 96
        %v4292 = vpop.permute.xlu0 %4291
        %4293 = vrot.lane.b32.xlu0 %v3735, 96
        %v4294 = vpop.permute.xlu0 %4293
        %4295 = vrot.lane.b32.xlu0 %v3741, 96
        %v4296 = vpop.permute.xlu0 %4295
        %4297 = vrot.lane.b32.xlu0 %v3810, 96
        %v4298 = vpop.permute.xlu0 %4297
        %4299 = vrot.lane.b32.xlu0 %v3816, 96
        %v4300 = vpop.permute.xlu0 %4299
        %4301 = vrot.lane.b32.xlu0 %v3812, 96
        %v4302 = vpop.permute.xlu0 %4301
        %4303 = vrot.lane.b32.xlu0 %v3818, 96
        %v4304 = vpop.permute.xlu0 %4303
        %4305 = vrot.lane.b32.xlu0 %v3887, 96
        %v4306 = vpop.permute.xlu0 %4305
        %4307 = vrot.lane.b32.xlu0 %v3893, 96
        %v4308 = vpop.permute.xlu0 %4307
        %4309 = vrot.lane.b32.xlu0 %v3889, 96
        %v4310 = vpop.permute.xlu0 %4309
        %4311 = vrot.lane.b32.xlu0 %v3895, 96
        %v4312 = vpop.permute.xlu0 %4311
        %v4313 = vsel %vm2511, %v4306, %v4310
        %v4314 = vsel %vm2511, %v4308, %v4312
        %v4315 = vsel %vm2511, %v4302, %v4306
        %v4316 = vsel %vm2511, %v4304, %v4308
        %v4317 = vsel %vm2511, %v4298, %v4302
        %v4318 = vsel %vm2511, %v4300, %v4304
        %v4319 = vsel %vm2511, %v4294, %v4298
        %v4320 = vsel %vm2511, %v4296, %v4300
        %v4321 = vsel %vm2511, %v4290, %v4294
        %v4322 = vsel %vm2511, %v4292, %v4296
        %v4323 = vsel %vm2511, %v4286, %v4290
        %v4324 = vsel %vm2511, %v4288, %v4292
        %v4325 = vsel %vm2511, %v4282, %v4286
        %v4326 = vsel %vm2511, %v4284, %v4288
        %v4327 = vsel %vm2511, %v4310, %v4282
        %v4328 = vsel %vm2511, %v4312, %v4284
        %v4329 = vmul.f32 %v2523, %v4325
        %v4330 = vmul.f32 %v2527, %v4323
        %v4331 = vmul.f32 %v2531, %v4321
        %v4332 = vmul.f32 %v2535, %v4319
        %v4333 = vmul.f32 %v2539, %v4317
        %v4334 = vmul.f32 %v2543, %v4315
        %v4335 = vmul.f32 %v2547, %v4313
        %v4336 = vmul.f32 %v2551, %v4327
        %v4337 = vmul.f32 %v2523, %v4326
        %v4338 = vmul.f32 %v2527, %v4324
        %v4339 = vmul.f32 %v2531, %v4322
        %v4340 = vmul.f32 %v2535, %v4320
        %v4341 = vmul.f32 %v2539, %v4318
        %v4342 = vmul.f32 %v2543, %v4316
        %v4343 = vmul.f32 %v2547, %v4314
        %v4344 = vmul.f32 %v2551, %v4328
        %4345 = vrot.lane.b32.xlu0 %v3656, 95
        %v4346 = vpop.permute.xlu0 %4345
        %4347 = vrot.lane.b32.xlu0 %v3662, 95
        %v4348 = vpop.permute.xlu0 %4347
        %4349 = vrot.lane.b32.xlu0 %v3658, 95
        %v4350 = vpop.permute.xlu0 %4349
        %4351 = vrot.lane.b32.xlu0 %v3664, 95
        %v4352 = vpop.permute.xlu0 %4351
        %4353 = vrot.lane.b32.xlu0 %v3733, 95
        %v4354 = vpop.permute.xlu0 %4353
        %4355 = vrot.lane.b32.xlu0 %v3739, 95
        %v4356 = vpop.permute.xlu0 %4355
        %4357 = vrot.lane.b32.xlu0 %v3735, 95
        %v4358 = vpop.permute.xlu0 %4357
        %4359 = vrot.lane.b32.xlu0 %v3741, 95
        %v4360 = vpop.permute.xlu0 %4359
        %4361 = vrot.lane.b32.xlu0 %v3810, 95
        %v4362 = vpop.permute.xlu0 %4361
        %4363 = vrot.lane.b32.xlu0 %v3816, 95
        %v4364 = vpop.permute.xlu0 %4363
        %4365 = vrot.lane.b32.xlu0 %v3812, 95
        %v4366 = vpop.permute.xlu0 %4365
        %4367 = vrot.lane.b32.xlu0 %v3818, 95
        %v4368 = vpop.permute.xlu0 %4367
        %4369 = vrot.lane.b32.xlu0 %v3887, 95
        %v4370 = vpop.permute.xlu0 %4369
        %4371 = vrot.lane.b32.xlu0 %v3893, 95
        %v4372 = vpop.permute.xlu0 %4371
        %4373 = vrot.lane.b32.xlu0 %v3889, 95
        %v4374 = vpop.permute.xlu0 %4373
        %4375 = vrot.lane.b32.xlu0 %v3895, 95
        %v4376 = vpop.permute.xlu0 %4375
        %v4377 = vsel %vm2576, %v4370, %v4374
        %v4378 = vsel %vm2576, %v4372, %v4376
        %v4379 = vsel %vm2576, %v4366, %v4370
        %v4380 = vsel %vm2576, %v4368, %v4372
        %v4381 = vsel %vm2576, %v4362, %v4366
        %v4382 = vsel %vm2576, %v4364, %v4368
        %v4383 = vsel %vm2576, %v4358, %v4362
        %v4384 = vsel %vm2576, %v4360, %v4364
        %v4385 = vsel %vm2576, %v4354, %v4358
        %v4386 = vsel %vm2576, %v4356, %v4360
        %v4387 = vsel %vm2576, %v4350, %v4354
        %v4388 = vsel %vm2576, %v4352, %v4356
        %v4389 = vsel %vm2576, %v4346, %v4350
        %v4390 = vsel %vm2576, %v4348, %v4352
        %v4391 = vsel %vm2576, %v4374, %v4346
        %v4392 = vsel %vm2576, %v4376, %v4348
        %v4393 = vmul.f32 %v2588, %v4389
        %v4394 = vmul.f32 %v2592, %v4387
        %v4395 = vmul.f32 %v2596, %v4385
        %v4396 = vmul.f32 %v2600, %v4383
        %v4397 = vmul.f32 %v2604, %v4381
        %v4398 = vmul.f32 %v2608, %v4379
        %v4399 = vmul.f32 %v2612, %v4377
        %v4400 = vmul.f32 %v2616, %v4391
        %v4401 = vmul.f32 %v2588, %v4390
        %v4402 = vmul.f32 %v2592, %v4388
        %v4403 = vmul.f32 %v2596, %v4386
        %v4404 = vmul.f32 %v2600, %v4384
        %v4405 = vmul.f32 %v2604, %v4382
        %v4406 = vmul.f32 %v2608, %v4380
        %v4407 = vmul.f32 %v2612, %v4378
        %v4408 = vmul.f32 %v2616, %v4392
        %v4409 = vpack.c.bf16 %v3953, %v3945
        %v4410 = vpack.c.bf16 %v3954, %v3946
        %v4411 = vpack.c.bf16 %v3955, %v3947
        %v4412 = vpack.c.bf16 %v3956, %v3948
        %v4413 = vpack.c.bf16 %v3957, %v3949
        %v4414 = vpack.c.bf16 %v3958, %v3950
        %v4415 = vpack.c.bf16 %v3959, %v3951
        %v4416 = vpack.c.bf16 %v3960, %v3952
        %v4417 = vpack.c.bf16 %v4017, %v4009
        %v4418 = vpack.c.bf16 %v4018, %v4010
        %v4419 = vpack.c.bf16 %v4019, %v4011
        %v4420 = vpack.c.bf16 %v4020, %v4012
        %v4421 = vpack.c.bf16 %v4021, %v4013
        %v4422 = vpack.c.bf16 %v4022, %v4014
        %v4423 = vpack.c.bf16 %v4023, %v4015
        %v4424 = vpack.c.bf16 %v4024, %v4016
        %v4425 = vpack.c.bf16 %v4081, %v4073
        %v4426 = vpack.c.bf16 %v4082, %v4074
        %v4427 = vpack.c.bf16 %v4083, %v4075
        %v4428 = vpack.c.bf16 %v4084, %v4076
        %v4429 = vpack.c.bf16 %v4085, %v4077
        %v4430 = vpack.c.bf16 %v4086, %v4078
        %v4431 = vpack.c.bf16 %v4087, %v4079
        %v4432 = vpack.c.bf16 %v4088, %v4080
        %v4433 = vpack.c.bf16 %v4145, %v4137
        %v4434 = vpack.c.bf16 %v4146, %v4138
        %v4435 = vpack.c.bf16 %v4147, %v4139
        %v4436 = vpack.c.bf16 %v4148, %v4140
        %v4437 = vpack.c.bf16 %v4149, %v4141
        %v4438 = vpack.c.bf16 %v4150, %v4142
        %v4439 = vpack.c.bf16 %v4151, %v4143
        %v4440 = vpack.c.bf16 %v4152, %v4144
        %v4441 = vpack.c.bf16 %v3662, %v3656
        %v4442 = vpack.c.bf16 %v3664, %v3658
        %v4443 = vpack.c.bf16 %v3739, %v3733
        %v4444 = vpack.c.bf16 %v3741, %v3735
        %v4445 = vpack.c.bf16 %v3816, %v3810
        %v4446 = vpack.c.bf16 %v3818, %v3812
        %v4447 = vpack.c.bf16 %v3893, %v3887
        %v4448 = vpack.c.bf16 %v3895, %v3889
        %v4449 = vpack.c.bf16 %v4209, %v4201
        %v4450 = vpack.c.bf16 %v4210, %v4202
        %v4451 = vpack.c.bf16 %v4211, %v4203
        %v4452 = vpack.c.bf16 %v4212, %v4204
        %v4453 = vpack.c.bf16 %v4213, %v4205
        %v4454 = vpack.c.bf16 %v4214, %v4206
        %v4455 = vpack.c.bf16 %v4215, %v4207
        %v4456 = vpack.c.bf16 %v4216, %v4208
        %v4457 = vpack.c.bf16 %v4273, %v4265
        %v4458 = vpack.c.bf16 %v4274, %v4266
        %v4459 = vpack.c.bf16 %v4275, %v4267
        %v4460 = vpack.c.bf16 %v4276, %v4268
        %v4461 = vpack.c.bf16 %v4277, %v4269
        %v4462 = vpack.c.bf16 %v4278, %v4270
        %v4463 = vpack.c.bf16 %v4279, %v4271
        %v4464 = vpack.c.bf16 %v4280, %v4272
        %v4465 = vpack.c.bf16 %v4337, %v4329
        %v4466 = vpack.c.bf16 %v4338, %v4330
        %v4467 = vpack.c.bf16 %v4339, %v4331
        %v4468 = vpack.c.bf16 %v4340, %v4332
        %v4469 = vpack.c.bf16 %v4341, %v4333
        %v4470 = vpack.c.bf16 %v4342, %v4334
        %v4471 = vpack.c.bf16 %v4343, %v4335
        %v4472 = vpack.c.bf16 %v4344, %v4336
        %v4473 = vpack.c.bf16 %v4401, %v4393
        %v4474 = vpack.c.bf16 %v4402, %v4394
        %v4475 = vpack.c.bf16 %v4403, %v4395
        %v4476 = vpack.c.bf16 %v4404, %v4396
        %v4477 = vpack.c.bf16 %v4405, %v4397
        %v4478 = vpack.c.bf16 %v4406, %v4398
        %v4479 = vpack.c.bf16 %v4407, %v4399
        %v4480 = vpack.c.bf16 %v4408, %v4400
        %v4481 = vld [vmem:[#allocation13] sm:$0xff]
        %v4482 = vld [vmem:[#allocation13 + $0x8] sm:$0xff]
        %v4483 = vld [vmem:[%s17] sm:$0xff]
        %v4484 = vld [vmem:[%s17 + $0x8] sm:$0xff]
        %4486 = vset.pattern.permute.xlu0 0
        %4487 = vperm.xlu0 %4486, %v4483
        %v4488 = vpop.permute.xlu0 %4487
        %4491 = vset.pattern.permute.xlu0 0
        %4492 = vperm.xlu0 %4491, %v4484
        %v4493 = vpop.permute.xlu0 %4492
        %v4497 = vunpack.c.l.b16 %v4481
        %v4498 = vunpack.c.h.b16 %v4481
        %v4499 = vunpack.c.l.b16 %v4482
        %v4500 = vunpack.c.h.b16 %v4482
        %v4501 = vpack.c.b16 %v4499, %v4497
        %v4502 = vpack.c.b16 %v4500, %v4498
        %v4505 = vsel %vm3542, %v4502, 0
        %4507 = vmatprep.subr.bf16.mxu0 %v4466
        %4508 = vmatpush1.bf16.msra.mxu0 %v4465
        %4509 = vmatprep.subr.bf16.mxu0 %v4458
        %4510 = vmatpush1.bf16.msra.mxu0 %v4457
        %4511 = vmatprep.subr.bf16.mxu0 %v4450
        %4512 = vmatpush1.bf16.msra.mxu0 %v4449
        %4513 = vmatprep.subr.bf16.mxu0 %v4442
        %4514 = vmatpush1.bf16.msra.mxu0 %v4441
        %4515 = vmatprep.subr.bf16.mxu0 %v4434
        %4516 = vmatpush1.bf16.msra.mxu0 %v4433
        %4517 = vmatprep.subr.bf16.mxu0 %v4426
        %4518 = vmatpush1.bf16.msra.mxu0 %v4425
        %4519 = vmatprep.subr.bf16.mxu0 %v4418
        %4520 = vmatpush1.bf16.msra.mxu0 %v4417
        %4521 = vmatprep.subr.bf16.mxu0 %v4410
        %4522 = vmatpush1.bf16.msra.mxu0 %v4409
        %4523 = vmatprep.subr.bf16.mxu0 0
        %4524 = vmatpush2.bf16.msra.mxu0 0
        %4525 = vmatprep.subr.bf16.mxu0 0
        %4526 = vmatpush2.bf16.msra.mxu0 0
        %4527 = vmatprep.subr.bf16.mxu0 0
        %4528 = vmatpush2.bf16.msra.mxu0 0
        %4529 = vmatprep.subr.bf16.mxu0 0
        %4530 = vmatpush2.bf16.msra.mxu0 0
        %4531 = vmatprep.subr.bf16.mxu0 0
        %4532 = vmatpush2.bf16.msra.mxu0 0
        %4533 = vmatprep.subr.bf16.mxu0 0
        %4534 = vmatpush2.bf16.msra.mxu0 0
        %4535 = vmatprep.subr.bf16.mxu0 0
        %4536 = vmatpush2.bf16.msra.mxu0 0
        %4537 = vmatprep.subr.bf16.mxu0 %v4474
        %4538 = vmatpush2.bf16.msra.mxu0 %v4473
        %4539 = vmatprep.mubr.bf16.mxu0 %v4505
        %4540 = vmatmul.mubr.bf16.gmra.mxu0 %v4501
        %v4541 = vpop.f32.mrf.mxu0
        %v4542 = vadd.f32 %v4488, %v4541
        %v4543 = vpop.f32.mrf.mxu0
        %v4544 = vadd.f32 %v4488, %v4543
        %v4545 = vpop.f32.mrf.mxu0
        %v4546 = vadd.f32 %v4493, %v4545
        %v4547 = vpop.f32.mrf.mxu0
        %v4548 = vadd.f32 %v4493, %v4547
        %4549 = vdwg.mxu0
        %4550 = vmatprep.subr.bf16.mxu0 %v4468
        %4551 = vmatpush1.bf16.msra.mxu0 %v4467
        %4552 = vmatprep.subr.bf16.mxu0 %v4460
        %4553 = vmatpush1.bf16.msra.mxu0 %v4459
        %4554 = vmatprep.subr.bf16.mxu0 %v4452
        %4555 = vmatpush1.bf16.msra.mxu0 %v4451
        %4556 = vmatprep.subr.bf16.mxu0 %v4444
        %4557 = vmatpush1.bf16.msra.mxu0 %v4443
        %4558 = vmatprep.subr.bf16.mxu0 %v4436
        %4559 = vmatpush1.bf16.msra.mxu0 %v4435
        %4560 = vmatprep.subr.bf16.mxu0 %v4428
        %4561 = vmatpush1.bf16.msra.mxu0 %v4427
        %4562 = vmatprep.subr.bf16.mxu0 %v4420
        %4563 = vmatpush1.bf16.msra.mxu0 %v4419
        %4564 = vmatprep.subr.bf16.mxu0 %v4412
        %4565 = vmatpush1.bf16.msra.mxu0 %v4411
        %4566 = vmatprep.subr.bf16.mxu0 0
        %4567 = vmatpush2.bf16.msra.mxu0 0
        %4568 = vmatprep.subr.bf16.mxu0 0
        %4569 = vmatpush2.bf16.msra.mxu0 0
        %4570 = vmatprep.subr.bf16.mxu0 0
        %4571 = vmatpush2.bf16.msra.mxu0 0
        %4572 = vmatprep.subr.bf16.mxu0 0
        %4573 = vmatpush2.bf16.msra.mxu0 0
        %4574 = vmatprep.subr.bf16.mxu0 0
        %4575 = vmatpush2.bf16.msra.mxu0 0
        %4576 = vmatprep.subr.bf16.mxu0 0
        %4577 = vmatpush2.bf16.msra.mxu0 0
        %4578 = vmatprep.subr.bf16.mxu0 0
        %4579 = vmatpush2.bf16.msra.mxu0 0
        %4580 = vmatprep.subr.bf16.mxu0 %v4476
        %4581 = vmatpush2.bf16.msra.mxu0 %v4475
        %4582 = vmatprep.mubr.bf16.mxu0 %v4505
        %4583 = vmatmul.mubr.bf16.gmra.mxu0 %v4501
        %v4584 = vpop.f32.mrf.mxu0
        %v4585 = vadd.f32 %v4488, %v4584
        %v4586 = vpop.f32.mrf.mxu0
        %v4587 = vadd.f32 %v4488, %v4586
        %v4588 = vpop.f32.mrf.mxu0
        %v4589 = vadd.f32 %v4493, %v4588
        %v4590 = vpop.f32.mrf.mxu0
        %v4591 = vadd.f32 %v4493, %v4590
        %4592 = vdwg.mxu0
        %4593 = vmatprep.subr.bf16.mxu0 %v4470
        %4594 = vmatpush1.bf16.msra.mxu0 %v4469
        %4595 = vmatprep.subr.bf16.mxu0 %v4462
        %4596 = vmatpush1.bf16.msra.mxu0 %v4461
        %4597 = vmatprep.subr.bf16.mxu0 %v4454
        %4598 = vmatpush1.bf16.msra.mxu0 %v4453
        %4599 = vmatprep.subr.bf16.mxu0 %v4446
        %4600 = vmatpush1.bf16.msra.mxu0 %v4445
        %4601 = vmatprep.subr.bf16.mxu0 %v4438
        %4602 = vmatpush1.bf16.msra.mxu0 %v4437
        %4603 = vmatprep.subr.bf16.mxu0 %v4430
        %4604 = vmatpush1.bf16.msra.mxu0 %v4429
        %4605 = vmatprep.subr.bf16.mxu0 %v4422
        %4606 = vmatpush1.bf16.msra.mxu0 %v4421
        %4607 = vmatprep.subr.bf16.mxu0 %v4414
        %4608 = vmatpush1.bf16.msra.mxu0 %v4413
        %4609 = vmatprep.subr.bf16.mxu0 0
        %4610 = vmatpush2.bf16.msra.mxu0 0
        %4611 = vmatprep.subr.bf16.mxu0 0
        %4612 = vmatpush2.bf16.msra.mxu0 0
        %4613 = vmatprep.subr.bf16.mxu0 0
        %4614 = vmatpush2.bf16.msra.mxu0 0
        %4615 = vmatprep.subr.bf16.mxu0 0
        %4616 = vmatpush2.bf16.msra.mxu0 0
        %4617 = vmatprep.subr.bf16.mxu0 0
        %4618 = vmatpush2.bf16.msra.mxu0 0
        %4619 = vmatprep.subr.bf16.mxu0 0
        %4620 = vmatpush2.bf16.msra.mxu0 0
        %4621 = vmatprep.subr.bf16.mxu0 0
        %4622 = vmatpush2.bf16.msra.mxu0 0
        %4623 = vmatprep.subr.bf16.mxu0 %v4478
        %4624 = vmatpush2.bf16.msra.mxu0 %v4477
        %4625 = vmatprep.mubr.bf16.mxu0 %v4505
        %4626 = vmatmul.mubr.bf16.gmra.mxu0 %v4501
        %v4627 = vpop.f32.mrf.mxu0
        %v4628 = vadd.f32 %v4488, %v4627
        %v4629 = vpop.f32.mrf.mxu0
        %v4630 = vadd.f32 %v4488, %v4629
        %v4631 = vpop.f32.mrf.mxu0
        %v4632 = vadd.f32 %v4493, %v4631
        %v4633 = vpop.f32.mrf.mxu0
        %v4634 = vadd.f32 %v4493, %v4633
        %4635 = vdwg.mxu0
        %4636 = vmatprep.subr.bf16.mxu0 %v4472
        %4637 = vmatpush1.bf16.msra.mxu0 %v4471
        %4638 = vmatprep.subr.bf16.mxu0 %v4464
        %4639 = vmatpush1.bf16.msra.mxu0 %v4463
        %4640 = vmatprep.subr.bf16.mxu0 %v4456
        %4641 = vmatpush1.bf16.msra.mxu0 %v4455
        %4642 = vmatprep.subr.bf16.mxu0 %v4448
        %4643 = vmatpush1.bf16.msra.mxu0 %v4447
        %4644 = vmatprep.subr.bf16.mxu0 %v4440
        %4645 = vmatpush1.bf16.msra.mxu0 %v4439
        %4646 = vmatprep.subr.bf16.mxu0 %v4432
        %4647 = vmatpush1.bf16.msra.mxu0 %v4431
        %4648 = vmatprep.subr.bf16.mxu0 %v4424
        %4649 = vmatpush1.bf16.msra.mxu0 %v4423
        %4650 = vmatprep.subr.bf16.mxu0 %v4416
        %4651 = vmatpush1.bf16.msra.mxu0 %v4415
        %4652 = vmatprep.subr.bf16.mxu0 0
        %4653 = vmatpush2.bf16.msra.mxu0 0
        %4654 = vmatprep.subr.bf16.mxu0 0
        %4655 = vmatpush2.bf16.msra.mxu0 0
        %4656 = vmatprep.subr.bf16.mxu0 0
        %4657 = vmatpush2.bf16.msra.mxu0 0
        %4658 = vmatprep.subr.bf16.mxu0 0
        %4659 = vmatpush2.bf16.msra.mxu0 0
        %4660 = vmatprep.subr.bf16.mxu0 0
        %4661 = vmatpush2.bf16.msra.mxu0 0
        %4662 = vmatprep.subr.bf16.mxu0 0
        %4663 = vmatpush2.bf16.msra.mxu0 0
        %4664 = vmatprep.subr.bf16.mxu0 0
        %4665 = vmatpush2.bf16.msra.mxu0 0
        %4666 = vmatprep.subr.bf16.mxu0 %v4480
        %4667 = vmatpush2.bf16.msra.mxu0 %v4479
        %4668 = vmatprep.mubr.bf16.mxu0 %v4505
        %4669 = vmatmul.mubr.bf16.gmra.mxu0 %v4501
        %v4670 = vpop.f32.mrf.mxu0
        %v4671 = vadd.f32 %v4488, %v4670
        %v4672 = vpop.f32.mrf.mxu0
        %v4673 = vadd.f32 %v4488, %v4672
        %v4674 = vpop.f32.mrf.mxu0
        %v4675 = vadd.f32 %v4493, %v4674
        %v4676 = vpop.f32.mrf.mxu0
        %v4677 = vadd.f32 %v4493, %v4676
        %4678 = vdwg.mxu0
        %4679 = vrot.lane.b32.xlu0 %v3365, 33
        %v4680 = vpop.permute.xlu0 %4679
        %4681 = vrot.lane.b32.xlu0 %v3366, 33
        %v4682 = vpop.permute.xlu0 %4681
        %4683 = vrot.lane.b32.xlu0 %v3367, 33
        %v4684 = vpop.permute.xlu0 %4683
        %4685 = vrot.lane.b32.xlu0 %v3368, 33
        %v4686 = vpop.permute.xlu0 %4685
        %4687 = vrot.lane.b32.xlu0 %v3369, 33
        %v4688 = vpop.permute.xlu0 %4687
        %4689 = vrot.lane.b32.xlu0 %v3370, 33
        %v4690 = vpop.permute.xlu0 %4689
        %4691 = vrot.lane.b32.xlu0 %v3371, 33
        %v4692 = vpop.permute.xlu0 %4691
        %4693 = vrot.lane.b32.xlu0 %v3372, 33
        %v4694 = vpop.permute.xlu0 %4693
        %v4695 = vsel %vm2123, %v4692, %v4694
        %v4696 = vsel %vm2123, %v4690, %v4692
        %v4697 = vsel %vm2123, %v4688, %v4690
        %v4698 = vsel %vm2123, %v4686, %v4688
        %v4699 = vsel %vm2123, %v4684, %v4686
        %v4700 = vsel %vm2123, %v4682, %v4684
        %v4701 = vsel %vm2123, %v4680, %v4682
        %v4702 = vsel %vm2123, %v4694, %v4680
        %v4703 = vmul.f32 %v2135, %v4702
        %v4704 = vmul.f32 %v2139, %v4701
        %v4705 = vmul.f32 %v2143, %v4700
        %v4706 = vmul.f32 %v2147, %v4699
        %v4707 = vmul.f32 %v2151, %v4698
        %v4708 = vmul.f32 %v2155, %v4697
        %v4709 = vmul.f32 %v2159, %v4696
        %v4710 = vmul.f32 %v2163, %v4695
        %4711 = vrot.lane.b32.xlu0 %v4542, 33
        %v4712 = vpop.permute.xlu0 %4711
        %4713 = vrot.lane.b32.xlu0 %v4546, 33
        %v4714 = vpop.permute.xlu0 %4713
        %4715 = vrot.lane.b32.xlu0 %v4544, 33
        %v4716 = vpop.permute.xlu0 %4715
        %4717 = vrot.lane.b32.xlu0 %v4548, 33
        %v4718 = vpop.permute.xlu0 %4717
        %4719 = vrot.lane.b32.xlu0 %v4585, 33
        %v4720 = vpop.permute.xlu0 %4719
        %4721 = vrot.lane.b32.xlu0 %v4589, 33
        %v4722 = vpop.permute.xlu0 %4721
        %4723 = vrot.lane.b32.xlu0 %v4587, 33
        %v4724 = vpop.permute.xlu0 %4723
        %4725 = vrot.lane.b32.xlu0 %v4591, 33
        %v4726 = vpop.permute.xlu0 %4725
        %4727 = vrot.lane.b32.xlu0 %v4628, 33
        %v4728 = vpop.permute.xlu0 %4727
        %4729 = vrot.lane.b32.xlu0 %v4632, 33
        %v4730 = vpop.permute.xlu0 %4729
        %4731 = vrot.lane.b32.xlu0 %v4630, 33
        %v4732 = vpop.permute.xlu0 %4731
        %4733 = vrot.lane.b32.xlu0 %v4634, 33
        %v4734 = vpop.permute.xlu0 %4733
        %4735 = vrot.lane.b32.xlu0 %v4671, 33
        %v4736 = vpop.permute.xlu0 %4735
        %4737 = vrot.lane.b32.xlu0 %v4675, 33
        %v4738 = vpop.permute.xlu0 %4737
        %4739 = vrot.lane.b32.xlu0 %v4673, 33
        %v4740 = vpop.permute.xlu0 %4739
        %4741 = vrot.lane.b32.xlu0 %v4677, 33
        %v4742 = vpop.permute.xlu0 %4741
        %v4743 = vsel %vm2123, %v4736, %v4740
        %v4744 = vsel %vm2123, %v4738, %v4742
        %v4745 = vsel %vm2123, %v4732, %v4736
        %v4746 = vsel %vm2123, %v4734, %v4738
        %v4747 = vsel %vm2123, %v4728, %v4732
        %v4748 = vsel %vm2123, %v4730, %v4734
        %v4749 = vsel %vm2123, %v4724, %v4728
        %v4750 = vsel %vm2123, %v4726, %v4730
        %v4751 = vsel %vm2123, %v4720, %v4724
        %v4752 = vsel %vm2123, %v4722, %v4726
        %v4753 = vsel %vm2123, %v4716, %v4720
        %v4754 = vsel %vm2123, %v4718, %v4722
        %v4755 = vsel %vm2123, %v4712, %v4716
        %v4756 = vsel %vm2123, %v4714, %v4718
        %v4757 = vsel %vm2123, %v4740, %v4712
        %v4758 = vsel %vm2123, %v4742, %v4714
        %v4759 = vmul.f32 %v2135, %v4757
        %v4760 = vmul.f32 %v2139, %v4755
        %v4761 = vmul.f32 %v2143, %v4753
        %v4762 = vmul.f32 %v2147, %v4751
        %v4763 = vmul.f32 %v2151, %v4749
        %v4764 = vmul.f32 %v2155, %v4747
        %v4765 = vmul.f32 %v2159, %v4745
        %v4766 = vmul.f32 %v2163, %v4743
        %v4767 = vmul.f32 %v2135, %v4758
        %v4768 = vmul.f32 %v2139, %v4756
        %v4769 = vmul.f32 %v2143, %v4754
        %v4770 = vmul.f32 %v2147, %v4752
        %v4771 = vmul.f32 %v2151, %v4750
        %v4772 = vmul.f32 %v2155, %v4748
        %v4773 = vmul.f32 %v2159, %v4746
        %v4774 = vmul.f32 %v2163, %v4744
        %4775 = vrot.lane.b32.xlu0 %v3365, 32
        %v4776 = vpop.permute.xlu0 %4775
        %4777 = vrot.lane.b32.xlu0 %v3366, 32
        %v4778 = vpop.permute.xlu0 %4777
        %4779 = vrot.lane.b32.xlu0 %v3367, 32
        %v4780 = vpop.permute.xlu0 %4779
        %4781 = vrot.lane.b32.xlu0 %v3368, 32
        %v4782 = vpop.permute.xlu0 %4781
        %4783 = vrot.lane.b32.xlu0 %v3369, 32
        %v4784 = vpop.permute.xlu0 %4783
        %4785 = vrot.lane.b32.xlu0 %v3370, 32
        %v4786 = vpop.permute.xlu0 %4785
        %4787 = vrot.lane.b32.xlu0 %v3371, 32
        %v4788 = vpop.permute.xlu0 %4787
        %4789 = vrot.lane.b32.xlu0 %v3372, 32
        %v4790 = vpop.permute.xlu0 %4789
        %v4791 = vsel %vm2188, %v4788, %v4790
        %v4792 = vsel %vm2188, %v4786, %v4788
        %v4793 = vsel %vm2188, %v4784, %v4786
        %v4794 = vsel %vm2188, %v4782, %v4784
        %v4795 = vsel %vm2188, %v4780, %v4782
        %v4796 = vsel %vm2188, %v4778, %v4780
        %v4797 = vsel %vm2188, %v4776, %v4778
        %v4798 = vsel %vm2188, %v4790, %v4776
        %v4799 = vmul.f32 %v2200, %v4798
        %v4800 = vmul.f32 %v2204, %v4797
        %v4801 = vmul.f32 %v2208, %v4796
        %v4802 = vmul.f32 %v2212, %v4795
        %v4803 = vmul.f32 %v2216, %v4794
        %v4804 = vmul.f32 %v2220, %v4793
        %v4805 = vmul.f32 %v2224, %v4792
        %v4806 = vmul.f32 %v2228, %v4791
        %4807 = vrot.lane.b32.xlu0 %v4542, 32
        %v4808 = vpop.permute.xlu0 %4807
        %4809 = vrot.lane.b32.xlu0 %v4546, 32
        %v4810 = vpop.permute.xlu0 %4809
        %4811 = vrot.lane.b32.xlu0 %v4544, 32
        %v4812 = vpop.permute.xlu0 %4811
        %4813 = vrot.lane.b32.xlu0 %v4548, 32
        %v4814 = vpop.permute.xlu0 %4813
        %4815 = vrot.lane.b32.xlu0 %v4585, 32
        %v4816 = vpop.permute.xlu0 %4815
        %4817 = vrot.lane.b32.xlu0 %v4589, 32
        %v4818 = vpop.permute.xlu0 %4817
        %4819 = vrot.lane.b32.xlu0 %v4587, 32
        %v4820 = vpop.permute.xlu0 %4819
        %4821 = vrot.lane.b32.xlu0 %v4591, 32
        %v4822 = vpop.permute.xlu0 %4821
        %4823 = vrot.lane.b32.xlu0 %v4628, 32
        %v4824 = vpop.permute.xlu0 %4823
        %4825 = vrot.lane.b32.xlu0 %v4632, 32
        %v4826 = vpop.permute.xlu0 %4825
        %4827 = vrot.lane.b32.xlu0 %v4630, 32
        %v4828 = vpop.permute.xlu0 %4827
        %4829 = vrot.lane.b32.xlu0 %v4634, 32
        %v4830 = vpop.permute.xlu0 %4829
        %4831 = vrot.lane.b32.xlu0 %v4671, 32
        %v4832 = vpop.permute.xlu0 %4831
        %4833 = vrot.lane.b32.xlu0 %v4675, 32
        %v4834 = vpop.permute.xlu0 %4833
        %4835 = vrot.lane.b32.xlu0 %v4673, 32
        %v4836 = vpop.permute.xlu0 %4835
        %4837 = vrot.lane.b32.xlu0 %v4677, 32
        %v4838 = vpop.permute.xlu0 %4837
        %v4839 = vsel %vm2188, %v4832, %v4836
        %v4840 = vsel %vm2188, %v4834, %v4838
        %v4841 = vsel %vm2188, %v4828, %v4832
        %v4842 = vsel %vm2188, %v4830, %v4834
        %v4843 = vsel %vm2188, %v4824, %v4828
        %v4844 = vsel %vm2188, %v4826, %v4830
        %v4845 = vsel %vm2188, %v4820, %v4824
        %v4846 = vsel %vm2188, %v4822, %v4826
        %v4847 = vsel %vm2188, %v4816, %v4820
        %v4848 = vsel %vm2188, %v4818, %v4822
        %v4849 = vsel %vm2188, %v4812, %v4816
        %v4850 = vsel %vm2188, %v4814, %v4818
        %v4851 = vsel %vm2188, %v4808, %v4812
        %v4852 = vsel %vm2188, %v4810, %v4814
        %v4853 = vsel %vm2188, %v4836, %v4808
        %v4854 = vsel %vm2188, %v4838, %v4810
        %v4855 = vmul.f32 %v2200, %v4853
        %v4856 = vmul.f32 %v2204, %v4851
        %v4857 = vmul.f32 %v2208, %v4849
        %v4858 = vmul.f32 %v2212, %v4847
        %v4859 = vmul.f32 %v2216, %v4845
        %v4860 = vmul.f32 %v2220, %v4843
        %v4861 = vmul.f32 %v2224, %v4841
        %v4862 = vmul.f32 %v2228, %v4839
        %v4863 = vmul.f32 %v2200, %v4854
        %v4864 = vmul.f32 %v2204, %v4852
        %v4865 = vmul.f32 %v2208, %v4850
        %v4866 = vmul.f32 %v2212, %v4848
        %v4867 = vmul.f32 %v2216, %v4846
        %v4868 = vmul.f32 %v2220, %v4844
        %v4869 = vmul.f32 %v2224, %v4842
        %v4870 = vmul.f32 %v2228, %v4840
        %4871 = vrot.lane.b32.xlu0 %v3365, 31
        %v4872 = vpop.permute.xlu0 %4871
        %4873 = vrot.lane.b32.xlu0 %v3366, 31
        %v4874 = vpop.permute.xlu0 %4873
        %4875 = vrot.lane.b32.xlu0 %v3367, 31
        %v4876 = vpop.permute.xlu0 %4875
        %4877 = vrot.lane.b32.xlu0 %v3368, 31
        %v4878 = vpop.permute.xlu0 %4877
        %4879 = vrot.lane.b32.xlu0 %v3369, 31
        %v4880 = vpop.permute.xlu0 %4879
        %4881 = vrot.lane.b32.xlu0 %v3370, 31
        %v4882 = vpop.permute.xlu0 %4881
        %4883 = vrot.lane.b32.xlu0 %v3371, 31
        %v4884 = vpop.permute.xlu0 %4883
        %4885 = vrot.lane.b32.xlu0 %v3372, 31
        %v4886 = vpop.permute.xlu0 %4885
        %v4887 = vsel %vm2253, %v4884, %v4886
        %v4888 = vsel %vm2253, %v4882, %v4884
        %v4889 = vsel %vm2253, %v4880, %v4882
        %v4890 = vsel %vm2253, %v4878, %v4880
        %v4891 = vsel %vm2253, %v4876, %v4878
        %v4892 = vsel %vm2253, %v4874, %v4876
        %v4893 = vsel %vm2253, %v4872, %v4874
        %v4894 = vsel %vm2253, %v4886, %v4872
        %v4895 = vmul.f32 %v2265, %v4894
        %v4896 = vmul.f32 %v2269, %v4893
        %v4897 = vmul.f32 %v2273, %v4892
        %v4898 = vmul.f32 %v2277, %v4891
        %v4899 = vmul.f32 %v2281, %v4890
        %v4900 = vmul.f32 %v2285, %v4889
        %v4901 = vmul.f32 %v2289, %v4888
        %v4902 = vmul.f32 %v2293, %v4887
        %4903 = vrot.lane.b32.xlu0 %v4542, 31
        %v4904 = vpop.permute.xlu0 %4903
        %4905 = vrot.lane.b32.xlu0 %v4546, 31
        %v4906 = vpop.permute.xlu0 %4905
        %4907 = vrot.lane.b32.xlu0 %v4544, 31
        %v4908 = vpop.permute.xlu0 %4907
        %4909 = vrot.lane.b32.xlu0 %v4548, 31
        %v4910 = vpop.permute.xlu0 %4909
        %4911 = vrot.lane.b32.xlu0 %v4585, 31
        %v4912 = vpop.permute.xlu0 %4911
        %4913 = vrot.lane.b32.xlu0 %v4589, 31
        %v4914 = vpop.permute.xlu0 %4913
        %4915 = vrot.lane.b32.xlu0 %v4587, 31
        %v4916 = vpop.permute.xlu0 %4915
        %4917 = vrot.lane.b32.xlu0 %v4591, 31
        %v4918 = vpop.permute.xlu0 %4917
        %4919 = vrot.lane.b32.xlu0 %v4628, 31
        %v4920 = vpop.permute.xlu0 %4919
        %4921 = vrot.lane.b32.xlu0 %v4632, 31
        %v4922 = vpop.permute.xlu0 %4921
        %4923 = vrot.lane.b32.xlu0 %v4630, 31
        %v4924 = vpop.permute.xlu0 %4923
        %4925 = vrot.lane.b32.xlu0 %v4634, 31
        %v4926 = vpop.permute.xlu0 %4925
        %4927 = vrot.lane.b32.xlu0 %v4671, 31
        %v4928 = vpop.permute.xlu0 %4927
        %4929 = vrot.lane.b32.xlu0 %v4675, 31
        %v4930 = vpop.permute.xlu0 %4929
        %4931 = vrot.lane.b32.xlu0 %v4673, 31
        %v4932 = vpop.permute.xlu0 %4931
        %4933 = vrot.lane.b32.xlu0 %v4677, 31
        %v4934 = vpop.permute.xlu0 %4933
        %v4935 = vsel %vm2253, %v4928, %v4932
        %v4936 = vsel %vm2253, %v4930, %v4934
        %v4937 = vsel %vm2253, %v4924, %v4928
        %v4938 = vsel %vm2253, %v4926, %v4930
        %v4939 = vsel %vm2253, %v4920, %v4924
        %v4940 = vsel %vm2253, %v4922, %v4926
        %v4941 = vsel %vm2253, %v4916, %v4920
        %v4942 = vsel %vm2253, %v4918, %v4922
        %v4943 = vsel %vm2253, %v4912, %v4916
        %v4944 = vsel %vm2253, %v4914, %v4918
        %v4945 = vsel %vm2253, %v4908, %v4912
        %v4946 = vsel %vm2253, %v4910, %v4914
        %v4947 = vsel %vm2253, %v4904, %v4908
        %v4948 = vsel %vm2253, %v4906, %v4910
        %v4949 = vsel %vm2253, %v4932, %v4904
        %v4950 = vsel %vm2253, %v4934, %v4906
        %v4951 = vmul.f32 %v2265, %v4949
        %v4952 = vmul.f32 %v2269, %v4947
        %v4953 = vmul.f32 %v2273, %v4945
        %v4954 = vmul.f32 %v2277, %v4943
        %v4955 = vmul.f32 %v2281, %v4941
        %v4956 = vmul.f32 %v2285, %v4939
        %v4957 = vmul.f32 %v2289, %v4937
        %v4958 = vmul.f32 %v2293, %v4935
        %v4959 = vmul.f32 %v2265, %v4950
        %v4960 = vmul.f32 %v2269, %v4948
        %v4961 = vmul.f32 %v2273, %v4946
        %v4962 = vmul.f32 %v2277, %v4944
        %v4963 = vmul.f32 %v2281, %v4942
        %v4964 = vmul.f32 %v2285, %v4940
        %v4965 = vmul.f32 %v2289, %v4938
        %v4966 = vmul.f32 %v2293, %v4936
        %4967 = vrot.lane.b32.xlu0 %v3365, 1
        %v4968 = vpop.permute.xlu0 %4967
        %4969 = vrot.lane.b32.xlu0 %v3366, 1
        %v4970 = vpop.permute.xlu0 %4969
        %4971 = vrot.lane.b32.xlu0 %v3367, 1
        %v4972 = vpop.permute.xlu0 %4971
        %4973 = vrot.lane.b32.xlu0 %v3368, 1
        %v4974 = vpop.permute.xlu0 %4973
        %4975 = vrot.lane.b32.xlu0 %v3369, 1
        %v4976 = vpop.permute.xlu0 %4975
        %4977 = vrot.lane.b32.xlu0 %v3370, 1
        %v4978 = vpop.permute.xlu0 %4977
        %4979 = vrot.lane.b32.xlu0 %v3371, 1
        %v4980 = vpop.permute.xlu0 %4979
        %4981 = vrot.lane.b32.xlu0 %v3372, 1
        %v4982 = vpop.permute.xlu0 %4981
        %v4983 = vsel %vm1941, %v4980, %v4982
        %v4984 = vsel %vm1941, %v4978, %v4980
        %v4985 = vsel %vm1941, %v4976, %v4978
        %v4986 = vsel %vm1941, %v4974, %v4976
        %v4987 = vsel %vm1941, %v4972, %v4974
        %v4988 = vsel %vm1941, %v4970, %v4972
        %v4989 = vsel %vm1941, %v4968, %v4970
        %v4990 = vsel %vm1941, %v4982, %v4968
        %v4991 = vmul.f32 %v2329, %v4990
        %v4992 = vmul.f32 %v2333, %v4989
        %v4993 = vmul.f32 %v2337, %v4988
        %v4994 = vmul.f32 %v2341, %v4987
        %v4995 = vmul.f32 %v2345, %v4986
        %v4996 = vmul.f32 %v2349, %v4985
        %v4997 = vmul.f32 %v2353, %v4984
        %v4998 = vmul.f32 %v2357, %v4983
        %4999 = vrot.lane.b32.xlu0 %v4542, 1
        %v5000 = vpop.permute.xlu0 %4999
        %5001 = vrot.lane.b32.xlu0 %v4546, 1
        %v5002 = vpop.permute.xlu0 %5001
        %5003 = vrot.lane.b32.xlu0 %v4544, 1
        %v5004 = vpop.permute.xlu0 %5003
        %5005 = vrot.lane.b32.xlu0 %v4548, 1
        %v5006 = vpop.permute.xlu0 %5005
        %5007 = vrot.lane.b32.xlu0 %v4585, 1
        %v5008 = vpop.permute.xlu0 %5007
        %5009 = vrot.lane.b32.xlu0 %v4589, 1
        %v5010 = vpop.permute.xlu0 %5009
        %5011 = vrot.lane.b32.xlu0 %v4587, 1
        %v5012 = vpop.permute.xlu0 %5011
        %5013 = vrot.lane.b32.xlu0 %v4591, 1
        %v5014 = vpop.permute.xlu0 %5013
        %5015 = vrot.lane.b32.xlu0 %v4628, 1
        %v5016 = vpop.permute.xlu0 %5015
        %5017 = vrot.lane.b32.xlu0 %v4632, 1
        %v5018 = vpop.permute.xlu0 %5017
        %5019 = vrot.lane.b32.xlu0 %v4630, 1
        %v5020 = vpop.permute.xlu0 %5019
        %5021 = vrot.lane.b32.xlu0 %v4634, 1
        %v5022 = vpop.permute.xlu0 %5021
        %5023 = vrot.lane.b32.xlu0 %v4671, 1
        %v5024 = vpop.permute.xlu0 %5023
        %5025 = vrot.lane.b32.xlu0 %v4675, 1
        %v5026 = vpop.permute.xlu0 %5025
        %5027 = vrot.lane.b32.xlu0 %v4673, 1
        %v5028 = vpop.permute.xlu0 %5027
        %5029 = vrot.lane.b32.xlu0 %v4677, 1
        %v5030 = vpop.permute.xlu0 %5029
        %v5031 = vsel %vm1941, %v5024, %v5028
        %v5032 = vsel %vm1941, %v5026, %v5030
        %v5033 = vsel %vm1941, %v5020, %v5024
        %v5034 = vsel %vm1941, %v5022, %v5026
        %v5035 = vsel %vm1941, %v5016, %v5020
        %v5036 = vsel %vm1941, %v5018, %v5022
        %v5037 = vsel %vm1941, %v5012, %v5016
        %v5038 = vsel %vm1941, %v5014, %v5018
        %v5039 = vsel %vm1941, %v5008, %v5012
        %v5040 = vsel %vm1941, %v5010, %v5014
        %v5041 = vsel %vm1941, %v5004, %v5008
        %v5042 = vsel %vm1941, %v5006, %v5010
        %v5043 = vsel %vm1941, %v5000, %v5004
        %v5044 = vsel %vm1941, %v5002, %v5006
        %v5045 = vsel %vm1941, %v5028, %v5000
        %v5046 = vsel %vm1941, %v5030, %v5002
        %v5047 = vmul.f32 %v2329, %v5045
        %v5048 = vmul.f32 %v2333, %v5043
        %v5049 = vmul.f32 %v2337, %v5041
        %v5050 = vmul.f32 %v2341, %v5039
        %v5051 = vmul.f32 %v2345, %v5037
        %v5052 = vmul.f32 %v2349, %v5035
        %v5053 = vmul.f32 %v2353, %v5033
        %v5054 = vmul.f32 %v2357, %v5031
        %v5055 = vmul.f32 %v2329, %v5046
        %v5056 = vmul.f32 %v2333, %v5044
        %v5057 = vmul.f32 %v2337, %v5042
        %v5058 = vmul.f32 %v2341, %v5040
        %v5059 = vmul.f32 %v2345, %v5038
        %v5060 = vmul.f32 %v2349, %v5036
        %v5061 = vmul.f32 %v2353, %v5034
        %v5062 = vmul.f32 %v2357, %v5032
        %5063 = vrot.lane.b32.xlu0 %v3365, 127
        %v5064 = vpop.permute.xlu0 %5063
        %5065 = vrot.lane.b32.xlu0 %v3366, 127
        %v5066 = vpop.permute.xlu0 %5065
        %5067 = vrot.lane.b32.xlu0 %v3367, 127
        %v5068 = vpop.permute.xlu0 %5067
        %5069 = vrot.lane.b32.xlu0 %v3368, 127
        %v5070 = vpop.permute.xlu0 %5069
        %5071 = vrot.lane.b32.xlu0 %v3369, 127
        %v5072 = vpop.permute.xlu0 %5071
        %5073 = vrot.lane.b32.xlu0 %v3370, 127
        %v5074 = vpop.permute.xlu0 %5073
        %5075 = vrot.lane.b32.xlu0 %v3371, 127
        %v5076 = vpop.permute.xlu0 %5075
        %5077 = vrot.lane.b32.xlu0 %v3372, 127
        %v5078 = vpop.permute.xlu0 %5077
        %v5079 = vsel %vm1958, %v5076, %v5078
        %v5080 = vsel %vm1958, %v5074, %v5076
        %v5081 = vsel %vm1958, %v5072, %v5074
        %v5082 = vsel %vm1958, %v5070, %v5072
        %v5083 = vsel %vm1958, %v5068, %v5070
        %v5084 = vsel %vm1958, %v5066, %v5068
        %v5085 = vsel %vm1958, %v5064, %v5066
        %v5086 = vsel %vm1958, %v5078, %v5064
        %v5087 = vmul.f32 %v2393, %v5085
        %v5088 = vmul.f32 %v2397, %v5084
        %v5089 = vmul.f32 %v2401, %v5083
        %v5090 = vmul.f32 %v2405, %v5082
        %v5091 = vmul.f32 %v2409, %v5081
        %v5092 = vmul.f32 %v2413, %v5080
        %v5093 = vmul.f32 %v2417, %v5079
        %v5094 = vmul.f32 %v2421, %v5086
        %5095 = vrot.lane.b32.xlu0 %v4542, 127
        %v5096 = vpop.permute.xlu0 %5095
        %5097 = vrot.lane.b32.xlu0 %v4546, 127
        %v5098 = vpop.permute.xlu0 %5097
        %5099 = vrot.lane.b32.xlu0 %v4544, 127
        %v5100 = vpop.permute.xlu0 %5099
        %5101 = vrot.lane.b32.xlu0 %v4548, 127
        %v5102 = vpop.permute.xlu0 %5101
        %5103 = vrot.lane.b32.xlu0 %v4585, 127
        %v5104 = vpop.permute.xlu0 %5103
        %5105 = vrot.lane.b32.xlu0 %v4589, 127
        %v5106 = vpop.permute.xlu0 %5105
        %5107 = vrot.lane.b32.xlu0 %v4587, 127
        %v5108 = vpop.permute.xlu0 %5107
        %5109 = vrot.lane.b32.xlu0 %v4591, 127
        %v5110 = vpop.permute.xlu0 %5109
        %5111 = vrot.lane.b32.xlu0 %v4628, 127
        %v5112 = vpop.permute.xlu0 %5111
        %5113 = vrot.lane.b32.xlu0 %v4632, 127
        %v5114 = vpop.permute.xlu0 %5113
        %5115 = vrot.lane.b32.xlu0 %v4630, 127
        %v5116 = vpop.permute.xlu0 %5115
        %5117 = vrot.lane.b32.xlu0 %v4634, 127
        %v5118 = vpop.permute.xlu0 %5117
        %5119 = vrot.lane.b32.xlu0 %v4671, 127
        %v5120 = vpop.permute.xlu0 %5119
        %5121 = vrot.lane.b32.xlu0 %v4675, 127
        %v5122 = vpop.permute.xlu0 %5121
        %5123 = vrot.lane.b32.xlu0 %v4673, 127
        %v5124 = vpop.permute.xlu0 %5123
        %5125 = vrot.lane.b32.xlu0 %v4677, 127
        %v5126 = vpop.permute.xlu0 %5125
        %v5127 = vsel %vm1958, %v5120, %v5124
        %v5128 = vsel %vm1958, %v5122, %v5126
        %v5129 = vsel %vm1958, %v5116, %v5120
        %v5130 = vsel %vm1958, %v5118, %v5122
        %v5131 = vsel %vm1958, %v5112, %v5116
        %v5132 = vsel %vm1958, %v5114, %v5118
        %v5133 = vsel %vm1958, %v5108, %v5112
        %v5134 = vsel %vm1958, %v5110, %v5114
        %v5135 = vsel %vm1958, %v5104, %v5108
        %v5136 = vsel %vm1958, %v5106, %v5110
        %v5137 = vsel %vm1958, %v5100, %v5104
        %v5138 = vsel %vm1958, %v5102, %v5106
        %v5139 = vsel %vm1958, %v5096, %v5100
        %v5140 = vsel %vm1958, %v5098, %v5102
        %v5141 = vsel %vm1958, %v5124, %v5096
        %v5142 = vsel %vm1958, %v5126, %v5098
        %v5143 = vmul.f32 %v2393, %v5139
        %v5144 = vmul.f32 %v2397, %v5137
        %v5145 = vmul.f32 %v2401, %v5135
        %v5146 = vmul.f32 %v2405, %v5133
        %v5147 = vmul.f32 %v2409, %v5131
        %v5148 = vmul.f32 %v2413, %v5129
        %v5149 = vmul.f32 %v2417, %v5127
        %v5150 = vmul.f32 %v2421, %v5141
        %v5151 = vmul.f32 %v2393, %v5140
        %v5152 = vmul.f32 %v2397, %v5138
        %v5153 = vmul.f32 %v2401, %v5136
        %v5154 = vmul.f32 %v2405, %v5134
        %v5155 = vmul.f32 %v2409, %v5132
        %v5156 = vmul.f32 %v2413, %v5130
        %v5157 = vmul.f32 %v2417, %v5128
        %v5158 = vmul.f32 %v2421, %v5142
        %5159 = vrot.lane.b32.xlu0 %v3365, 97
        %v5160 = vpop.permute.xlu0 %5159
        %5161 = vrot.lane.b32.xlu0 %v3366, 97
        %v5162 = vpop.permute.xlu0 %5161
        %5163 = vrot.lane.b32.xlu0 %v3367, 97
        %v5164 = vpop.permute.xlu0 %5163
        %5165 = vrot.lane.b32.xlu0 %v3368, 97
        %v5166 = vpop.permute.xlu0 %5165
        %5167 = vrot.lane.b32.xlu0 %v3369, 97
        %v5168 = vpop.permute.xlu0 %5167
        %5169 = vrot.lane.b32.xlu0 %v3370, 97
        %v5170 = vpop.permute.xlu0 %5169
        %5171 = vrot.lane.b32.xlu0 %v3371, 97
        %v5172 = vpop.permute.xlu0 %5171
        %5173 = vrot.lane.b32.xlu0 %v3372, 97
        %v5174 = vpop.permute.xlu0 %5173
        %v5175 = vsel %vm2446, %v5172, %v5174
        %v5176 = vsel %vm2446, %v5170, %v5172
        %v5177 = vsel %vm2446, %v5168, %v5170
        %v5178 = vsel %vm2446, %v5166, %v5168
        %v5179 = vsel %vm2446, %v5164, %v5166
        %v5180 = vsel %vm2446, %v5162, %v5164
        %v5181 = vsel %vm2446, %v5160, %v5162
        %v5182 = vsel %vm2446, %v5174, %v5160
        %v5183 = vmul.f32 %v2458, %v5181
        %v5184 = vmul.f32 %v2462, %v5180
        %v5185 = vmul.f32 %v2466, %v5179
        %v5186 = vmul.f32 %v2470, %v5178
        %v5187 = vmul.f32 %v2474, %v5177
        %v5188 = vmul.f32 %v2478, %v5176
        %v5189 = vmul.f32 %v2482, %v5175
        %v5190 = vmul.f32 %v2486, %v5182
        %5191 = vrot.lane.b32.xlu0 %v4542, 97
        %v5192 = vpop.permute.xlu0 %5191
        %5193 = vrot.lane.b32.xlu0 %v4546, 97
        %v5194 = vpop.permute.xlu0 %5193
        %5195 = vrot.lane.b32.xlu0 %v4544, 97
        %v5196 = vpop.permute.xlu0 %5195
        %5197 = vrot.lane.b32.xlu0 %v4548, 97
        %v5198 = vpop.permute.xlu0 %5197
        %5199 = vrot.lane.b32.xlu0 %v4585, 97
        %v5200 = vpop.permute.xlu0 %5199
        %5201 = vrot.lane.b32.xlu0 %v4589, 97
        %v5202 = vpop.permute.xlu0 %5201
        %5203 = vrot.lane.b32.xlu0 %v4587, 97
        %v5204 = vpop.permute.xlu0 %5203
        %5205 = vrot.lane.b32.xlu0 %v4591, 97
        %v5206 = vpop.permute.xlu0 %5205
        %5207 = vrot.lane.b32.xlu0 %v4628, 97
        %v5208 = vpop.permute.xlu0 %5207
        %5209 = vrot.lane.b32.xlu0 %v4632, 97
        %v5210 = vpop.permute.xlu0 %5209
        %5211 = vrot.lane.b32.xlu0 %v4630, 97
        %v5212 = vpop.permute.xlu0 %5211
        %5213 = vrot.lane.b32.xlu0 %v4634, 97
        %v5214 = vpop.permute.xlu0 %5213
        %5215 = vrot.lane.b32.xlu0 %v4671, 97
        %v5216 = vpop.permute.xlu0 %5215
        %5217 = vrot.lane.b32.xlu0 %v4675, 97
        %v5218 = vpop.permute.xlu0 %5217
        %5219 = vrot.lane.b32.xlu0 %v4673, 97
        %v5220 = vpop.permute.xlu0 %5219
        %5221 = vrot.lane.b32.xlu0 %v4677, 97
        %v5222 = vpop.permute.xlu0 %5221
        %v5223 = vsel %vm2446, %v5216, %v5220
        %v5224 = vsel %vm2446, %v5218, %v5222
        %v5225 = vsel %vm2446, %v5212, %v5216
        %v5226 = vsel %vm2446, %v5214, %v5218
        %v5227 = vsel %vm2446, %v5208, %v5212
        %v5228 = vsel %vm2446, %v5210, %v5214
        %v5229 = vsel %vm2446, %v5204, %v5208
        %v5230 = vsel %vm2446, %v5206, %v5210
        %v5231 = vsel %vm2446, %v5200, %v5204
        %v5232 = vsel %vm2446, %v5202, %v5206
        %v5233 = vsel %vm2446, %v5196, %v5200
        %v5234 = vsel %vm2446, %v5198, %v5202
        %v5235 = vsel %vm2446, %v5192, %v5196
        %v5236 = vsel %vm2446, %v5194, %v5198
        %v5237 = vsel %vm2446, %v5220, %v5192
        %v5238 = vsel %vm2446, %v5222, %v5194
        %v5239 = vmul.f32 %v2458, %v5235
        %v5240 = vmul.f32 %v2462, %v5233
        %v5241 = vmul.f32 %v2466, %v5231
        %v5242 = vmul.f32 %v2470, %v5229
        %v5243 = vmul.f32 %v2474, %v5227
        %v5244 = vmul.f32 %v2478, %v5225
        %v5245 = vmul.f32 %v2482, %v5223
        %v5246 = vmul.f32 %v2486, %v5237
        %v5247 = vmul.f32 %v2458, %v5236
        %v5248 = vmul.f32 %v2462, %v5234
        %v5249 = vmul.f32 %v2466, %v5232
        %v5250 = vmul.f32 %v2470, %v5230
        %v5251 = vmul.f32 %v2474, %v5228
        %v5252 = vmul.f32 %v2478, %v5226
        %v5253 = vmul.f32 %v2482, %v5224
        %v5254 = vmul.f32 %v2486, %v5238
        %5255 = vrot.lane.b32.xlu0 %v3365, 96
        %v5256 = vpop.permute.xlu0 %5255
        %5257 = vrot.lane.b32.xlu0 %v3366, 96
        %v5258 = vpop.permute.xlu0 %5257
        %5259 = vrot.lane.b32.xlu0 %v3367, 96
        %v5260 = vpop.permute.xlu0 %5259
        %5261 = vrot.lane.b32.xlu0 %v3368, 96
        %v5262 = vpop.permute.xlu0 %5261
        %5263 = vrot.lane.b32.xlu0 %v3369, 96
        %v5264 = vpop.permute.xlu0 %5263
        %5265 = vrot.lane.b32.xlu0 %v3370, 96
        %v5266 = vpop.permute.xlu0 %5265
        %5267 = vrot.lane.b32.xlu0 %v3371, 96
        %v5268 = vpop.permute.xlu0 %5267
        %5269 = vrot.lane.b32.xlu0 %v3372, 96
        %v5270 = vpop.permute.xlu0 %5269
        %v5271 = vsel %vm2511, %v5268, %v5270
        %v5272 = vsel %vm2511, %v5266, %v5268
        %v5273 = vsel %vm2511, %v5264, %v5266
        %v5274 = vsel %vm2511, %v5262, %v5264
        %v5275 = vsel %vm2511, %v5260, %v5262
        %v5276 = vsel %vm2511, %v5258, %v5260
        %v5277 = vsel %vm2511, %v5256, %v5258
        %v5278 = vsel %vm2511, %v5270, %v5256
        %v5279 = vmul.f32 %v2523, %v5277
        %v5280 = vmul.f32 %v2527, %v5276
        %v5281 = vmul.f32 %v2531, %v5275
        %v5282 = vmul.f32 %v2535, %v5274
        %v5283 = vmul.f32 %v2539, %v5273
        %v5284 = vmul.f32 %v2543, %v5272
        %v5285 = vmul.f32 %v2547, %v5271
        %v5286 = vmul.f32 %v2551, %v5278
        %5287 = vrot.lane.b32.xlu0 %v4542, 96
        %v5288 = vpop.permute.xlu0 %5287
        %5289 = vrot.lane.b32.xlu0 %v4546, 96
        %v5290 = vpop.permute.xlu0 %5289
        %5291 = vrot.lane.b32.xlu0 %v4544, 96
        %v5292 = vpop.permute.xlu0 %5291
        %5293 = vrot.lane.b32.xlu0 %v4548, 96
        %v5294 = vpop.permute.xlu0 %5293
        %5295 = vrot.lane.b32.xlu0 %v4585, 96
        %v5296 = vpop.permute.xlu0 %5295
        %5297 = vrot.lane.b32.xlu0 %v4589, 96
        %v5298 = vpop.permute.xlu0 %5297
        %5299 = vrot.lane.b32.xlu0 %v4587, 96
        %v5300 = vpop.permute.xlu0 %5299
        %5301 = vrot.lane.b32.xlu0 %v4591, 96
        %v5302 = vpop.permute.xlu0 %5301
        %5303 = vrot.lane.b32.xlu0 %v4628, 96
        %v5304 = vpop.permute.xlu0 %5303
        %5305 = vrot.lane.b32.xlu0 %v4632, 96
        %v5306 = vpop.permute.xlu0 %5305
        %5307 = vrot.lane.b32.xlu0 %v4630, 96
        %v5308 = vpop.permute.xlu0 %5307
        %5309 = vrot.lane.b32.xlu0 %v4634, 96
        %v5310 = vpop.permute.xlu0 %5309
        %5311 = vrot.lane.b32.xlu0 %v4671, 96
        %v5312 = vpop.permute.xlu0 %5311
        %5313 = vrot.lane.b32.xlu0 %v4675, 96
        %v5314 = vpop.permute.xlu0 %5313
        %5315 = vrot.lane.b32.xlu0 %v4673, 96
        %v5316 = vpop.permute.xlu0 %5315
        %5317 = vrot.lane.b32.xlu0 %v4677, 96
        %v5318 = vpop.permute.xlu0 %5317
        %v5319 = vsel %vm2511, %v5312, %v5316
        %v5320 = vsel %vm2511, %v5314, %v5318
        %v5321 = vsel %vm2511, %v5308, %v5312
        %v5322 = vsel %vm2511, %v5310, %v5314
        %v5323 = vsel %vm2511, %v5304, %v5308
        %v5324 = vsel %vm2511, %v5306, %v5310
        %v5325 = vsel %vm2511, %v5300, %v5304
        %v5326 = vsel %vm2511, %v5302, %v5306
        %v5327 = vsel %vm2511, %v5296, %v5300
        %v5328 = vsel %vm2511, %v5298, %v5302
        %v5329 = vsel %vm2511, %v5292, %v5296
        %v5330 = vsel %vm2511, %v5294, %v5298
        %v5331 = vsel %vm2511, %v5288, %v5292
        %v5332 = vsel %vm2511, %v5290, %v5294
        %v5333 = vsel %vm2511, %v5316, %v5288
        %v5334 = vsel %vm2511, %v5318, %v5290
        %v5335 = vmul.f32 %v2523, %v5331
        %v5336 = vmul.f32 %v2527, %v5329
        %v5337 = vmul.f32 %v2531, %v5327
        %v5338 = vmul.f32 %v2535, %v5325
        %v5339 = vmul.f32 %v2539, %v5323
        %v5340 = vmul.f32 %v2543, %v5321
        %v5341 = vmul.f32 %v2547, %v5319
        %v5342 = vmul.f32 %v2551, %v5333
        %v5343 = vmul.f32 %v2523, %v5332
        %v5344 = vmul.f32 %v2527, %v5330
        %v5345 = vmul.f32 %v2531, %v5328
        %v5346 = vmul.f32 %v2535, %v5326
        %v5347 = vmul.f32 %v2539, %v5324
        %v5348 = vmul.f32 %v2543, %v5322
        %v5349 = vmul.f32 %v2547, %v5320
        %v5350 = vmul.f32 %v2551, %v5334
        %5351 = vrot.lane.b32.xlu0 %v3365, 95
        %v5352 = vpop.permute.xlu0 %5351
        %5353 = vrot.lane.b32.xlu0 %v3366, 95
        %v5354 = vpop.permute.xlu0 %5353
        %5355 = vrot.lane.b32.xlu0 %v3367, 95
        %v5356 = vpop.permute.xlu0 %5355
        %5357 = vrot.lane.b32.xlu0 %v3368, 95
        %v5358 = vpop.permute.xlu0 %5357
        %5359 = vrot.lane.b32.xlu0 %v3369, 95
        %v5360 = vpop.permute.xlu0 %5359
        %5361 = vrot.lane.b32.xlu0 %v3370, 95
        %v5362 = vpop.permute.xlu0 %5361
        %5363 = vrot.lane.b32.xlu0 %v3371, 95
        %v5364 = vpop.permute.xlu0 %5363
        %5365 = vrot.lane.b32.xlu0 %v3372, 95
        %v5366 = vpop.permute.xlu0 %5365
        %v5367 = vsel %vm2576, %v5364, %v5366
        %v5368 = vsel %vm2576, %v5362, %v5364
        %v5369 = vsel %vm2576, %v5360, %v5362
        %v5370 = vsel %vm2576, %v5358, %v5360
        %v5371 = vsel %vm2576, %v5356, %v5358
        %v5372 = vsel %vm2576, %v5354, %v5356
        %v5373 = vsel %vm2576, %v5352, %v5354
        %v5374 = vsel %vm2576, %v5366, %v5352
        %v5375 = vmul.f32 %v2588, %v5373
        %v5376 = vmul.f32 %v2592, %v5372
        %v5377 = vmul.f32 %v2596, %v5371
        %v5378 = vmul.f32 %v2600, %v5370
        %v5379 = vmul.f32 %v2604, %v5369
        %v5380 = vmul.f32 %v2608, %v5368
        %v5381 = vmul.f32 %v2612, %v5367
        %v5382 = vmul.f32 %v2616, %v5374
        %5383 = vrot.lane.b32.xlu0 %v4542, 95
        %v5384 = vpop.permute.xlu0 %5383
        %5385 = vrot.lane.b32.xlu0 %v4546, 95
        %v5386 = vpop.permute.xlu0 %5385
        %5387 = vrot.lane.b32.xlu0 %v4544, 95
        %v5388 = vpop.permute.xlu0 %5387
        %5389 = vrot.lane.b32.xlu0 %v4548, 95
        %v5390 = vpop.permute.xlu0 %5389
        %5391 = vrot.lane.b32.xlu0 %v4585, 95
        %v5392 = vpop.permute.xlu0 %5391
        %5393 = vrot.lane.b32.xlu0 %v4589, 95
        %v5394 = vpop.permute.xlu0 %5393
        %5395 = vrot.lane.b32.xlu0 %v4587, 95
        %v5396 = vpop.permute.xlu0 %5395
        %5397 = vrot.lane.b32.xlu0 %v4591, 95
        %v5398 = vpop.permute.xlu0 %5397
        %5399 = vrot.lane.b32.xlu0 %v4628, 95
        %v5400 = vpop.permute.xlu0 %5399
        %5401 = vrot.lane.b32.xlu0 %v4632, 95
        %v5402 = vpop.permute.xlu0 %5401
        %5403 = vrot.lane.b32.xlu0 %v4630, 95
        %v5404 = vpop.permute.xlu0 %5403
        %5405 = vrot.lane.b32.xlu0 %v4634, 95
        %v5406 = vpop.permute.xlu0 %5405
        %5407 = vrot.lane.b32.xlu0 %v4671, 95
        %v5408 = vpop.permute.xlu0 %5407
        %5409 = vrot.lane.b32.xlu0 %v4675, 95
        %v5410 = vpop.permute.xlu0 %5409
        %5411 = vrot.lane.b32.xlu0 %v4673, 95
        %v5412 = vpop.permute.xlu0 %5411
        %5413 = vrot.lane.b32.xlu0 %v4677, 95
        %v5414 = vpop.permute.xlu0 %5413
        %v5415 = vsel %vm2576, %v5408, %v5412
        %v5416 = vsel %vm2576, %v5410, %v5414
        %v5417 = vsel %vm2576, %v5404, %v5408
        %v5418 = vsel %vm2576, %v5406, %v5410
        %v5419 = vsel %vm2576, %v5400, %v5404
        %v5420 = vsel %vm2576, %v5402, %v5406
        %v5421 = vsel %vm2576, %v5396, %v5400
        %v5422 = vsel %vm2576, %v5398, %v5402
        %v5423 = vsel %vm2576, %v5392, %v5396
        %v5424 = vsel %vm2576, %v5394, %v5398
        %v5425 = vsel %vm2576, %v5388, %v5392
        %v5426 = vsel %vm2576, %v5390, %v5394
        %v5427 = vsel %vm2576, %v5384, %v5388
        %v5428 = vsel %vm2576, %v5386, %v5390
        %v5429 = vsel %vm2576, %v5412, %v5384
        %v5430 = vsel %vm2576, %v5414, %v5386
        %v5431 = vmul.f32 %v2588, %v5427
        %v5432 = vmul.f32 %v2592, %v5425
        %v5433 = vmul.f32 %v2596, %v5423
        %v5434 = vmul.f32 %v2600, %v5421
        %v5435 = vmul.f32 %v2604, %v5419
        %v5436 = vmul.f32 %v2608, %v5417
        %v5437 = vmul.f32 %v2612, %v5415
        %v5438 = vmul.f32 %v2616, %v5429
        %v5439 = vmul.f32 %v2588, %v5428
        %v5440 = vmul.f32 %v2592, %v5426
        %v5441 = vmul.f32 %v2596, %v5424
        %v5442 = vmul.f32 %v2600, %v5422
        %v5443 = vmul.f32 %v2604, %v5420
        %v5444 = vmul.f32 %v2608, %v5418
        %v5445 = vmul.f32 %v2612, %v5416
        %v5446 = vmul.f32 %v2616, %v5430
        %v5447 = vpack.c.bf16 %v4759, %v4703
        %v5448 = vpack.c.bf16 %v4760, %v4704
        %v5449 = vpack.c.bf16 %v4761, %v4705
        %v5450 = vpack.c.bf16 %v4762, %v4706
        %v5451 = vpack.c.bf16 %v4763, %v4707
        %v5452 = vpack.c.bf16 %v4764, %v4708
        %v5453 = vpack.c.bf16 %v4765, %v4709
        %v5454 = vpack.c.bf16 %v4766, %v4710
        %v5455 = vpack.c.bf16 %v4799, %v4767
        %v5456 = vpack.c.bf16 %v4800, %v4768
        %v5457 = vpack.c.bf16 %v4801, %v4769
        %v5458 = vpack.c.bf16 %v4802, %v4770
        %v5459 = vpack.c.bf16 %v4803, %v4771
        %v5460 = vpack.c.bf16 %v4804, %v4772
        %v5461 = vpack.c.bf16 %v4805, %v4773
        %v5462 = vpack.c.bf16 %v4806, %v4774
        %v5463 = vpack.c.bf16 %v4863, %v4855
        %v5464 = vpack.c.bf16 %v4864, %v4856
        %v5465 = vpack.c.bf16 %v4865, %v4857
        %v5466 = vpack.c.bf16 %v4866, %v4858
        %v5467 = vpack.c.bf16 %v4867, %v4859
        %v5468 = vpack.c.bf16 %v4868, %v4860
        %v5469 = vpack.c.bf16 %v4869, %v4861
        %v5470 = vpack.c.bf16 %v4870, %v4862
        %v5471 = vpack.c.bf16 %v4951, %v4895
        %v5472 = vpack.c.bf16 %v4952, %v4896
        %v5473 = vpack.c.bf16 %v4953, %v4897
        %v5474 = vpack.c.bf16 %v4954, %v4898
        %v5475 = vpack.c.bf16 %v4955, %v4899
        %v5476 = vpack.c.bf16 %v4956, %v4900
        %v5477 = vpack.c.bf16 %v4957, %v4901
        %v5478 = vpack.c.bf16 %v4958, %v4902
        %v5479 = vpack.c.bf16 %v4991, %v4959
        %v5480 = vpack.c.bf16 %v4992, %v4960
        %v5481 = vpack.c.bf16 %v4993, %v4961
        %v5482 = vpack.c.bf16 %v4994, %v4962
        %v5483 = vpack.c.bf16 %v4995, %v4963
        %v5484 = vpack.c.bf16 %v4996, %v4964
        %v5485 = vpack.c.bf16 %v4997, %v4965
        %v5486 = vpack.c.bf16 %v4998, %v4966
        %v5487 = vpack.c.bf16 %v5055, %v5047
        %v5488 = vpack.c.bf16 %v5056, %v5048
        %v5489 = vpack.c.bf16 %v5057, %v5049
        %v5490 = vpack.c.bf16 %v5058, %v5050
        %v5491 = vpack.c.bf16 %v5059, %v5051
        %v5492 = vpack.c.bf16 %v5060, %v5052
        %v5493 = vpack.c.bf16 %v5061, %v5053
        %v5494 = vpack.c.bf16 %v5062, %v5054
        %v5495 = vpack.c.bf16 %v4542, %v3365
        %v5496 = vpack.c.bf16 %v4544, %v3366
        %v5497 = vpack.c.bf16 %v4585, %v3367
        %v5498 = vpack.c.bf16 %v4587, %v3368
        %v5499 = vpack.c.bf16 %v4628, %v3369
        %v5500 = vpack.c.bf16 %v4630, %v3370
        %v5501 = vpack.c.bf16 %v4671, %v3371
        %v5502 = vpack.c.bf16 %v4673, %v3372
        %v5503 = vpack.c.bf16 %v5087, %v4546
        %v5504 = vpack.c.bf16 %v5088, %v4548
        %v5505 = vpack.c.bf16 %v5089, %v4589
        %v5506 = vpack.c.bf16 %v5090, %v4591
        %v5507 = vpack.c.bf16 %v5091, %v4632
        %v5508 = vpack.c.bf16 %v5092, %v4634
        %v5509 = vpack.c.bf16 %v5093, %v4675
        %v5510 = vpack.c.bf16 %v5094, %v4677
        %v5511 = vpack.c.bf16 %v5151, %v5143
        %v5512 = vpack.c.bf16 %v5152, %v5144
        %v5513 = vpack.c.bf16 %v5153, %v5145
        %v5514 = vpack.c.bf16 %v5154, %v5146
        %v5515 = vpack.c.bf16 %v5155, %v5147
        %v5516 = vpack.c.bf16 %v5156, %v5148
        %v5517 = vpack.c.bf16 %v5157, %v5149
        %v5518 = vpack.c.bf16 %v5158, %v5150
        %v5519 = vpack.c.bf16 %v5239, %v5183
        %v5520 = vpack.c.bf16 %v5240, %v5184
        %v5521 = vpack.c.bf16 %v5241, %v5185
        %v5522 = vpack.c.bf16 %v5242, %v5186
        %v5523 = vpack.c.bf16 %v5243, %v5187
        %v5524 = vpack.c.bf16 %v5244, %v5188
        %v5525 = vpack.c.bf16 %v5245, %v5189
        %v5526 = vpack.c.bf16 %v5246, %v5190
        %v5527 = vpack.c.bf16 %v5279, %v5247
        %v5528 = vpack.c.bf16 %v5280, %v5248
        %v5529 = vpack.c.bf16 %v5281, %v5249
        %v5530 = vpack.c.bf16 %v5282, %v5250
        %v5531 = vpack.c.bf16 %v5283, %v5251
        %v5532 = vpack.c.bf16 %v5284, %v5252
        %v5533 = vpack.c.bf16 %v5285, %v5253
        %v5534 = vpack.c.bf16 %v5286, %v5254
        %v5535 = vpack.c.bf16 %v5343, %v5335
        %v5536 = vpack.c.bf16 %v5344, %v5336
        %v5537 = vpack.c.bf16 %v5345, %v5337
        %v5538 = vpack.c.bf16 %v5346, %v5338
        %v5539 = vpack.c.bf16 %v5347, %v5339
        %v5540 = vpack.c.bf16 %v5348, %v5340
        %v5541 = vpack.c.bf16 %v5349, %v5341
        %v5542 = vpack.c.bf16 %v5350, %v5342
        %v5543 = vpack.c.bf16 %v5431, %v5375
        %v5544 = vpack.c.bf16 %v5432, %v5376
        %v5545 = vpack.c.bf16 %v5433, %v5377
        %v5546 = vpack.c.bf16 %v5434, %v5378
        %v5547 = vpack.c.bf16 %v5435, %v5379
        %v5548 = vpack.c.bf16 %v5436, %v5380
        %v5549 = vpack.c.bf16 %v5437, %v5381
        %v5550 = vpack.c.bf16 %v5438, %v5382
        %v5551 = vpack.c.bf16 %v5439, %v5439
        %v5552 = vpack.c.bf16 %v5440, %v5440
        %v5553 = vpack.c.bf16 %v5441, %v5441
        %v5554 = vpack.c.bf16 %v5442, %v5442
        %v5555 = vpack.c.bf16 %v5443, %v5443
        %v5556 = vpack.c.bf16 %v5444, %v5444
        %v5557 = vpack.c.bf16 %v5445, %v5445
        %v5558 = vpack.c.bf16 %v5446, %v5446
        %v5559 = vld [vmem:[%s18] sm:$0xff]
        %v5560 = vld [vmem:[%s18 + $0x8] sm:$0xff]
        %v5561 = vld [vmem:[%s18 + $0x10] sm:$0xff]
        %v5562 = vld [vmem:[%s19] sm:$0xff]
        %v5563 = vld [vmem:[%s19 + $0x8] sm:$0xff]
        %v5564 = vld [vmem:[%s19 + $0x10] sm:$0xff]
        %5566 = vset.pattern.permute.xlu0 0
        %5567 = vperm.xlu0 %5566, %v5562
        %v5568 = vpop.permute.xlu0 %5567
        %5571 = vset.pattern.permute.xlu0 0
        %5572 = vperm.xlu0 %5571, %v5563
        %v5573 = vpop.permute.xlu0 %5572
        %5576 = vset.pattern.permute.xlu0 0
        %5577 = vperm.xlu0 %5576, %v5564
        %v5578 = vpop.permute.xlu0 %5577
        %v5583 = vunpack.c.l.b16 %v5559
        %v5584 = vunpack.c.h.b16 %v5559
        %v5585 = vunpack.c.l.b16 %v5560
        %v5586 = vunpack.c.h.b16 %v5560
        %v5587 = vunpack.c.l.b16 %v5561
        %v5588 = vunpack.c.h.b16 %v5561
        %v5589 = vpack.c.b16 %v5585, %v5583
        %v5590 = vpack.c.b16 %v5586, %v5584
        %v5591 = vpack.c.b16 %v5587, %v5587
        %v5592 = vpack.c.b16 %v5588, %v5588
        %vm5595 = vcmask 719872
        %v5597 = vsel %vm5595, %v5590, 0
        %v5600 = vsel %vm5595, %v5592, 0
        %v5603 = vsel %vm2055, %v5551, 0
        %v5606 = vsel %vm2055, %v5552, 0
        %v5609 = vsel %vm2055, %v5553, 0
        %v5612 = vsel %vm2055, %v5554, 0
        %v5615 = vsel %vm2055, %v5555, 0
        %v5618 = vsel %vm2055, %v5556, 0
        %v5621 = vsel %vm2055, %v5557, 0
        %v5624 = vsel %vm2055, %v5558, 0
        %5626 = vmatprep.subr.bf16.mxu0 %v5504
        %5627 = vmatpush1.bf16.msra.mxu0 %v5503
        %5628 = vmatprep.subr.bf16.mxu0 %v5496
        %5629 = vmatpush1.bf16.msra.mxu0 %v5495
        %5630 = vmatprep.subr.bf16.mxu0 %v5488
        %5631 = vmatpush1.bf16.msra.mxu0 %v5487
        %5632 = vmatprep.subr.bf16.mxu0 %v5480
        %5633 = vmatpush1.bf16.msra.mxu0 %v5479
        %5634 = vmatprep.subr.bf16.mxu0 %v5472
        %5635 = vmatpush1.bf16.msra.mxu0 %v5471
        %5636 = vmatprep.subr.bf16.mxu0 %v5464
        %5637 = vmatpush1.bf16.msra.mxu0 %v5463
        %5638 = vmatprep.subr.bf16.mxu0 %v5456
        %5639 = vmatpush1.bf16.msra.mxu0 %v5455
        %5640 = vmatprep.subr.bf16.mxu0 %v5448
        %5641 = vmatpush1.bf16.msra.mxu0 %v5447
        %5642 = vmatprep.subr.bf16.mxu0 0
        %5643 = vmatpush2.bf16.msra.mxu0 0
        %5644 = vmatprep.subr.bf16.mxu0 0
        %5645 = vmatpush2.bf16.msra.mxu0 0
        %5646 = vmatprep.subr.bf16.mxu0 %v5606
        %5647 = vmatpush2.bf16.msra.mxu0 %v5603
        %5648 = vmatprep.subr.bf16.mxu0 %v5544
        %5649 = vmatpush2.bf16.msra.mxu0 %v5543
        %5650 = vmatprep.subr.bf16.mxu0 %v5536
        %5651 = vmatpush2.bf16.msra.mxu0 %v5535
        %5652 = vmatprep.subr.bf16.mxu0 %v5528
        %5653 = vmatpush2.bf16.msra.mxu0 %v5527
        %5654 = vmatprep.subr.bf16.mxu0 %v5520
        %5655 = vmatpush2.bf16.msra.mxu0 %v5519
        %5656 = vmatprep.subr.bf16.mxu0 %v5512
        %5657 = vmatpush2.bf16.msra.mxu0 %v5511
        %5658 = vmatprep.mubr.bf16.mxu0 %v5597
        %5659 = vmatmul.mubr.bf16.gmra.mxu0 %v5589
        %v5660 = vpop.f32.mrf.mxu0
        %v5661 = vadd.f32 %v5568, %v5660
        %v5662 = vpop.f32.mrf.mxu0
        %v5663 = vadd.f32 %v5568, %v5662
        %v5664 = vpop.f32.mrf.mxu0
        %v5665 = vadd.f32 %v5573, %v5664
        %v5666 = vpop.f32.mrf.mxu0
        %v5667 = vadd.f32 %v5573, %v5666
        %5668 = vmatprep.mubr.bf16.mxu0 %v5600
        %5669 = vmatmul.mubr.bf16.gmra.mxu0 %v5591
        %v5670 = vpop.f32.mrf.mxu0
        %v5671 = vadd.f32 %v5578, %v5670
        %v5672 = vpop.f32.mrf.mxu0
        %v5673 = vadd.f32 %v5578, %v5672
        %v5674 = vpop.f32.mrf.mxu0
        %v5675 = vpop.f32.mrf.mxu0
        %5676 = vdwg.mxu0
        %5677 = vmatprep.subr.bf16.mxu0 %v5506
        %5678 = vmatpush1.bf16.msra.mxu0 %v5505
        %5679 = vmatprep.subr.bf16.mxu0 %v5498
        %5680 = vmatpush1.bf16.msra.mxu0 %v5497
        %5681 = vmatprep.subr.bf16.mxu0 %v5490
        %5682 = vmatpush1.bf16.msra.mxu0 %v5489
        %5683 = vmatprep.subr.bf16.mxu0 %v5482
        %5684 = vmatpush1.bf16.msra.mxu0 %v5481
        %5685 = vmatprep.subr.bf16.mxu0 %v5474
        %5686 = vmatpush1.bf16.msra.mxu0 %v5473
        %5687 = vmatprep.subr.bf16.mxu0 %v5466
        %5688 = vmatpush1.bf16.msra.mxu0 %v5465
        %5689 = vmatprep.subr.bf16.mxu0 %v5458
        %5690 = vmatpush1.bf16.msra.mxu0 %v5457
        %5691 = vmatprep.subr.bf16.mxu0 %v5450
        %5692 = vmatpush1.bf16.msra.mxu0 %v5449
        %5693 = vmatprep.subr.bf16.mxu0 0
        %5694 = vmatpush2.bf16.msra.mxu0 0
        %5695 = vmatprep.subr.bf16.mxu0 0
        %5696 = vmatpush2.bf16.msra.mxu0 0
        %5697 = vmatprep.subr.bf16.mxu0 %v5612
        %5698 = vmatpush2.bf16.msra.mxu0 %v5609
        %5699 = vmatprep.subr.bf16.mxu0 %v5546
        %5700 = vmatpush2.bf16.msra.mxu0 %v5545
        %5701 = vmatprep.subr.bf16.mxu0 %v5538
        %5702 = vmatpush2.bf16.msra.mxu0 %v5537
        %5703 = vmatprep.subr.bf16.mxu0 %v5530
        %5704 = vmatpush2.bf16.msra.mxu0 %v5529
        %5705 = vmatprep.subr.bf16.mxu0 %v5522
        %5706 = vmatpush2.bf16.msra.mxu0 %v5521
        %5707 = vmatprep.subr.bf16.mxu0 %v5514
        %5708 = vmatpush2.bf16.msra.mxu0 %v5513
        %5709 = vmatprep.mubr.bf16.mxu0 %v5597
        %5710 = vmatmul.mubr.bf16.gmra.mxu0 %v5589
        %v5711 = vpop.f32.mrf.mxu0
        %v5712 = vadd.f32 %v5568, %v5711
        %v5713 = vpop.f32.mrf.mxu0
        %v5714 = vadd.f32 %v5568, %v5713
        %v5715 = vpop.f32.mrf.mxu0
        %v5716 = vadd.f32 %v5573, %v5715
        %v5717 = vpop.f32.mrf.mxu0
        %v5718 = vadd.f32 %v5573, %v5717
        %5719 = vmatprep.mubr.bf16.mxu0 %v5600
        %5720 = vmatmul.mubr.bf16.gmra.mxu0 %v5591
        %v5721 = vpop.f32.mrf.mxu0
        %v5722 = vadd.f32 %v5578, %v5721
        %v5723 = vpop.f32.mrf.mxu0
        %v5724 = vadd.f32 %v5578, %v5723
        %v5725 = vpop.f32.mrf.mxu0
        %v5726 = vpop.f32.mrf.mxu0
        %5727 = vdwg.mxu0
        %5728 = vmatprep.subr.bf16.mxu0 %v5508
        %5729 = vmatpush1.bf16.msra.mxu0 %v5507
        %5730 = vmatprep.subr.bf16.mxu0 %v5500
        %5731 = vmatpush1.bf16.msra.mxu0 %v5499
        %5732 = vmatprep.subr.bf16.mxu0 %v5492
        %5733 = vmatpush1.bf16.msra.mxu0 %v5491
        %5734 = vmatprep.subr.bf16.mxu0 %v5484
        %5735 = vmatpush1.bf16.msra.mxu0 %v5483
        %5736 = vmatprep.subr.bf16.mxu0 %v5476
        %5737 = vmatpush1.bf16.msra.mxu0 %v5475
        %5738 = vmatprep.subr.bf16.mxu0 %v5468
        %5739 = vmatpush1.bf16.msra.mxu0 %v5467
        %5740 = vmatprep.subr.bf16.mxu0 %v5460
        %5741 = vmatpush1.bf16.msra.mxu0 %v5459
        %5742 = vmatprep.subr.bf16.mxu0 %v5452
        %5743 = vmatpush1.bf16.msra.mxu0 %v5451
        %5744 = vmatprep.subr.bf16.mxu0 0
        %5745 = vmatpush2.bf16.msra.mxu0 0
        %5746 = vmatprep.subr.bf16.mxu0 0
        %5747 = vmatpush2.bf16.msra.mxu0 0
        %5748 = vmatprep.subr.bf16.mxu0 %v5618
        %5749 = vmatpush2.bf16.msra.mxu0 %v5615
        %5750 = vmatprep.subr.bf16.mxu0 %v5548
        %5751 = vmatpush2.bf16.msra.mxu0 %v5547
        %5752 = vmatprep.subr.bf16.mxu0 %v5540
        %5753 = vmatpush2.bf16.msra.mxu0 %v5539
        %5754 = vmatprep.subr.bf16.mxu0 %v5532
        %5755 = vmatpush2.bf16.msra.mxu0 %v5531
        %5756 = vmatprep.subr.bf16.mxu0 %v5524
        %5757 = vmatpush2.bf16.msra.mxu0 %v5523
        %5758 = vmatprep.subr.bf16.mxu0 %v5516
        %5759 = vmatpush2.bf16.msra.mxu0 %v5515
        %5760 = vmatprep.mubr.bf16.mxu0 %v5597
        %5761 = vmatmul.mubr.bf16.gmra.mxu0 %v5589
        %v5762 = vpop.f32.mrf.mxu0
        %v5763 = vadd.f32 %v5568, %v5762
        %v5764 = vpop.f32.mrf.mxu0
        %v5765 = vadd.f32 %v5568, %v5764
        %v5766 = vpop.f32.mrf.mxu0
        %v5767 = vadd.f32 %v5573, %v5766
        %v5768 = vpop.f32.mrf.mxu0
        %v5769 = vadd.f32 %v5573, %v5768
        %5770 = vmatprep.mubr.bf16.mxu0 %v5600
        %5771 = vmatmul.mubr.bf16.gmra.mxu0 %v5591
        %v5772 = vpop.f32.mrf.mxu0
        %v5773 = vadd.f32 %v5578, %v5772
        %v5774 = vpop.f32.mrf.mxu0
        %v5775 = vadd.f32 %v5578, %v5774
        %v5776 = vpop.f32.mrf.mxu0
        %v5777 = vpop.f32.mrf.mxu0
        %5778 = vdwg.mxu0
        %5779 = vmatprep.subr.bf16.mxu0 %v5510
        %5780 = vmatpush1.bf16.msra.mxu0 %v5509
        %5781 = vmatprep.subr.bf16.mxu0 %v5502
        %5782 = vmatpush1.bf16.msra.mxu0 %v5501
        %5783 = vmatprep.subr.bf16.mxu0 %v5494
        %5784 = vmatpush1.bf16.msra.mxu0 %v5493
        %5785 = vmatprep.subr.bf16.mxu0 %v5486
        %5786 = vmatpush1.bf16.msra.mxu0 %v5485
        %5787 = vmatprep.subr.bf16.mxu0 %v5478
        %5788 = vmatpush1.bf16.msra.mxu0 %v5477
        %5789 = vmatprep.subr.bf16.mxu0 %v5470
        %5790 = vmatpush1.bf16.msra.mxu0 %v5469
        %5791 = vmatprep.subr.bf16.mxu0 %v5462
        %5792 = vmatpush1.bf16.msra.mxu0 %v5461
        %5793 = vmatprep.subr.bf16.mxu0 %v5454
        %5794 = vmatpush1.bf16.msra.mxu0 %v5453
        %5795 = vmatprep.subr.bf16.mxu0 0
        %5796 = vmatpush2.bf16.msra.mxu0 0
        %5797 = vmatprep.subr.bf16.mxu0 0
        %5798 = vmatpush2.bf16.msra.mxu0 0
        %5799 = vmatprep.subr.bf16.mxu0 %v5624
        %5800 = vmatpush2.bf16.msra.mxu0 %v5621
        %5801 = vmatprep.subr.bf16.mxu0 %v5550
        %5802 = vmatpush2.bf16.msra.mxu0 %v5549
        %5803 = vmatprep.subr.bf16.mxu0 %v5542
        %5804 = vmatpush2.bf16.msra.mxu0 %v5541
        %5805 = vmatprep.subr.bf16.mxu0 %v5534
        %5806 = vmatpush2.bf16.msra.mxu0 %v5533
        %5807 = vmatprep.subr.bf16.mxu0 %v5526
        %5808 = vmatpush2.bf16.msra.mxu0 %v5525
        %5809 = vmatprep.subr.bf16.mxu0 %v5518
        %5810 = vmatpush2.bf16.msra.mxu0 %v5517
        %5811 = vmatprep.mubr.bf16.mxu0 %v5597
        %5812 = vmatmul.mubr.bf16.gmra.mxu0 %v5589
        %v5813 = vpop.f32.mrf.mxu0
        %v5814 = vadd.f32 %v5568, %v5813
        %v5815 = vpop.f32.mrf.mxu0
        %v5816 = vadd.f32 %v5568, %v5815
        %v5817 = vpop.f32.mrf.mxu0
        %v5818 = vadd.f32 %v5573, %v5817
        %v5819 = vpop.f32.mrf.mxu0
        %v5820 = vadd.f32 %v5573, %v5819
        %5821 = vmatprep.mubr.bf16.mxu0 %v5600
        %5822 = vmatmul.mubr.bf16.gmra.mxu0 %v5591
        %v5823 = vpop.f32.mrf.mxu0
        %v5824 = vadd.f32 %v5578, %v5823
        %v5825 = vpop.f32.mrf.mxu0
        %v5826 = vadd.f32 %v5578, %v5825
        %v5827 = vpop.f32.mrf.mxu0
        %v5828 = vpop.f32.mrf.mxu0
        %5829 = vdwg.mxu0
        %5830 = vrot.lane.b32.xlu0 %v5661, 33
        %v5831 = vpop.permute.xlu0 %5830
        %5832 = vrot.lane.b32.xlu0 %v5665, 33
        %v5833 = vpop.permute.xlu0 %5832
        %5834 = vrot.lane.b32.xlu0 %v5671, 33
        %v5835 = vpop.permute.xlu0 %5834
        %5836 = vrot.lane.b32.xlu0 %v5663, 33
        %v5837 = vpop.permute.xlu0 %5836
        %5838 = vrot.lane.b32.xlu0 %v5667, 33
        %v5839 = vpop.permute.xlu0 %5838
        %5840 = vrot.lane.b32.xlu0 %v5673, 33
        %v5841 = vpop.permute.xlu0 %5840
        %5842 = vrot.lane.b32.xlu0 %v5712, 33
        %v5843 = vpop.permute.xlu0 %5842
        %5844 = vrot.lane.b32.xlu0 %v5716, 33
        %v5845 = vpop.permute.xlu0 %5844
        %5846 = vrot.lane.b32.xlu0 %v5722, 33
        %v5847 = vpop.permute.xlu0 %5846
        %5848 = vrot.lane.b32.xlu0 %v5714, 33
        %v5849 = vpop.permute.xlu0 %5848
        %5850 = vrot.lane.b32.xlu0 %v5718, 33
        %v5851 = vpop.permute.xlu0 %5850
        %5852 = vrot.lane.b32.xlu0 %v5724, 33
        %v5853 = vpop.permute.xlu0 %5852
        %5854 = vrot.lane.b32.xlu0 %v5763, 33
        %v5855 = vpop.permute.xlu0 %5854
        %5856 = vrot.lane.b32.xlu0 %v5767, 33
        %v5857 = vpop.permute.xlu0 %5856
        %5858 = vrot.lane.b32.xlu0 %v5773, 33
        %v5859 = vpop.permute.xlu0 %5858
        %5860 = vrot.lane.b32.xlu0 %v5765, 33
        %v5861 = vpop.permute.xlu0 %5860
        %5862 = vrot.lane.b32.xlu0 %v5769, 33
        %v5863 = vpop.permute.xlu0 %5862
        %5864 = vrot.lane.b32.xlu0 %v5775, 33
        %v5865 = vpop.permute.xlu0 %5864
        %5866 = vrot.lane.b32.xlu0 %v5814, 33
        %v5867 = vpop.permute.xlu0 %5866
        %5868 = vrot.lane.b32.xlu0 %v5818, 33
        %v5869 = vpop.permute.xlu0 %5868
        %5870 = vrot.lane.b32.xlu0 %v5824, 33
        %v5871 = vpop.permute.xlu0 %5870
        %5872 = vrot.lane.b32.xlu0 %v5816, 33
        %v5873 = vpop.permute.xlu0 %5872
        %5874 = vrot.lane.b32.xlu0 %v5820, 33
        %v5875 = vpop.permute.xlu0 %5874
        %5876 = vrot.lane.b32.xlu0 %v5826, 33
        %v5877 = vpop.permute.xlu0 %5876
        %v5878 = vsel %vm2123, %v5867, %v5873
        %v5879 = vsel %vm2123, %v5869, %v5875
        %v5880 = vsel %vm2123, %v5871, %v5877
        %v5881 = vsel %vm2123, %v5861, %v5867
        %v5882 = vsel %vm2123, %v5863, %v5869
        %v5883 = vsel %vm2123, %v5865, %v5871
        %v5884 = vsel %vm2123, %v5855, %v5861
        %v5885 = vsel %vm2123, %v5857, %v5863
        %v5886 = vsel %vm2123, %v5859, %v5865
        %v5887 = vsel %vm2123, %v5849, %v5855
        %v5888 = vsel %vm2123, %v5851, %v5857
        %v5889 = vsel %vm2123, %v5853, %v5859
        %v5890 = vsel %vm2123, %v5843, %v5849
        %v5891 = vsel %vm2123, %v5845, %v5851
        %v5892 = vsel %vm2123, %v5847, %v5853
        %v5893 = vsel %vm2123, %v5837, %v5843
        %v5894 = vsel %vm2123, %v5839, %v5845
        %v5895 = vsel %vm2123, %v5841, %v5847
        %v5896 = vsel %vm2123, %v5831, %v5837
        %v5897 = vsel %vm2123, %v5833, %v5839
        %v5898 = vsel %vm2123, %v5835, %v5841
        %v5899 = vsel %vm2123, %v5873, %v5831
        %v5900 = vsel %vm2123, %v5875, %v5833
        %v5901 = vsel %vm2123, %v5877, %v5835
        %v5902 = vmul.f32 %v2135, %v5899
        %v5903 = vmul.f32 %v2139, %v5896
        %v5904 = vmul.f32 %v2143, %v5893
        %v5905 = vmul.f32 %v2147, %v5890
        %v5906 = vmul.f32 %v2151, %v5887
        %v5907 = vmul.f32 %v2155, %v5884
        %v5908 = vmul.f32 %v2159, %v5881
        %v5909 = vmul.f32 %v2163, %v5878
        %v5910 = vmul.f32 %v2135, %v5900
        %v5911 = vmul.f32 %v2139, %v5897
        %v5912 = vmul.f32 %v2143, %v5894
        %v5913 = vmul.f32 %v2147, %v5891
        %v5914 = vmul.f32 %v2151, %v5888
        %v5915 = vmul.f32 %v2155, %v5885
        %v5916 = vmul.f32 %v2159, %v5882
        %v5917 = vmul.f32 %v2163, %v5879
        %v5918 = vmul.f32 %v2135, %v5901
        %v5919 = vmul.f32 %v2139, %v5898
        %v5920 = vmul.f32 %v2143, %v5895
        %v5921 = vmul.f32 %v2147, %v5892
        %v5922 = vmul.f32 %v2151, %v5889
        %v5923 = vmul.f32 %v2155, %v5886
        %v5924 = vmul.f32 %v2159, %v5883
        %v5925 = vmul.f32 %v2163, %v5880
        %5926 = vrot.lane.b32.xlu0 %v5661, 32
        %v5927 = vpop.permute.xlu0 %5926
        %5928 = vrot.lane.b32.xlu0 %v5665, 32
        %v5929 = vpop.permute.xlu0 %5928
        %5930 = vrot.lane.b32.xlu0 %v5671, 32
        %v5931 = vpop.permute.xlu0 %5930
        %5932 = vrot.lane.b32.xlu0 %v5663, 32
        %v5933 = vpop.permute.xlu0 %5932
        %5934 = vrot.lane.b32.xlu0 %v5667, 32
        %v5935 = vpop.permute.xlu0 %5934
        %5936 = vrot.lane.b32.xlu0 %v5673, 32
        %v5937 = vpop.permute.xlu0 %5936
        %5938 = vrot.lane.b32.xlu0 %v5712, 32
        %v5939 = vpop.permute.xlu0 %5938
        %5940 = vrot.lane.b32.xlu0 %v5716, 32
        %v5941 = vpop.permute.xlu0 %5940
        %5942 = vrot.lane.b32.xlu0 %v5722, 32
        %v5943 = vpop.permute.xlu0 %5942
        %5944 = vrot.lane.b32.xlu0 %v5714, 32
        %v5945 = vpop.permute.xlu0 %5944
        %5946 = vrot.lane.b32.xlu0 %v5718, 32
        %v5947 = vpop.permute.xlu0 %5946
        %5948 = vrot.lane.b32.xlu0 %v5724, 32
        %v5949 = vpop.permute.xlu0 %5948
        %5950 = vrot.lane.b32.xlu0 %v5763, 32
        %v5951 = vpop.permute.xlu0 %5950
        %5952 = vrot.lane.b32.xlu0 %v5767, 32
        %v5953 = vpop.permute.xlu0 %5952
        %5954 = vrot.lane.b32.xlu0 %v5773, 32
        %v5955 = vpop.permute.xlu0 %5954
        %5956 = vrot.lane.b32.xlu0 %v5765, 32
        %v5957 = vpop.permute.xlu0 %5956
        %5958 = vrot.lane.b32.xlu0 %v5769, 32
        %v5959 = vpop.permute.xlu0 %5958
        %5960 = vrot.lane.b32.xlu0 %v5775, 32
        %v5961 = vpop.permute.xlu0 %5960
        %5962 = vrot.lane.b32.xlu0 %v5814, 32
        %v5963 = vpop.permute.xlu0 %5962
        %5964 = vrot.lane.b32.xlu0 %v5818, 32
        %v5965 = vpop.permute.xlu0 %5964
        %5966 = vrot.lane.b32.xlu0 %v5824, 32
        %v5967 = vpop.permute.xlu0 %5966
        %5968 = vrot.lane.b32.xlu0 %v5816, 32
        %v5969 = vpop.permute.xlu0 %5968
        %5970 = vrot.lane.b32.xlu0 %v5820, 32
        %v5971 = vpop.permute.xlu0 %5970
        %5972 = vrot.lane.b32.xlu0 %v5826, 32
        %v5973 = vpop.permute.xlu0 %5972
        %v5974 = vsel %vm2188, %v5963, %v5969
        %v5975 = vsel %vm2188, %v5965, %v5971
        %v5976 = vsel %vm2188, %v5967, %v5973
        %v5977 = vsel %vm2188, %v5957, %v5963
        %v5978 = vsel %vm2188, %v5959, %v5965
        %v5979 = vsel %vm2188, %v5961, %v5967
        %v5980 = vsel %vm2188, %v5951, %v5957
        %v5981 = vsel %vm2188, %v5953, %v5959
        %v5982 = vsel %vm2188, %v5955, %v5961
        %v5983 = vsel %vm2188, %v5945, %v5951
        %v5984 = vsel %vm2188, %v5947, %v5953
        %v5985 = vsel %vm2188, %v5949, %v5955
        %v5986 = vsel %vm2188, %v5939, %v5945
        %v5987 = vsel %vm2188, %v5941, %v5947
        %v5988 = vsel %vm2188, %v5943, %v5949
        %v5989 = vsel %vm2188, %v5933, %v5939
        %v5990 = vsel %vm2188, %v5935, %v5941
        %v5991 = vsel %vm2188, %v5937, %v5943
        %v5992 = vsel %vm2188, %v5927, %v5933
        %v5993 = vsel %vm2188, %v5929, %v5935
        %v5994 = vsel %vm2188, %v5931, %v5937
        %v5995 = vsel %vm2188, %v5969, %v5927
        %v5996 = vsel %vm2188, %v5971, %v5929
        %v5997 = vsel %vm2188, %v5973, %v5931
        %v5998 = vmul.f32 %v2200, %v5995
        %v5999 = vmul.f32 %v2204, %v5992
        %v6000 = vmul.f32 %v2208, %v5989
        %v6001 = vmul.f32 %v2212, %v5986
        %v6002 = vmul.f32 %v2216, %v5983
        %v6003 = vmul.f32 %v2220, %v5980
        %v6004 = vmul.f32 %v2224, %v5977
        %v6005 = vmul.f32 %v2228, %v5974
        %v6006 = vmul.f32 %v2200, %v5996
        %v6007 = vmul.f32 %v2204, %v5993
        %v6008 = vmul.f32 %v2208, %v5990
        %v6009 = vmul.f32 %v2212, %v5987
        %v6010 = vmul.f32 %v2216, %v5984
        %v6011 = vmul.f32 %v2220, %v5981
        %v6012 = vmul.f32 %v2224, %v5978
        %v6013 = vmul.f32 %v2228, %v5975
        %v6014 = vmul.f32 %v2200, %v5997
        %v6015 = vmul.f32 %v2204, %v5994
        %v6016 = vmul.f32 %v2208, %v5991
        %v6017 = vmul.f32 %v2212, %v5988
        %v6018 = vmul.f32 %v2216, %v5985
        %v6019 = vmul.f32 %v2220, %v5982
        %v6020 = vmul.f32 %v2224, %v5979
        %v6021 = vmul.f32 %v2228, %v5976
        %6022 = vrot.lane.b32.xlu0 %v5661, 31
        %v6023 = vpop.permute.xlu0 %6022
        %6024 = vrot.lane.b32.xlu0 %v5665, 31
        %v6025 = vpop.permute.xlu0 %6024
        %6026 = vrot.lane.b32.xlu0 %v5671, 31
        %v6027 = vpop.permute.xlu0 %6026
        %6028 = vrot.lane.b32.xlu0 %v5663, 31
        %v6029 = vpop.permute.xlu0 %6028
        %6030 = vrot.lane.b32.xlu0 %v5667, 31
        %v6031 = vpop.permute.xlu0 %6030
        %6032 = vrot.lane.b32.xlu0 %v5673, 31
        %v6033 = vpop.permute.xlu0 %6032
        %6034 = vrot.lane.b32.xlu0 %v5712, 31
        %v6035 = vpop.permute.xlu0 %6034
        %6036 = vrot.lane.b32.xlu0 %v5716, 31
        %v6037 = vpop.permute.xlu0 %6036
        %6038 = vrot.lane.b32.xlu0 %v5722, 31
        %v6039 = vpop.permute.xlu0 %6038
        %6040 = vrot.lane.b32.xlu0 %v5714, 31
        %v6041 = vpop.permute.xlu0 %6040
        %6042 = vrot.lane.b32.xlu0 %v5718, 31
        %v6043 = vpop.permute.xlu0 %6042
        %6044 = vrot.lane.b32.xlu0 %v5724, 31
        %v6045 = vpop.permute.xlu0 %6044
        %6046 = vrot.lane.b32.xlu0 %v5763, 31
        %v6047 = vpop.permute.xlu0 %6046
        %6048 = vrot.lane.b32.xlu0 %v5767, 31
        %v6049 = vpop.permute.xlu0 %6048
        %6050 = vrot.lane.b32.xlu0 %v5773, 31
        %v6051 = vpop.permute.xlu0 %6050
        %6052 = vrot.lane.b32.xlu0 %v5765, 31
        %v6053 = vpop.permute.xlu0 %6052
        %6054 = vrot.lane.b32.xlu0 %v5769, 31
        %v6055 = vpop.permute.xlu0 %6054
        %6056 = vrot.lane.b32.xlu0 %v5775, 31
        %v6057 = vpop.permute.xlu0 %6056
        %6058 = vrot.lane.b32.xlu0 %v5814, 31
        %v6059 = vpop.permute.xlu0 %6058
        %6060 = vrot.lane.b32.xlu0 %v5818, 31
        %v6061 = vpop.permute.xlu0 %6060
        %6062 = vrot.lane.b32.xlu0 %v5824, 31
        %v6063 = vpop.permute.xlu0 %6062
        %6064 = vrot.lane.b32.xlu0 %v5816, 31
        %v6065 = vpop.permute.xlu0 %6064
        %6066 = vrot.lane.b32.xlu0 %v5820, 31
        %v6067 = vpop.permute.xlu0 %6066
        %6068 = vrot.lane.b32.xlu0 %v5826, 31
        %v6069 = vpop.permute.xlu0 %6068
        %v6070 = vsel %vm2253, %v6059, %v6065
        %v6071 = vsel %vm2253, %v6061, %v6067
        %v6072 = vsel %vm2253, %v6063, %v6069
        %v6073 = vsel %vm2253, %v6053, %v6059
        %v6074 = vsel %vm2253, %v6055, %v6061
        %v6075 = vsel %vm2253, %v6057, %v6063
        %v6076 = vsel %vm2253, %v6047, %v6053
        %v6077 = vsel %vm2253, %v6049, %v6055
        %v6078 = vsel %vm2253, %v6051, %v6057
        %v6079 = vsel %vm2253, %v6041, %v6047
        %v6080 = vsel %vm2253, %v6043, %v6049
        %v6081 = vsel %vm2253, %v6045, %v6051
        %v6082 = vsel %vm2253, %v6035, %v6041
        %v6083 = vsel %vm2253, %v6037, %v6043
        %v6084 = vsel %vm2253, %v6039, %v6045
        %v6085 = vsel %vm2253, %v6029, %v6035
        %v6086 = vsel %vm2253, %v6031, %v6037
        %v6087 = vsel %vm2253, %v6033, %v6039
        %v6088 = vsel %vm2253, %v6023, %v6029
        %v6089 = vsel %vm2253, %v6025, %v6031
        %v6090 = vsel %vm2253, %v6027, %v6033
        %v6091 = vsel %vm2253, %v6065, %v6023
        %v6092 = vsel %vm2253, %v6067, %v6025
        %v6093 = vsel %vm2253, %v6069, %v6027
        %v6094 = vmul.f32 %v2265, %v6091
        %v6095 = vmul.f32 %v2269, %v6088
        %v6096 = vmul.f32 %v2273, %v6085
        %v6097 = vmul.f32 %v2277, %v6082
        %v6098 = vmul.f32 %v2281, %v6079
        %v6099 = vmul.f32 %v2285, %v6076
        %v6100 = vmul.f32 %v2289, %v6073
        %v6101 = vmul.f32 %v2293, %v6070
        %v6102 = vmul.f32 %v2265, %v6092
        %v6103 = vmul.f32 %v2269, %v6089
        %v6104 = vmul.f32 %v2273, %v6086
        %v6105 = vmul.f32 %v2277, %v6083
        %v6106 = vmul.f32 %v2281, %v6080
        %v6107 = vmul.f32 %v2285, %v6077
        %v6108 = vmul.f32 %v2289, %v6074
        %v6109 = vmul.f32 %v2293, %v6071
        %v6110 = vmul.f32 %v2265, %v6093
        %v6111 = vmul.f32 %v2269, %v6090
        %v6112 = vmul.f32 %v2273, %v6087
        %v6113 = vmul.f32 %v2277, %v6084
        %v6114 = vmul.f32 %v2281, %v6081
        %v6115 = vmul.f32 %v2285, %v6078
        %v6116 = vmul.f32 %v2289, %v6075
        %v6117 = vmul.f32 %v2293, %v6072
        %6118 = vrot.lane.b32.xlu0 %v5661, 1
        %v6119 = vpop.permute.xlu0 %6118
        %6120 = vrot.lane.b32.xlu0 %v5665, 1
        %v6121 = vpop.permute.xlu0 %6120
        %6122 = vrot.lane.b32.xlu0 %v5671, 1
        %v6123 = vpop.permute.xlu0 %6122
        %6124 = vrot.lane.b32.xlu0 %v5663, 1
        %v6125 = vpop.permute.xlu0 %6124
        %6126 = vrot.lane.b32.xlu0 %v5667, 1
        %v6127 = vpop.permute.xlu0 %6126
        %6128 = vrot.lane.b32.xlu0 %v5673, 1
        %v6129 = vpop.permute.xlu0 %6128
        %6130 = vrot.lane.b32.xlu0 %v5712, 1
        %v6131 = vpop.permute.xlu0 %6130
        %6132 = vrot.lane.b32.xlu0 %v5716, 1
        %v6133 = vpop.permute.xlu0 %6132
        %6134 = vrot.lane.b32.xlu0 %v5722, 1
        %v6135 = vpop.permute.xlu0 %6134
        %6136 = vrot.lane.b32.xlu0 %v5714, 1
        %v6137 = vpop.permute.xlu0 %6136
        %6138 = vrot.lane.b32.xlu0 %v5718, 1
        %v6139 = vpop.permute.xlu0 %6138
        %6140 = vrot.lane.b32.xlu0 %v5724, 1
        %v6141 = vpop.permute.xlu0 %6140
        %6142 = vrot.lane.b32.xlu0 %v5763, 1
        %v6143 = vpop.permute.xlu0 %6142
        %6144 = vrot.lane.b32.xlu0 %v5767, 1
        %v6145 = vpop.permute.xlu0 %6144
        %6146 = vrot.lane.b32.xlu0 %v5773, 1
        %v6147 = vpop.permute.xlu0 %6146
        %6148 = vrot.lane.b32.xlu0 %v5765, 1
        %v6149 = vpop.permute.xlu0 %6148
        %6150 = vrot.lane.b32.xlu0 %v5769, 1
        %v6151 = vpop.permute.xlu0 %6150
        %6152 = vrot.lane.b32.xlu0 %v5775, 1
        %v6153 = vpop.permute.xlu0 %6152
        %6154 = vrot.lane.b32.xlu0 %v5814, 1
        %v6155 = vpop.permute.xlu0 %6154
        %6156 = vrot.lane.b32.xlu0 %v5818, 1
        %v6157 = vpop.permute.xlu0 %6156
        %6158 = vrot.lane.b32.xlu0 %v5824, 1
        %v6159 = vpop.permute.xlu0 %6158
        %6160 = vrot.lane.b32.xlu0 %v5816, 1
        %v6161 = vpop.permute.xlu0 %6160
        %6162 = vrot.lane.b32.xlu0 %v5820, 1
        %v6163 = vpop.permute.xlu0 %6162
        %6164 = vrot.lane.b32.xlu0 %v5826, 1
        %v6165 = vpop.permute.xlu0 %6164
        %v6166 = vsel %vm1941, %v6155, %v6161
        %v6167 = vsel %vm1941, %v6157, %v6163
        %v6168 = vsel %vm1941, %v6159, %v6165
        %v6169 = vsel %vm1941, %v6149, %v6155
        %v6170 = vsel %vm1941, %v6151, %v6157
        %v6171 = vsel %vm1941, %v6153, %v6159
        %v6172 = vsel %vm1941, %v6143, %v6149
        %v6173 = vsel %vm1941, %v6145, %v6151
        %v6174 = vsel %vm1941, %v6147, %v6153
        %v6175 = vsel %vm1941, %v6137, %v6143
        %v6176 = vsel %vm1941, %v6139, %v6145
        %v6177 = vsel %vm1941, %v6141, %v6147
        %v6178 = vsel %vm1941, %v6131, %v6137
        %v6179 = vsel %vm1941, %v6133, %v6139
        %v6180 = vsel %vm1941, %v6135, %v6141
        %v6181 = vsel %vm1941, %v6125, %v6131
        %v6182 = vsel %vm1941, %v6127, %v6133
        %v6183 = vsel %vm1941, %v6129, %v6135
        %v6184 = vsel %vm1941, %v6119, %v6125
        %v6185 = vsel %vm1941, %v6121, %v6127
        %v6186 = vsel %vm1941, %v6123, %v6129
        %v6187 = vsel %vm1941, %v6161, %v6119
        %v6188 = vsel %vm1941, %v6163, %v6121
        %v6189 = vsel %vm1941, %v6165, %v6123
        %v6190 = vmul.f32 %v2329, %v6187
        %v6191 = vmul.f32 %v2333, %v6184
        %v6192 = vmul.f32 %v2337, %v6181
        %v6193 = vmul.f32 %v2341, %v6178
        %v6194 = vmul.f32 %v2345, %v6175
        %v6195 = vmul.f32 %v2349, %v6172
        %v6196 = vmul.f32 %v2353, %v6169
        %v6197 = vmul.f32 %v2357, %v6166
        %v6198 = vmul.f32 %v2329, %v6188
        %v6199 = vmul.f32 %v2333, %v6185
        %v6200 = vmul.f32 %v2337, %v6182
        %v6201 = vmul.f32 %v2341, %v6179
        %v6202 = vmul.f32 %v2345, %v6176
        %v6203 = vmul.f32 %v2349, %v6173
        %v6204 = vmul.f32 %v2353, %v6170
        %v6205 = vmul.f32 %v2357, %v6167
        %v6206 = vmul.f32 %v2329, %v6189
        %v6207 = vmul.f32 %v2333, %v6186
        %v6208 = vmul.f32 %v2337, %v6183
        %v6209 = vmul.f32 %v2341, %v6180
        %v6210 = vmul.f32 %v2345, %v6177
        %v6211 = vmul.f32 %v2349, %v6174
        %v6212 = vmul.f32 %v2353, %v6171
        %v6213 = vmul.f32 %v2357, %v6168
        %6214 = vrot.lane.b32.xlu0 %v5661, 127
        %v6215 = vpop.permute.xlu0 %6214
        %6216 = vrot.lane.b32.xlu0 %v5665, 127
        %v6217 = vpop.permute.xlu0 %6216
        %6218 = vrot.lane.b32.xlu0 %v5671, 127
        %v6219 = vpop.permute.xlu0 %6218
        %6220 = vrot.lane.b32.xlu0 %v5663, 127
        %v6221 = vpop.permute.xlu0 %6220
        %6222 = vrot.lane.b32.xlu0 %v5667, 127
        %v6223 = vpop.permute.xlu0 %6222
        %6224 = vrot.lane.b32.xlu0 %v5673, 127
        %v6225 = vpop.permute.xlu0 %6224
        %6226 = vrot.lane.b32.xlu0 %v5712, 127
        %v6227 = vpop.permute.xlu0 %6226
        %6228 = vrot.lane.b32.xlu0 %v5716, 127
        %v6229 = vpop.permute.xlu0 %6228
        %6230 = vrot.lane.b32.xlu0 %v5722, 127
        %v6231 = vpop.permute.xlu0 %6230
        %6232 = vrot.lane.b32.xlu0 %v5714, 127
        %v6233 = vpop.permute.xlu0 %6232
        %6234 = vrot.lane.b32.xlu0 %v5718, 127
        %v6235 = vpop.permute.xlu0 %6234
        %6236 = vrot.lane.b32.xlu0 %v5724, 127
        %v6237 = vpop.permute.xlu0 %6236
        %6238 = vrot.lane.b32.xlu0 %v5763, 127
        %v6239 = vpop.permute.xlu0 %6238
        %6240 = vrot.lane.b32.xlu0 %v5767, 127
        %v6241 = vpop.permute.xlu0 %6240
        %6242 = vrot.lane.b32.xlu0 %v5773, 127
        %v6243 = vpop.permute.xlu0 %6242
        %6244 = vrot.lane.b32.xlu0 %v5765, 127
        %v6245 = vpop.permute.xlu0 %6244
        %6246 = vrot.lane.b32.xlu0 %v5769, 127
        %v6247 = vpop.permute.xlu0 %6246
        %6248 = vrot.lane.b32.xlu0 %v5775, 127
        %v6249 = vpop.permute.xlu0 %6248
        %6250 = vrot.lane.b32.xlu0 %v5814, 127
        %v6251 = vpop.permute.xlu0 %6250
        %6252 = vrot.lane.b32.xlu0 %v5818, 127
        %v6253 = vpop.permute.xlu0 %6252
        %6254 = vrot.lane.b32.xlu0 %v5824, 127
        %v6255 = vpop.permute.xlu0 %6254
        %6256 = vrot.lane.b32.xlu0 %v5816, 127
        %v6257 = vpop.permute.xlu0 %6256
        %6258 = vrot.lane.b32.xlu0 %v5820, 127
        %v6259 = vpop.permute.xlu0 %6258
        %6260 = vrot.lane.b32.xlu0 %v5826, 127
        %v6261 = vpop.permute.xlu0 %6260
        %v6262 = vsel %vm1958, %v6251, %v6257
        %v6263 = vsel %vm1958, %v6253, %v6259
        %v6264 = vsel %vm1958, %v6255, %v6261
        %v6265 = vsel %vm1958, %v6245, %v6251
        %v6266 = vsel %vm1958, %v6247, %v6253
        %v6267 = vsel %vm1958, %v6249, %v6255
        %v6268 = vsel %vm1958, %v6239, %v6245
        %v6269 = vsel %vm1958, %v6241, %v6247
        %v6270 = vsel %vm1958, %v6243, %v6249
        %v6271 = vsel %vm1958, %v6233, %v6239
        %v6272 = vsel %vm1958, %v6235, %v6241
        %v6273 = vsel %vm1958, %v6237, %v6243
        %v6274 = vsel %vm1958, %v6227, %v6233
        %v6275 = vsel %vm1958, %v6229, %v6235
        %v6276 = vsel %vm1958, %v6231, %v6237
        %v6277 = vsel %vm1958, %v6221, %v6227
        %v6278 = vsel %vm1958, %v6223, %v6229
        %v6279 = vsel %vm1958, %v6225, %v6231
        %v6280 = vsel %vm1958, %v6215, %v6221
        %v6281 = vsel %vm1958, %v6217, %v6223
        %v6282 = vsel %vm1958, %v6219, %v6225
        %v6283 = vsel %vm1958, %v6257, %v6215
        %v6284 = vsel %vm1958, %v6259, %v6217
        %v6285 = vsel %vm1958, %v6261, %v6219
        %v6286 = vmul.f32 %v2393, %v6280
        %v6287 = vmul.f32 %v2397, %v6277
        %v6288 = vmul.f32 %v2401, %v6274
        %v6289 = vmul.f32 %v2405, %v6271
        %v6290 = vmul.f32 %v2409, %v6268
        %v6291 = vmul.f32 %v2413, %v6265
        %v6292 = vmul.f32 %v2417, %v6262
        %v6293 = vmul.f32 %v2421, %v6283
        %v6294 = vmul.f32 %v2393, %v6281
        %v6295 = vmul.f32 %v2397, %v6278
        %v6296 = vmul.f32 %v2401, %v6275
        %v6297 = vmul.f32 %v2405, %v6272
        %v6298 = vmul.f32 %v2409, %v6269
        %v6299 = vmul.f32 %v2413, %v6266
        %v6300 = vmul.f32 %v2417, %v6263
        %v6301 = vmul.f32 %v2421, %v6284
        %v6302 = vmul.f32 %v2393, %v6282
        %v6303 = vmul.f32 %v2397, %v6279
        %v6304 = vmul.f32 %v2401, %v6276
        %v6305 = vmul.f32 %v2405, %v6273
        %v6306 = vmul.f32 %v2409, %v6270
        %v6307 = vmul.f32 %v2413, %v6267
        %v6308 = vmul.f32 %v2417, %v6264
        %v6309 = vmul.f32 %v2421, %v6285
        %6310 = vrot.lane.b32.xlu0 %v5661, 97
        %v6311 = vpop.permute.xlu0 %6310
        %6312 = vrot.lane.b32.xlu0 %v5665, 97
        %v6313 = vpop.permute.xlu0 %6312
        %6314 = vrot.lane.b32.xlu0 %v5671, 97
        %v6315 = vpop.permute.xlu0 %6314
        %6316 = vrot.lane.b32.xlu0 %v5663, 97
        %v6317 = vpop.permute.xlu0 %6316
        %6318 = vrot.lane.b32.xlu0 %v5667, 97
        %v6319 = vpop.permute.xlu0 %6318
        %6320 = vrot.lane.b32.xlu0 %v5673, 97
        %v6321 = vpop.permute.xlu0 %6320
        %6322 = vrot.lane.b32.xlu0 %v5712, 97
        %v6323 = vpop.permute.xlu0 %6322
        %6324 = vrot.lane.b32.xlu0 %v5716, 97
        %v6325 = vpop.permute.xlu0 %6324
        %6326 = vrot.lane.b32.xlu0 %v5722, 97
        %v6327 = vpop.permute.xlu0 %6326
        %6328 = vrot.lane.b32.xlu0 %v5714, 97
        %v6329 = vpop.permute.xlu0 %6328
        %6330 = vrot.lane.b32.xlu0 %v5718, 97
        %v6331 = vpop.permute.xlu0 %6330
        %6332 = vrot.lane.b32.xlu0 %v5724, 97
        %v6333 = vpop.permute.xlu0 %6332
        %6334 = vrot.lane.b32.xlu0 %v5763, 97
        %v6335 = vpop.permute.xlu0 %6334
        %6336 = vrot.lane.b32.xlu0 %v5767, 97
        %v6337 = vpop.permute.xlu0 %6336
        %6338 = vrot.lane.b32.xlu0 %v5773, 97
        %v6339 = vpop.permute.xlu0 %6338
        %6340 = vrot.lane.b32.xlu0 %v5765, 97
        %v6341 = vpop.permute.xlu0 %6340
        %6342 = vrot.lane.b32.xlu0 %v5769, 97
        %v6343 = vpop.permute.xlu0 %6342
        %6344 = vrot.lane.b32.xlu0 %v5775, 97
        %v6345 = vpop.permute.xlu0 %6344
        %6346 = vrot.lane.b32.xlu0 %v5814, 97
        %v6347 = vpop.permute.xlu0 %6346
        %6348 = vrot.lane.b32.xlu0 %v5818, 97
        %v6349 = vpop.permute.xlu0 %6348
        %6350 = vrot.lane.b32.xlu0 %v5824, 97
        %v6351 = vpop.permute.xlu0 %6350
        %6352 = vrot.lane.b32.xlu0 %v5816, 97
        %v6353 = vpop.permute.xlu0 %6352
        %6354 = vrot.lane.b32.xlu0 %v5820, 97
        %v6355 = vpop.permute.xlu0 %6354
        %6356 = vrot.lane.b32.xlu0 %v5826, 97
        %v6357 = vpop.permute.xlu0 %6356
        %v6358 = vsel %vm2446, %v6347, %v6353
        %v6359 = vsel %vm2446, %v6349, %v6355
        %v6360 = vsel %vm2446, %v6351, %v6357
        %v6361 = vsel %vm2446, %v6341, %v6347
        %v6362 = vsel %vm2446, %v6343, %v6349
        %v6363 = vsel %vm2446, %v6345, %v6351
        %v6364 = vsel %vm2446, %v6335, %v6341
        %v6365 = vsel %vm2446, %v6337, %v6343
        %v6366 = vsel %vm2446, %v6339, %v6345
        %v6367 = vsel %vm2446, %v6329, %v6335
        %v6368 = vsel %vm2446, %v6331, %v6337
        %v6369 = vsel %vm2446, %v6333, %v6339
        %v6370 = vsel %vm2446, %v6323, %v6329
        %v6371 = vsel %vm2446, %v6325, %v6331
        %v6372 = vsel %vm2446, %v6327, %v6333
        %v6373 = vsel %vm2446, %v6317, %v6323
        %v6374 = vsel %vm2446, %v6319, %v6325
        %v6375 = vsel %vm2446, %v6321, %v6327
        %v6376 = vsel %vm2446, %v6311, %v6317
        %v6377 = vsel %vm2446, %v6313, %v6319
        %v6378 = vsel %vm2446, %v6315, %v6321
        %v6379 = vsel %vm2446, %v6353, %v6311
        %v6380 = vsel %vm2446, %v6355, %v6313
        %v6381 = vsel %vm2446, %v6357, %v6315
        %v6382 = vmul.f32 %v2458, %v6376
        %v6383 = vmul.f32 %v2462, %v6373
        %v6384 = vmul.f32 %v2466, %v6370
        %v6385 = vmul.f32 %v2470, %v6367
        %v6386 = vmul.f32 %v2474, %v6364
        %v6387 = vmul.f32 %v2478, %v6361
        %v6388 = vmul.f32 %v2482, %v6358
        %v6389 = vmul.f32 %v2486, %v6379
        %v6390 = vmul.f32 %v2458, %v6377
        %v6391 = vmul.f32 %v2462, %v6374
        %v6392 = vmul.f32 %v2466, %v6371
        %v6393 = vmul.f32 %v2470, %v6368
        %v6394 = vmul.f32 %v2474, %v6365
        %v6395 = vmul.f32 %v2478, %v6362
        %v6396 = vmul.f32 %v2482, %v6359
        %v6397 = vmul.f32 %v2486, %v6380
        %v6398 = vmul.f32 %v2458, %v6378
        %v6399 = vmul.f32 %v2462, %v6375
        %v6400 = vmul.f32 %v2466, %v6372
        %v6401 = vmul.f32 %v2470, %v6369
        %v6402 = vmul.f32 %v2474, %v6366
        %v6403 = vmul.f32 %v2478, %v6363
        %v6404 = vmul.f32 %v2482, %v6360
        %v6405 = vmul.f32 %v2486, %v6381
        %6406 = vrot.lane.b32.xlu0 %v5661, 96
        %v6407 = vpop.permute.xlu0 %6406
        %6408 = vrot.lane.b32.xlu0 %v5665, 96
        %v6409 = vpop.permute.xlu0 %6408
        %6410 = vrot.lane.b32.xlu0 %v5671, 96
        %v6411 = vpop.permute.xlu0 %6410
        %6412 = vrot.lane.b32.xlu0 %v5663, 96
        %v6413 = vpop.permute.xlu0 %6412
        %6414 = vrot.lane.b32.xlu0 %v5667, 96
        %v6415 = vpop.permute.xlu0 %6414
        %6416 = vrot.lane.b32.xlu0 %v5673, 96
        %v6417 = vpop.permute.xlu0 %6416
        %6418 = vrot.lane.b32.xlu0 %v5712, 96
        %v6419 = vpop.permute.xlu0 %6418
        %6420 = vrot.lane.b32.xlu0 %v5716, 96
        %v6421 = vpop.permute.xlu0 %6420
        %6422 = vrot.lane.b32.xlu0 %v5722, 96
        %v6423 = vpop.permute.xlu0 %6422
        %6424 = vrot.lane.b32.xlu0 %v5714, 96
        %v6425 = vpop.permute.xlu0 %6424
        %6426 = vrot.lane.b32.xlu0 %v5718, 96
        %v6427 = vpop.permute.xlu0 %6426
        %6428 = vrot.lane.b32.xlu0 %v5724, 96
        %v6429 = vpop.permute.xlu0 %6428
        %6430 = vrot.lane.b32.xlu0 %v5763, 96
        %v6431 = vpop.permute.xlu0 %6430
        %6432 = vrot.lane.b32.xlu0 %v5767, 96
        %v6433 = vpop.permute.xlu0 %6432
        %6434 = vrot.lane.b32.xlu0 %v5773, 96
        %v6435 = vpop.permute.xlu0 %6434
        %6436 = vrot.lane.b32.xlu0 %v5765, 96
        %v6437 = vpop.permute.xlu0 %6436
        %6438 = vrot.lane.b32.xlu0 %v5769, 96
        %v6439 = vpop.permute.xlu0 %6438
        %6440 = vrot.lane.b32.xlu0 %v5775, 96
        %v6441 = vpop.permute.xlu0 %6440
        %6442 = vrot.lane.b32.xlu0 %v5814, 96
        %v6443 = vpop.permute.xlu0 %6442
        %6444 = vrot.lane.b32.xlu0 %v5818, 96
        %v6445 = vpop.permute.xlu0 %6444
        %6446 = vrot.lane.b32.xlu0 %v5824, 96
        %v6447 = vpop.permute.xlu0 %6446
        %6448 = vrot.lane.b32.xlu0 %v5816, 96
        %v6449 = vpop.permute.xlu0 %6448
        %6450 = vrot.lane.b32.xlu0 %v5820, 96
        %v6451 = vpop.permute.xlu0 %6450
        %6452 = vrot.lane.b32.xlu0 %v5826, 96
        %v6453 = vpop.permute.xlu0 %6452
        %v6454 = vsel %vm2511, %v6443, %v6449
        %v6455 = vsel %vm2511, %v6445, %v6451
        %v6456 = vsel %vm2511, %v6447, %v6453
        %v6457 = vsel %vm2511, %v6437, %v6443
        %v6458 = vsel %vm2511, %v6439, %v6445
        %v6459 = vsel %vm2511, %v6441, %v6447
        %v6460 = vsel %vm2511, %v6431, %v6437
        %v6461 = vsel %vm2511, %v6433, %v6439
        %v6462 = vsel %vm2511, %v6435, %v6441
        %v6463 = vsel %vm2511, %v6425, %v6431
        %v6464 = vsel %vm2511, %v6427, %v6433
        %v6465 = vsel %vm2511, %v6429, %v6435
        %v6466 = vsel %vm2511, %v6419, %v6425
        %v6467 = vsel %vm2511, %v6421, %v6427
        %v6468 = vsel %vm2511, %v6423, %v6429
        %v6469 = vsel %vm2511, %v6413, %v6419
        %v6470 = vsel %vm2511, %v6415, %v6421
        %v6471 = vsel %vm2511, %v6417, %v6423
        %v6472 = vsel %vm2511, %v6407, %v6413
        %v6473 = vsel %vm2511, %v6409, %v6415
        %v6474 = vsel %vm2511, %v6411, %v6417
        %v6475 = vsel %vm2511, %v6449, %v6407
        %v6476 = vsel %vm2511, %v6451, %v6409
        %v6477 = vsel %vm2511, %v6453, %v6411
        %v6478 = vmul.f32 %v2523, %v6472
        %v6479 = vmul.f32 %v2527, %v6469
        %v6480 = vmul.f32 %v2531, %v6466
        %v6481 = vmul.f32 %v2535, %v6463
        %v6482 = vmul.f32 %v2539, %v6460
        %v6483 = vmul.f32 %v2543, %v6457
        %v6484 = vmul.f32 %v2547, %v6454
        %v6485 = vmul.f32 %v2551, %v6475
        %v6486 = vmul.f32 %v2523, %v6473
        %v6487 = vmul.f32 %v2527, %v6470
        %v6488 = vmul.f32 %v2531, %v6467
        %v6489 = vmul.f32 %v2535, %v6464
        %v6490 = vmul.f32 %v2539, %v6461
        %v6491 = vmul.f32 %v2543, %v6458
        %v6492 = vmul.f32 %v2547, %v6455
        %v6493 = vmul.f32 %v2551, %v6476
        %v6494 = vmul.f32 %v2523, %v6474
        %v6495 = vmul.f32 %v2527, %v6471
        %v6496 = vmul.f32 %v2531, %v6468
        %v6497 = vmul.f32 %v2535, %v6465
        %v6498 = vmul.f32 %v2539, %v6462
        %v6499 = vmul.f32 %v2543, %v6459
        %v6500 = vmul.f32 %v2547, %v6456
        %v6501 = vmul.f32 %v2551, %v6477
        %6502 = vrot.lane.b32.xlu0 %v5661, 95
        %v6503 = vpop.permute.xlu0 %6502
        %6504 = vrot.lane.b32.xlu0 %v5665, 95
        %v6505 = vpop.permute.xlu0 %6504
        %6506 = vrot.lane.b32.xlu0 %v5671, 95
        %v6507 = vpop.permute.xlu0 %6506
        %6508 = vrot.lane.b32.xlu0 %v5663, 95
        %v6509 = vpop.permute.xlu0 %6508
        %6510 = vrot.lane.b32.xlu0 %v5667, 95
        %v6511 = vpop.permute.xlu0 %6510
        %6512 = vrot.lane.b32.xlu0 %v5673, 95
        %v6513 = vpop.permute.xlu0 %6512
        %6514 = vrot.lane.b32.xlu0 %v5712, 95
        %v6515 = vpop.permute.xlu0 %6514
        %6516 = vrot.lane.b32.xlu0 %v5716, 95
        %v6517 = vpop.permute.xlu0 %6516
        %6518 = vrot.lane.b32.xlu0 %v5722, 95
        %v6519 = vpop.permute.xlu0 %6518
        %6520 = vrot.lane.b32.xlu0 %v5714, 95
        %v6521 = vpop.permute.xlu0 %6520
        %6522 = vrot.lane.b32.xlu0 %v5718, 95
        %v6523 = vpop.permute.xlu0 %6522
        %6524 = vrot.lane.b32.xlu0 %v5724, 95
        %v6525 = vpop.permute.xlu0 %6524
        %6526 = vrot.lane.b32.xlu0 %v5763, 95
        %v6527 = vpop.permute.xlu0 %6526
        %6528 = vrot.lane.b32.xlu0 %v5767, 95
        %v6529 = vpop.permute.xlu0 %6528
        %6530 = vrot.lane.b32.xlu0 %v5773, 95
        %v6531 = vpop.permute.xlu0 %6530
        %6532 = vrot.lane.b32.xlu0 %v5765, 95
        %v6533 = vpop.permute.xlu0 %6532
        %6534 = vrot.lane.b32.xlu0 %v5769, 95
        %v6535 = vpop.permute.xlu0 %6534
        %6536 = vrot.lane.b32.xlu0 %v5775, 95
        %v6537 = vpop.permute.xlu0 %6536
        %6538 = vrot.lane.b32.xlu0 %v5814, 95
        %v6539 = vpop.permute.xlu0 %6538
        %6540 = vrot.lane.b32.xlu0 %v5818, 95
        %v6541 = vpop.permute.xlu0 %6540
        %6542 = vrot.lane.b32.xlu0 %v5824, 95
        %v6543 = vpop.permute.xlu0 %6542
        %6544 = vrot.lane.b32.xlu0 %v5816, 95
        %v6545 = vpop.permute.xlu0 %6544
        %6546 = vrot.lane.b32.xlu0 %v5820, 95
        %v6547 = vpop.permute.xlu0 %6546
        %6548 = vrot.lane.b32.xlu0 %v5826, 95
        %v6549 = vpop.permute.xlu0 %6548
        %v6550 = vsel %vm2576, %v6539, %v6545
        %v6551 = vsel %vm2576, %v6541, %v6547
        %v6552 = vsel %vm2576, %v6543, %v6549
        %v6553 = vsel %vm2576, %v6533, %v6539
        %v6554 = vsel %vm2576, %v6535, %v6541
        %v6555 = vsel %vm2576, %v6537, %v6543
        %v6556 = vsel %vm2576, %v6527, %v6533
        %v6557 = vsel %vm2576, %v6529, %v6535
        %v6558 = vsel %vm2576, %v6531, %v6537
        %v6559 = vsel %vm2576, %v6521, %v6527
        %v6560 = vsel %vm2576, %v6523, %v6529
        %v6561 = vsel %vm2576, %v6525, %v6531
        %v6562 = vsel %vm2576, %v6515, %v6521
        %v6563 = vsel %vm2576, %v6517, %v6523
        %v6564 = vsel %vm2576, %v6519, %v6525
        %v6565 = vsel %vm2576, %v6509, %v6515
        %v6566 = vsel %vm2576, %v6511, %v6517
        %v6567 = vsel %vm2576, %v6513, %v6519
        %v6568 = vsel %vm2576, %v6503, %v6509
        %v6569 = vsel %vm2576, %v6505, %v6511
        %v6570 = vsel %vm2576, %v6507, %v6513
        %v6571 = vsel %vm2576, %v6545, %v6503
        %v6572 = vsel %vm2576, %v6547, %v6505
        %v6573 = vsel %vm2576, %v6549, %v6507
        %v6574 = vmul.f32 %v2588, %v6568
        %v6575 = vmul.f32 %v2592, %v6565
        %v6576 = vmul.f32 %v2596, %v6562
        %v6577 = vmul.f32 %v2600, %v6559
        %v6578 = vmul.f32 %v2604, %v6556
        %v6579 = vmul.f32 %v2608, %v6553
        %v6580 = vmul.f32 %v2612, %v6550
        %v6581 = vmul.f32 %v2616, %v6571
        %v6582 = vmul.f32 %v2588, %v6569
        %v6583 = vmul.f32 %v2592, %v6566
        %v6584 = vmul.f32 %v2596, %v6563
        %v6585 = vmul.f32 %v2600, %v6560
        %v6586 = vmul.f32 %v2604, %v6557
        %v6587 = vmul.f32 %v2608, %v6554
        %v6588 = vmul.f32 %v2612, %v6551
        %v6589 = vmul.f32 %v2616, %v6572
        %v6590 = vmul.f32 %v2588, %v6570
        %v6591 = vmul.f32 %v2592, %v6567
        %v6592 = vmul.f32 %v2596, %v6564
        %v6593 = vmul.f32 %v2600, %v6561
        %v6594 = vmul.f32 %v2604, %v6558
        %v6595 = vmul.f32 %v2608, %v6555
        %v6596 = vmul.f32 %v2612, %v6552
        %v6597 = vmul.f32 %v2616, %v6573
        %v6598 = vpack.c.bf16 %v5910, %v5902
        %v6599 = vpack.c.bf16 %v5911, %v5903
        %v6600 = vpack.c.bf16 %v5912, %v5904
        %v6601 = vpack.c.bf16 %v5913, %v5905
        %v6602 = vpack.c.bf16 %v5914, %v5906
        %v6603 = vpack.c.bf16 %v5915, %v5907
        %v6604 = vpack.c.bf16 %v5916, %v5908
        %v6605 = vpack.c.bf16 %v5917, %v5909
        %v6606 = vpack.c.bf16 %v5998, %v5918
        %v6607 = vpack.c.bf16 %v5999, %v5919
        %v6608 = vpack.c.bf16 %v6000, %v5920
        %v6609 = vpack.c.bf16 %v6001, %v5921
        %v6610 = vpack.c.bf16 %v6002, %v5922
        %v6611 = vpack.c.bf16 %v6003, %v5923
        %v6612 = vpack.c.bf16 %v6004, %v5924
        %v6613 = vpack.c.bf16 %v6005, %v5925
        %v6614 = vpack.c.bf16 %v6014, %v6006
        %v6615 = vpack.c.bf16 %v6015, %v6007
        %v6616 = vpack.c.bf16 %v6016, %v6008
        %v6617 = vpack.c.bf16 %v6017, %v6009
        %v6618 = vpack.c.bf16 %v6018, %v6010
        %v6619 = vpack.c.bf16 %v6019, %v6011
        %v6620 = vpack.c.bf16 %v6020, %v6012
        %v6621 = vpack.c.bf16 %v6021, %v6013
        %v6622 = vpack.c.bf16 %v6102, %v6094
        %v6623 = vpack.c.bf16 %v6103, %v6095
        %v6624 = vpack.c.bf16 %v6104, %v6096
        %v6625 = vpack.c.bf16 %v6105, %v6097
        %v6626 = vpack.c.bf16 %v6106, %v6098
        %v6627 = vpack.c.bf16 %v6107, %v6099
        %v6628 = vpack.c.bf16 %v6108, %v6100
        %v6629 = vpack.c.bf16 %v6109, %v6101
        %v6630 = vpack.c.bf16 %v6190, %v6110
        %v6631 = vpack.c.bf16 %v6191, %v6111
        %v6632 = vpack.c.bf16 %v6192, %v6112
        %v6633 = vpack.c.bf16 %v6193, %v6113
        %v6634 = vpack.c.bf16 %v6194, %v6114
        %v6635 = vpack.c.bf16 %v6195, %v6115
        %v6636 = vpack.c.bf16 %v6196, %v6116
        %v6637 = vpack.c.bf16 %v6197, %v6117
        %v6638 = vpack.c.bf16 %v6206, %v6198
        %v6639 = vpack.c.bf16 %v6207, %v6199
        %v6640 = vpack.c.bf16 %v6208, %v6200
        %v6641 = vpack.c.bf16 %v6209, %v6201
        %v6642 = vpack.c.bf16 %v6210, %v6202
        %v6643 = vpack.c.bf16 %v6211, %v6203
        %v6644 = vpack.c.bf16 %v6212, %v6204
        %v6645 = vpack.c.bf16 %v6213, %v6205
        %v6646 = vpack.c.bf16 %v5665, %v5661
        %v6647 = vpack.c.bf16 %v5667, %v5663
        %v6648 = vpack.c.bf16 %v5716, %v5712
        %v6649 = vpack.c.bf16 %v5718, %v5714
        %v6650 = vpack.c.bf16 %v5767, %v5763
        %v6651 = vpack.c.bf16 %v5769, %v5765
        %v6652 = vpack.c.bf16 %v5818, %v5814
        %v6653 = vpack.c.bf16 %v5820, %v5816
        %v6654 = vpack.c.bf16 %v6286, %v5671
        %v6655 = vpack.c.bf16 %v6287, %v5673
        %v6656 = vpack.c.bf16 %v6288, %v5722
        %v6657 = vpack.c.bf16 %v6289, %v5724
        %v6658 = vpack.c.bf16 %v6290, %v5773
        %v6659 = vpack.c.bf16 %v6291, %v5775
        %v6660 = vpack.c.bf16 %v6292, %v5824
        %v6661 = vpack.c.bf16 %v6293, %v5826
        %v6662 = vpack.c.bf16 %v6302, %v6294
        %v6663 = vpack.c.bf16 %v6303, %v6295
        %v6664 = vpack.c.bf16 %v6304, %v6296
        %v6665 = vpack.c.bf16 %v6305, %v6297
        %v6666 = vpack.c.bf16 %v6306, %v6298
        %v6667 = vpack.c.bf16 %v6307, %v6299
        %v6668 = vpack.c.bf16 %v6308, %v6300
        %v6669 = vpack.c.bf16 %v6309, %v6301
        %v6670 = vpack.c.bf16 %v6390, %v6382
        %v6671 = vpack.c.bf16 %v6391, %v6383
        %v6672 = vpack.c.bf16 %v6392, %v6384
        %v6673 = vpack.c.bf16 %v6393, %v6385
        %v6674 = vpack.c.bf16 %v6394, %v6386
        %v6675 = vpack.c.bf16 %v6395, %v6387
        %v6676 = vpack.c.bf16 %v6396, %v6388
        %v6677 = vpack.c.bf16 %v6397, %v6389
        %v6678 = vpack.c.bf16 %v6478, %v6398
        %v6679 = vpack.c.bf16 %v6479, %v6399
        %v6680 = vpack.c.bf16 %v6480, %v6400
        %v6681 = vpack.c.bf16 %v6481, %v6401
        %v6682 = vpack.c.bf16 %v6482, %v6402
        %v6683 = vpack.c.bf16 %v6483, %v6403
        %v6684 = vpack.c.bf16 %v6484, %v6404
        %v6685 = vpack.c.bf16 %v6485, %v6405
        %v6686 = vpack.c.bf16 %v6494, %v6486
        %v6687 = vpack.c.bf16 %v6495, %v6487
        %v6688 = vpack.c.bf16 %v6496, %v6488
        %v6689 = vpack.c.bf16 %v6497, %v6489
        %v6690 = vpack.c.bf16 %v6498, %v6490
        %v6691 = vpack.c.bf16 %v6499, %v6491
        %v6692 = vpack.c.bf16 %v6500, %v6492
        %v6693 = vpack.c.bf16 %v6501, %v6493
        %v6694 = vpack.c.bf16 %v6582, %v6574
        %v6695 = vpack.c.bf16 %v6583, %v6575
        %v6696 = vpack.c.bf16 %v6584, %v6576
        %v6697 = vpack.c.bf16 %v6585, %v6577
        %v6698 = vpack.c.bf16 %v6586, %v6578
        %v6699 = vpack.c.bf16 %v6587, %v6579
        %v6700 = vpack.c.bf16 %v6588, %v6580
        %v6701 = vpack.c.bf16 %v6589, %v6581
        %v6702 = vpack.c.bf16 %v6590, %v6590
        %v6703 = vpack.c.bf16 %v6591, %v6591
        %v6704 = vpack.c.bf16 %v6592, %v6592
        %v6705 = vpack.c.bf16 %v6593, %v6593
        %v6706 = vpack.c.bf16 %v6594, %v6594
        %v6707 = vpack.c.bf16 %v6595, %v6595
        %v6708 = vpack.c.bf16 %v6596, %v6596
        %v6709 = vpack.c.bf16 %v6597, %v6597
        %v6710 = vld [vmem:[%s20] sm:$0xff]
        %v6711 = vld [vmem:[%s20 + $0x8] sm:$0xff]
        %v6712 = vld [vmem:[%s20 + $0x10] sm:$0xff]
        %v6713 = vld [vmem:[%s21] sm:$0xff]
        %v6714 = vld [vmem:[%s21 + $0x8] sm:$0xff]
        %v6715 = vld [vmem:[%s21 + $0x10] sm:$0xff]
        %6717 = vset.pattern.permute.xlu0 0
        %6718 = vperm.xlu0 %6717, %v6713
        %v6719 = vpop.permute.xlu0 %6718
        %6722 = vset.pattern.permute.xlu0 0
        %6723 = vperm.xlu0 %6722, %v6714
        %v6724 = vpop.permute.xlu0 %6723
        %6727 = vset.pattern.permute.xlu0 0
        %6728 = vperm.xlu0 %6727, %v6715
        %v6729 = vpop.permute.xlu0 %6728
        %v6734 = vunpack.c.l.b16 %v6710
        %v6735 = vunpack.c.h.b16 %v6710
        %v6736 = vunpack.c.l.b16 %v6711
        %v6737 = vunpack.c.h.b16 %v6711
        %v6738 = vunpack.c.l.b16 %v6712
        %v6739 = vunpack.c.h.b16 %v6712
        %v6740 = vpack.c.b16 %v6736, %v6734
        %v6741 = vpack.c.b16 %v6737, %v6735
        %v6742 = vpack.c.b16 %v6738, %v6738
        %v6743 = vpack.c.b16 %v6739, %v6739
        %v6747 = vsel %vm5595, %v6741, 0
        %v6750 = vsel %vm5595, %v6743, 0
        %v6753 = vsel %vm2055, %v6702, 0
        %v6756 = vsel %vm2055, %v6703, 0
        %v6759 = vsel %vm2055, %v6704, 0
        %v6762 = vsel %vm2055, %v6705, 0
        %v6765 = vsel %vm2055, %v6706, 0
        %v6768 = vsel %vm2055, %v6707, 0
        %v6771 = vsel %vm2055, %v6708, 0
        %v6774 = vsel %vm2055, %v6709, 0
        %6776 = vmatprep.subr.bf16.mxu0 %v6655
        %6777 = vmatpush1.bf16.msra.mxu0 %v6654
        %6778 = vmatprep.subr.bf16.mxu0 %v6647
        %6779 = vmatpush1.bf16.msra.mxu0 %v6646
        %6780 = vmatprep.subr.bf16.mxu0 %v6639
        %6781 = vmatpush1.bf16.msra.mxu0 %v6638
        %6782 = vmatprep.subr.bf16.mxu0 %v6631
        %6783 = vmatpush1.bf16.msra.mxu0 %v6630
        %6784 = vmatprep.subr.bf16.mxu0 %v6623
        %6785 = vmatpush1.bf16.msra.mxu0 %v6622
        %6786 = vmatprep.subr.bf16.mxu0 %v6615
        %6787 = vmatpush1.bf16.msra.mxu0 %v6614
        %6788 = vmatprep.subr.bf16.mxu0 %v6607
        %6789 = vmatpush1.bf16.msra.mxu0 %v6606
        %6790 = vmatprep.subr.bf16.mxu0 %v6599
        %6791 = vmatpush1.bf16.msra.mxu0 %v6598
        %6792 = vmatprep.subr.bf16.mxu0 0
        %6793 = vmatpush2.bf16.msra.mxu0 0
        %6794 = vmatprep.subr.bf16.mxu0 0
        %6795 = vmatpush2.bf16.msra.mxu0 0
        %6796 = vmatprep.subr.bf16.mxu0 %v6756
        %6797 = vmatpush2.bf16.msra.mxu0 %v6753
        %6798 = vmatprep.subr.bf16.mxu0 %v6695
        %6799 = vmatpush2.bf16.msra.mxu0 %v6694
        %6800 = vmatprep.subr.bf16.mxu0 %v6687
        %6801 = vmatpush2.bf16.msra.mxu0 %v6686
        %6802 = vmatprep.subr.bf16.mxu0 %v6679
        %6803 = vmatpush2.bf16.msra.mxu0 %v6678
        %6804 = vmatprep.subr.bf16.mxu0 %v6671
        %6805 = vmatpush2.bf16.msra.mxu0 %v6670
        %6806 = vmatprep.subr.bf16.mxu0 %v6663
        %6807 = vmatpush2.bf16.msra.mxu0 %v6662
        %6808 = vmatprep.mubr.bf16.mxu0 %v6747
        %6809 = vmatmul.mubr.bf16.gmra.mxu0 %v6740
        %v6810 = vpop.f32.mrf.mxu0
        %v6811 = vadd.f32 %v6719, %v6810
        %v6812 = vpop.f32.mrf.mxu0
        %v6813 = vadd.f32 %v6719, %v6812
        %v6814 = vpop.f32.mrf.mxu0
        %v6815 = vadd.f32 %v6724, %v6814
        %v6816 = vpop.f32.mrf.mxu0
        %v6817 = vadd.f32 %v6724, %v6816
        %6818 = vmatprep.mubr.bf16.mxu0 %v6750
        %6819 = vmatmul.mubr.bf16.gmra.mxu0 %v6742
        %v6820 = vpop.f32.mrf.mxu0
        %v6821 = vadd.f32 %v6729, %v6820
        %v6822 = vpop.f32.mrf.mxu0
        %v6823 = vadd.f32 %v6729, %v6822
        %v6824 = vpop.f32.mrf.mxu0
        %v6825 = vpop.f32.mrf.mxu0
        %6826 = vdwg.mxu0
        %6827 = vmatprep.subr.bf16.mxu0 %v6657
        %6828 = vmatpush1.bf16.msra.mxu0 %v6656
        %6829 = vmatprep.subr.bf16.mxu0 %v6649
        %6830 = vmatpush1.bf16.msra.mxu0 %v6648
        %6831 = vmatprep.subr.bf16.mxu0 %v6641
        %6832 = vmatpush1.bf16.msra.mxu0 %v6640
        %6833 = vmatprep.subr.bf16.mxu0 %v6633
        %6834 = vmatpush1.bf16.msra.mxu0 %v6632
        %6835 = vmatprep.subr.bf16.mxu0 %v6625
        %6836 = vmatpush1.bf16.msra.mxu0 %v6624
        %6837 = vmatprep.subr.bf16.mxu0 %v6617
        %6838 = vmatpush1.bf16.msra.mxu0 %v6616
        %6839 = vmatprep.subr.bf16.mxu0 %v6609
        %6840 = vmatpush1.bf16.msra.mxu0 %v6608
        %6841 = vmatprep.subr.bf16.mxu0 %v6601
        %6842 = vmatpush1.bf16.msra.mxu0 %v6600
        %6843 = vmatprep.subr.bf16.mxu0 0
        %6844 = vmatpush2.bf16.msra.mxu0 0
        %6845 = vmatprep.subr.bf16.mxu0 0
        %6846 = vmatpush2.bf16.msra.mxu0 0
        %6847 = vmatprep.subr.bf16.mxu0 %v6762
        %6848 = vmatpush2.bf16.msra.mxu0 %v6759
        %6849 = vmatprep.subr.bf16.mxu0 %v6697
        %6850 = vmatpush2.bf16.msra.mxu0 %v6696
        %6851 = vmatprep.subr.bf16.mxu0 %v6689
        %6852 = vmatpush2.bf16.msra.mxu0 %v6688
        %6853 = vmatprep.subr.bf16.mxu0 %v6681
        %6854 = vmatpush2.bf16.msra.mxu0 %v6680
        %6855 = vmatprep.subr.bf16.mxu0 %v6673
        %6856 = vmatpush2.bf16.msra.mxu0 %v6672
        %6857 = vmatprep.subr.bf16.mxu0 %v6665
        %6858 = vmatpush2.bf16.msra.mxu0 %v6664
        %6859 = vmatprep.mubr.bf16.mxu0 %v6747
        %6860 = vmatmul.mubr.bf16.gmra.mxu0 %v6740
        %v6861 = vpop.f32.mrf.mxu0
        %v6862 = vadd.f32 %v6719, %v6861
        %v6863 = vpop.f32.mrf.mxu0
        %v6864 = vadd.f32 %v6719, %v6863
        %v6865 = vpop.f32.mrf.mxu0
        %v6866 = vadd.f32 %v6724, %v6865
        %v6867 = vpop.f32.mrf.mxu0
        %v6868 = vadd.f32 %v6724, %v6867
        %6869 = vmatprep.mubr.bf16.mxu0 %v6750
        %6870 = vmatmul.mubr.bf16.gmra.mxu0 %v6742
        %v6871 = vpop.f32.mrf.mxu0
        %v6872 = vadd.f32 %v6729, %v6871
        %v6873 = vpop.f32.mrf.mxu0
        %v6874 = vadd.f32 %v6729, %v6873
        %v6875 = vpop.f32.mrf.mxu0
        %v6876 = vpop.f32.mrf.mxu0
        %6877 = vdwg.mxu0
        %6878 = vmatprep.subr.bf16.mxu0 %v6659
        %6879 = vmatpush1.bf16.msra.mxu0 %v6658
        %6880 = vmatprep.subr.bf16.mxu0 %v6651
        %6881 = vmatpush1.bf16.msra.mxu0 %v6650
        %6882 = vmatprep.subr.bf16.mxu0 %v6643
        %6883 = vmatpush1.bf16.msra.mxu0 %v6642
        %6884 = vmatprep.subr.bf16.mxu0 %v6635
        %6885 = vmatpush1.bf16.msra.mxu0 %v6634
        %6886 = vmatprep.subr.bf16.mxu0 %v6627
        %6887 = vmatpush1.bf16.msra.mxu0 %v6626
        %6888 = vmatprep.subr.bf16.mxu0 %v6619
        %6889 = vmatpush1.bf16.msra.mxu0 %v6618
        %6890 = vmatprep.subr.bf16.mxu0 %v6611
        %6891 = vmatpush1.bf16.msra.mxu0 %v6610
        %6892 = vmatprep.subr.bf16.mxu0 %v6603
        %6893 = vmatpush1.bf16.msra.mxu0 %v6602
        %6894 = vmatprep.subr.bf16.mxu0 0
        %6895 = vmatpush2.bf16.msra.mxu0 0
        %6896 = vmatprep.subr.bf16.mxu0 0
        %6897 = vmatpush2.bf16.msra.mxu0 0
        %6898 = vmatprep.subr.bf16.mxu0 %v6768
        %6899 = vmatpush2.bf16.msra.mxu0 %v6765
        %6900 = vmatprep.subr.bf16.mxu0 %v6699
        %6901 = vmatpush2.bf16.msra.mxu0 %v6698
        %6902 = vmatprep.subr.bf16.mxu0 %v6691
        %6903 = vmatpush2.bf16.msra.mxu0 %v6690
        %6904 = vmatprep.subr.bf16.mxu0 %v6683
        %6905 = vmatpush2.bf16.msra.mxu0 %v6682
        %6906 = vmatprep.subr.bf16.mxu0 %v6675
        %6907 = vmatpush2.bf16.msra.mxu0 %v6674
        %6908 = vmatprep.subr.bf16.mxu0 %v6667
        %6909 = vmatpush2.bf16.msra.mxu0 %v6666
        %6910 = vmatprep.mubr.bf16.mxu0 %v6747
        %6911 = vmatmul.mubr.bf16.gmra.mxu0 %v6740
        %v6912 = vpop.f32.mrf.mxu0
        %v6913 = vadd.f32 %v6719, %v6912
        %v6914 = vpop.f32.mrf.mxu0
        %v6915 = vadd.f32 %v6719, %v6914
        %v6916 = vpop.f32.mrf.mxu0
        %v6917 = vadd.f32 %v6724, %v6916
        %v6918 = vpop.f32.mrf.mxu0
        %v6919 = vadd.f32 %v6724, %v6918
        %6920 = vmatprep.mubr.bf16.mxu0 %v6750
        %6921 = vmatmul.mubr.bf16.gmra.mxu0 %v6742
        %v6922 = vpop.f32.mrf.mxu0
        %v6923 = vadd.f32 %v6729, %v6922
        %v6924 = vpop.f32.mrf.mxu0
        %v6925 = vadd.f32 %v6729, %v6924
        %v6926 = vpop.f32.mrf.mxu0
        %v6927 = vpop.f32.mrf.mxu0
        %6928 = vdwg.mxu0
        %6929 = vmatprep.subr.bf16.mxu0 %v6661
        %6930 = vmatpush1.bf16.msra.mxu0 %v6660
        %6931 = vmatprep.subr.bf16.mxu0 %v6653
        %6932 = vmatpush1.bf16.msra.mxu0 %v6652
        %6933 = vmatprep.subr.bf16.mxu0 %v6645
        %6934 = vmatpush1.bf16.msra.mxu0 %v6644
        %6935 = vmatprep.subr.bf16.mxu0 %v6637
        %6936 = vmatpush1.bf16.msra.mxu0 %v6636
        %6937 = vmatprep.subr.bf16.mxu0 %v6629
        %6938 = vmatpush1.bf16.msra.mxu0 %v6628
        %6939 = vmatprep.subr.bf16.mxu0 %v6621
        %6940 = vmatpush1.bf16.msra.mxu0 %v6620
        %6941 = vmatprep.subr.bf16.mxu0 %v6613
        %6942 = vmatpush1.bf16.msra.mxu0 %v6612
        %6943 = vmatprep.subr.bf16.mxu0 %v6605
        %6944 = vmatpush1.bf16.msra.mxu0 %v6604
        %6945 = vmatprep.subr.bf16.mxu0 0
        %6946 = vmatpush2.bf16.msra.mxu0 0
        %6947 = vmatprep.subr.bf16.mxu0 0
        %6948 = vmatpush2.bf16.msra.mxu0 0
        %6949 = vmatprep.subr.bf16.mxu0 %v6774
        %6950 = vmatpush2.bf16.msra.mxu0 %v6771
        %6951 = vmatprep.subr.bf16.mxu0 %v6701
        %6952 = vmatpush2.bf16.msra.mxu0 %v6700
        %6953 = vmatprep.subr.bf16.mxu0 %v6693
        %6954 = vmatpush2.bf16.msra.mxu0 %v6692
        %6955 = vmatprep.subr.bf16.mxu0 %v6685
        %6956 = vmatpush2.bf16.msra.mxu0 %v6684
        %6957 = vmatprep.subr.bf16.mxu0 %v6677
        %6958 = vmatpush2.bf16.msra.mxu0 %v6676
        %6959 = vmatprep.subr.bf16.mxu0 %v6669
        %6960 = vmatpush2.bf16.msra.mxu0 %v6668
        %6961 = vmatprep.mubr.bf16.mxu0 %v6747
        %6962 = vmatmul.mubr.bf16.gmra.mxu0 %v6740
        %v6963 = vpop.f32.mrf.mxu0
        %v6964 = vadd.f32 %v6719, %v6963
        %v6965 = vpop.f32.mrf.mxu0
        %v6966 = vadd.f32 %v6719, %v6965
        %v6967 = vpop.f32.mrf.mxu0
        %v6968 = vadd.f32 %v6724, %v6967
        %v6969 = vpop.f32.mrf.mxu0
        %v6970 = vadd.f32 %v6724, %v6969
        %6971 = vmatprep.mubr.bf16.mxu0 %v6750
        %6972 = vmatmul.mubr.bf16.gmra.mxu0 %v6742
        %v6973 = vpop.f32.mrf.mxu0
        %v6974 = vadd.f32 %v6729, %v6973
        %v6975 = vpop.f32.mrf.mxu0
        %v6976 = vadd.f32 %v6729, %v6975
        %v6977 = vpop.f32.mrf.mxu0
        %v6978 = vpop.f32.mrf.mxu0
        %6979 = vdwg.mxu0
        %v6980 = vld [vmem:[%s22] sm:$0x1]
        %v6981 = vld [vmem:[#allocation2] sm:$0x1]
        %6983 = vset.pattern.permute.xlu0 0
        %6984 = vperm.xlu0 %6983, %v6981
        %v6985 = vpop.permute.xlu0 %6984
        %v6987 = vlaneseq
        %v6988 = vshrl.u32 %v6987, 7
        %v6989 = vsub.s32 0, %v6988
        %v6990 = vrot.slane %v6985, %v6989
        %vm6991 = vcmask 195584
        %v6993 = vsel %vm6991, %v6980, 0
        %6995 = vmatprep.subr.mxu0 0.0
        %6996 = vmatpush1.msra.mxu0 0.0
        %6997 = vmatprep.subr.mxu0 0.0
        %6998 = vmatpush1.msra.mxu0 0.0
        %6999 = vmatprep.subr.mxu0 0.0
        %7000 = vmatpush1.msra.mxu0 0.0
        %7001 = vmatprep.subr.mxu0 0.0
        %7002 = vmatpush1.msra.mxu0 0.0
        %7003 = vmatprep.subr.mxu0 0.0
        %7004 = vmatpush1.msra.mxu0 0.0
        %7005 = vmatprep.subr.mxu0 0.0
        %7006 = vmatpush1.msra.mxu0 0.0
        %7007 = vmatprep.subr.mxu0 0.0
        %7008 = vmatpush1.msra.mxu0 0.0
        %7009 = vmatprep.subr.mxu0 0.0
        %7010 = vmatpush1.msra.mxu0 0.0
        %7011 = vmatprep.subr.mxu0 0.0
        %7012 = vmatpush1.msra.mxu0 0.0
        %7013 = vmatprep.subr.mxu0 0.0
        %7014 = vmatpush1.msra.mxu0 0.0
        %7015 = vmatprep.subr.mxu0 0.0
        %7016 = vmatpush1.msra.mxu0 0.0
        %7017 = vmatprep.subr.mxu0 0.0
        %7018 = vmatpush1.msra.mxu0 0.0
        %7019 = vmatprep.subr.mxu0 0.0
        %7020 = vmatpush1.msra.mxu0 0.0
        %7021 = vmatprep.subr.mxu0 %v6823
        %7022 = vmatpush1.msra.mxu0 %v6821
        %7023 = vmatprep.subr.mxu0 %v6817
        %7024 = vmatpush1.msra.mxu0 %v6815
        %7025 = vmatprep.subr.mxu0 %v6813
        %7026 = vmatpush1.msra.mxu0 %v6811
        %7027 = vmatprep.subr.mxu0 0.0
        %7028 = vmatpush2.msra.mxu0 0.0
        %7029 = vmatprep.subr.mxu0 0.0
        %7030 = vmatpush2.msra.mxu0 0.0
        %7031 = vmatprep.subr.mxu0 0.0
        %7032 = vmatpush2.msra.mxu0 0.0
        %7033 = vmatprep.subr.mxu0 0.0
        %7034 = vmatpush2.msra.mxu0 0.0
        %7035 = vmatprep.subr.mxu0 0.0
        %7036 = vmatpush2.msra.mxu0 0.0
        %7037 = vmatprep.subr.mxu0 0.0
        %7038 = vmatpush2.msra.mxu0 0.0
        %7039 = vmatprep.subr.mxu0 0.0
        %7040 = vmatpush2.msra.mxu0 0.0
        %7041 = vmatprep.subr.mxu0 0.0
        %7042 = vmatpush2.msra.mxu0 0.0
        %7043 = vmatprep.subr.mxu0 0.0
        %7044 = vmatpush2.msra.mxu0 0.0
        %7045 = vmatprep.subr.mxu0 0.0
        %7046 = vmatpush2.msra.mxu0 0.0
        %7047 = vmatprep.subr.mxu0 0.0
        %7048 = vmatpush2.msra.mxu0 0.0
        %7049 = vmatprep.subr.mxu0 0.0
        %7050 = vmatpush2.msra.mxu0 0.0
        %7051 = vmatprep.subr.mxu0 0.0
        %7052 = vmatpush2.msra.mxu0 0.0
        %7053 = vmatprep.subr.mxu0 0.0
        %7054 = vmatpush2.msra.mxu0 0.0
        %7055 = vmatprep.subr.mxu0 0.0
        %7056 = vmatpush2.msra.mxu0 0.0
        %7057 = vmatprep.subr.mxu0 0.0
        %7058 = vmatpush2.msra.mxu0 0.0
        %7059 = vmatprep.mubr.f32.mxu0 0.0
        %7060 = vmatmul.mubr.f32.gmra.mxu0 %v6993
        %v7061 = vpop.f32.mrf.mxu0
        %v7062 = vadd.f32 %v6990, %v7061
        %v7063 = vpop.f32.mrf.mxu0
        %v7064 = vadd.f32 %v6990, %v7063
        %7065 = vdwg.mxu0
        %7066 = vmatprep.subr.mxu0 0.0
        %7067 = vmatpush1.msra.mxu0 0.0
        %7068 = vmatprep.subr.mxu0 0.0
        %7069 = vmatpush1.msra.mxu0 0.0
        %7070 = vmatprep.subr.mxu0 0.0
        %7071 = vmatpush1.msra.mxu0 0.0
        %7072 = vmatprep.subr.mxu0 0.0
        %7073 = vmatpush1.msra.mxu0 0.0
        %7074 = vmatprep.subr.mxu0 0.0
        %7075 = vmatpush1.msra.mxu0 0.0
        %7076 = vmatprep.subr.mxu0 0.0
        %7077 = vmatpush1.msra.mxu0 0.0
        %7078 = vmatprep.subr.mxu0 0.0
        %7079 = vmatpush1.msra.mxu0 0.0
        %7080 = vmatprep.subr.mxu0 0.0
        %7081 = vmatpush1.msra.mxu0 0.0
        %7082 = vmatprep.subr.mxu0 0.0
        %7083 = vmatpush1.msra.mxu0 0.0
        %7084 = vmatprep.subr.mxu0 0.0
        %7085 = vmatpush1.msra.mxu0 0.0
        %7086 = vmatprep.subr.mxu0 0.0
        %7087 = vmatpush1.msra.mxu0 0.0
        %7088 = vmatprep.subr.mxu0 0.0
        %7089 = vmatpush1.msra.mxu0 0.0
        %7090 = vmatprep.subr.mxu0 0.0
        %7091 = vmatpush1.msra.mxu0 0.0
        %7092 = vmatprep.subr.mxu0 %v6874
        %7093 = vmatpush1.msra.mxu0 %v6872
        %7094 = vmatprep.subr.mxu0 %v6868
        %7095 = vmatpush1.msra.mxu0 %v6866
        %7096 = vmatprep.subr.mxu0 %v6864
        %7097 = vmatpush1.msra.mxu0 %v6862
        %7098 = vmatprep.subr.mxu0 0.0
        %7099 = vmatpush2.msra.mxu0 0.0
        %7100 = vmatprep.subr.mxu0 0.0
        %7101 = vmatpush2.msra.mxu0 0.0
        %7102 = vmatprep.subr.mxu0 0.0
        %7103 = vmatpush2.msra.mxu0 0.0
        %7104 = vmatprep.subr.mxu0 0.0
        %7105 = vmatpush2.msra.mxu0 0.0
        %7106 = vmatprep.subr.mxu0 0.0
        %7107 = vmatpush2.msra.mxu0 0.0
        %7108 = vmatprep.subr.mxu0 0.0
        %7109 = vmatpush2.msra.mxu0 0.0
        %7110 = vmatprep.subr.mxu0 0.0
        %7111 = vmatpush2.msra.mxu0 0.0
        %7112 = vmatprep.subr.mxu0 0.0
        %7113 = vmatpush2.msra.mxu0 0.0
        %7114 = vmatprep.subr.mxu0 0.0
        %7115 = vmatpush2.msra.mxu0 0.0
        %7116 = vmatprep.subr.mxu0 0.0
        %7117 = vmatpush2.msra.mxu0 0.0
        %7118 = vmatprep.subr.mxu0 0.0
        %7119 = vmatpush2.msra.mxu0 0.0
        %7120 = vmatprep.subr.mxu0 0.0
        %7121 = vmatpush2.msra.mxu0 0.0
        %7122 = vmatprep.subr.mxu0 0.0
        %7123 = vmatpush2.msra.mxu0 0.0
        %7124 = vmatprep.subr.mxu0 0.0
        %7125 = vmatpush2.msra.mxu0 0.0
        %7126 = vmatprep.subr.mxu0 0.0
        %7127 = vmatpush2.msra.mxu0 0.0
        %7128 = vmatprep.subr.mxu0 0.0
        %7129 = vmatpush2.msra.mxu0 0.0
        %7130 = vmatprep.mubr.f32.mxu0 0.0
        %7131 = vmatmul.mubr.f32.gmra.mxu0 %v6993
        %v7132 = vpop.f32.mrf.mxu0
        %v7133 = vadd.f32 %v6990, %v7132
        %v7134 = vpop.f32.mrf.mxu0
        %v7135 = vadd.f32 %v6990, %v7134
        %7136 = vdwg.mxu0
        %7137 = vmatprep.subr.mxu0 0.0
        %7138 = vmatpush1.msra.mxu0 0.0
        %7139 = vmatprep.subr.mxu0 0.0
        %7140 = vmatpush1.msra.mxu0 0.0
        %7141 = vmatprep.subr.mxu0 0.0
        %7142 = vmatpush1.msra.mxu0 0.0
        %7143 = vmatprep.subr.mxu0 0.0
        %7144 = vmatpush1.msra.mxu0 0.0
        %7145 = vmatprep.subr.mxu0 0.0
        %7146 = vmatpush1.msra.mxu0 0.0
        %7147 = vmatprep.subr.mxu0 0.0
        %7148 = vmatpush1.msra.mxu0 0.0
        %7149 = vmatprep.subr.mxu0 0.0
        %7150 = vmatpush1.msra.mxu0 0.0
        %7151 = vmatprep.subr.mxu0 0.0
        %7152 = vmatpush1.msra.mxu0 0.0
        %7153 = vmatprep.subr.mxu0 0.0
        %7154 = vmatpush1.msra.mxu0 0.0
        %7155 = vmatprep.subr.mxu0 0.0
        %7156 = vmatpush1.msra.mxu0 0.0
        %7157 = vmatprep.subr.mxu0 0.0
        %7158 = vmatpush1.msra.mxu0 0.0
        %7159 = vmatprep.subr.mxu0 0.0
        %7160 = vmatpush1.msra.mxu0 0.0
        %7161 = vmatprep.subr.mxu0 0.0
        %7162 = vmatpush1.msra.mxu0 0.0
        %7163 = vmatprep.subr.mxu0 %v6925
        %7164 = vmatpush1.msra.mxu0 %v6923
        %7165 = vmatprep.subr.mxu0 %v6919
        %7166 = vmatpush1.msra.mxu0 %v6917
        %7167 = vmatprep.subr.mxu0 %v6915
        %7168 = vmatpush1.msra.mxu0 %v6913
        %7169 = vmatprep.subr.mxu0 0.0
        %7170 = vmatpush2.msra.mxu0 0.0
        %7171 = vmatprep.subr.mxu0 0.0
        %7172 = vmatpush2.msra.mxu0 0.0
        %7173 = vmatprep.subr.mxu0 0.0
        %7174 = vmatpush2.msra.mxu0 0.0
        %7175 = vmatprep.subr.mxu0 0.0
        %7176 = vmatpush2.msra.mxu0 0.0
        %7177 = vmatprep.subr.mxu0 0.0
        %7178 = vmatpush2.msra.mxu0 0.0
        %7179 = vmatprep.subr.mxu0 0.0
        %7180 = vmatpush2.msra.mxu0 0.0
        %7181 = vmatprep.subr.mxu0 0.0
        %7182 = vmatpush2.msra.mxu0 0.0
        %7183 = vmatprep.subr.mxu0 0.0
        %7184 = vmatpush2.msra.mxu0 0.0
        %7185 = vmatprep.subr.mxu0 0.0
        %7186 = vmatpush2.msra.mxu0 0.0
        %7187 = vmatprep.subr.mxu0 0.0
        %7188 = vmatpush2.msra.mxu0 0.0
        %7189 = vmatprep.subr.mxu0 0.0
        %7190 = vmatpush2.msra.mxu0 0.0
        %7191 = vmatprep.subr.mxu0 0.0
        %7192 = vmatpush2.msra.mxu0 0.0
        %7193 = vmatprep.subr.mxu0 0.0
        %7194 = vmatpush2.msra.mxu0 0.0
        %7195 = vmatprep.subr.mxu0 0.0
        %7196 = vmatpush2.msra.mxu0 0.0
        %7197 = vmatprep.subr.mxu0 0.0
        %7198 = vmatpush2.msra.mxu0 0.0
        %7199 = vmatprep.subr.mxu0 0.0
        %7200 = vmatpush2.msra.mxu0 0.0
        %7201 = vmatprep.mubr.f32.mxu0 0.0
        %7202 = vmatmul.mubr.f32.gmra.mxu0 %v6993
        %v7203 = vpop.f32.mrf.mxu0
        %v7204 = vadd.f32 %v6990, %v7203
        %v7205 = vpop.f32.mrf.mxu0
        %v7206 = vadd.f32 %v6990, %v7205
        %7207 = vdwg.mxu0
        %7208 = vmatprep.subr.mxu0 0.0
        %7209 = vmatpush1.msra.mxu0 0.0
        %7210 = vmatprep.subr.mxu0 0.0
        %7211 = vmatpush1.msra.mxu0 0.0
        %7212 = vmatprep.subr.mxu0 0.0
        %7213 = vmatpush1.msra.mxu0 0.0
        %7214 = vmatprep.subr.mxu0 0.0
        %7215 = vmatpush1.msra.mxu0 0.0
        %7216 = vmatprep.subr.mxu0 0.0
        %7217 = vmatpush1.msra.mxu0 0.0
        %7218 = vmatprep.subr.mxu0 0.0
        %7219 = vmatpush1.msra.mxu0 0.0
        %7220 = vmatprep.subr.mxu0 0.0
        %7221 = vmatpush1.msra.mxu0 0.0
        %7222 = vmatprep.subr.mxu0 0.0
        %7223 = vmatpush1.msra.mxu0 0.0
        %7224 = vmatprep.subr.mxu0 0.0
        %7225 = vmatpush1.msra.mxu0 0.0
        %7226 = vmatprep.subr.mxu0 0.0
        %7227 = vmatpush1.msra.mxu0 0.0
        %7228 = vmatprep.subr.mxu0 0.0
        %7229 = vmatpush1.msra.mxu0 0.0
        %7230 = vmatprep.subr.mxu0 0.0
        %7231 = vmatpush1.msra.mxu0 0.0
        %7232 = vmatprep.subr.mxu0 0.0
        %7233 = vmatpush1.msra.mxu0 0.0
        %7234 = vmatprep.subr.mxu0 %v6976
        %7235 = vmatpush1.msra.mxu0 %v6974
        %7236 = vmatprep.subr.mxu0 %v6970
        %7237 = vmatpush1.msra.mxu0 %v6968
        %7238 = vmatprep.subr.mxu0 %v6966
        %7239 = vmatpush1.msra.mxu0 %v6964
        %7240 = vmatprep.subr.mxu0 0.0
        %7241 = vmatpush2.msra.mxu0 0.0
        %7242 = vmatprep.subr.mxu0 0.0
        %7243 = vmatpush2.msra.mxu0 0.0
        %7244 = vmatprep.subr.mxu0 0.0
        %7245 = vmatpush2.msra.mxu0 0.0
        %7246 = vmatprep.subr.mxu0 0.0
        %7247 = vmatpush2.msra.mxu0 0.0
        %7248 = vmatprep.subr.mxu0 0.0
        %7249 = vmatpush2.msra.mxu0 0.0
        %7250 = vmatprep.subr.mxu0 0.0
        %7251 = vmatpush2.msra.mxu0 0.0
        %7252 = vmatprep.subr.mxu0 0.0
        %7253 = vmatpush2.msra.mxu0 0.0
        %7254 = vmatprep.subr.mxu0 0.0
        %7255 = vmatpush2.msra.mxu0 0.0
        %7256 = vmatprep.subr.mxu0 0.0
        %7257 = vmatpush2.msra.mxu0 0.0
        %7258 = vmatprep.subr.mxu0 0.0
        %7259 = vmatpush2.msra.mxu0 0.0
        %7260 = vmatprep.subr.mxu0 0.0
        %7261 = vmatpush2.msra.mxu0 0.0
        %7262 = vmatprep.subr.mxu0 0.0
        %7263 = vmatpush2.msra.mxu0 0.0
        %7264 = vmatprep.subr.mxu0 0.0
        %7265 = vmatpush2.msra.mxu0 0.0
        %7266 = vmatprep.subr.mxu0 0.0
        %7267 = vmatpush2.msra.mxu0 0.0
        %7268 = vmatprep.subr.mxu0 0.0
        %7269 = vmatpush2.msra.mxu0 0.0
        %7270 = vmatprep.subr.mxu0 0.0
        %7271 = vmatpush2.msra.mxu0 0.0
        %7272 = vmatprep.mubr.f32.mxu0 0.0
        %7273 = vmatmul.mubr.f32.gmra.mxu0 %v6993
        %v7274 = vpop.f32.mrf.mxu0
        %v7275 = vadd.f32 %v6990, %v7274
        %v7276 = vpop.f32.mrf.mxu0
        %v7277 = vadd.f32 %v6990, %v7276
        %7278 = vdwg.mxu0
        %v7287 = vcombine.low %v7062, %v7064
        %v7288 = vcombine.low %v7133, %v7135
        %v7289 = vcombine.low %v7204, %v7206
        %v7290 = vcombine.low %v7275, %v7277
        %v7292 = vunpack.c.l.s4 1966171168
        %v7293 = vunpack.c.0.s8 %v7292
        %v7294 = vlaneseq
        %v7295 = vshrl.u32 %v7294, 7
        %v7296 = vsub.s32 %v7293, %v7295
        %v7297 = vrot.slane %v7287, %v7296
        %v7299 = vunpack.c.l.s4 1966171168
        %v7300 = vunpack.c.0.s8 %v7299
        %v7301 = vlaneseq
        %v7302 = vshrl.u32 %v7301, 7
        %v7303 = vsub.s32 %v7300, %v7302
        %v7304 = vrot.slane %v7288, %v7303
        %v7306 = vunpack.c.l.s4 1966171168
        %v7307 = vunpack.c.0.s8 %v7306
        %v7308 = vlaneseq
        %v7309 = vshrl.u32 %v7308, 7
        %v7310 = vsub.s32 %v7307, %v7309
        %v7311 = vrot.slane %v7289, %v7310
        %v7313 = vunpack.c.l.s4 1966171168
        %v7314 = vunpack.c.0.s8 %v7313
        %v7315 = vlaneseq
        %v7316 = vshrl.u32 %v7315, 7
        %v7317 = vsub.s32 %v7314, %v7316
        %v7318 = vrot.slane %v7290, %v7317
        %v7319 = vcombine.low %v7297, %v7304
        %v7320 = vcombine.low %v7311, %v7318
        %v7322 = vunpack.c.l.s4 1966171168
        %v7323 = vunpack.c.0.s8 %v7322
        %v7324 = vlaneseq
        %v7325 = vshrl.u32 %v7324, 7
        %v7326 = vsub.s32 %v7323, %v7325
        %v7327 = vrot.slane %v7319, %v7326
        %v7329 = vunpack.c.l.s4 1966171168
        %v7330 = vunpack.c.0.s8 %v7329
        %v7331 = vlaneseq
        %v7332 = vshrl.u32 %v7331, 7
        %v7333 = vsub.s32 %v7330, %v7332
        %v7334 = vrot.slane %v7320, %v7333
        %v7335 = vcombine.low %v7327, %v7334
        %7337 = vst [vmem:[%s872] sm:$0xff] %v7335
        %p7338 = scmp.lt.s32.totalorder %s41, 1
        %s7339 = scalar_select %p7338, %s41, 1
        %s7340 = smul.addr %s7339, 8
        %s7341 = scalar_lea.vmem %s24, %s7340
        // Predicated region
        $region145: #{pdc_im_forward.1} parent=115 // pred_check
          %p7342 = pneg %p578
        $region146: #{pdc_im_forward.1} parent=115 // pred_check_branch
          %7344 = sbr.rel (%p7342) target = $region148
        $region147: #{pdc_im_forward.1} parent=115 // pred_region
          _
        $region148: #{pdc_im_forward.1} parent=115 // pred_fallthru
          _
      $region116: #{pdc_im_forward.1} parent=5 // pred_fallthru
        _
      %p7345 = scmp.le.s32.totalorder 2, %s36
      // Predicated region
      $region149: #{pdc_im_forward.1} parent=5 // pred_check
        %p7346 = pneg %p7345
      $region150: #{pdc_im_forward.1} parent=5 // pred_check_branch
        %7348 = sbr.rel (%p7346) target = $region152
      $region151: #{pdc_im_forward.1} parent=5 // pred_region
        %s7349 = ssub.s32 %s36, 2
        // Predicated region
        $region153: #{pdc_im_forward.1} parent=151 // pred_check
          %p7350 = pneg %p584
        $region154: #{pdc_im_forward.1} parent=151 // pred_check_branch
          %7352 = sbr.rel (%p7350) target = $region156
        $region155: #{pdc_im_forward.1} parent=151 // pred_region
          %p7353 = scmp.lt.s32.totalorder %s42, 1
          %s7354 = scalar_select %p7353, %s42, 1
          %s7355 = smul.addr %s7354, 8
          %s7356 = scalar_lea.vmem %s24, %s7355
        $region156: #{pdc_im_forward.1} parent=151 // pred_fallthru
          _
      $region152: #{pdc_im_forward.1} parent=5 // pred_fallthru
        _
    $region6: #{pdc_im_forward.1} parent=1 // loop_footer
      %s40 = sadd.s32 1, %s36
    $region7: #{pdc_im_forward.1} parent=1 // loop_footer_branch
      %35 = sbr.rel target = $region3
    $region8: #{pdc_im_forward.1} parent=1 // loop_exit
      _
    %7357 = vsyncpa [#allocation4], 1
    %s7358 = scalar_lea.sflag [#allocation4], 1
    %7359 = vsyncpa %s7358, 1
    %7360 = vsyncpa [#allocation6], 1
    %7361 = vsyncpa [#allocation9], 1
    %7362 = vsyncpa [#allocation12], 1

</llo_original>
